<compile_context>
chip_gen: v5e
topology: v5e:2x2
jax: 0.10.0
libtpu: 0.0.40
codegen_flags: <defaults>
</compile_context>

<pallas_src>
import functools

import numpy as np
import jax
import jax.numpy as jnp
from jax import lax
from jax.experimental import pallas as pl
from jax.experimental.pallas import tpu as pltpu


def _round_up(x, m):
    return ((x + m - 1) // m) * m


def _silu(y):
    # y * sigmoid(y) == 0.5 * y * (1 + tanh(y/2)): one EUP op instead of two.
    return 0.5 * y * (1.0 + jnp.tanh(0.5 * y))


# -----------------------------------------------------------------------------
# Kernel 1: stem conv (6x6 / stride 2) as (HW, Kd) @ (Kd, C) + bias + SiLU.
# Grid over batch (>=2 parallel steps feeds both v7x TensorCores).
# -----------------------------------------------------------------------------
def _conv_silu_kernel(x_ref, w_ref, b_ref, o_ref):
    y = jnp.dot(x_ref[...], w_ref[...], preferred_element_type=jnp.float32)
    o_ref[...] = _silu(y + b_ref[...]).astype(o_ref.dtype)


def _conv_s2_call(patches3d, w, b, cout):
    n, hw, kd = patches3d.shape
    return pl.pallas_call(
        _conv_silu_kernel,
        out_shape=jax.ShapeDtypeStruct((n, hw, cout), jnp.bfloat16),
        grid=(n,),
        in_specs=[
            pl.BlockSpec((None, hw, kd), lambda i: (i, 0, 0)),
            pl.BlockSpec((kd, cout), lambda i: (0, 0)),
            pl.BlockSpec((1, cout), lambda i: (0, 0)),
        ],
        out_specs=pl.BlockSpec((None, hw, cout), lambda i: (i, 0, 0)),
        compiler_params=pltpu.CompilerParams(dimension_semantics=("parallel",)),
    )(patches3d, w, b)


# -----------------------------------------------------------------------------
# Kernel 2: fused stage = downsample conv + CSP(split1/split2 -> bottlenecks
# -> mix), one grid step per image, everything resident on-chip.
#
# 3x3 bottleneck conv trick: the hidden activation h (HW, hc) is stored once
# into a row-padded VMEM buffer at row offset P (8-aligned); the tap for
# kernel offset (dh, dw) is the contiguous window buf[P + dh*W + dw : .. + HW].
# Rows that fall outside the image land in the zeroed padding ring; taps that
# cross a row boundary horizontally are zeroed by a per-position column mask
# (depends only on dw), so no column-padded scatter is needed.
# -----------------------------------------------------------------------------
def _csp_stage_kernel(H, W, depth, hidden, pad_rows,
                      x_ref, cm_ref,
                      wd_ref, bd_ref,
                      ws1_ref, bs1_ref, ws2_ref, bs2_ref,
                      w1_ref, b1_ref, w2_ref, b2_ref,
                      wm1_ref, wm2_ref, bm_ref,
                      o_ref, buf_ref):
    HW = H * W
    P = pad_rows
    T = buf_ref.shape[0]

    # --- downsample conv (3x3 / s2 via pre-built patches): one matmul --------
    c = _silu(jnp.dot(x_ref[...], wd_ref[...],
                      preferred_element_type=jnp.float32) + bd_ref[...])
    c = c.astype(jnp.bfloat16)

    # --- CSP split (split1 feeds the bottlenecks, split2 bypasses) -----------
    y1 = _silu(jnp.dot(c, ws1_ref[...], preferred_element_type=jnp.float32)
               + bs1_ref[...])
    y2 = _silu(jnp.dot(c, ws2_ref[...], preferred_element_type=jnp.float32)
               + bs2_ref[...])

    # Zero only the padding ring of the tap buffer (rows [P, P+HW) are fully
    # overwritten by every bottleneck below).  Done per grid step so it is
    # correct even when grid steps are split across TensorCores.
    buf_ref[pl.ds(0, P), :] = jnp.zeros((P, hidden), buf_ref.dtype)
    buf_ref[pl.ds(P + HW, T - P - HW), :] = jnp.zeros((T - P - HW, hidden),
                                                      buf_ref.dtype)

    cm_left = cm_ref[0]    # (HW, 1): 1.0 where the dw = -1 tap is in-bounds
    cm_right = cm_ref[1]   # (HW, 1): 1.0 where the dw = +1 tap is in-bounds

    # --- bottleneck chain (residual kept in registers) -----------------------
    # TODO(synk): move y1/acc to a VMEM f32 accumulator when HW*hidden grows.
    for d in range(depth):
        h1 = _silu(jnp.dot(y1.astype(jnp.bfloat16), w1_ref[d],
                           preferred_element_type=jnp.float32) + b1_ref[d])
        # single aligned slab store (no per-row scatter)
        buf_ref[pl.ds(P, HW), :] = h1.astype(buf_ref.dtype)

        acc = jnp.zeros((HW, hidden), jnp.float32)
        t = 0
        for dh in (-1, 0, 1):
            for dw in (-1, 0, 1):
                tap = buf_ref[pl.ds(P + dh * W + dw, HW), :]
                if dw == -1:
                    tap = tap * cm_left
                elif dw == 1:
                    tap = tap * cm_right
                acc = acc + jnp.dot(tap, w2_ref[d * 9 + t],
                                    preferred_element_type=jnp.float32)
                t += 1
        y1 = y1 + _silu(acc + b2_ref[d])

    # --- mix 1x1 conv on cat(y1, y2): concat folded into two matmuls ---------
    out = _silu(jnp.dot(y1.astype(jnp.bfloat16), wm1_ref[...],
                        preferred_element_type=jnp.float32)
                + jnp.dot(y2.astype(jnp.bfloat16), wm2_ref[...],
                          preferred_element_type=jnp.float32)
                + bm_ref[...])
    o_ref[...] = out.astype(o_ref.dtype)


def _csp_stage_call(x_prev, st):
    dn, cs = st["down"], st["csp"]
    patches = _extract_patches(x_prev, 3, 2, 1)          # (N, H, W, 9*Cin) bf16
    n, H, W, kd = patches.shape
    hw = H * W
    hidden, depth, cout = cs["hidden"], cs["depth"], dn["cout"]

    P = _round_up(W + 1, 8)                               # 8-aligned row pad
    T = _round_up(P + hw + W + 1, 8)                      # tap buffer rows

    # Static column-validity masks for the two horizontal tap shifts.
    j = np.arange(hw, dtype=np.int32) % W
    cmask = np.stack([(j >= 1), (j <= W - 2)]).astype(np.float32)
    cmask = jnp.asarray(cmask.reshape(2, hw, 1), dtype=jnp.bfloat16)

    kernel = functools.partial(_csp_stage_kernel, H, W, depth, hidden, P)
    full2 = lambda i: (0, 0)
    full3 = lambda i: (0, 0, 0)
    out = pl.pallas_call(
        kernel,
        out_shape=jax.ShapeDtypeStruct((n, hw, cout), jnp.bfloat16),
        grid=(n,),
        in_specs=[
            pl.BlockSpec((None, hw, kd), lambda i: (i, 0, 0)),   # patches
            pl.BlockSpec((2, hw, 1), full3),                     # column masks
            pl.BlockSpec((kd, cout), full2),                     # wdown
            pl.BlockSpec((1, cout), full2),                      # bdown
            pl.BlockSpec((cout, hidden), full2),                 # wsplit1
            pl.BlockSpec((1, hidden), full2),                    # bsplit1
            pl.BlockSpec((cout, hidden), full2),                 # wsplit2
            pl.BlockSpec((1, hidden), full2),                    # bsplit2
            pl.BlockSpec((depth, hidden, hidden), full3),        # w1 (1x1)
            pl.BlockSpec((depth, 1, hidden), full3),             # b1
            pl.BlockSpec((depth * 9, hidden, hidden), full3),    # w2 (3x3 taps)
            pl.BlockSpec((depth, 1, hidden), full3),             # b2
            pl.BlockSpec((hidden, cout), full2),                 # wmix (y1 half)
            pl.BlockSpec((hidden, cout), full2),                 # wmix (y2 half)
            pl.BlockSpec((1, cout), full2),                      # bmix
        ],
        out_specs=pl.BlockSpec((None, hw, cout), lambda i: (i, 0, 0)),
        scratch_shapes=[pltpu.VMEM((T, hidden), jnp.bfloat16)],
        compiler_params=pltpu.CompilerParams(dimension_semantics=("parallel",)),
    )(patches.reshape(n, hw, kd), cmask,
      dn["w"], dn["b"],
      cs["ws1"], cs["bs1"], cs["ws2"], cs["bs2"],
      cs["w1"], cs["b1"], cs["w2"], cs["b2"],
      cs["wm1"], cs["wm2"], cs["bm"])
    return out.reshape(n, H, W, cout)


# -----------------------------------------------------------------------------
# JAX glue
# -----------------------------------------------------------------------------
def _extract_patches(x, k, stride, pad):
    # Only used for the 5 stride-2 convs; inflation is k^2/s^2 on tiny maps.
    if pad > 0:
        x = jnp.pad(x, ((0, 0), (pad, pad), (pad, pad), (0, 0)))
    n, hp, wp, c = x.shape
    oh = (hp - k) // stride + 1
    ow = (wp - k) // stride + 1
    cols = []
    for kh in range(k):
        for kw in range(k):
            cols.append(lax.slice(
                x, (0, kh, kw, 0),
                (n, kh + stride * (oh - 1) + 1, kw + stride * (ow - 1) + 1, c),
                (1, stride, stride, 1)))
    return jnp.concatenate(cols, axis=-1)   # (n, oh, ow, k*k*c), order (kh, kw, cin)


def pallas_backbone(x_nchw, params):
    x = jnp.transpose(x_nchw, (0, 2, 3, 1)).astype(jnp.bfloat16)   # NCHW -> NHWC
    p = params["stem"]
    patches = _extract_patches(x, 6, 2, 3)
    n, H, W, kd = patches.shape
    c = _conv_s2_call(patches.reshape(n, H * W, kd), p["w"], p["b"], p["cout"])
    c = c.reshape(n, H, W, p["cout"])
    outs = [c]
    for st in params["stages"]:
        c = _csp_stage_call(c, st)
        outs.append(c)
    # back to NCHW f32 (module semantics); inter-stage traffic stays bf16
    return [jnp.transpose(o, (0, 3, 1, 2)).astype(jnp.float32) for o in outs]


# -----------------------------------------------------------------------------
# Pure-JAX reference (f32, HIGHEST precision) for verification
# -----------------------------------------------------------------------------
def _ref_conv(x, w_flat, b, k, cin, cout, stride):
    w = w_flat.astype(jnp.float32).reshape(k, k, cin, cout)
    y = lax.conv_general_dilated(
        x, w, (stride, stride), [(k // 2, k // 2)] * 2,
        dimension_numbers=("NHWC", "HWIO", "NHWC"),
        precision=lax.Precision.HIGHEST)
    y = y + b.reshape(-1)
    return y * jax.nn.sigmoid(y)


def ref_backbone(x_nchw, params):
    x = jnp.transpose(x_nchw, (0, 2, 3, 1))
    p = params["stem"]
    c = _ref_conv(x, p["w"], p["b"], 6, p["cin"], p["cout"], 2)
    outs = [c]
    for st in params["stages"]:
        dn, cs = st["down"], st["csp"]
        c = _ref_conv(c, dn["w"], dn["b"], 3, dn["cin"], dn["cout"], 2)
        h, cout, depth = cs["hidden"], dn["cout"], cs["depth"]
        y1 = _ref_conv(c, cs["ws1"], cs["bs1"], 1, cout, h, 1)
        y2 = _ref_conv(c, cs["ws2"], cs["bs2"], 1, cout, h, 1)
        for d in range(depth):
            t = _ref_conv(y1, cs["w1"][d], cs["b1"][d], 1, h, h, 1)
            t = _ref_conv(t, cs["w2"][d * 9:(d + 1) * 9].reshape(9 * h, h),
                          cs["b2"][d], 3, h, h, 1)
            y1 = y1 + t
        wm = jnp.concatenate([cs["wm1"], cs["wm2"]], axis=0)
        c = _ref_conv(jnp.concatenate([y1, y2], axis=-1), wm, cs["bm"],
                      1, 2 * h, cout, 1)
        outs.append(c)
    return [jnp.transpose(o, (0, 3, 1, 2)) for o in outs]


# -----------------------------------------------------------------------------
# Deterministic parameter construction (Conv + eval-mode BN folded, bf16 weights)
# -----------------------------------------------------------------------------
class _Keys:
    def __init__(self, seed):
        self._key = jax.random.PRNGKey(seed)

    def next(self):
        self._key, sub = jax.random.split(self._key)
        return sub


def _init_conv(kg, cin, cout, k):
    fan_in = k * k * cin
    w = jax.random.normal(kg.next(), (k, k, cin, cout), jnp.float32) / np.sqrt(fan_in)
    gamma = 1.0 + 0.1 * jax.random.normal(kg.next(), (cout,), jnp.float32)
    beta = 0.1 * jax.random.normal(kg.next(), (cout,), jnp.float32)
    mean = 0.1 * jax.random.normal(kg.next(), (cout,), jnp.float32)
    var = 1.0 + 0.2 * jax.random.uniform(kg.next(), (cout,), jnp.float32)
    scale = gamma / jnp.sqrt(var + 1e-5)
    bias = beta - mean * scale
    w = (w * scale[None, None, None, :]).reshape(k * k * cin, cout)
    return w.astype(jnp.bfloat16), bias.reshape(1, cout)   # BN folded; bf16 weights


def init_backbone(seed, in_channels=3, width=8, depth=1):
    kg = _Keys(seed)
    chs = [width, width * 2, width * 4, width * 8, width * 16]
    depths = [depth, depth * 2, depth * 3, depth]
    w, b = _init_conv(kg, in_channels, width, 6)
    params = {"stem": {"k": 6, "cin": in_channels, "cout": width, "w": w, "b": b},
              "stages": []}
    for i in range(4):
        cin, cout, d = chs[i], chs[i + 1], depths[i]
        h = cout // 2
        wd, bd = _init_conv(kg, cin, cout, 3)
        ws1, bs1 = _init_conv(kg, cout, h, 1)
        ws2, bs2 = _init_conv(kg, cout, h, 1)
        w1s, b1s, w2s, b2s = [], [], [], []
        for _ in range(d):
            a, ab = _init_conv(kg, h, h, 1)
            w1s.append(a)
            b1s.append(ab)
            cw, cb = _init_conv(kg, h, h, 3)
            w2s.append(cw.reshape(9, h, h))
            b2s.append(cb)
        wm, bm = _init_conv(kg, 2 * h, cout, 1)
        params["stages"].append({
            "down": {"k": 3, "cin": cin, "cout": cout, "w": wd, "b": bd},
            "csp": {"hidden": h, "depth": d,
                    "ws1": ws1, "bs1": bs1, "ws2": ws2, "bs2": bs2,
                    "w1": jnp.stack(w1s), "b1": jnp.stack(b1s),
                    "w2": jnp.concatenate(w2s, axis=0), "b2": jnp.stack(b2s),
                    "wm1": wm[:h], "wm2": wm[h:], "bm": bm},
        })
    return params


# -----------------------------------------------------------------------------
if __name__ == "__main__":
    width, depth, in_channels = 8, 1, 3
    params = init_backbone(1, in_channels=in_channels, width=width, depth=depth)

    # deterministic NCHW input, like the PyTorch module expects
    x = jax.random.normal(jax.random.PRNGKey(0), (2, in_channels, 16, 16), jnp.float32)

    fwd = jax.jit(lambda inp: pallas_backbone(inp, params))
    outs = jax.block_until_ready(fwd(x))

    refs = jax.block_until_ready(jax.jit(lambda inp: ref_backbone(inp, params))(x))

    expected_shapes = [
        (2, width, 9, 9),
        (2, width * 2, 5, 5),
        (2, width * 4, 3, 3),
        (2, width * 8, 2, 2),
        (2, width * 16, 1, 1),
    ]
    for o, r, s in zip(outs, refs, expected_shapes):
        assert o.shape == s, (o.shape, s)
        np.testing.assert_allclose(np.asarray(o), np.asarray(r), rtol=5e-2, atol=5e-2)

    print("KERNEL_OK")
</pallas_src>

<mosaic_0001>
module attributes {stable_mosaic.version = 11 : i64} {
  func.func @_conv_silu_kernel(%arg0: i32, %arg1: memref<1x81x108xbf16, #tpu.memory_space<vmem>>, %arg2: memref<108x8xbf16, #tpu.memory_space<vmem>>, %arg3: memref<1x8xf32, #tpu.memory_space<vmem>>, %arg4: memref<1x81x8xbf16, #tpu.memory_space<vmem>>) attributes {dimension_semantics = [#tpu.dimension_semantics<parallel>], iteration_bounds = array<i64: 2>, scalar_prefetch = 0 : i64, scratch_operands = 0 : i64, tpu.core_type = #tpu.core_type<tc>, window_params = [{transform_indices = @transform_0, window_bounds = array<i64: 1, 81, 108>}, {pipeline_mode = #tpu.pipeline_mode<synchronous>, transform_indices = @transform_1, window_bounds = array<i64: 108, 8>}, {pipeline_mode = #tpu.pipeline_mode<synchronous>, transform_indices = @transform_2, window_bounds = array<i64: 1, 8>}, {transform_indices = @transform_3, window_bounds = array<i64: 1, 81, 8>}]} {
    %c0 = arith.constant 0 : index
    %c0_0 = arith.constant 0 : index
    %c0_1 = arith.constant 0 : index
    %0 = vector.load %arg1[%c0, %c0_0, %c0_1] : memref<1x81x108xbf16, #tpu.memory_space<vmem>>, vector<1x81x108xbf16>
    %1 = vector.shape_cast %0 : vector<1x81x108xbf16> to vector<81x108xbf16>
    %c0_2 = arith.constant 0 : index
    %c0_3 = arith.constant 0 : index
    %2 = vector.load %arg2[%c0_2, %c0_3] : memref<108x8xbf16, #tpu.memory_space<vmem>>, vector<108x8xbf16>
    %cst = arith.constant dense<0.000000e+00> : vector<81x8xf32>
    %3 = tpu.matmul %1, %2, %cst {dimension_numbers = #tpu.dot_dimension_numbers<[1], [0], [0], [1], [0, 0, 1, 1], [], []>} : vector<81x108xbf16>, vector<108x8xbf16>, vector<81x8xf32> -> vector<81x8xf32>
    %c0_4 = arith.constant 0 : index
    %c0_5 = arith.constant 0 : index
    %4 = vector.load %arg3[%c0_4, %c0_5] : memref<1x8xf32, #tpu.memory_space<vmem>>, vector<1x8xf32>
    %5 = vector.broadcast %4 : vector<1x8xf32> to vector<81x8xf32>
    %6 = arith.addf %3, %5 : vector<81x8xf32>
    %cst_6 = arith.constant 5.000000e-01 : f32
    %7 = vector.broadcast %cst_6 : f32 to vector<81x8xf32>
    %8 = arith.mulf %7, %6 : vector<81x8xf32>
    %cst_7 = arith.constant 5.000000e-01 : f32
    %9 = vector.broadcast %cst_7 : f32 to vector<81x8xf32>
    %10 = arith.mulf %9, %6 : vector<81x8xf32>
    %11 = math.tanh %10 : vector<81x8xf32>
    %cst_8 = arith.constant 1.000000e+00 : f32
    %12 = vector.broadcast %cst_8 : f32 to vector<81x8xf32>
    %13 = arith.addf %12, %11 : vector<81x8xf32>
    %14 = arith.mulf %8, %13 : vector<81x8xf32>
    %15 = arith.truncf %14 : vector<81x8xf32> to vector<81x8xbf16>
    %c0_9 = arith.constant 0 : index
    %c0_10 = arith.constant 0 : index
    %c0_11 = arith.constant 0 : index
    %16 = vector.load %arg4[%c0_9, %c0_10, %c0_11] : memref<1x81x8xbf16, #tpu.memory_space<vmem>>, vector<1x81x8xbf16>
    %17 = vector.shape_cast %16 : vector<1x81x8xbf16> to vector<81x8xbf16>
    %18 = vector.shape_cast %15 : vector<81x8xbf16> to vector<1x81x8xbf16>
    tpu.vector_store %arg4[%c0_9, %c0_10, %c0_11], %18 {strides = array<i32>} : memref<1x81x8xbf16, #tpu.memory_space<vmem>>, vector<1x81x8xbf16>,
    return
  }
  func.func @transform_0(%arg0: i32) -> (i32, i32, i32) {
    %c0_i32 = arith.constant 0 : i32
    %c0_i32_0 = arith.constant 0 : i32
    %c0_i32_1 = arith.constant 0 : i32
    return %arg0, %c0_i32, %c0_i32_0 : i32, i32, i32
  }
  func.func @transform_1(%arg0: i32) -> (i32, i32) {
    %c0_i32 = arith.constant 0 : i32
    %c0_i32_0 = arith.constant 0 : i32
    %c0_i32_1 = arith.constant 0 : i32
    return %c0_i32, %c0_i32_0 : i32, i32
  }
  func.func @transform_2(%arg0: i32) -> (i32, i32) {
    %c0_i32 = arith.constant 0 : i32
    %c0_i32_0 = arith.constant 0 : i32
    %c0_i32_1 = arith.constant 0 : i32
    return %c0_i32, %c0_i32_0 : i32, i32
  }
  func.func @transform_3(%arg0: i32) -> (i32, i32, i32) {
    %c0_i32 = arith.constant 0 : i32
    %c0_i32_0 = arith.constant 0 : i32
    %c0_i32_1 = arith.constant 0 : i32
    return %arg0, %c0_i32, %c0_i32_0 : i32, i32, i32
  }
}

module attributes {stable_mosaic.version = 11 : i64} {
  func.func @_csp_stage_kernel(%arg0: i32, %arg1: memref<1x25x72xbf16, #tpu.memory_space<vmem>>, %arg2: memref<2x25x1xbf16, #tpu.memory_space<vmem>>, %arg3: memref<72x16xbf16, #tpu.memory_space<vmem>>, %arg4: memref<1x16xf32, #tpu.memory_space<vmem>>, %arg5: memref<16x8xbf16, #tpu.memory_space<vmem>>, %arg6: memref<1x8xf32, #tpu.memory_space<vmem>>, %arg7: memref<16x8xbf16, #tpu.memory_space<vmem>>, %arg8: memref<1x8xf32, #tpu.memory_space<vmem>>, %arg9: memref<1x8x8xbf16, #tpu.memory_space<vmem>>, %arg10: memref<1x1x8xf32, #tpu.memory_space<vmem>>, %arg11: memref<9x8x8xbf16, #tpu.memory_space<vmem>>, %arg12: memref<1x1x8xf32, #tpu.memory_space<vmem>>, %arg13: memref<8x16xbf16, #tpu.memory_space<vmem>>, %arg14: memref<8x16xbf16, #tpu.memory_space<vmem>>, %arg15: memref<1x16xf32, #tpu.memory_space<vmem>>, %arg16: memref<1x25x16xbf16, #tpu.memory_space<vmem>>, %arg17: memref<40x8xbf16, #tpu.memory_space<vmem>>) attributes {dimension_semantics = [#tpu.dimension_semantics<parallel>], iteration_bounds = array<i64: 2>, scalar_prefetch = 0 : i64, scratch_operands = 1 : i64, tpu.core_type = #tpu.core_type<tc>, window_params = [{transform_indices = @transform_0, window_bounds = array<i64: 1, 25, 72>}, {pipeline_mode = #tpu.pipeline_mode<synchronous>, transform_indices = @transform_1, window_bounds = array<i64: 2, 25, 1>}, {pipeline_mode = #tpu.pipeline_mode<synchronous>, transform_indices = @transform_2, window_bounds = array<i64: 72, 16>}, {pipeline_mode = #tpu.pipeline_mode<synchronous>, transform_indices = @transform_3, window_bounds = array<i64: 1, 16>}, {pipeline_mode = #tpu.pipeline_mode<synchronous>, transform_indices = @transform_4, window_bounds = array<i64: 16, 8>}, {pipeline_mode = #tpu.pipeline_mode<synchronous>, transform_indices = @transform_5, window_bounds = array<i64: 1, 8>}, {pipeline_mode = #tpu.pipeline_mode<synchronous>, transform_indices = @transform_6, window_bounds = array<i64: 16, 8>}, {pipeline_mode = #tpu.pipeline_mode<synchronous>, transform_indices = @transform_7, window_bounds = array<i64: 1, 8>}, {pipeline_mode = #tpu.pipeline_mode<synchronous>, transform_indices = @transform_8, window_bounds = array<i64: 1, 8, 8>}, {pipeline_mode = #tpu.pipeline_mode<synchronous>, transform_indices = @transform_9, window_bounds = array<i64: 1, 1, 8>}, {pipeline_mode = #tpu.pipeline_mode<synchronous>, transform_indices = @transform_10, window_bounds = array<i64: 9, 8, 8>}, {pipeline_mode = #tpu.pipeline_mode<synchronous>, transform_indices = @transform_11, window_bounds = array<i64: 1, 1, 8>}, {pipeline_mode = #tpu.pipeline_mode<synchronous>, transform_indices = @transform_12, window_bounds = array<i64: 8, 16>}, {pipeline_mode = #tpu.pipeline_mode<synchronous>, transform_indices = @transform_13, window_bounds = array<i64: 8, 16>}, {pipeline_mode = #tpu.pipeline_mode<synchronous>, transform_indices = @transform_14, window_bounds = array<i64: 1, 16>}, {transform_indices = @transform_15, window_bounds = array<i64: 1, 25, 16>}]} {
    %c0 = arith.constant 0 : index
    %c0_0 = arith.constant 0 : index
    %c0_1 = arith.constant 0 : index
    %0 = vector.load %arg1[%c0, %c0_0, %c0_1] : memref<1x25x72xbf16, #tpu.memory_space<vmem>>, vector<1x25x72xbf16>
    %1 = vector.shape_cast %0 : vector<1x25x72xbf16> to vector<25x72xbf16>
    %c0_2 = arith.constant 0 : index
    %c0_3 = arith.constant 0 : index
    %2 = vector.load %arg3[%c0_2, %c0_3] : memref<72x16xbf16, #tpu.memory_space<vmem>>, vector<72x16xbf16>
    %cst = arith.constant dense<0.000000e+00> : vector<25x16xf32>
    %3 = tpu.matmul %1, %2, %cst {dimension_numbers = #tpu.dot_dimension_numbers<[1], [0], [0], [1], [0, 0, 1, 1], [], []>} : vector<25x72xbf16>, vector<72x16xbf16>, vector<25x16xf32> -> vector<25x16xf32>
    %c0_4 = arith.constant 0 : index
    %c0_5 = arith.constant 0 : index
    %4 = vector.load %arg4[%c0_4, %c0_5] : memref<1x16xf32, #tpu.memory_space<vmem>>, vector<1x16xf32>
    %5 = vector.broadcast %4 : vector<1x16xf32> to vector<25x16xf32>
    %6 = arith.addf %3, %5 : vector<25x16xf32>
    %cst_6 = arith.constant 5.000000e-01 : f32
    %7 = vector.broadcast %cst_6 : f32 to vector<25x16xf32>
    %8 = arith.mulf %7, %6 : vector<25x16xf32>
    %cst_7 = arith.constant 5.000000e-01 : f32
    %9 = vector.broadcast %cst_7 : f32 to vector<25x16xf32>
    %10 = arith.mulf %9, %6 : vector<25x16xf32>
    %11 = math.tanh %10 : vector<25x16xf32>
    %cst_8 = arith.constant 1.000000e+00 : f32
    %12 = vector.broadcast %cst_8 : f32 to vector<25x16xf32>
    %13 = arith.addf %12, %11 : vector<25x16xf32>
    %14 = arith.mulf %8, %13 : vector<25x16xf32>
    %15 = arith.truncf %14 : vector<25x16xf32> to vector<25x16xbf16>
    %c0_9 = arith.constant 0 : index
    %c0_10 = arith.constant 0 : index
    %16 = vector.load %arg5[%c0_9, %c0_10] : memref<16x8xbf16, #tpu.memory_space<vmem>>, vector<16x8xbf16>
    %cst_11 = arith.constant dense<0.000000e+00> : vector<25x8xf32>
    %17 = tpu.matmul %15, %16, %cst_11 {dimension_numbers = #tpu.dot_dimension_numbers<[1], [0], [0], [1], [0, 0, 1, 1], [], []>} : vector<25x16xbf16>, vector<16x8xbf16>, vector<25x8xf32> -> vector<25x8xf32>
    %c0_12 = arith.constant 0 : index
    %c0_13 = arith.constant 0 : index
    %18 = vector.load %arg6[%c0_12, %c0_13] : memref<1x8xf32, #tpu.memory_space<vmem>>, vector<1x8xf32>
    %19 = vector.broadcast %18 : vector<1x8xf32> to vector<25x8xf32>
    %20 = arith.addf %17, %19 : vector<25x8xf32>
    %cst_14 = arith.constant 5.000000e-01 : f32
    %21 = vector.broadcast %cst_14 : f32 to vector<25x8xf32>
    %22 = arith.mulf %21, %20 : vector<25x8xf32>
    %cst_15 = arith.constant 5.000000e-01 : f32
    %23 = vector.broadcast %cst_15 : f32 to vector<25x8xf32>
    %24 = arith.mulf %23, %20 : vector<25x8xf32>
    %25 = math.tanh %24 : vector<25x8xf32>
    %cst_16 = arith.constant 1.000000e+00 : f32
    %26 = vector.broadcast %cst_16 : f32 to vector<25x8xf32>
    %27 = arith.addf %26, %25 : vector<25x8xf32>
    %28 = arith.mulf %22, %27 : vector<25x8xf32>
    %c0_17 = arith.constant 0 : index
    %c0_18 = arith.constant 0 : index
    %29 = vector.load %arg7[%c0_17, %c0_18] : memref<16x8xbf16, #tpu.memory_space<vmem>>, vector<16x8xbf16>
    %cst_19 = arith.constant dense<0.000000e+00> : vector<25x8xf32>
    %30 = tpu.matmul %15, %29, %cst_19 {dimension_numbers = #tpu.dot_dimension_numbers<[1], [0], [0], [1], [0, 0, 1, 1], [], []>} : vector<25x16xbf16>, vector<16x8xbf16>, vector<25x8xf32> -> vector<25x8xf32>
    %c0_20 = arith.constant 0 : index
    %c0_21 = arith.constant 0 : index
    %31 = vector.load %arg8[%c0_20, %c0_21] : memref<1x8xf32, #tpu.memory_space<vmem>>, vector<1x8xf32>
    %32 = vector.broadcast %31 : vector<1x8xf32> to vector<25x8xf32>
    %33 = arith.addf %30, %32 : vector<25x8xf32>
    %cst_22 = arith.constant 5.000000e-01 : f32
    %34 = vector.broadcast %cst_22 : f32 to vector<25x8xf32>
    %35 = arith.mulf %34, %33 : vector<25x8xf32>
    %cst_23 = arith.constant 5.000000e-01 : f32
    %36 = vector.broadcast %cst_23 : f32 to vector<25x8xf32>
    %37 = arith.mulf %36, %33 : vector<25x8xf32>
    %38 = math.tanh %37 : vector<25x8xf32>
    %cst_24 = arith.constant 1.000000e+00 : f32
    %39 = vector.broadcast %cst_24 : f32 to vector<25x8xf32>
    %40 = arith.addf %39, %38 : vector<25x8xf32>
    %41 = arith.mulf %35, %40 : vector<25x8xf32>
    %cst_25 = arith.constant 0.000000e+00 : bf16
    %42 = vector.broadcast %cst_25 : bf16 to vector<8x8xbf16>
    %c0_26 = arith.constant 0 : index
    %c0_27 = arith.constant 0 : index
    %43 = vector.load %arg17[%c0_26, %c0_27] : memref<40x8xbf16, #tpu.memory_space<vmem>>, vector<8x8xbf16>
    tpu.vector_store %arg17[%c0_26, %c0_27], %42 {strides = array<i32>} : memref<40x8xbf16, #tpu.memory_space<vmem>>, vector<8x8xbf16>,
    %cst_28 = arith.constant 0.000000e+00 : bf16
    %44 = vector.broadcast %cst_28 : bf16 to vector<7x8xbf16>
    %c33 = arith.constant 33 : index
    %c0_29 = arith.constant 0 : index
    %45 = vector.load %arg17[%c33, %c0_29] : memref<40x8xbf16, #tpu.memory_space<vmem>>, vector<7x8xbf16>
    tpu.vector_store %arg17[%c33, %c0_29], %44 {strides = array<i32>} : memref<40x8xbf16, #tpu.memory_space<vmem>>, vector<7x8xbf16>,
    %c0_30 = arith.constant 0 : index
    %c0_31 = arith.constant 0 : index
    %c0_32 = arith.constant 0 : index
    %46 = vector.load %arg2[%c0_30, %c0_31, %c0_32] : memref<2x25x1xbf16, #tpu.memory_space<vmem>>, vector<1x25x1xbf16>
    %47 = vector.shape_cast %46 : vector<1x25x1xbf16> to vector<25x1xbf16>
    %c1 = arith.constant 1 : index
    %c0_33 = arith.constant 0 : index
    %c0_34 = arith.constant 0 : index
    %48 = vector.load %arg2[%c1, %c0_33, %c0_34] : memref<2x25x1xbf16, #tpu.memory_space<vmem>>, vector<1x25x1xbf16>
    %49 = vector.shape_cast %48 : vector<1x25x1xbf16> to vector<25x1xbf16>
    %50 = arith.truncf %28 : vector<25x8xf32> to vector<25x8xbf16>
    %c0_35 = arith.constant 0 : index
    %c0_36 = arith.constant 0 : index
    %c0_37 = arith.constant 0 : index
    %51 = vector.load %arg9[%c0_35, %c0_36, %c0_37] : memref<1x8x8xbf16, #tpu.memory_space<vmem>>, vector<1x8x8xbf16>
    %52 = vector.shape_cast %51 : vector<1x8x8xbf16> to vector<8x8xbf16>
    %cst_38 = arith.constant dense<0.000000e+00> : vector<25x8xf32>
    %53 = tpu.matmul %50, %52, %cst_38 {dimension_numbers = #tpu.dot_dimension_numbers<[1], [0], [0], [1], [0, 0, 1, 1], [], []>} : vector<25x8xbf16>, vector<8x8xbf16>, vector<25x8xf32> -> vector<25x8xf32>
    %c0_39 = arith.constant 0 : index
    %c0_40 = arith.constant 0 : index
    %c0_41 = arith.constant 0 : index
    %54 = vector.load %arg10[%c0_39, %c0_40, %c0_41] : memref<1x1x8xf32, #tpu.memory_space<vmem>>, vector<1x1x8xf32>
    %55 = vector.shape_cast %54 : vector<1x1x8xf32> to vector<1x8xf32>
    %56 = vector.broadcast %55 : vector<1x8xf32> to vector<25x8xf32>
    %57 = arith.addf %53, %56 : vector<25x8xf32>
    %cst_42 = arith.constant 5.000000e-01 : f32
    %58 = vector.broadcast %cst_42 : f32 to vector<25x8xf32>
    %59 = arith.mulf %58, %57 : vector<25x8xf32>
    %cst_43 = arith.constant 5.000000e-01 : f32
    %60 = vector.broadcast %cst_43 : f32 to vector<25x8xf32>
    %61 = arith.mulf %60, %57 : vector<25x8xf32>
    %62 = math.tanh %61 : vector<25x8xf32>
    %cst_44 = arith.constant 1.000000e+00 : f32
    %63 = vector.broadcast %cst_44 : f32 to vector<25x8xf32>
    %64 = arith.addf %63, %62 : vector<25x8xf32>
    %65 = arith.mulf %59, %64 : vector<25x8xf32>
    %66 = arith.truncf %65 : vector<25x8xf32> to vector<25x8xbf16>
    %c8 = arith.constant 8 : index
    %c0_45 = arith.constant 0 : index
    %67 = vector.load %arg17[%c8, %c0_45] : memref<40x8xbf16, #tpu.memory_space<vmem>>, vector<25x8xbf16>
    tpu.vector_store %arg17[%c8, %c0_45], %66 {strides = array<i32>} : memref<40x8xbf16, #tpu.memory_space<vmem>>, vector<25x8xbf16>,
    %cst_46 = arith.constant 0.000000e+00 : f32
    %68 = vector.broadcast %cst_46 : f32 to vector<25x8xf32>
    %c2 = arith.constant 2 : index
    %c0_47 = arith.constant 0 : index
    %69 = vector.load %arg17[%c2, %c0_47] : memref<40x8xbf16, #tpu.memory_space<vmem>>, vector<25x8xbf16>
    %70 = vector.broadcast %47 : vector<25x1xbf16> to vector<25x8xbf16>
    %71 = arith.mulf %69, %70 : vector<25x8xbf16>
    %c0_48 = arith.constant 0 : index
    %c0_49 = arith.constant 0 : index
    %c0_50 = arith.constant 0 : index
    %72 = vector.load %arg11[%c0_48, %c0_49, %c0_50] : memref<9x8x8xbf16, #tpu.memory_space<vmem>>, vector<1x8x8xbf16>
    %73 = vector.shape_cast %72 : vector<1x8x8xbf16> to vector<8x8xbf16>
    %cst_51 = arith.constant dense<0.000000e+00> : vector<25x8xf32>
    %74 = tpu.matmul %71, %73, %cst_51 {dimension_numbers = #tpu.dot_dimension_numbers<[1], [0], [0], [1], [0, 0, 1, 1], [], []>} : vector<25x8xbf16>, vector<8x8xbf16>, vector<25x8xf32> -> vector<25x8xf32>
    %75 = arith.addf %68, %74 : vector<25x8xf32>
    %c3 = arith.constant 3 : index
    %c0_52 = arith.constant 0 : index
    %76 = vector.load %arg17[%c3, %c0_52] : memref<40x8xbf16, #tpu.memory_space<vmem>>, vector<25x8xbf16>
    %c1_53 = arith.constant 1 : index
    %c0_54 = arith.constant 0 : index
    %c0_55 = arith.constant 0 : index
    %77 = vector.load %arg11[%c1_53, %c0_54, %c0_55] : memref<9x8x8xbf16, #tpu.memory_space<vmem>>, vector<1x8x8xbf16>
    %78 = vector.shape_cast %77 : vector<1x8x8xbf16> to vector<8x8xbf16>
    %cst_56 = arith.constant dense<0.000000e+00> : vector<25x8xf32>
    %79 = tpu.matmul %76, %78, %cst_56 {dimension_numbers = #tpu.dot_dimension_numbers<[1], [0], [0], [1], [0, 0, 1, 1], [], []>} : vector<25x8xbf16>, vector<8x8xbf16>, vector<25x8xf32> -> vector<25x8xf32>
    %80 = arith.addf %75, %79 : vector<25x8xf32>
    %c4 = arith.constant 4 : index
    %c0_57 = arith.constant 0 : index
    %81 = vector.load %arg17[%c4, %c0_57] : memref<40x8xbf16, #tpu.memory_space<vmem>>, vector<25x8xbf16>
    %82 = vector.broadcast %49 : vector<25x1xbf16> to vector<25x8xbf16>
    %83 = arith.mulf %81, %82 : vector<25x8xbf16>
    %c2_58 = arith.constant 2 : index
    %c0_59 = arith.constant 0 : index
    %c0_60 = arith.constant 0 : index
    %84 = vector.load %arg11[%c2_58, %c0_59, %c0_60] : memref<9x8x8xbf16, #tpu.memory_space<vmem>>, vector<1x8x8xbf16>
    %85 = vector.shape_cast %84 : vector<1x8x8xbf16> to vector<8x8xbf16>
    %cst_61 = arith.constant dense<0.000000e+00> : vector<25x8xf32>
    %86 = tpu.matmul %83, %85, %cst_61 {dimension_numbers = #tpu.dot_dimension_numbers<[1], [0], [0], [1], [0, 0, 1, 1], [], []>} : vector<25x8xbf16>, vector<8x8xbf16>, vector<25x8xf32> -> vector<25x8xf32>
    %87 = arith.addf %80, %86 : vector<25x8xf32>
    %c7 = arith.constant 7 : index
    %c0_62 = arith.constant 0 : index
    %88 = vector.load %arg17[%c7, %c0_62] : memref<40x8xbf16, #tpu.memory_space<vmem>>, vector<25x8xbf16>
    %89 = vector.broadcast %47 : vector<25x1xbf16> to vector<25x8xbf16>
    %90 = arith.mulf %88, %89 : vector<25x8xbf16>
    %c3_63 = arith.constant 3 : index
    %c0_64 = arith.constant 0 : index
    %c0_65 = arith.constant 0 : index
    %91 = vector.load %arg11[%c3_63, %c0_64, %c0_65] : memref<9x8x8xbf16, #tpu.memory_space<vmem>>, vector<1x8x8xbf16>
    %92 = vector.shape_cast %91 : vector<1x8x8xbf16> to vector<8x8xbf16>
    %cst_66 = arith.constant dense<0.000000e+00> : vector<25x8xf32>
    %93 = tpu.matmul %90, %92, %cst_66 {dimension_numbers = #tpu.dot_dimension_numbers<[1], [0], [0], [1], [0, 0, 1, 1], [], []>} : vector<25x8xbf16>, vector<8x8xbf16>, vector<25x8xf32> -> vector<25x8xf32>
    %94 = arith.addf %87, %93 : vector<25x8xf32>
    %c8_67 = arith.constant 8 : index
    %c0_68 = arith.constant 0 : index
    %95 = vector.load %arg17[%c8_67, %c0_68] : memref<40x8xbf16, #tpu.memory_space<vmem>>, vector<25x8xbf16>
    %c4_69 = arith.constant 4 : index
    %c0_70 = arith.constant 0 : index
    %c0_71 = arith.constant 0 : index
    %96 = vector.load %arg11[%c4_69, %c0_70, %c0_71] : memref<9x8x8xbf16, #tpu.memory_space<vmem>>, vector<1x8x8xbf16>
    %97 = vector.shape_cast %96 : vector<1x8x8xbf16> to vector<8x8xbf16>
    %cst_72 = arith.constant dense<0.000000e+00> : vector<25x8xf32>
    %98 = tpu.matmul %95, %97, %cst_72 {dimension_numbers = #tpu.dot_dimension_numbers<[1], [0], [0], [1], [0, 0, 1, 1], [], []>} : vector<25x8xbf16>, vector<8x8xbf16>, vector<25x8xf32> -> vector<25x8xf32>
    %99 = arith.addf %94, %98 : vector<25x8xf32>
    %c9 = arith.constant 9 : index
    %c0_73 = arith.constant 0 : index
    %100 = vector.load %arg17[%c9, %c0_73] : memref<40x8xbf16, #tpu.memory_space<vmem>>, vector<25x8xbf16>
    %101 = vector.broadcast %49 : vector<25x1xbf16> to vector<25x8xbf16>
    %102 = arith.mulf %100, %101 : vector<25x8xbf16>
    %c5 = arith.constant 5 : index
    %c0_74 = arith.constant 0 : index
    %c0_75 = arith.constant 0 : index
    %103 = vector.load %arg11[%c5, %c0_74, %c0_75] : memref<9x8x8xbf16, #tpu.memory_space<vmem>>, vector<1x8x8xbf16>
    %104 = vector.shape_cast %103 : vector<1x8x8xbf16> to vector<8x8xbf16>
    %cst_76 = arith.constant dense<0.000000e+00> : vector<25x8xf32>
    %105 = tpu.matmul %102, %104, %cst_76 {dimension_numbers = #tpu.dot_dimension_numbers<[1], [0], [0], [1], [0, 0, 1, 1], [], []>} : vector<25x8xbf16>, vector<8x8xbf16>, vector<25x8xf32> -> vector<25x8xf32>
    %106 = arith.addf %99, %105 : vector<25x8xf32>
    %c12 = arith.constant 12 : index
    %c0_77 = arith.constant 0 : index
    %107 = vector.load %arg17[%c12, %c0_77] : memref<40x8xbf16, #tpu.memory_space<vmem>>, vector<25x8xbf16>
    %108 = vector.broadcast %47 : vector<25x1xbf16> to vector<25x8xbf16>
    %109 = arith.mulf %107, %108 : vector<25x8xbf16>
    %c6 = arith.constant 6 : index
    %c0_78 = arith.constant 0 : index
    %c0_79 = arith.constant 0 : index
    %110 = vector.load %arg11[%c6, %c0_78, %c0_79] : memref<9x8x8xbf16, #tpu.memory_space<vmem>>, vector<1x8x8xbf16>
    %111 = vector.shape_cast %110 : vector<1x8x8xbf16> to vector<8x8xbf16>
    %cst_80 = arith.constant dense<0.000000e+00> : vector<25x8xf32>
    %112 = tpu.matmul %109, %111, %cst_80 {dimension_numbers = #tpu.dot_dimension_numbers<[1], [0], [0], [1], [0, 0, 1, 1], [], []>} : vector<25x8xbf16>, vector<8x8xbf16>, vector<25x8xf32> -> vector<25x8xf32>
    %113 = arith.addf %106, %112 : vector<25x8xf32>
    %c13 = arith.constant 13 : index
    %c0_81 = arith.constant 0 : index
    %114 = vector.load %arg17[%c13, %c0_81] : memref<40x8xbf16, #tpu.memory_space<vmem>>, vector<25x8xbf16>
    %c7_82 = arith.constant 7 : index
    %c0_83 = arith.constant 0 : index
    %c0_84 = arith.constant 0 : index
    %115 = vector.load %arg11[%c7_82, %c0_83, %c0_84] : memref<9x8x8xbf16, #tpu.memory_space<vmem>>, vector<1x8x8xbf16>
    %116 = vector.shape_cast %115 : vector<1x8x8xbf16> to vector<8x8xbf16>
    %cst_85 = arith.constant dense<0.000000e+00> : vector<25x8xf32>
    %117 = tpu.matmul %114, %116, %cst_85 {dimension_numbers = #tpu.dot_dimension_numbers<[1], [0], [0], [1], [0, 0, 1, 1], [], []>} : vector<25x8xbf16>, vector<8x8xbf16>, vector<25x8xf32> -> vector<25x8xf32>
    %118 = arith.addf %113, %117 : vector<25x8xf32>
    %c14 = arith.constant 14 : index
    %c0_86 = arith.constant 0 : index
    %119 = vector.load %arg17[%c14, %c0_86] : memref<40x8xbf16, #tpu.memory_space<vmem>>, vector<25x8xbf16>
    %120 = vector.broadcast %49 : vector<25x1xbf16> to vector<25x8xbf16>
    %121 = arith.mulf %119, %120 : vector<25x8xbf16>
    %c8_87 = arith.constant 8 : index
    %c0_88 = arith.constant 0 : index
    %c0_89 = arith.constant 0 : index
    %122 = vector.load %arg11[%c8_87, %c0_88, %c0_89] : memref<9x8x8xbf16, #tpu.memory_space<vmem>>, vector<1x8x8xbf16>
    %123 = vector.shape_cast %122 : vector<1x8x8xbf16> to vector<8x8xbf16>
    %cst_90 = arith.constant dense<0.000000e+00> : vector<25x8xf32>
    %124 = tpu.matmul %121, %123, %cst_90 {dimension_numbers = #tpu.dot_dimension_numbers<[1], [0], [0], [1], [0, 0, 1, 1], [], []>} : vector<25x8xbf16>, vector<8x8xbf16>, vector<25x8xf32> -> vector<25x8xf32>
    %125 = arith.addf %118, %124 : vector<25x8xf32>
    %c0_91 = arith.constant 0 : index
    %c0_92 = arith.constant 0 : index
    %c0_93 = arith.constant 0 : index
    %126 = vector.load %arg12[%c0_91, %c0_92, %c0_93] : memref<1x1x8xf32, #tpu.memory_space<vmem>>, vector<1x1x8xf32>
    %127 = vector.shape_cast %126 : vector<1x1x8xf32> to vector<1x8xf32>
    %128 = vector.broadcast %127 : vector<1x8xf32> to vector<25x8xf32>
    %129 = arith.addf %125, %128 : vector<25x8xf32>
    %cst_94 = arith.constant 5.000000e-01 : f32
    %130 = vector.broadcast %cst_94 : f32 to vector<25x8xf32>
    %131 = arith.mulf %130, %129 : vector<25x8xf32>
    %cst_95 = arith.constant 5.000000e-01 : f32
    %132 = vector.broadcast %cst_95 : f32 to vector<25x8xf32>
    %133 = arith.mulf %132, %129 : vector<25x8xf32>
    %134 = math.tanh %133 : vector<25x8xf32>
    %cst_96 = arith.constant 1.000000e+00 : f32
    %135 = vector.broadcast %cst_96 : f32 to vector<25x8xf32>
    %136 = arith.addf %135, %134 : vector<25x8xf32>
    %137 = arith.mulf %131, %136 : vector<25x8xf32>
    %138 = arith.addf %28, %137 : vector<25x8xf32>
    %139 = arith.truncf %138 : vector<25x8xf32> to vector<25x8xbf16>
    %c0_97 = arith.constant 0 : index
    %c0_98 = arith.constant 0 : index
    %140 = vector.load %arg13[%c0_97, %c0_98] : memref<8x16xbf16, #tpu.memory_space<vmem>>, vector<8x16xbf16>
    %cst_99 = arith.constant dense<0.000000e+00> : vector<25x16xf32>
    %141 = tpu.matmul %139, %140, %cst_99 {dimension_numbers = #tpu.dot_dimension_numbers<[1], [0], [0], [1], [0, 0, 1, 1], [], []>} : vector<25x8xbf16>, vector<8x16xbf16>, vector<25x16xf32> -> vector<25x16xf32>
    %142 = arith.truncf %41 : vector<25x8xf32> to vector<25x8xbf16>
    %c0_100 = arith.constant 0 : index
    %c0_101 = arith.constant 0 : index
    %143 = vector.load %arg14[%c0_100, %c0_101] : memref<8x16xbf16, #tpu.memory_space<vmem>>, vector<8x16xbf16>
    %cst_102 = arith.constant dense<0.000000e+00> : vector<25x16xf32>
    %144 = tpu.matmul %142, %143, %cst_102 {dimension_numbers = #tpu.dot_dimension_numbers<[1], [0], [0], [1], [0, 0, 1, 1], [], []>} : vector<25x8xbf16>, vector<8x16xbf16>, vector<25x16xf32> -> vector<25x16xf32>
    %145 = arith.addf %141, %144 : vector<25x16xf32>
    %c0_103 = arith.constant 0 : index
    %c0_104 = arith.constant 0 : index
    %146 = vector.load %arg15[%c0_103, %c0_104] : memref<1x16xf32, #tpu.memory_space<vmem>>, vector<1x16xf32>
    %147 = vector.broadcast %146 : vector<1x16xf32> to vector<25x16xf32>
    %148 = arith.addf %145, %147 : vector<25x16xf32>
    %cst_105 = arith.constant 5.000000e-01 : f32
    %149 = vector.broadcast %cst_105 : f32 to vector<25x16xf32>
    %150 = arith.mulf %149, %148 : vector<25x16xf32>
    %cst_106 = arith.constant 5.000000e-01 : f32
    %151 = vector.broadcast %cst_106 : f32 to vector<25x16xf32>
    %152 = arith.mulf %151, %148 : vector<25x16xf32>
    %153 = math.tanh %152 : vector<25x16xf32>
    %cst_107 = arith.constant 1.000000e+00 : f32
    %154 = vector.broadcast %cst_107 : f32 to vector<25x16xf32>
    %155 = arith.addf %154, %153 : vector<25x16xf32>
    %156 = arith.mulf %150, %155 : vector<25x16xf32>
    %157 = arith.truncf %156 : vector<25x16xf32> to vector<25x16xbf16>
    %c0_108 = arith.constant 0 : index
    %c0_109 = arith.constant 0 : index
    %c0_110 = arith.constant 0 : index
    %158 = vector.load %arg16[%c0_108, %c0_109, %c0_110] : memref<1x25x16xbf16, #tpu.memory_space<vmem>>, vector<1x25x16xbf16>
    %159 = vector.shape_cast %158 : vector<1x25x16xbf16> to vector<25x16xbf16>
    %160 = vector.shape_cast %157 : vector<25x16xbf16> to vector<1x25x16xbf16>
    tpu.vector_store %arg16[%c0_108, %c0_109, %c0_110], %160 {strides = array<i32>} : memref<1x25x16xbf16, #tpu.memory_space<vmem>>, vector<1x25x16xbf16>,
    return
  }
  func.func @transform_0(%arg0: i32) -> (i32, i32, i32) {
    %c0_i32 = arith.constant 0 : i32
    %c0_i32_0 = arith.constant 0 : i32
    %c0_i32_1 = arith.constant 0 : i32
    return %arg0, %c0_i32, %c0_i32_0 : i32, i32, i32
  }
  func.func @transform_1(%arg0: i32) -> (i32, i32, i32) {
    %c0_i32 = arith.constant 0 : i32
    %c0_i32_0 = arith.constant 0 : i32
    %c0_i32_1 = arith.constant 0 : i32
    %c0_i32_2 = arith.constant 0 : i32
    return %c0_i32, %c0_i32_0, %c0_i32_1 : i32, i32, i32
  }
  func.func @transform_2(%arg0: i32) -> (i32, i32) {
    %c0_i32 = arith.constant 0 : i32
    %c0_i32_0 = arith.constant 0 : i32
    %c0_i32_1 = arith.constant 0 : i32
    return %c0_i32, %c0_i32_0 : i32, i32
  }
  func.func @transform_3(%arg0: i32) -> (i32, i32) {
    %c0_i32 = arith.constant 0 : i32
    %c0_i32_0 = arith.constant 0 : i32
    %c0_i32_1 = arith.constant 0 : i32
    return %c0_i32, %c0_i32_0 : i32, i32
  }
  func.func @transform_4(%arg0: i32) -> (i32, i32) {
    %c0_i32 = arith.constant 0 : i32
    %c0_i32_0 = arith.constant 0 : i32
    %c0_i32_1 = arith.constant 0 : i32
    return %c0_i32, %c0_i32_0 : i32, i32
  }
  func.func @transform_5(%arg0: i32) -> (i32, i32) {
    %c0_i32 = arith.constant 0 : i32
    %c0_i32_0 = arith.constant 0 : i32
    %c0_i32_1 = arith.constant 0 : i32
    return %c0_i32, %c0_i32_0 : i32, i32
  }
  func.func @transform_6(%arg0: i32) -> (i32, i32) {
    %c0_i32 = arith.constant 0 : i32
    %c0_i32_0 = arith.constant 0 : i32
    %c0_i32_1 = arith.constant 0 : i32
    return %c0_i32, %c0_i32_0 : i32, i32
  }
  func.func @transform_7(%arg0: i32) -> (i32, i32) {
    %c0_i32 = arith.constant 0 : i32
    %c0_i32_0 = arith.constant 0 : i32
    %c0_i32_1 = arith.constant 0 : i32
    return %c0_i32, %c0_i32_0 : i32, i32
  }
  func.func @transform_8(%arg0: i32) -> (i32, i32, i32) {
    %c0_i32 = arith.constant 0 : i32
    %c0_i32_0 = arith.constant 0 : i32
    %c0_i32_1 = arith.constant 0 : i32
    %c0_i32_2 = arith.constant 0 : i32
    return %c0_i32, %c0_i32_0, %c0_i32_1 : i32, i32, i32
  }
  func.func @transform_9(%arg0: i32) -> (i32, i32, i32) {
    %c0_i32 = arith.constant 0 : i32
    %c0_i32_0 = arith.constant 0 : i32
    %c0_i32_1 = arith.constant 0 : i32
    %c0_i32_2 = arith.constant 0 : i32
    return %c0_i32, %c0_i32_0, %c0_i32_1 : i32, i32, i32
  }
  func.func @transform_10(%arg0: i32) -> (i32, i32, i32) {
    %c0_i32 = arith.constant 0 : i32
    %c0_i32_0 = arith.constant 0 : i32
    %c0_i32_1 = arith.constant 0 : i32
    %c0_i32_2 = arith.constant 0 : i32
    return %c0_i32, %c0_i32_0, %c0_i32_1 : i32, i32, i32
  }
  func.func @transform_11(%arg0: i32) -> (i32, i32, i32) {
    %c0_i32 = arith.constant 0 : i32
    %c0_i32_0 = arith.constant 0 : i32
    %c0_i32_1 = arith.constant 0 : i32
    %c0_i32_2 = arith.constant 0 : i32
    return %c0_i32, %c0_i32_0, %c0_i32_1 : i32, i32, i32
  }
  func.func @transform_12(%arg0: i32) -> (i32, i32) {
    %c0_i32 = arith.constant 0 : i32
    %c0_i32_0 = arith.constant 0 : i32
    %c0_i32_1 = arith.constant 0 : i32
    return %c0_i32, %c0_i32_0 : i32, i32
  }
  func.func @transform_13(%arg0: i32) -> (i32, i32) {
    %c0_i32 = arith.constant 0 : i32
    %c0_i32_0 = arith.constant 0 : i32
    %c0_i32_1 = arith.constant 0 : i32
    return %c0_i32, %c0_i32_0 : i32, i32
  }
  func.func @transform_14(%arg0: i32) -> (i32, i32) {
    %c0_i32 = arith.constant 0 : i32
    %c0_i32_0 = arith.constant 0 : i32
    %c0_i32_1 = arith.constant 0 : i32
    return %c0_i32, %c0_i32_0 : i32, i32
  }
  func.func @transform_15(%arg0: i32) -> (i32, i32, i32) {
    %c0_i32 = arith.constant 0 : i32
    %c0_i32_0 = arith.constant 0 : i32
    %c0_i32_1 = arith.constant 0 : i32
    return %arg0, %c0_i32, %c0_i32_0 : i32, i32, i32
  }
}

module attributes {stable_mosaic.version = 11 : i64} {
  func.func @_csp_stage_kernel(%arg0: i32, %arg1: memref<1x9x144xbf16, #tpu.memory_space<vmem>>, %arg2: memref<2x9x1xbf16, #tpu.memory_space<vmem>>, %arg3: memref<144x32xbf16, #tpu.memory_space<vmem>>, %arg4: memref<1x32xf32, #tpu.memory_space<vmem>>, %arg5: memref<32x16xbf16, #tpu.memory_space<vmem>>, %arg6: memref<1x16xf32, #tpu.memory_space<vmem>>, %arg7: memref<32x16xbf16, #tpu.memory_space<vmem>>, %arg8: memref<1x16xf32, #tpu.memory_space<vmem>>, %arg9: memref<2x16x16xbf16, #tpu.memory_space<vmem>>, %arg10: memref<2x1x16xf32, #tpu.memory_space<vmem>>, %arg11: memref<18x16x16xbf16, #tpu.memory_space<vmem>>, %arg12: memref<2x1x16xf32, #tpu.memory_space<vmem>>, %arg13: memref<16x32xbf16, #tpu.memory_space<vmem>>, %arg14: memref<16x32xbf16, #tpu.memory_space<vmem>>, %arg15: memref<1x32xf32, #tpu.memory_space<vmem>>, %arg16: memref<1x9x32xbf16, #tpu.memory_space<vmem>>, %arg17: memref<24x16xbf16, #tpu.memory_space<vmem>>) attributes {dimension_semantics = [#tpu.dimension_semantics<parallel>], iteration_bounds = array<i64: 2>, scalar_prefetch = 0 : i64, scratch_operands = 1 : i64, tpu.core_type = #tpu.core_type<tc>, window_params = [{transform_indices = @transform_0, window_bounds = array<i64: 1, 9, 144>}, {pipeline_mode = #tpu.pipeline_mode<synchronous>, transform_indices = @transform_1, window_bounds = array<i64: 2, 9, 1>}, {pipeline_mode = #tpu.pipeline_mode<synchronous>, transform_indices = @transform_2, window_bounds = array<i64: 144, 32>}, {pipeline_mode = #tpu.pipeline_mode<synchronous>, transform_indices = @transform_3, window_bounds = array<i64: 1, 32>}, {pipeline_mode = #tpu.pipeline_mode<synchronous>, transform_indices = @transform_4, window_bounds = array<i64: 32, 16>}, {pipeline_mode = #tpu.pipeline_mode<synchronous>, transform_indices = @transform_5, window_bounds = array<i64: 1, 16>}, {pipeline_mode = #tpu.pipeline_mode<synchronous>, transform_indices = @transform_6, window_bounds = array<i64: 32, 16>}, {pipeline_mode = #tpu.pipeline_mode<synchronous>, transform_indices = @transform_7, window_bounds = array<i64: 1, 16>}, {pipeline_mode = #tpu.pipeline_mode<synchronous>, transform_indices = @transform_8, window_bounds = array<i64: 2, 16, 16>}, {pipeline_mode = #tpu.pipeline_mode<synchronous>, transform_indices = @transform_9, window_bounds = array<i64: 2, 1, 16>}, {pipeline_mode = #tpu.pipeline_mode<synchronous>, transform_indices = @transform_10, window_bounds = array<i64: 18, 16, 16>}, {pipeline_mode = #tpu.pipeline_mode<synchronous>, transform_indices = @transform_11, window_bounds = array<i64: 2, 1, 16>}, {pipeline_mode = #tpu.pipeline_mode<synchronous>, transform_indices = @transform_12, window_bounds = array<i64: 16, 32>}, {pipeline_mode = #tpu.pipeline_mode<synchronous>, transform_indices = @transform_13, window_bounds = array<i64: 16, 32>}, {pipeline_mode = #tpu.pipeline_mode<synchronous>, transform_indices = @transform_14, window_bounds = array<i64: 1, 32>}, {transform_indices = @transform_15, window_bounds = array<i64: 1, 9, 32>}]} {
    %c0 = arith.constant 0 : index
    %c0_0 = arith.constant 0 : index
    %c0_1 = arith.constant 0 : index
    %0 = vector.load %arg1[%c0, %c0_0, %c0_1] : memref<1x9x144xbf16, #tpu.memory_space<vmem>>, vector<1x9x144xbf16>
    %1 = vector.shape_cast %0 : vector<1x9x144xbf16> to vector<9x144xbf16>
    %c0_2 = arith.constant 0 : index
    %c0_3 = arith.constant 0 : index
    %2 = vector.load %arg3[%c0_2, %c0_3] : memref<144x32xbf16, #tpu.memory_space<vmem>>, vector<144x32xbf16>
    %cst = arith.constant dense<0.000000e+00> : vector<9x32xf32>
    %3 = tpu.matmul %1, %2, %cst {dimension_numbers = #tpu.dot_dimension_numbers<[1], [0], [0], [1], [0, 0, 1, 1], [], []>} : vector<9x144xbf16>, vector<144x32xbf16>, vector<9x32xf32> -> vector<9x32xf32>
    %c0_4 = arith.constant 0 : index
    %c0_5 = arith.constant 0 : index
    %4 = vector.load %arg4[%c0_4, %c0_5] : memref<1x32xf32, #tpu.memory_space<vmem>>, vector<1x32xf32>
    %5 = vector.broadcast %4 : vector<1x32xf32> to vector<9x32xf32>
    %6 = arith.addf %3, %5 : vector<9x32xf32>
    %cst_6 = arith.constant 5.000000e-01 : f32
    %7 = vector.broadcast %cst_6 : f32 to vector<9x32xf32>
    %8 = arith.mulf %7, %6 : vector<9x32xf32>
    %cst_7 = arith.constant 5.000000e-01 : f32
    %9 = vector.broadcast %cst_7 : f32 to vector<9x32xf32>
    %10 = arith.mulf %9, %6 : vector<9x32xf32>
    %11 = math.tanh %10 : vector<9x32xf32>
    %cst_8 = arith.constant 1.000000e+00 : f32
    %12 = vector.broadcast %cst_8 : f32 to vector<9x32xf32>
    %13 = arith.addf %12, %11 : vector<9x32xf32>
    %14 = arith.mulf %8, %13 : vector<9x32xf32>
    %15 = arith.truncf %14 : vector<9x32xf32> to vector<9x32xbf16>
    %c0_9 = arith.constant 0 : index
    %c0_10 = arith.constant 0 : index
    %16 = vector.load %arg5[%c0_9, %c0_10] : memref<32x16xbf16, #tpu.memory_space<vmem>>, vector<32x16xbf16>
    %cst_11 = arith.constant dense<0.000000e+00> : vector<9x16xf32>
    %17 = tpu.matmul %15, %16, %cst_11 {dimension_numbers = #tpu.dot_dimension_numbers<[1], [0], [0], [1], [0, 0, 1, 1], [], []>} : vector<9x32xbf16>, vector<32x16xbf16>, vector<9x16xf32> -> vector<9x16xf32>
    %c0_12 = arith.constant 0 : index
    %c0_13 = arith.constant 0 : index
    %18 = vector.load %arg6[%c0_12, %c0_13] : memref<1x16xf32, #tpu.memory_space<vmem>>, vector<1x16xf32>
    %19 = vector.broadcast %18 : vector<1x16xf32> to vector<9x16xf32>
    %20 = arith.addf %17, %19 : vector<9x16xf32>
    %cst_14 = arith.constant 5.000000e-01 : f32
    %21 = vector.broadcast %cst_14 : f32 to vector<9x16xf32>
    %22 = arith.mulf %21, %20 : vector<9x16xf32>
    %cst_15 = arith.constant 5.000000e-01 : f32
    %23 = vector.broadcast %cst_15 : f32 to vector<9x16xf32>
    %24 = arith.mulf %23, %20 : vector<9x16xf32>
    %25 = math.tanh %24 : vector<9x16xf32>
    %cst_16 = arith.constant 1.000000e+00 : f32
    %26 = vector.broadcast %cst_16 : f32 to vector<9x16xf32>
    %27 = arith.addf %26, %25 : vector<9x16xf32>
    %28 = arith.mulf %22, %27 : vector<9x16xf32>
    %c0_17 = arith.constant 0 : index
    %c0_18 = arith.constant 0 : index
    %29 = vector.load %arg7[%c0_17, %c0_18] : memref<32x16xbf16, #tpu.memory_space<vmem>>, vector<32x16xbf16>
    %cst_19 = arith.constant dense<0.000000e+00> : vector<9x16xf32>
    %30 = tpu.matmul %15, %29, %cst_19 {dimension_numbers = #tpu.dot_dimension_numbers<[1], [0], [0], [1], [0, 0, 1, 1], [], []>} : vector<9x32xbf16>, vector<32x16xbf16>, vector<9x16xf32> -> vector<9x16xf32>
    %c0_20 = arith.constant 0 : index
    %c0_21 = arith.constant 0 : index
    %31 = vector.load %arg8[%c0_20, %c0_21] : memref<1x16xf32, #tpu.memory_space<vmem>>, vector<1x16xf32>
    %32 = vector.broadcast %31 : vector<1x16xf32> to vector<9x16xf32>
    %33 = arith.addf %30, %32 : vector<9x16xf32>
    %cst_22 = arith.constant 5.000000e-01 : f32
    %34 = vector.broadcast %cst_22 : f32 to vector<9x16xf32>
    %35 = arith.mulf %34, %33 : vector<9x16xf32>
    %cst_23 = arith.constant 5.000000e-01 : f32
    %36 = vector.broadcast %cst_23 : f32 to vector<9x16xf32>
    %37 = arith.mulf %36, %33 : vector<9x16xf32>
    %38 = math.tanh %37 : vector<9x16xf32>
    %cst_24 = arith.constant 1.000000e+00 : f32
    %39 = vector.broadcast %cst_24 : f32 to vector<9x16xf32>
    %40 = arith.addf %39, %38 : vector<9x16xf32>
    %41 = arith.mulf %35, %40 : vector<9x16xf32>
    %cst_25 = arith.constant 0.000000e+00 : bf16
    %42 = vector.broadcast %cst_25 : bf16 to vector<8x16xbf16>
    %c0_26 = arith.constant 0 : index
    %c0_27 = arith.constant 0 : index
    %43 = vector.load %arg17[%c0_26, %c0_27] : memref<24x16xbf16, #tpu.memory_space<vmem>>, vector<8x16xbf16>
    tpu.vector_store %arg17[%c0_26, %c0_27], %42 {strides = array<i32>} : memref<24x16xbf16, #tpu.memory_space<vmem>>, vector<8x16xbf16>,
    %cst_28 = arith.constant 0.000000e+00 : bf16
    %44 = vector.broadcast %cst_28 : bf16 to vector<7x16xbf16>
    %c17 = arith.constant 17 : index
    %c0_29 = arith.constant 0 : index
    %45 = vector.load %arg17[%c17, %c0_29] : memref<24x16xbf16, #tpu.memory_space<vmem>>, vector<7x16xbf16>
    tpu.vector_store %arg17[%c17, %c0_29], %44 {strides = array<i32>} : memref<24x16xbf16, #tpu.memory_space<vmem>>, vector<7x16xbf16>,
    %c0_30 = arith.constant 0 : index
    %c0_31 = arith.constant 0 : index
    %c0_32 = arith.constant 0 : index
    %46 = vector.load %arg2[%c0_30, %c0_31, %c0_32] : memref<2x9x1xbf16, #tpu.memory_space<vmem>>, vector<1x9x1xbf16>
    %47 = vector.shape_cast %46 : vector<1x9x1xbf16> to vector<9x1xbf16>
    %c1 = arith.constant 1 : index
    %c0_33 = arith.constant 0 : index
    %c0_34 = arith.constant 0 : index
    %48 = vector.load %arg2[%c1, %c0_33, %c0_34] : memref<2x9x1xbf16, #tpu.memory_space<vmem>>, vector<1x9x1xbf16>
    %49 = vector.shape_cast %48 : vector<1x9x1xbf16> to vector<9x1xbf16>
    %50 = arith.truncf %28 : vector<9x16xf32> to vector<9x16xbf16>
    %c0_35 = arith.constant 0 : index
    %c0_36 = arith.constant 0 : index
    %c0_37 = arith.constant 0 : index
    %51 = vector.load %arg9[%c0_35, %c0_36, %c0_37] : memref<2x16x16xbf16, #tpu.memory_space<vmem>>, vector<1x16x16xbf16>
    %52 = vector.shape_cast %51 : vector<1x16x16xbf16> to vector<16x16xbf16>
    %cst_38 = arith.constant dense<0.000000e+00> : vector<9x16xf32>
    %53 = tpu.matmul %50, %52, %cst_38 {dimension_numbers = #tpu.dot_dimension_numbers<[1], [0], [0], [1], [0, 0, 1, 1], [], []>} : vector<9x16xbf16>, vector<16x16xbf16>, vector<9x16xf32> -> vector<9x16xf32>
    %c0_39 = arith.constant 0 : index
    %c0_40 = arith.constant 0 : index
    %c0_41 = arith.constant 0 : index
    %54 = vector.load %arg10[%c0_39, %c0_40, %c0_41] : memref<2x1x16xf32, #tpu.memory_space<vmem>>, vector<1x1x16xf32>
    %55 = vector.shape_cast %54 : vector<1x1x16xf32> to vector<1x16xf32>
    %56 = vector.broadcast %55 : vector<1x16xf32> to vector<9x16xf32>
    %57 = arith.addf %53, %56 : vector<9x16xf32>
    %cst_42 = arith.constant 5.000000e-01 : f32
    %58 = vector.broadcast %cst_42 : f32 to vector<9x16xf32>
    %59 = arith.mulf %58, %57 : vector<9x16xf32>
    %cst_43 = arith.constant 5.000000e-01 : f32
    %60 = vector.broadcast %cst_43 : f32 to vector<9x16xf32>
    %61 = arith.mulf %60, %57 : vector<9x16xf32>
    %62 = math.tanh %61 : vector<9x16xf32>
    %cst_44 = arith.constant 1.000000e+00 : f32
    %63 = vector.broadcast %cst_44 : f32 to vector<9x16xf32>
    %64 = arith.addf %63, %62 : vector<9x16xf32>
    %65 = arith.mulf %59, %64 : vector<9x16xf32>
    %66 = arith.truncf %65 : vector<9x16xf32> to vector<9x16xbf16>
    %c8 = arith.constant 8 : index
    %c0_45 = arith.constant 0 : index
    %67 = vector.load %arg17[%c8, %c0_45] : memref<24x16xbf16, #tpu.memory_space<vmem>>, vector<9x16xbf16>
    tpu.vector_store %arg17[%c8, %c0_45], %66 {strides = array<i32>} : memref<24x16xbf16, #tpu.memory_space<vmem>>, vector<9x16xbf16>,
    %cst_46 = arith.constant 0.000000e+00 : f32
    %68 = vector.broadcast %cst_46 : f32 to vector<9x16xf32>
    %c4 = arith.constant 4 : index
    %c0_47 = arith.constant 0 : index
    %69 = vector.load %arg17[%c4, %c0_47] : memref<24x16xbf16, #tpu.memory_space<vmem>>, vector<9x16xbf16>
    %70 = vector.broadcast %47 : vector<9x1xbf16> to vector<9x16xbf16>
    %71 = arith.mulf %69, %70 : vector<9x16xbf16>
    %c0_48 = arith.constant 0 : index
    %c0_49 = arith.constant 0 : index
    %c0_50 = arith.constant 0 : index
    %72 = vector.load %arg11[%c0_48, %c0_49, %c0_50] : memref<18x16x16xbf16, #tpu.memory_space<vmem>>, vector<1x16x16xbf16>
    %73 = vector.shape_cast %72 : vector<1x16x16xbf16> to vector<16x16xbf16>
    %cst_51 = arith.constant dense<0.000000e+00> : vector<9x16xf32>
    %74 = tpu.matmul %71, %73, %cst_51 {dimension_numbers = #tpu.dot_dimension_numbers<[1], [0], [0], [1], [0, 0, 1, 1], [], []>} : vector<9x16xbf16>, vector<16x16xbf16>, vector<9x16xf32> -> vector<9x16xf32>
    %75 = arith.addf %68, %74 : vector<9x16xf32>
    %c5 = arith.constant 5 : index
    %c0_52 = arith.constant 0 : index
    %76 = vector.load %arg17[%c5, %c0_52] : memref<24x16xbf16, #tpu.memory_space<vmem>>, vector<9x16xbf16>
    %c1_53 = arith.constant 1 : index
    %c0_54 = arith.constant 0 : index
    %c0_55 = arith.constant 0 : index
    %77 = vector.load %arg11[%c1_53, %c0_54, %c0_55] : memref<18x16x16xbf16, #tpu.memory_space<vmem>>, vector<1x16x16xbf16>
    %78 = vector.shape_cast %77 : vector<1x16x16xbf16> to vector<16x16xbf16>
    %cst_56 = arith.constant dense<0.000000e+00> : vector<9x16xf32>
    %79 = tpu.matmul %76, %78, %cst_56 {dimension_numbers = #tpu.dot_dimension_numbers<[1], [0], [0], [1], [0, 0, 1, 1], [], []>} : vector<9x16xbf16>, vector<16x16xbf16>, vector<9x16xf32> -> vector<9x16xf32>
    %80 = arith.addf %75, %79 : vector<9x16xf32>
    %c6 = arith.constant 6 : index
    %c0_57 = arith.constant 0 : index
    %81 = vector.load %arg17[%c6, %c0_57] : memref<24x16xbf16, #tpu.memory_space<vmem>>, vector<9x16xbf16>
    %82 = vector.broadcast %49 : vector<9x1xbf16> to vector<9x16xbf16>
    %83 = arith.mulf %81, %82 : vector<9x16xbf16>
    %c2 = arith.constant 2 : index
    %c0_58 = arith.constant 0 : index
    %c0_59 = arith.constant 0 : index
    %84 = vector.load %arg11[%c2, %c0_58, %c0_59] : memref<18x16x16xbf16, #tpu.memory_space<vmem>>, vector<1x16x16xbf16>
    %85 = vector.shape_cast %84 : vector<1x16x16xbf16> to vector<16x16xbf16>
    %cst_60 = arith.constant dense<0.000000e+00> : vector<9x16xf32>
    %86 = tpu.matmul %83, %85, %cst_60 {dimension_numbers = #tpu.dot_dimension_numbers<[1], [0], [0], [1], [0, 0, 1, 1], [], []>} : vector<9x16xbf16>, vector<16x16xbf16>, vector<9x16xf32> -> vector<9x16xf32>
    %87 = arith.addf %80, %86 : vector<9x16xf32>
    %c7 = arith.constant 7 : index
    %c0_61 = arith.constant 0 : index
    %88 = vector.load %arg17[%c7, %c0_61] : memref<24x16xbf16, #tpu.memory_space<vmem>>, vector<9x16xbf16>
    %89 = vector.broadcast %47 : vector<9x1xbf16> to vector<9x16xbf16>
    %90 = arith.mulf %88, %89 : vector<9x16xbf16>
    %c3 = arith.constant 3 : index
    %c0_62 = arith.constant 0 : index
    %c0_63 = arith.constant 0 : index
    %91 = vector.load %arg11[%c3, %c0_62, %c0_63] : memref<18x16x16xbf16, #tpu.memory_space<vmem>>, vector<1x16x16xbf16>
    %92 = vector.shape_cast %91 : vector<1x16x16xbf16> to vector<16x16xbf16>
    %cst_64 = arith.constant dense<0.000000e+00> : vector<9x16xf32>
    %93 = tpu.matmul %90, %92, %cst_64 {dimension_numbers = #tpu.dot_dimension_numbers<[1], [0], [0], [1], [0, 0, 1, 1], [], []>} : vector<9x16xbf16>, vector<16x16xbf16>, vector<9x16xf32> -> vector<9x16xf32>
    %94 = arith.addf %87, %93 : vector<9x16xf32>
    %c8_65 = arith.constant 8 : index
    %c0_66 = arith.constant 0 : index
    %95 = vector.load %arg17[%c8_65, %c0_66] : memref<24x16xbf16, #tpu.memory_space<vmem>>, vector<9x16xbf16>
    %c4_67 = arith.constant 4 : index
    %c0_68 = arith.constant 0 : index
    %c0_69 = arith.constant 0 : index
    %96 = vector.load %arg11[%c4_67, %c0_68, %c0_69] : memref<18x16x16xbf16, #tpu.memory_space<vmem>>, vector<1x16x16xbf16>
    %97 = vector.shape_cast %96 : vector<1x16x16xbf16> to vector<16x16xbf16>
    %cst_70 = arith.constant dense<0.000000e+00> : vector<9x16xf32>
    %98 = tpu.matmul %95, %97, %cst_70 {dimension_numbers = #tpu.dot_dimension_numbers<[1], [0], [0], [1], [0, 0, 1, 1], [], []>} : vector<9x16xbf16>, vector<16x16xbf16>, vector<9x16xf32> -> vector<9x16xf32>
    %99 = arith.addf %94, %98 : vector<9x16xf32>
    %c9 = arith.constant 9 : index
    %c0_71 = arith.constant 0 : index
    %100 = vector.load %arg17[%c9, %c0_71] : memref<24x16xbf16, #tpu.memory_space<vmem>>, vector<9x16xbf16>
    %101 = vector.broadcast %49 : vector<9x1xbf16> to vector<9x16xbf16>
    %102 = arith.mulf %100, %101 : vector<9x16xbf16>
    %c5_72 = arith.constant 5 : index
    %c0_73 = arith.constant 0 : index
    %c0_74 = arith.constant 0 : index
    %103 = vector.load %arg11[%c5_72, %c0_73, %c0_74] : memref<18x16x16xbf16, #tpu.memory_space<vmem>>, vector<1x16x16xbf16>
    %104 = vector.shape_cast %103 : vector<1x16x16xbf16> to vector<16x16xbf16>
    %cst_75 = arith.constant dense<0.000000e+00> : vector<9x16xf32>
    %105 = tpu.matmul %102, %104, %cst_75 {dimension_numbers = #tpu.dot_dimension_numbers<[1], [0], [0], [1], [0, 0, 1, 1], [], []>} : vector<9x16xbf16>, vector<16x16xbf16>, vector<9x16xf32> -> vector<9x16xf32>
    %106 = arith.addf %99, %105 : vector<9x16xf32>
    %c10 = arith.constant 10 : index
    %c0_76 = arith.constant 0 : index
    %107 = vector.load %arg17[%c10, %c0_76] : memref<24x16xbf16, #tpu.memory_space<vmem>>, vector<9x16xbf16>
    %108 = vector.broadcast %47 : vector<9x1xbf16> to vector<9x16xbf16>
    %109 = arith.mulf %107, %108 : vector<9x16xbf16>
    %c6_77 = arith.constant 6 : index
    %c0_78 = arith.constant 0 : index
    %c0_79 = arith.constant 0 : index
    %110 = vector.load %arg11[%c6_77, %c0_78, %c0_79] : memref<18x16x16xbf16, #tpu.memory_space<vmem>>, vector<1x16x16xbf16>
    %111 = vector.shape_cast %110 : vector<1x16x16xbf16> to vector<16x16xbf16>
    %cst_80 = arith.constant dense<0.000000e+00> : vector<9x16xf32>
    %112 = tpu.matmul %109, %111, %cst_80 {dimension_numbers = #tpu.dot_dimension_numbers<[1], [0], [0], [1], [0, 0, 1, 1], [], []>} : vector<9x16xbf16>, vector<16x16xbf16>, vector<9x16xf32> -> vector<9x16xf32>
    %113 = arith.addf %106, %112 : vector<9x16xf32>
    %c11 = arith.constant 11 : index
    %c0_81 = arith.constant 0 : index
    %114 = vector.load %arg17[%c11, %c0_81] : memref<24x16xbf16, #tpu.memory_space<vmem>>, vector<9x16xbf16>
    %c7_82 = arith.constant 7 : index
    %c0_83 = arith.constant 0 : index
    %c0_84 = arith.constant 0 : index
    %115 = vector.load %arg11[%c7_82, %c0_83, %c0_84] : memref<18x16x16xbf16, #tpu.memory_space<vmem>>, vector<1x16x16xbf16>
    %116 = vector.shape_cast %115 : vector<1x16x16xbf16> to vector<16x16xbf16>
    %cst_85 = arith.constant dense<0.000000e+00> : vector<9x16xf32>
    %117 = tpu.matmul %114, %116, %cst_85 {dimension_numbers = #tpu.dot_dimension_numbers<[1], [0], [0], [1], [0, 0, 1, 1], [], []>} : vector<9x16xbf16>, vector<16x16xbf16>, vector<9x16xf32> -> vector<9x16xf32>
    %118 = arith.addf %113, %117 : vector<9x16xf32>
    %c12 = arith.constant 12 : index
    %c0_86 = arith.constant 0 : index
    %119 = vector.load %arg17[%c12, %c0_86] : memref<24x16xbf16, #tpu.memory_space<vmem>>, vector<9x16xbf16>
    %120 = vector.broadcast %49 : vector<9x1xbf16> to vector<9x16xbf16>
    %121 = arith.mulf %119, %120 : vector<9x16xbf16>
    %c8_87 = arith.constant 8 : index
    %c0_88 = arith.constant 0 : index
    %c0_89 = arith.constant 0 : index
    %122 = vector.load %arg11[%c8_87, %c0_88, %c0_89] : memref<18x16x16xbf16, #tpu.memory_space<vmem>>, vector<1x16x16xbf16>
    %123 = vector.shape_cast %122 : vector<1x16x16xbf16> to vector<16x16xbf16>
    %cst_90 = arith.constant dense<0.000000e+00> : vector<9x16xf32>
    %124 = tpu.matmul %121, %123, %cst_90 {dimension_numbers = #tpu.dot_dimension_numbers<[1], [0], [0], [1], [0, 0, 1, 1], [], []>} : vector<9x16xbf16>, vector<16x16xbf16>, vector<9x16xf32> -> vector<9x16xf32>
    %125 = arith.addf %118, %124 : vector<9x16xf32>
    %c0_91 = arith.constant 0 : index
    %c0_92 = arith.constant 0 : index
    %c0_93 = arith.constant 0 : index
    %126 = vector.load %arg12[%c0_91, %c0_92, %c0_93] : memref<2x1x16xf32, #tpu.memory_space<vmem>>, vector<1x1x16xf32>
    %127 = vector.shape_cast %126 : vector<1x1x16xf32> to vector<1x16xf32>
    %128 = vector.broadcast %127 : vector<1x16xf32> to vector<9x16xf32>
    %129 = arith.addf %125, %128 : vector<9x16xf32>
    %cst_94 = arith.constant 5.000000e-01 : f32
    %130 = vector.broadcast %cst_94 : f32 to vector<9x16xf32>
    %131 = arith.mulf %130, %129 : vector<9x16xf32>
    %cst_95 = arith.constant 5.000000e-01 : f32
    %132 = vector.broadcast %cst_95 : f32 to vector<9x16xf32>
    %133 = arith.mulf %132, %129 : vector<9x16xf32>
    %134 = math.tanh %133 : vector<9x16xf32>
    %cst_96 = arith.constant 1.000000e+00 : f32
    %135 = vector.broadcast %cst_96 : f32 to vector<9x16xf32>
    %136 = arith.addf %135, %134 : vector<9x16xf32>
    %137 = arith.mulf %131, %136 : vector<9x16xf32>
    %138 = arith.addf %28, %137 : vector<9x16xf32>
    %139 = arith.truncf %138 : vector<9x16xf32> to vector<9x16xbf16>
    %c1_97 = arith.constant 1 : index
    %c0_98 = arith.constant 0 : index
    %c0_99 = arith.constant 0 : index
    %140 = vector.load %arg9[%c1_97, %c0_98, %c0_99] : memref<2x16x16xbf16, #tpu.memory_space<vmem>>, vector<1x16x16xbf16>
    %141 = vector.shape_cast %140 : vector<1x16x16xbf16> to vector<16x16xbf16>
    %cst_100 = arith.constant dense<0.000000e+00> : vector<9x16xf32>
    %142 = tpu.matmul %139, %141, %cst_100 {dimension_numbers = #tpu.dot_dimension_numbers<[1], [0], [0], [1], [0, 0, 1, 1], [], []>} : vector<9x16xbf16>, vector<16x16xbf16>, vector<9x16xf32> -> vector<9x16xf32>
    %c1_101 = arith.constant 1 : index
    %c0_102 = arith.constant 0 : index
    %c0_103 = arith.constant 0 : index
    %143 = vector.load %arg10[%c1_101, %c0_102, %c0_103] : memref<2x1x16xf32, #tpu.memory_space<vmem>>, vector<1x1x16xf32>
    %144 = vector.shape_cast %143 : vector<1x1x16xf32> to vector<1x16xf32>
    %145 = vector.broadcast %144 : vector<1x16xf32> to vector<9x16xf32>
    %146 = arith.addf %142, %145 : vector<9x16xf32>
    %cst_104 = arith.constant 5.000000e-01 : f32
    %147 = vector.broadcast %cst_104 : f32 to vector<9x16xf32>
    %148 = arith.mulf %147, %146 : vector<9x16xf32>
    %cst_105 = arith.constant 5.000000e-01 : f32
    %149 = vector.broadcast %cst_105 : f32 to vector<9x16xf32>
    %150 = arith.mulf %149, %146 : vector<9x16xf32>
    %151 = math.tanh %150 : vector<9x16xf32>
    %cst_106 = arith.constant 1.000000e+00 : f32
    %152 = vector.broadcast %cst_106 : f32 to vector<9x16xf32>
    %153 = arith.addf %152, %151 : vector<9x16xf32>
    %154 = arith.mulf %148, %153 : vector<9x16xf32>
    %155 = arith.truncf %154 : vector<9x16xf32> to vector<9x16xbf16>
    %c8_107 = arith.constant 8 : index
    %c0_108 = arith.constant 0 : index
    %156 = vector.load %arg17[%c8_107, %c0_108] : memref<24x16xbf16, #tpu.memory_space<vmem>>, vector<9x16xbf16>
    tpu.vector_store %arg17[%c8_107, %c0_108], %155 {strides = array<i32>} : memref<24x16xbf16, #tpu.memory_space<vmem>>, vector<9x16xbf16>,
    %cst_109 = arith.constant 0.000000e+00 : f32
    %157 = vector.broadcast %cst_109 : f32 to vector<9x16xf32>
    %c4_110 = arith.constant 4 : index
    %c0_111 = arith.constant 0 : index
    %158 = vector.load %arg17[%c4_110, %c0_111] : memref<24x16xbf16, #tpu.memory_space<vmem>>, vector<9x16xbf16>
    %159 = vector.broadcast %47 : vector<9x1xbf16> to vector<9x16xbf16>
    %160 = arith.mulf %158, %159 : vector<9x16xbf16>
    %c9_112 = arith.constant 9 : index
    %c0_113 = arith.constant 0 : index
    %c0_114 = arith.constant 0 : index
    %161 = vector.load %arg11[%c9_112, %c0_113, %c0_114] : memref<18x16x16xbf16, #tpu.memory_space<vmem>>, vector<1x16x16xbf16>
    %162 = vector.shape_cast %161 : vector<1x16x16xbf16> to vector<16x16xbf16>
    %cst_115 = arith.constant dense<0.000000e+00> : vector<9x16xf32>
    %163 = tpu.matmul %160, %162, %cst_115 {dimension_numbers = #tpu.dot_dimension_numbers<[1], [0], [0], [1], [0, 0, 1, 1], [], []>} : vector<9x16xbf16>, vector<16x16xbf16>, vector<9x16xf32> -> vector<9x16xf32>
    %164 = arith.addf %157, %163 : vector<9x16xf32>
    %c5_116 = arith.constant 5 : index
    %c0_117 = arith.constant 0 : index
    %165 = vector.load %arg17[%c5_116, %c0_117] : memref<24x16xbf16, #tpu.memory_space<vmem>>, vector<9x16xbf16>
    %c10_118 = arith.constant 10 : index
    %c0_119 = arith.constant 0 : index
    %c0_120 = arith.constant 0 : index
    %166 = vector.load %arg11[%c10_118, %c0_119, %c0_120] : memref<18x16x16xbf16, #tpu.memory_space<vmem>>, vector<1x16x16xbf16>
    %167 = vector.shape_cast %166 : vector<1x16x16xbf16> to vector<16x16xbf16>
    %cst_121 = arith.constant dense<0.000000e+00> : vector<9x16xf32>
    %168 = tpu.matmul %165, %167, %cst_121 {dimension_numbers = #tpu.dot_dimension_numbers<[1], [0], [0], [1], [0, 0, 1, 1], [], []>} : vector<9x16xbf16>, vector<16x16xbf16>, vector<9x16xf32> -> vector<9x16xf32>
    %169 = arith.addf %164, %168 : vector<9x16xf32>
    %c6_122 = arith.constant 6 : index
    %c0_123 = arith.constant 0 : index
    %170 = vector.load %arg17[%c6_122, %c0_123] : memref<24x16xbf16, #tpu.memory_space<vmem>>, vector<9x16xbf16>
    %171 = vector.broadcast %49 : vector<9x1xbf16> to vector<9x16xbf16>
    %172 = arith.mulf %170, %171 : vector<9x16xbf16>
    %c11_124 = arith.constant 11 : index
    %c0_125 = arith.constant 0 : index
    %c0_126 = arith.constant 0 : index
    %173 = vector.load %arg11[%c11_124, %c0_125, %c0_126] : memref<18x16x16xbf16, #tpu.memory_space<vmem>>, vector<1x16x16xbf16>
    %174 = vector.shape_cast %173 : vector<1x16x16xbf16> to vector<16x16xbf16>
    %cst_127 = arith.constant dense<0.000000e+00> : vector<9x16xf32>
    %175 = tpu.matmul %172, %174, %cst_127 {dimension_numbers = #tpu.dot_dimension_numbers<[1], [0], [0], [1], [0, 0, 1, 1], [], []>} : vector<9x16xbf16>, vector<16x16xbf16>, vector<9x16xf32> -> vector<9x16xf32>
    %176 = arith.addf %169, %175 : vector<9x16xf32>
    %c7_128 = arith.constant 7 : index
    %c0_129 = arith.constant 0 : index
    %177 = vector.load %arg17[%c7_128, %c0_129] : memref<24x16xbf16, #tpu.memory_space<vmem>>, vector<9x16xbf16>
    %178 = vector.broadcast %47 : vector<9x1xbf16> to vector<9x16xbf16>
    %179 = arith.mulf %177, %178 : vector<9x16xbf16>
    %c12_130 = arith.constant 12 : index
    %c0_131 = arith.constant 0 : index
    %c0_132 = arith.constant 0 : index
    %180 = vector.load %arg11[%c12_130, %c0_131, %c0_132] : memref<18x16x16xbf16, #tpu.memory_space<vmem>>, vector<1x16x16xbf16>
    %181 = vector.shape_cast %180 : vector<1x16x16xbf16> to vector<16x16xbf16>
    %cst_133 = arith.constant dense<0.000000e+00> : vector<9x16xf32>
    %182 = tpu.matmul %179, %181, %cst_133 {dimension_numbers = #tpu.dot_dimension_numbers<[1], [0], [0], [1], [0, 0, 1, 1], [], []>} : vector<9x16xbf16>, vector<16x16xbf16>, vector<9x16xf32> -> vector<9x16xf32>
    %183 = arith.addf %176, %182 : vector<9x16xf32>
    %c8_134 = arith.constant 8 : index
    %c0_135 = arith.constant 0 : index
    %184 = vector.load %arg17[%c8_134, %c0_135] : memref<24x16xbf16, #tpu.memory_space<vmem>>, vector<9x16xbf16>
    %c13 = arith.constant 13 : index
    %c0_136 = arith.constant 0 : index
    %c0_137 = arith.constant 0 : index
    %185 = vector.load %arg11[%c13, %c0_136, %c0_137] : memref<18x16x16xbf16, #tpu.memory_space<vmem>>, vector<1x16x16xbf16>
    %186 = vector.shape_cast %185 : vector<1x16x16xbf16> to vector<16x16xbf16>
    %cst_138 = arith.constant dense<0.000000e+00> : vector<9x16xf32>
    %187 = tpu.matmul %184, %186, %cst_138 {dimension_numbers = #tpu.dot_dimension_numbers<[1], [0], [0], [1], [0, 0, 1, 1], [], []>} : vector<9x16xbf16>, vector<16x16xbf16>, vector<9x16xf32> -> vector<9x16xf32>
    %188 = arith.addf %183, %187 : vector<9x16xf32>
    %c9_139 = arith.constant 9 : index
    %c0_140 = arith.constant 0 : index
    %189 = vector.load %arg17[%c9_139, %c0_140] : memref<24x16xbf16, #tpu.memory_space<vmem>>, vector<9x16xbf16>
    %190 = vector.broadcast %49 : vector<9x1xbf16> to vector<9x16xbf16>
    %191 = arith.mulf %189, %190 : vector<9x16xbf16>
    %c14 = arith.constant 14 : index
    %c0_141 = arith.constant 0 : index
    %c0_142 = arith.constant 0 : index
    %192 = vector.load %arg11[%c14, %c0_141, %c0_142] : memref<18x16x16xbf16, #tpu.memory_space<vmem>>, vector<1x16x16xbf16>
    %193 = vector.shape_cast %192 : vector<1x16x16xbf16> to vector<16x16xbf16>
    %cst_143 = arith.constant dense<0.000000e+00> : vector<9x16xf32>
    %194 = tpu.matmul %191, %193, %cst_143 {dimension_numbers = #tpu.dot_dimension_numbers<[1], [0], [0], [1], [0, 0, 1, 1], [], []>} : vector<9x16xbf16>, vector<16x16xbf16>, vector<9x16xf32> -> vector<9x16xf32>
    %195 = arith.addf %188, %194 : vector<9x16xf32>
    %c10_144 = arith.constant 10 : index
    %c0_145 = arith.constant 0 : index
    %196 = vector.load %arg17[%c10_144, %c0_145] : memref<24x16xbf16, #tpu.memory_space<vmem>>, vector<9x16xbf16>
    %197 = vector.broadcast %47 : vector<9x1xbf16> to vector<9x16xbf16>
    %198 = arith.mulf %196, %197 : vector<9x16xbf16>
    %c15 = arith.constant 15 : index
    %c0_146 = arith.constant 0 : index
    %c0_147 = arith.constant 0 : index
    %199 = vector.load %arg11[%c15, %c0_146, %c0_147] : memref<18x16x16xbf16, #tpu.memory_space<vmem>>, vector<1x16x16xbf16>
    %200 = vector.shape_cast %199 : vector<1x16x16xbf16> to vector<16x16xbf16>
    %cst_148 = arith.constant dense<0.000000e+00> : vector<9x16xf32>
    %201 = tpu.matmul %198, %200, %cst_148 {dimension_numbers = #tpu.dot_dimension_numbers<[1], [0], [0], [1], [0, 0, 1, 1], [], []>} : vector<9x16xbf16>, vector<16x16xbf16>, vector<9x16xf32> -> vector<9x16xf32>
    %202 = arith.addf %195, %201 : vector<9x16xf32>
    %c11_149 = arith.constant 11 : index
    %c0_150 = arith.constant 0 : index
    %203 = vector.load %arg17[%c11_149, %c0_150] : memref<24x16xbf16, #tpu.memory_space<vmem>>, vector<9x16xbf16>
    %c16 = arith.constant 16 : index
    %c0_151 = arith.constant 0 : index
    %c0_152 = arith.constant 0 : index
    %204 = vector.load %arg11[%c16, %c0_151, %c0_152] : memref<18x16x16xbf16, #tpu.memory_space<vmem>>, vector<1x16x16xbf16>
    %205 = vector.shape_cast %204 : vector<1x16x16xbf16> to vector<16x16xbf16>
    %cst_153 = arith.constant dense<0.000000e+00> : vector<9x16xf32>
    %206 = tpu.matmul %203, %205, %cst_153 {dimension_numbers = #tpu.dot_dimension_numbers<[1], [0], [0], [1], [0, 0, 1, 1], [], []>} : vector<9x16xbf16>, vector<16x16xbf16>, vector<9x16xf32> -> vector<9x16xf32>
    %207 = arith.addf %202, %206 : vector<9x16xf32>
    %c12_154 = arith.constant 12 : index
    %c0_155 = arith.constant 0 : index
    %208 = vector.load %arg17[%c12_154, %c0_155] : memref<24x16xbf16, #tpu.memory_space<vmem>>, vector<9x16xbf16>
    %209 = vector.broadcast %49 : vector<9x1xbf16> to vector<9x16xbf16>
    %210 = arith.mulf %208, %209 : vector<9x16xbf16>
    %c17_156 = arith.constant 17 : index
    %c0_157 = arith.constant 0 : index
    %c0_158 = arith.constant 0 : index
    %211 = vector.load %arg11[%c17_156, %c0_157, %c0_158] : memref<18x16x16xbf16, #tpu.memory_space<vmem>>, vector<1x16x16xbf16>
    %212 = vector.shape_cast %211 : vector<1x16x16xbf16> to vector<16x16xbf16>
    %cst_159 = arith.constant dense<0.000000e+00> : vector<9x16xf32>
    %213 = tpu.matmul %210, %212, %cst_159 {dimension_numbers = #tpu.dot_dimension_numbers<[1], [0], [0], [1], [0, 0, 1, 1], [], []>} : vector<9x16xbf16>, vector<16x16xbf16>, vector<9x16xf32> -> vector<9x16xf32>
    %214 = arith.addf %207, %213 : vector<9x16xf32>
    %c1_160 = arith.constant 1 : index
    %c0_161 = arith.constant 0 : index
    %c0_162 = arith.constant 0 : index
    %215 = vector.load %arg12[%c1_160, %c0_161, %c0_162] : memref<2x1x16xf32, #tpu.memory_space<vmem>>, vector<1x1x16xf32>
    %216 = vector.shape_cast %215 : vector<1x1x16xf32> to vector<1x16xf32>
    %217 = vector.broadcast %216 : vector<1x16xf32> to vector<9x16xf32>
    %218 = arith.addf %214, %217 : vector<9x16xf32>
    %cst_163 = arith.constant 5.000000e-01 : f32
    %219 = vector.broadcast %cst_163 : f32 to vector<9x16xf32>
    %220 = arith.mulf %219, %218 : vector<9x16xf32>
    %cst_164 = arith.constant 5.000000e-01 : f32
    %221 = vector.broadcast %cst_164 : f32 to vector<9x16xf32>
    %222 = arith.mulf %221, %218 : vector<9x16xf32>
    %223 = math.tanh %222 : vector<9x16xf32>
    %cst_165 = arith.constant 1.000000e+00 : f32
    %224 = vector.broadcast %cst_165 : f32 to vector<9x16xf32>
    %225 = arith.addf %224, %223 : vector<9x16xf32>
    %226 = arith.mulf %220, %225 : vector<9x16xf32>
    %227 = arith.addf %138, %226 : vector<9x16xf32>
    %228 = arith.truncf %227 : vector<9x16xf32> to vector<9x16xbf16>
    %c0_166 = arith.constant 0 : index
    %c0_167 = arith.constant 0 : index
    %229 = vector.load %arg13[%c0_166, %c0_167] : memref<16x32xbf16, #tpu.memory_space<vmem>>, vector<16x32xbf16>
    %cst_168 = arith.constant dense<0.000000e+00> : vector<9x32xf32>
    %230 = tpu.matmul %228, %229, %cst_168 {dimension_numbers = #tpu.dot_dimension_numbers<[1], [0], [0], [1], [0, 0, 1, 1], [], []>} : vector<9x16xbf16>, vector<16x32xbf16>, vector<9x32xf32> -> vector<9x32xf32>
    %231 = arith.truncf %41 : vector<9x16xf32> to vector<9x16xbf16>
    %c0_169 = arith.constant 0 : index
    %c0_170 = arith.constant 0 : index
    %232 = vector.load %arg14[%c0_169, %c0_170] : memref<16x32xbf16, #tpu.memory_space<vmem>>, vector<16x32xbf16>
    %cst_171 = arith.constant dense<0.000000e+00> : vector<9x32xf32>
    %233 = tpu.matmul %231, %232, %cst_171 {dimension_numbers = #tpu.dot_dimension_numbers<[1], [0], [0], [1], [0, 0, 1, 1], [], []>} : vector<9x16xbf16>, vector<16x32xbf16>, vector<9x32xf32> -> vector<9x32xf32>
    %234 = arith.addf %230, %233 : vector<9x32xf32>
    %c0_172 = arith.constant 0 : index
    %c0_173 = arith.constant 0 : index
    %235 = vector.load %arg15[%c0_172, %c0_173] : memref<1x32xf32, #tpu.memory_space<vmem>>, vector<1x32xf32>
    %236 = vector.broadcast %235 : vector<1x32xf32> to vector<9x32xf32>
    %237 = arith.addf %234, %236 : vector<9x32xf32>
    %cst_174 = arith.constant 5.000000e-01 : f32
    %238 = vector.broadcast %cst_174 : f32 to vector<9x32xf32>
    %239 = arith.mulf %238, %237 : vector<9x32xf32>
    %cst_175 = arith.constant 5.000000e-01 : f32
    %240 = vector.broadcast %cst_175 : f32 to vector<9x32xf32>
    %241 = arith.mulf %240, %237 : vector<9x32xf32>
    %242 = math.tanh %241 : vector<9x32xf32>
    %cst_176 = arith.constant 1.000000e+00 : f32
    %243 = vector.broadcast %cst_176 : f32 to vector<9x32xf32>
    %244 = arith.addf %243, %242 : vector<9x32xf32>
    %245 = arith.mulf %239, %244 : vector<9x32xf32>
    %246 = arith.truncf %245 : vector<9x32xf32> to vector<9x32xbf16>
    %c0_177 = arith.constant 0 : index
    %c0_178 = arith.constant 0 : index
    %c0_179 = arith.constant 0 : index
    %247 = vector.load %arg16[%c0_177, %c0_178, %c0_179] : memref<1x9x32xbf16, #tpu.memory_space<vmem>>, vector<1x9x32xbf16>
    %248 = vector.shape_cast %247 : vector<1x9x32xbf16> to vector<9x32xbf16>
    %249 = vector.shape_cast %246 : vector<9x32xbf16> to vector<1x9x32xbf16>
    tpu.vector_store %arg16[%c0_177, %c0_178, %c0_179], %249 {strides = array<i32>} : memref<1x9x32xbf16, #tpu.memory_space<vmem>>, vector<1x9x32xbf16>,
    return
  }
  func.func @transform_0(%arg0: i32) -> (i32, i32, i32) {
    %c0_i32 = arith.constant 0 : i32
    %c0_i32_0 = arith.constant 0 : i32
    %c0_i32_1 = arith.constant 0 : i32
    return %arg0, %c0_i32, %c0_i32_0 : i32, i32, i32
  }
  func.func @transform_1(%arg0: i32) -> (i32, i32, i32) {
    %c0_i32 = arith.constant 0 : i32
    %c0_i32_0 = arith.constant 0 : i32
    %c0_i32_1 = arith.constant 0 : i32
    %c0_i32_2 = arith.constant 0 : i32
    return %c0_i32, %c0_i32_0, %c0_i32_1 : i32, i32, i32
  }
  func.func @transform_2(%arg0: i32) -> (i32, i32) {
    %c0_i32 = arith.constant 0 : i32
    %c0_i32_0 = arith.constant 0 : i32
    %c0_i32_1 = arith.constant 0 : i32
    return %c0_i32, %c0_i32_0 : i32, i32
  }
  func.func @transform_3(%arg0: i32) -> (i32, i32) {
    %c0_i32 = arith.constant 0 : i32
    %c0_i32_0 = arith.constant 0 : i32
    %c0_i32_1 = arith.constant 0 : i32
    return %c0_i32, %c0_i32_0 : i32, i32
  }
  func.func @transform_4(%arg0: i32) -> (i32, i32) {
    %c0_i32 = arith.constant 0 : i32
    %c0_i32_0 = arith.constant 0 : i32
    %c0_i32_1 = arith.constant 0 : i32
    return %c0_i32, %c0_i32_0 : i32, i32
  }
  func.func @transform_5(%arg0: i32) -> (i32, i32) {
    %c0_i32 = arith.constant 0 : i32
    %c0_i32_0 = arith.constant 0 : i32
    %c0_i32_1 = arith.constant 0 : i32
    return %c0_i32, %c0_i32_0 : i32, i32
  }
  func.func @transform_6(%arg0: i32) -> (i32, i32) {
    %c0_i32 = arith.constant 0 : i32
    %c0_i32_0 = arith.constant 0 : i32
    %c0_i32_1 = arith.constant 0 : i32
    return %c0_i32, %c0_i32_0 : i32, i32
  }
  func.func @transform_7(%arg0: i32) -> (i32, i32) {
    %c0_i32 = arith.constant 0 : i32
    %c0_i32_0 = arith.constant 0 : i32
    %c0_i32_1 = arith.constant 0 : i32
    return %c0_i32, %c0_i32_0 : i32, i32
  }
  func.func @transform_8(%arg0: i32) -> (i32, i32, i32) {
    %c0_i32 = arith.constant 0 : i32
    %c0_i32_0 = arith.constant 0 : i32
    %c0_i32_1 = arith.constant 0 : i32
    %c0_i32_2 = arith.constant 0 : i32
    return %c0_i32, %c0_i32_0, %c0_i32_1 : i32, i32, i32
  }
  func.func @transform_9(%arg0: i32) -> (i32, i32, i32) {
    %c0_i32 = arith.constant 0 : i32
    %c0_i32_0 = arith.constant 0 : i32
    %c0_i32_1 = arith.constant 0 : i32
    %c0_i32_2 = arith.constant 0 : i32
    return %c0_i32, %c0_i32_0, %c0_i32_1 : i32, i32, i32
  }
  func.func @transform_10(%arg0: i32) -> (i32, i32, i32) {
    %c0_i32 = arith.constant 0 : i32
    %c0_i32_0 = arith.constant 0 : i32
    %c0_i32_1 = arith.constant 0 : i32
    %c0_i32_2 = arith.constant 0 : i32
    return %c0_i32, %c0_i32_0, %c0_i32_1 : i32, i32, i32
  }
  func.func @transform_11(%arg0: i32) -> (i32, i32, i32) {
    %c0_i32 = arith.constant 0 : i32
    %c0_i32_0 = arith.constant 0 : i32
    %c0_i32_1 = arith.constant 0 : i32
    %c0_i32_2 = arith.constant 0 : i32
    return %c0_i32, %c0_i32_0, %c0_i32_1 : i32, i32, i32
  }
  func.func @transform_12(%arg0: i32) -> (i32, i32) {
    %c0_i32 = arith.constant 0 : i32
    %c0_i32_0 = arith.constant 0 : i32
    %c0_i32_1 = arith.constant 0 : i32
    return %c0_i32, %c0_i32_0 : i32, i32
  }
  func.func @transform_13(%arg0: i32) -> (i32, i32) {
    %c0_i32 = arith.constant 0 : i32
    %c0_i32_0 = arith.constant 0 : i32
    %c0_i32_1 = arith.constant 0 : i32
    return %c0_i32, %c0_i32_0 : i32, i32
  }
  func.func @transform_14(%arg0: i32) -> (i32, i32) {
    %c0_i32 = arith.constant 0 : i32
    %c0_i32_0 = arith.constant 0 : i32
    %c0_i32_1 = arith.constant 0 : i32
    return %c0_i32, %c0_i32_0 : i32, i32
  }
  func.func @transform_15(%arg0: i32) -> (i32, i32, i32) {
    %c0_i32 = arith.constant 0 : i32
    %c0_i32_0 = arith.constant 0 : i32
    %c0_i32_1 = arith.constant 0 : i32
    return %arg0, %c0_i32, %c0_i32_0 : i32, i32, i32
  }
}

module attributes {stable_mosaic.version = 11 : i64} {
  func.func @_csp_stage_kernel(%arg0: i32, %arg1: memref<1x4x288xbf16, #tpu.memory_space<vmem>>, %arg2: memref<2x4x1xbf16, #tpu.memory_space<vmem>>, %arg3: memref<288x64xbf16, #tpu.memory_space<vmem>>, %arg4: memref<1x64xf32, #tpu.memory_space<vmem>>, %arg5: memref<64x32xbf16, #tpu.memory_space<vmem>>, %arg6: memref<1x32xf32, #tpu.memory_space<vmem>>, %arg7: memref<64x32xbf16, #tpu.memory_space<vmem>>, %arg8: memref<1x32xf32, #tpu.memory_space<vmem>>, %arg9: memref<3x32x32xbf16, #tpu.memory_space<vmem>>, %arg10: memref<3x1x32xf32, #tpu.memory_space<vmem>>, %arg11: memref<27x32x32xbf16, #tpu.memory_space<vmem>>, %arg12: memref<3x1x32xf32, #tpu.memory_space<vmem>>, %arg13: memref<32x64xbf16, #tpu.memory_space<vmem>>, %arg14: memref<32x64xbf16, #tpu.memory_space<vmem>>, %arg15: memref<1x64xf32, #tpu.memory_space<vmem>>, %arg16: memref<1x4x64xbf16, #tpu.memory_space<vmem>>, %arg17: memref<16x32xbf16, #tpu.memory_space<vmem>>) attributes {dimension_semantics = [#tpu.dimension_semantics<parallel>], iteration_bounds = array<i64: 2>, scalar_prefetch = 0 : i64, scratch_operands = 1 : i64, tpu.core_type = #tpu.core_type<tc>, window_params = [{transform_indices = @transform_0, window_bounds = array<i64: 1, 4, 288>}, {pipeline_mode = #tpu.pipeline_mode<synchronous>, transform_indices = @transform_1, window_bounds = array<i64: 2, 4, 1>}, {pipeline_mode = #tpu.pipeline_mode<synchronous>, transform_indices = @transform_2, window_bounds = array<i64: 288, 64>}, {pipeline_mode = #tpu.pipeline_mode<synchronous>, transform_indices = @transform_3, window_bounds = array<i64: 1, 64>}, {pipeline_mode = #tpu.pipeline_mode<synchronous>, transform_indices = @transform_4, window_bounds = array<i64: 64, 32>}, {pipeline_mode = #tpu.pipeline_mode<synchronous>, transform_indices = @transform_5, window_bounds = array<i64: 1, 32>}, {pipeline_mode = #tpu.pipeline_mode<synchronous>, transform_indices = @transform_6, window_bounds = array<i64: 64, 32>}, {pipeline_mode = #tpu.pipeline_mode<synchronous>, transform_indices = @transform_7, window_bounds = array<i64: 1, 32>}, {pipeline_mode = #tpu.pipeline_mode<synchronous>, transform_indices = @transform_8, window_bounds = array<i64: 3, 32, 32>}, {pipeline_mode = #tpu.pipeline_mode<synchronous>, transform_indices = @transform_9, window_bounds = array<i64: 3, 1, 32>}, {pipeline_mode = #tpu.pipeline_mode<synchronous>, transform_indices = @transform_10, window_bounds = array<i64: 27, 32, 32>}, {pipeline_mode = #tpu.pipeline_mode<synchronous>, transform_indices = @transform_11, window_bounds = array<i64: 3, 1, 32>}, {pipeline_mode = #tpu.pipeline_mode<synchronous>, transform_indices = @transform_12, window_bounds = array<i64: 32, 64>}, {pipeline_mode = #tpu.pipeline_mode<synchronous>, transform_indices = @transform_13, window_bounds = array<i64: 32, 64>}, {pipeline_mode = #tpu.pipeline_mode<synchronous>, transform_indices = @transform_14, window_bounds = array<i64: 1, 64>}, {transform_indices = @transform_15, window_bounds = array<i64: 1, 4, 64>}]} {
    %c0 = arith.constant 0 : index
    %c0_0 = arith.constant 0 : index
    %c0_1 = arith.constant 0 : index
    %0 = vector.load %arg1[%c0, %c0_0, %c0_1] : memref<1x4x288xbf16, #tpu.memory_space<vmem>>, vector<1x4x288xbf16>
    %1 = vector.shape_cast %0 : vector<1x4x288xbf16> to vector<4x288xbf16>
    %c0_2 = arith.constant 0 : index
    %c0_3 = arith.constant 0 : index
    %2 = vector.load %arg3[%c0_2, %c0_3] : memref<288x64xbf16, #tpu.memory_space<vmem>>, vector<288x64xbf16>
    %cst = arith.constant dense<0.000000e+00> : vector<4x64xf32>
    %3 = tpu.matmul %1, %2, %cst {dimension_numbers = #tpu.dot_dimension_numbers<[1], [0], [0], [1], [0, 0, 1, 1], [], []>} : vector<4x288xbf16>, vector<288x64xbf16>, vector<4x64xf32> -> vector<4x64xf32>
    %c0_4 = arith.constant 0 : index
    %c0_5 = arith.constant 0 : index
    %4 = vector.load %arg4[%c0_4, %c0_5] : memref<1x64xf32, #tpu.memory_space<vmem>>, vector<1x64xf32>
    %5 = vector.broadcast %4 : vector<1x64xf32> to vector<4x64xf32>
    %6 = arith.addf %3, %5 : vector<4x64xf32>
    %cst_6 = arith.constant 5.000000e-01 : f32
    %7 = vector.broadcast %cst_6 : f32 to vector<4x64xf32>
    %8 = arith.mulf %7, %6 : vector<4x64xf32>
    %cst_7 = arith.constant 5.000000e-01 : f32
    %9 = vector.broadcast %cst_7 : f32 to vector<4x64xf32>
    %10 = arith.mulf %9, %6 : vector<4x64xf32>
    %11 = math.tanh %10 : vector<4x64xf32>
    %cst_8 = arith.constant 1.000000e+00 : f32
    %12 = vector.broadcast %cst_8 : f32 to vector<4x64xf32>
    %13 = arith.addf %12, %11 : vector<4x64xf32>
    %14 = arith.mulf %8, %13 : vector<4x64xf32>
    %15 = arith.truncf %14 : vector<4x64xf32> to vector<4x64xbf16>
    %c0_9 = arith.constant 0 : index
    %c0_10 = arith.constant 0 : index
    %16 = vector.load %arg5[%c0_9, %c0_10] : memref<64x32xbf16, #tpu.memory_space<vmem>>, vector<64x32xbf16>
    %cst_11 = arith.constant dense<0.000000e+00> : vector<4x32xf32>
    %17 = tpu.matmul %15, %16, %cst_11 {dimension_numbers = #tpu.dot_dimension_numbers<[1], [0], [0], [1], [0, 0, 1, 1], [], []>} : vector<4x64xbf16>, vector<64x32xbf16>, vector<4x32xf32> -> vector<4x32xf32>
    %c0_12 = arith.constant 0 : index
    %c0_13 = arith.constant 0 : index
    %18 = vector.load %arg6[%c0_12, %c0_13] : memref<1x32xf32, #tpu.memory_space<vmem>>, vector<1x32xf32>
    %19 = vector.broadcast %18 : vector<1x32xf32> to vector<4x32xf32>
    %20 = arith.addf %17, %19 : vector<4x32xf32>
    %cst_14 = arith.constant 5.000000e-01 : f32
    %21 = vector.broadcast %cst_14 : f32 to vector<4x32xf32>
    %22 = arith.mulf %21, %20 : vector<4x32xf32>
    %cst_15 = arith.constant 5.000000e-01 : f32
    %23 = vector.broadcast %cst_15 : f32 to vector<4x32xf32>
    %24 = arith.mulf %23, %20 : vector<4x32xf32>
    %25 = math.tanh %24 : vector<4x32xf32>
    %cst_16 = arith.constant 1.000000e+00 : f32
    %26 = vector.broadcast %cst_16 : f32 to vector<4x32xf32>
    %27 = arith.addf %26, %25 : vector<4x32xf32>
    %28 = arith.mulf %22, %27 : vector<4x32xf32>
    %c0_17 = arith.constant 0 : index
    %c0_18 = arith.constant 0 : index
    %29 = vector.load %arg7[%c0_17, %c0_18] : memref<64x32xbf16, #tpu.memory_space<vmem>>, vector<64x32xbf16>
    %cst_19 = arith.constant dense<0.000000e+00> : vector<4x32xf32>
    %30 = tpu.matmul %15, %29, %cst_19 {dimension_numbers = #tpu.dot_dimension_numbers<[1], [0], [0], [1], [0, 0, 1, 1], [], []>} : vector<4x64xbf16>, vector<64x32xbf16>, vector<4x32xf32> -> vector<4x32xf32>
    %c0_20 = arith.constant 0 : index
    %c0_21 = arith.constant 0 : index
    %31 = vector.load %arg8[%c0_20, %c0_21] : memref<1x32xf32, #tpu.memory_space<vmem>>, vector<1x32xf32>
    %32 = vector.broadcast %31 : vector<1x32xf32> to vector<4x32xf32>
    %33 = arith.addf %30, %32 : vector<4x32xf32>
    %cst_22 = arith.constant 5.000000e-01 : f32
    %34 = vector.broadcast %cst_22 : f32 to vector<4x32xf32>
    %35 = arith.mulf %34, %33 : vector<4x32xf32>
    %cst_23 = arith.constant 5.000000e-01 : f32
    %36 = vector.broadcast %cst_23 : f32 to vector<4x32xf32>
    %37 = arith.mulf %36, %33 : vector<4x32xf32>
    %38 = math.tanh %37 : vector<4x32xf32>
    %cst_24 = arith.constant 1.000000e+00 : f32
    %39 = vector.broadcast %cst_24 : f32 to vector<4x32xf32>
    %40 = arith.addf %39, %38 : vector<4x32xf32>
    %41 = arith.mulf %35, %40 : vector<4x32xf32>
    %cst_25 = arith.constant 0.000000e+00 : bf16
    %42 = vector.broadcast %cst_25 : bf16 to vector<8x32xbf16>
    %c0_26 = arith.constant 0 : index
    %c0_27 = arith.constant 0 : index
    %43 = vector.load %arg17[%c0_26, %c0_27] : memref<16x32xbf16, #tpu.memory_space<vmem>>, vector<8x32xbf16>
    tpu.vector_store %arg17[%c0_26, %c0_27], %42 {strides = array<i32>} : memref<16x32xbf16, #tpu.memory_space<vmem>>, vector<8x32xbf16>,
    %cst_28 = arith.constant 0.000000e+00 : bf16
    %44 = vector.broadcast %cst_28 : bf16 to vector<4x32xbf16>
    %c12 = arith.constant 12 : index
    %c0_29 = arith.constant 0 : index
    %45 = vector.load %arg17[%c12, %c0_29] : memref<16x32xbf16, #tpu.memory_space<vmem>>, vector<4x32xbf16>
    tpu.vector_store %arg17[%c12, %c0_29], %44 {strides = array<i32>} : memref<16x32xbf16, #tpu.memory_space<vmem>>, vector<4x32xbf16>,
    %c0_30 = arith.constant 0 : index
    %c0_31 = arith.constant 0 : index
    %c0_32 = arith.constant 0 : index
    %46 = vector.load %arg2[%c0_30, %c0_31, %c0_32] : memref<2x4x1xbf16, #tpu.memory_space<vmem>>, vector<1x4x1xbf16>
    %47 = vector.shape_cast %46 : vector<1x4x1xbf16> to vector<4x1xbf16>
    %c1 = arith.constant 1 : index
    %c0_33 = arith.constant 0 : index
    %c0_34 = arith.constant 0 : index
    %48 = vector.load %arg2[%c1, %c0_33, %c0_34] : memref<2x4x1xbf16, #tpu.memory_space<vmem>>, vector<1x4x1xbf16>
    %49 = vector.shape_cast %48 : vector<1x4x1xbf16> to vector<4x1xbf16>
    %50 = arith.truncf %28 : vector<4x32xf32> to vector<4x32xbf16>
    %c0_35 = arith.constant 0 : index
    %c0_36 = arith.constant 0 : index
    %c0_37 = arith.constant 0 : index
    %51 = vector.load %arg9[%c0_35, %c0_36, %c0_37] : memref<3x32x32xbf16, #tpu.memory_space<vmem>>, vector<1x32x32xbf16>
    %52 = vector.shape_cast %51 : vector<1x32x32xbf16> to vector<32x32xbf16>
    %cst_38 = arith.constant dense<0.000000e+00> : vector<4x32xf32>
    %53 = tpu.matmul %50, %52, %cst_38 {dimension_numbers = #tpu.dot_dimension_numbers<[1], [0], [0], [1], [0, 0, 1, 1], [], []>} : vector<4x32xbf16>, vector<32x32xbf16>, vector<4x32xf32> -> vector<4x32xf32>
    %c0_39 = arith.constant 0 : index
    %c0_40 = arith.constant 0 : index
    %c0_41 = arith.constant 0 : index
    %54 = vector.load %arg10[%c0_39, %c0_40, %c0_41] : memref<3x1x32xf32, #tpu.memory_space<vmem>>, vector<1x1x32xf32>
    %55 = vector.shape_cast %54 : vector<1x1x32xf32> to vector<1x32xf32>
    %56 = vector.broadcast %55 : vector<1x32xf32> to vector<4x32xf32>
    %57 = arith.addf %53, %56 : vector<4x32xf32>
    %cst_42 = arith.constant 5.000000e-01 : f32
    %58 = vector.broadcast %cst_42 : f32 to vector<4x32xf32>
    %59 = arith.mulf %58, %57 : vector<4x32xf32>
    %cst_43 = arith.constant 5.000000e-01 : f32
    %60 = vector.broadcast %cst_43 : f32 to vector<4x32xf32>
    %61 = arith.mulf %60, %57 : vector<4x32xf32>
    %62 = math.tanh %61 : vector<4x32xf32>
    %cst_44 = arith.constant 1.000000e+00 : f32
    %63 = vector.broadcast %cst_44 : f32 to vector<4x32xf32>
    %64 = arith.addf %63, %62 : vector<4x32xf32>
    %65 = arith.mulf %59, %64 : vector<4x32xf32>
    %66 = arith.truncf %65 : vector<4x32xf32> to vector<4x32xbf16>
    %c8 = arith.constant 8 : index
    %c0_45 = arith.constant 0 : index
    %67 = vector.load %arg17[%c8, %c0_45] : memref<16x32xbf16, #tpu.memory_space<vmem>>, vector<4x32xbf16>
    tpu.vector_store %arg17[%c8, %c0_45], %66 {strides = array<i32>} : memref<16x32xbf16, #tpu.memory_space<vmem>>, vector<4x32xbf16>,
    %cst_46 = arith.constant 0.000000e+00 : f32
    %68 = vector.broadcast %cst_46 : f32 to vector<4x32xf32>
    %c5 = arith.constant 5 : index
    %c0_47 = arith.constant 0 : index
    %69 = vector.load %arg17[%c5, %c0_47] : memref<16x32xbf16, #tpu.memory_space<vmem>>, vector<4x32xbf16>
    %70 = vector.broadcast %47 : vector<4x1xbf16> to vector<4x32xbf16>
    %71 = arith.mulf %69, %70 : vector<4x32xbf16>
    %c0_48 = arith.constant 0 : index
    %c0_49 = arith.constant 0 : index
    %c0_50 = arith.constant 0 : index
    %72 = vector.load %arg11[%c0_48, %c0_49, %c0_50] : memref<27x32x32xbf16, #tpu.memory_space<vmem>>, vector<1x32x32xbf16>
    %73 = vector.shape_cast %72 : vector<1x32x32xbf16> to vector<32x32xbf16>
    %cst_51 = arith.constant dense<0.000000e+00> : vector<4x32xf32>
    %74 = tpu.matmul %71, %73, %cst_51 {dimension_numbers = #tpu.dot_dimension_numbers<[1], [0], [0], [1], [0, 0, 1, 1], [], []>} : vector<4x32xbf16>, vector<32x32xbf16>, vector<4x32xf32> -> vector<4x32xf32>
    %75 = arith.addf %68, %74 : vector<4x32xf32>
    %c6 = arith.constant 6 : index
    %c0_52 = arith.constant 0 : index
    %76 = vector.load %arg17[%c6, %c0_52] : memref<16x32xbf16, #tpu.memory_space<vmem>>, vector<4x32xbf16>
    %c1_53 = arith.constant 1 : index
    %c0_54 = arith.constant 0 : index
    %c0_55 = arith.constant 0 : index
    %77 = vector.load %arg11[%c1_53, %c0_54, %c0_55] : memref<27x32x32xbf16, #tpu.memory_space<vmem>>, vector<1x32x32xbf16>
    %78 = vector.shape_cast %77 : vector<1x32x32xbf16> to vector<32x32xbf16>
    %cst_56 = arith.constant dense<0.000000e+00> : vector<4x32xf32>
    %79 = tpu.matmul %76, %78, %cst_56 {dimension_numbers = #tpu.dot_dimension_numbers<[1], [0], [0], [1], [0, 0, 1, 1], [], []>} : vector<4x32xbf16>, vector<32x32xbf16>, vector<4x32xf32> -> vector<4x32xf32>
    %80 = arith.addf %75, %79 : vector<4x32xf32>
    %c7 = arith.constant 7 : index
    %c0_57 = arith.constant 0 : index
    %81 = vector.load %arg17[%c7, %c0_57] : memref<16x32xbf16, #tpu.memory_space<vmem>>, vector<4x32xbf16>
    %82 = vector.broadcast %49 : vector<4x1xbf16> to vector<4x32xbf16>
    %83 = arith.mulf %81, %82 : vector<4x32xbf16>
    %c2 = arith.constant 2 : index
    %c0_58 = arith.constant 0 : index
    %c0_59 = arith.constant 0 : index
    %84 = vector.load %arg11[%c2, %c0_58, %c0_59] : memref<27x32x32xbf16, #tpu.memory_space<vmem>>, vector<1x32x32xbf16>
    %85 = vector.shape_cast %84 : vector<1x32x32xbf16> to vector<32x32xbf16>
    %cst_60 = arith.constant dense<0.000000e+00> : vector<4x32xf32>
    %86 = tpu.matmul %83, %85, %cst_60 {dimension_numbers = #tpu.dot_dimension_numbers<[1], [0], [0], [1], [0, 0, 1, 1], [], []>} : vector<4x32xbf16>, vector<32x32xbf16>, vector<4x32xf32> -> vector<4x32xf32>
    %87 = arith.addf %80, %86 : vector<4x32xf32>
    %c7_61 = arith.constant 7 : index
    %c0_62 = arith.constant 0 : index
    %88 = vector.load %arg17[%c7_61, %c0_62] : memref<16x32xbf16, #tpu.memory_space<vmem>>, vector<4x32xbf16>
    %89 = vector.broadcast %47 : vector<4x1xbf16> to vector<4x32xbf16>
    %90 = arith.mulf %88, %89 : vector<4x32xbf16>
    %c3 = arith.constant 3 : index
    %c0_63 = arith.constant 0 : index
    %c0_64 = arith.constant 0 : index
    %91 = vector.load %arg11[%c3, %c0_63, %c0_64] : memref<27x32x32xbf16, #tpu.memory_space<vmem>>, vector<1x32x32xbf16>
    %92 = vector.shape_cast %91 : vector<1x32x32xbf16> to vector<32x32xbf16>
    %cst_65 = arith.constant dense<0.000000e+00> : vector<4x32xf32>
    %93 = tpu.matmul %90, %92, %cst_65 {dimension_numbers = #tpu.dot_dimension_numbers<[1], [0], [0], [1], [0, 0, 1, 1], [], []>} : vector<4x32xbf16>, vector<32x32xbf16>, vector<4x32xf32> -> vector<4x32xf32>
    %94 = arith.addf %87, %93 : vector<4x32xf32>
    %c8_66 = arith.constant 8 : index
    %c0_67 = arith.constant 0 : index
    %95 = vector.load %arg17[%c8_66, %c0_67] : memref<16x32xbf16, #tpu.memory_space<vmem>>, vector<4x32xbf16>
    %c4 = arith.constant 4 : index
    %c0_68 = arith.constant 0 : index
    %c0_69 = arith.constant 0 : index
    %96 = vector.load %arg11[%c4, %c0_68, %c0_69] : memref<27x32x32xbf16, #tpu.memory_space<vmem>>, vector<1x32x32xbf16>
    %97 = vector.shape_cast %96 : vector<1x32x32xbf16> to vector<32x32xbf16>
    %cst_70 = arith.constant dense<0.000000e+00> : vector<4x32xf32>
    %98 = tpu.matmul %95, %97, %cst_70 {dimension_numbers = #tpu.dot_dimension_numbers<[1], [0], [0], [1], [0, 0, 1, 1], [], []>} : vector<4x32xbf16>, vector<32x32xbf16>, vector<4x32xf32> -> vector<4x32xf32>
    %99 = arith.addf %94, %98 : vector<4x32xf32>
    %c9 = arith.constant 9 : index
    %c0_71 = arith.constant 0 : index
    %100 = vector.load %arg17[%c9, %c0_71] : memref<16x32xbf16, #tpu.memory_space<vmem>>, vector<4x32xbf16>
    %101 = vector.broadcast %49 : vector<4x1xbf16> to vector<4x32xbf16>
    %102 = arith.mulf %100, %101 : vector<4x32xbf16>
    %c5_72 = arith.constant 5 : index
    %c0_73 = arith.constant 0 : index
    %c0_74 = arith.constant 0 : index
    %103 = vector.load %arg11[%c5_72, %c0_73, %c0_74] : memref<27x32x32xbf16, #tpu.memory_space<vmem>>, vector<1x32x32xbf16>
    %104 = vector.shape_cast %103 : vector<1x32x32xbf16> to vector<32x32xbf16>
    %cst_75 = arith.constant dense<0.000000e+00> : vector<4x32xf32>
    %105 = tpu.matmul %102, %104, %cst_75 {dimension_numbers = #tpu.dot_dimension_numbers<[1], [0], [0], [1], [0, 0, 1, 1], [], []>} : vector<4x32xbf16>, vector<32x32xbf16>, vector<4x32xf32> -> vector<4x32xf32>
    %106 = arith.addf %99, %105 : vector<4x32xf32>
    %c9_76 = arith.constant 9 : index
    %c0_77 = arith.constant 0 : index
    %107 = vector.load %arg17[%c9_76, %c0_77] : memref<16x32xbf16, #tpu.memory_space<vmem>>, vector<4x32xbf16>
    %108 = vector.broadcast %47 : vector<4x1xbf16> to vector<4x32xbf16>
    %109 = arith.mulf %107, %108 : vector<4x32xbf16>
    %c6_78 = arith.constant 6 : index
    %c0_79 = arith.constant 0 : index
    %c0_80 = arith.constant 0 : index
    %110 = vector.load %arg11[%c6_78, %c0_79, %c0_80] : memref<27x32x32xbf16, #tpu.memory_space<vmem>>, vector<1x32x32xbf16>
    %111 = vector.shape_cast %110 : vector<1x32x32xbf16> to vector<32x32xbf16>
    %cst_81 = arith.constant dense<0.000000e+00> : vector<4x32xf32>
    %112 = tpu.matmul %109, %111, %cst_81 {dimension_numbers = #tpu.dot_dimension_numbers<[1], [0], [0], [1], [0, 0, 1, 1], [], []>} : vector<4x32xbf16>, vector<32x32xbf16>, vector<4x32xf32> -> vector<4x32xf32>
    %113 = arith.addf %106, %112 : vector<4x32xf32>
    %c10 = arith.constant 10 : index
    %c0_82 = arith.constant 0 : index
    %114 = vector.load %arg17[%c10, %c0_82] : memref<16x32xbf16, #tpu.memory_space<vmem>>, vector<4x32xbf16>
    %c7_83 = arith.constant 7 : index
    %c0_84 = arith.constant 0 : index
    %c0_85 = arith.constant 0 : index
    %115 = vector.load %arg11[%c7_83, %c0_84, %c0_85] : memref<27x32x32xbf16, #tpu.memory_space<vmem>>, vector<1x32x32xbf16>
    %116 = vector.shape_cast %115 : vector<1x32x32xbf16> to vector<32x32xbf16>
    %cst_86 = arith.constant dense<0.000000e+00> : vector<4x32xf32>
    %117 = tpu.matmul %114, %116, %cst_86 {dimension_numbers = #tpu.dot_dimension_numbers<[1], [0], [0], [1], [0, 0, 1, 1], [], []>} : vector<4x32xbf16>, vector<32x32xbf16>, vector<4x32xf32> -> vector<4x32xf32>
    %118 = arith.addf %113, %117 : vector<4x32xf32>
    %c11 = arith.constant 11 : index
    %c0_87 = arith.constant 0 : index
    %119 = vector.load %arg17[%c11, %c0_87] : memref<16x32xbf16, #tpu.memory_space<vmem>>, vector<4x32xbf16>
    %120 = vector.broadcast %49 : vector<4x1xbf16> to vector<4x32xbf16>
    %121 = arith.mulf %119, %120 : vector<4x32xbf16>
    %c8_88 = arith.constant 8 : index
    %c0_89 = arith.constant 0 : index
    %c0_90 = arith.constant 0 : index
    %122 = vector.load %arg11[%c8_88, %c0_89, %c0_90] : memref<27x32x32xbf16, #tpu.memory_space<vmem>>, vector<1x32x32xbf16>
    %123 = vector.shape_cast %122 : vector<1x32x32xbf16> to vector<32x32xbf16>
    %cst_91 = arith.constant dense<0.000000e+00> : vector<4x32xf32>
    %124 = tpu.matmul %121, %123, %cst_91 {dimension_numbers = #tpu.dot_dimension_numbers<[1], [0], [0], [1], [0, 0, 1, 1], [], []>} : vector<4x32xbf16>, vector<32x32xbf16>, vector<4x32xf32> -> vector<4x32xf32>
    %125 = arith.addf %118, %124 : vector<4x32xf32>
    %c0_92 = arith.constant 0 : index
    %c0_93 = arith.constant 0 : index
    %c0_94 = arith.constant 0 : index
    %126 = vector.load %arg12[%c0_92, %c0_93, %c0_94] : memref<3x1x32xf32, #tpu.memory_space<vmem>>, vector<1x1x32xf32>
    %127 = vector.shape_cast %126 : vector<1x1x32xf32> to vector<1x32xf32>
    %128 = vector.broadcast %127 : vector<1x32xf32> to vector<4x32xf32>
    %129 = arith.addf %125, %128 : vector<4x32xf32>
    %cst_95 = arith.constant 5.000000e-01 : f32
    %130 = vector.broadcast %cst_95 : f32 to vector<4x32xf32>
    %131 = arith.mulf %130, %129 : vector<4x32xf32>
    %cst_96 = arith.constant 5.000000e-01 : f32
    %132 = vector.broadcast %cst_96 : f32 to vector<4x32xf32>
    %133 = arith.mulf %132, %129 : vector<4x32xf32>
    %134 = math.tanh %133 : vector<4x32xf32>
    %cst_97 = arith.constant 1.000000e+00 : f32
    %135 = vector.broadcast %cst_97 : f32 to vector<4x32xf32>
    %136 = arith.addf %135, %134 : vector<4x32xf32>
    %137 = arith.mulf %131, %136 : vector<4x32xf32>
    %138 = arith.addf %28, %137 : vector<4x32xf32>
    %139 = arith.truncf %138 : vector<4x32xf32> to vector<4x32xbf16>
    %c1_98 = arith.constant 1 : index
    %c0_99 = arith.constant 0 : index
    %c0_100 = arith.constant 0 : index
    %140 = vector.load %arg9[%c1_98, %c0_99, %c0_100] : memref<3x32x32xbf16, #tpu.memory_space<vmem>>, vector<1x32x32xbf16>
    %141 = vector.shape_cast %140 : vector<1x32x32xbf16> to vector<32x32xbf16>
    %cst_101 = arith.constant dense<0.000000e+00> : vector<4x32xf32>
    %142 = tpu.matmul %139, %141, %cst_101 {dimension_numbers = #tpu.dot_dimension_numbers<[1], [0], [0], [1], [0, 0, 1, 1], [], []>} : vector<4x32xbf16>, vector<32x32xbf16>, vector<4x32xf32> -> vector<4x32xf32>
    %c1_102 = arith.constant 1 : index
    %c0_103 = arith.constant 0 : index
    %c0_104 = arith.constant 0 : index
    %143 = vector.load %arg10[%c1_102, %c0_103, %c0_104] : memref<3x1x32xf32, #tpu.memory_space<vmem>>, vector<1x1x32xf32>
    %144 = vector.shape_cast %143 : vector<1x1x32xf32> to vector<1x32xf32>
    %145 = vector.broadcast %144 : vector<1x32xf32> to vector<4x32xf32>
    %146 = arith.addf %142, %145 : vector<4x32xf32>
    %cst_105 = arith.constant 5.000000e-01 : f32
    %147 = vector.broadcast %cst_105 : f32 to vector<4x32xf32>
    %148 = arith.mulf %147, %146 : vector<4x32xf32>
    %cst_106 = arith.constant 5.000000e-01 : f32
    %149 = vector.broadcast %cst_106 : f32 to vector<4x32xf32>
    %150 = arith.mulf %149, %146 : vector<4x32xf32>
    %151 = math.tanh %150 : vector<4x32xf32>
    %cst_107 = arith.constant 1.000000e+00 : f32
    %152 = vector.broadcast %cst_107 : f32 to vector<4x32xf32>
    %153 = arith.addf %152, %151 : vector<4x32xf32>
    %154 = arith.mulf %148, %153 : vector<4x32xf32>
    %155 = arith.truncf %154 : vector<4x32xf32> to vector<4x32xbf16>
    %c8_108 = arith.constant 8 : index
    %c0_109 = arith.constant 0 : index
    %156 = vector.load %arg17[%c8_108, %c0_109] : memref<16x32xbf16, #tpu.memory_space<vmem>>, vector<4x32xbf16>
    tpu.vector_store %arg17[%c8_108, %c0_109], %155 {strides = array<i32>} : memref<16x32xbf16, #tpu.memory_space<vmem>>, vector<4x32xbf16>,
    %cst_110 = arith.constant 0.000000e+00 : f32
    %157 = vector.broadcast %cst_110 : f32 to vector<4x32xf32>
    %c5_111 = arith.constant 5 : index
    %c0_112 = arith.constant 0 : index
    %158 = vector.load %arg17[%c5_111, %c0_112] : memref<16x32xbf16, #tpu.memory_space<vmem>>, vector<4x32xbf16>
    %159 = vector.broadcast %47 : vector<4x1xbf16> to vector<4x32xbf16>
    %160 = arith.mulf %158, %159 : vector<4x32xbf16>
    %c9_113 = arith.constant 9 : index
    %c0_114 = arith.constant 0 : index
    %c0_115 = arith.constant 0 : index
    %161 = vector.load %arg11[%c9_113, %c0_114, %c0_115] : memref<27x32x32xbf16, #tpu.memory_space<vmem>>, vector<1x32x32xbf16>
    %162 = vector.shape_cast %161 : vector<1x32x32xbf16> to vector<32x32xbf16>
    %cst_116 = arith.constant dense<0.000000e+00> : vector<4x32xf32>
    %163 = tpu.matmul %160, %162, %cst_116 {dimension_numbers = #tpu.dot_dimension_numbers<[1], [0], [0], [1], [0, 0, 1, 1], [], []>} : vector<4x32xbf16>, vector<32x32xbf16>, vector<4x32xf32> -> vector<4x32xf32>
    %164 = arith.addf %157, %163 : vector<4x32xf32>
    %c6_117 = arith.constant 6 : index
    %c0_118 = arith.constant 0 : index
    %165 = vector.load %arg17[%c6_117, %c0_118] : memref<16x32xbf16, #tpu.memory_space<vmem>>, vector<4x32xbf16>
    %c10_119 = arith.constant 10 : index
    %c0_120 = arith.constant 0 : index
    %c0_121 = arith.constant 0 : index
    %166 = vector.load %arg11[%c10_119, %c0_120, %c0_121] : memref<27x32x32xbf16, #tpu.memory_space<vmem>>, vector<1x32x32xbf16>
    %167 = vector.shape_cast %166 : vector<1x32x32xbf16> to vector<32x32xbf16>
    %cst_122 = arith.constant dense<0.000000e+00> : vector<4x32xf32>
    %168 = tpu.matmul %165, %167, %cst_122 {dimension_numbers = #tpu.dot_dimension_numbers<[1], [0], [0], [1], [0, 0, 1, 1], [], []>} : vector<4x32xbf16>, vector<32x32xbf16>, vector<4x32xf32> -> vector<4x32xf32>
    %169 = arith.addf %164, %168 : vector<4x32xf32>
    %c7_123 = arith.constant 7 : index
    %c0_124 = arith.constant 0 : index
    %170 = vector.load %arg17[%c7_123, %c0_124] : memref<16x32xbf16, #tpu.memory_space<vmem>>, vector<4x32xbf16>
    %171 = vector.broadcast %49 : vector<4x1xbf16> to vector<4x32xbf16>
    %172 = arith.mulf %170, %171 : vector<4x32xbf16>
    %c11_125 = arith.constant 11 : index
    %c0_126 = arith.constant 0 : index
    %c0_127 = arith.constant 0 : index
    %173 = vector.load %arg11[%c11_125, %c0_126, %c0_127] : memref<27x32x32xbf16, #tpu.memory_space<vmem>>, vector<1x32x32xbf16>
    %174 = vector.shape_cast %173 : vector<1x32x32xbf16> to vector<32x32xbf16>
    %cst_128 = arith.constant dense<0.000000e+00> : vector<4x32xf32>
    %175 = tpu.matmul %172, %174, %cst_128 {dimension_numbers = #tpu.dot_dimension_numbers<[1], [0], [0], [1], [0, 0, 1, 1], [], []>} : vector<4x32xbf16>, vector<32x32xbf16>, vector<4x32xf32> -> vector<4x32xf32>
    %176 = arith.addf %169, %175 : vector<4x32xf32>
    %c7_129 = arith.constant 7 : index
    %c0_130 = arith.constant 0 : index
    %177 = vector.load %arg17[%c7_129, %c0_130] : memref<16x32xbf16, #tpu.memory_space<vmem>>, vector<4x32xbf16>
    %178 = vector.broadcast %47 : vector<4x1xbf16> to vector<4x32xbf16>
    %179 = arith.mulf %177, %178 : vector<4x32xbf16>
    %c12_131 = arith.constant 12 : index
    %c0_132 = arith.constant 0 : index
    %c0_133 = arith.constant 0 : index
    %180 = vector.load %arg11[%c12_131, %c0_132, %c0_133] : memref<27x32x32xbf16, #tpu.memory_space<vmem>>, vector<1x32x32xbf16>
    %181 = vector.shape_cast %180 : vector<1x32x32xbf16> to vector<32x32xbf16>
    %cst_134 = arith.constant dense<0.000000e+00> : vector<4x32xf32>
    %182 = tpu.matmul %179, %181, %cst_134 {dimension_numbers = #tpu.dot_dimension_numbers<[1], [0], [0], [1], [0, 0, 1, 1], [], []>} : vector<4x32xbf16>, vector<32x32xbf16>, vector<4x32xf32> -> vector<4x32xf32>
    %183 = arith.addf %176, %182 : vector<4x32xf32>
    %c8_135 = arith.constant 8 : index
    %c0_136 = arith.constant 0 : index
    %184 = vector.load %arg17[%c8_135, %c0_136] : memref<16x32xbf16, #tpu.memory_space<vmem>>, vector<4x32xbf16>
    %c13 = arith.constant 13 : index
    %c0_137 = arith.constant 0 : index
    %c0_138 = arith.constant 0 : index
    %185 = vector.load %arg11[%c13, %c0_137, %c0_138] : memref<27x32x32xbf16, #tpu.memory_space<vmem>>, vector<1x32x32xbf16>
    %186 = vector.shape_cast %185 : vector<1x32x32xbf16> to vector<32x32xbf16>
    %cst_139 = arith.constant dense<0.000000e+00> : vector<4x32xf32>
    %187 = tpu.matmul %184, %186, %cst_139 {dimension_numbers = #tpu.dot_dimension_numbers<[1], [0], [0], [1], [0, 0, 1, 1], [], []>} : vector<4x32xbf16>, vector<32x32xbf16>, vector<4x32xf32> -> vector<4x32xf32>
    %188 = arith.addf %183, %187 : vector<4x32xf32>
    %c9_140 = arith.constant 9 : index
    %c0_141 = arith.constant 0 : index
    %189 = vector.load %arg17[%c9_140, %c0_141] : memref<16x32xbf16, #tpu.memory_space<vmem>>, vector<4x32xbf16>
    %190 = vector.broadcast %49 : vector<4x1xbf16> to vector<4x32xbf16>
    %191 = arith.mulf %189, %190 : vector<4x32xbf16>
    %c14 = arith.constant 14 : index
    %c0_142 = arith.constant 0 : index
    %c0_143 = arith.constant 0 : index
    %192 = vector.load %arg11[%c14, %c0_142, %c0_143] : memref<27x32x32xbf16, #tpu.memory_space<vmem>>, vector<1x32x32xbf16>
    %193 = vector.shape_cast %192 : vector<1x32x32xbf16> to vector<32x32xbf16>
    %cst_144 = arith.constant dense<0.000000e+00> : vector<4x32xf32>
    %194 = tpu.matmul %191, %193, %cst_144 {dimension_numbers = #tpu.dot_dimension_numbers<[1], [0], [0], [1], [0, 0, 1, 1], [], []>} : vector<4x32xbf16>, vector<32x32xbf16>, vector<4x32xf32> -> vector<4x32xf32>
    %195 = arith.addf %188, %194 : vector<4x32xf32>
    %c9_145 = arith.constant 9 : index
    %c0_146 = arith.constant 0 : index
    %196 = vector.load %arg17[%c9_145, %c0_146] : memref<16x32xbf16, #tpu.memory_space<vmem>>, vector<4x32xbf16>
    %197 = vector.broadcast %47 : vector<4x1xbf16> to vector<4x32xbf16>
    %198 = arith.mulf %196, %197 : vector<4x32xbf16>
    %c15 = arith.constant 15 : index
    %c0_147 = arith.constant 0 : index
    %c0_148 = arith.constant 0 : index
    %199 = vector.load %arg11[%c15, %c0_147, %c0_148] : memref<27x32x32xbf16, #tpu.memory_space<vmem>>, vector<1x32x32xbf16>
    %200 = vector.shape_cast %199 : vector<1x32x32xbf16> to vector<32x32xbf16>
    %cst_149 = arith.constant dense<0.000000e+00> : vector<4x32xf32>
    %201 = tpu.matmul %198, %200, %cst_149 {dimension_numbers = #tpu.dot_dimension_numbers<[1], [0], [0], [1], [0, 0, 1, 1], [], []>} : vector<4x32xbf16>, vector<32x32xbf16>, vector<4x32xf32> -> vector<4x32xf32>
    %202 = arith.addf %195, %201 : vector<4x32xf32>
    %c10_150 = arith.constant 10 : index
    %c0_151 = arith.constant 0 : index
    %203 = vector.load %arg17[%c10_150, %c0_151] : memref<16x32xbf16, #tpu.memory_space<vmem>>, vector<4x32xbf16>
    %c16 = arith.constant 16 : index
    %c0_152 = arith.constant 0 : index
    %c0_153 = arith.constant 0 : index
    %204 = vector.load %arg11[%c16, %c0_152, %c0_153] : memref<27x32x32xbf16, #tpu.memory_space<vmem>>, vector<1x32x32xbf16>
    %205 = vector.shape_cast %204 : vector<1x32x32xbf16> to vector<32x32xbf16>
    %cst_154 = arith.constant dense<0.000000e+00> : vector<4x32xf32>
    %206 = tpu.matmul %203, %205, %cst_154 {dimension_numbers = #tpu.dot_dimension_numbers<[1], [0], [0], [1], [0, 0, 1, 1], [], []>} : vector<4x32xbf16>, vector<32x32xbf16>, vector<4x32xf32> -> vector<4x32xf32>
    %207 = arith.addf %202, %206 : vector<4x32xf32>
    %c11_155 = arith.constant 11 : index
    %c0_156 = arith.constant 0 : index
    %208 = vector.load %arg17[%c11_155, %c0_156] : memref<16x32xbf16, #tpu.memory_space<vmem>>, vector<4x32xbf16>
    %209 = vector.broadcast %49 : vector<4x1xbf16> to vector<4x32xbf16>
    %210 = arith.mulf %208, %209 : vector<4x32xbf16>
    %c17 = arith.constant 17 : index
    %c0_157 = arith.constant 0 : index
    %c0_158 = arith.constant 0 : index
    %211 = vector.load %arg11[%c17, %c0_157, %c0_158] : memref<27x32x32xbf16, #tpu.memory_space<vmem>>, vector<1x32x32xbf16>
    %212 = vector.shape_cast %211 : vector<1x32x32xbf16> to vector<32x32xbf16>
    %cst_159 = arith.constant dense<0.000000e+00> : vector<4x32xf32>
    %213 = tpu.matmul %210, %212, %cst_159 {dimension_numbers = #tpu.dot_dimension_numbers<[1], [0], [0], [1], [0, 0, 1, 1], [], []>} : vector<4x32xbf16>, vector<32x32xbf16>, vector<4x32xf32> -> vector<4x32xf32>
    %214 = arith.addf %207, %213 : vector<4x32xf32>
    %c1_160 = arith.constant 1 : index
    %c0_161 = arith.constant 0 : index
    %c0_162 = arith.constant 0 : index
    %215 = vector.load %arg12[%c1_160, %c0_161, %c0_162] : memref<3x1x32xf32, #tpu.memory_space<vmem>>, vector<1x1x32xf32>
    %216 = vector.shape_cast %215 : vector<1x1x32xf32> to vector<1x32xf32>
    %217 = vector.broadcast %216 : vector<1x32xf32> to vector<4x32xf32>
    %218 = arith.addf %214, %217 : vector<4x32xf32>
    %cst_163 = arith.constant 5.000000e-01 : f32
    %219 = vector.broadcast %cst_163 : f32 to vector<4x32xf32>
    %220 = arith.mulf %219, %218 : vector<4x32xf32>
    %cst_164 = arith.constant 5.000000e-01 : f32
    %221 = vector.broadcast %cst_164 : f32 to vector<4x32xf32>
    %222 = arith.mulf %221, %218 : vector<4x32xf32>
    %223 = math.tanh %222 : vector<4x32xf32>
    %cst_165 = arith.constant 1.000000e+00 : f32
    %224 = vector.broadcast %cst_165 : f32 to vector<4x32xf32>
    %225 = arith.addf %224, %223 : vector<4x32xf32>
    %226 = arith.mulf %220, %225 : vector<4x32xf32>
    %227 = arith.addf %138, %226 : vector<4x32xf32>
    %228 = arith.truncf %227 : vector<4x32xf32> to vector<4x32xbf16>
    %c2_166 = arith.constant 2 : index
    %c0_167 = arith.constant 0 : index
    %c0_168 = arith.constant 0 : index
    %229 = vector.load %arg9[%c2_166, %c0_167, %c0_168] : memref<3x32x32xbf16, #tpu.memory_space<vmem>>, vector<1x32x32xbf16>
    %230 = vector.shape_cast %229 : vector<1x32x32xbf16> to vector<32x32xbf16>
    %cst_169 = arith.constant dense<0.000000e+00> : vector<4x32xf32>
    %231 = tpu.matmul %228, %230, %cst_169 {dimension_numbers = #tpu.dot_dimension_numbers<[1], [0], [0], [1], [0, 0, 1, 1], [], []>} : vector<4x32xbf16>, vector<32x32xbf16>, vector<4x32xf32> -> vector<4x32xf32>
    %c2_170 = arith.constant 2 : index
    %c0_171 = arith.constant 0 : index
    %c0_172 = arith.constant 0 : index
    %232 = vector.load %arg10[%c2_170, %c0_171, %c0_172] : memref<3x1x32xf32, #tpu.memory_space<vmem>>, vector<1x1x32xf32>
    %233 = vector.shape_cast %232 : vector<1x1x32xf32> to vector<1x32xf32>
    %234 = vector.broadcast %233 : vector<1x32xf32> to vector<4x32xf32>
    %235 = arith.addf %231, %234 : vector<4x32xf32>
    %cst_173 = arith.constant 5.000000e-01 : f32
    %236 = vector.broadcast %cst_173 : f32 to vector<4x32xf32>
    %237 = arith.mulf %236, %235 : vector<4x32xf32>
    %cst_174 = arith.constant 5.000000e-01 : f32
    %238 = vector.broadcast %cst_174 : f32 to vector<4x32xf32>
    %239 = arith.mulf %238, %235 : vector<4x32xf32>
    %240 = math.tanh %239 : vector<4x32xf32>
    %cst_175 = arith.constant 1.000000e+00 : f32
    %241 = vector.broadcast %cst_175 : f32 to vector<4x32xf32>
    %242 = arith.addf %241, %240 : vector<4x32xf32>
    %243 = arith.mulf %237, %242 : vector<4x32xf32>
    %244 = arith.truncf %243 : vector<4x32xf32> to vector<4x32xbf16>
    %c8_176 = arith.constant 8 : index
    %c0_177 = arith.constant 0 : index
    %245 = vector.load %arg17[%c8_176, %c0_177] : memref<16x32xbf16, #tpu.memory_space<vmem>>, vector<4x32xbf16>
    tpu.vector_store %arg17[%c8_176, %c0_177], %244 {strides = array<i32>} : memref<16x32xbf16, #tpu.memory_space<vmem>>, vector<4x32xbf16>,
    %cst_178 = arith.constant 0.000000e+00 : f32
    %246 = vector.broadcast %cst_178 : f32 to vector<4x32xf32>
    %c5_179 = arith.constant 5 : index
    %c0_180 = arith.constant 0 : index
    %247 = vector.load %arg17[%c5_179, %c0_180] : memref<16x32xbf16, #tpu.memory_space<vmem>>, vector<4x32xbf16>
    %248 = vector.broadcast %47 : vector<4x1xbf16> to vector<4x32xbf16>
    %249 = arith.mulf %247, %248 : vector<4x32xbf16>
    %c18 = arith.constant 18 : index
    %c0_181 = arith.constant 0 : index
    %c0_182 = arith.constant 0 : index
    %250 = vector.load %arg11[%c18, %c0_181, %c0_182] : memref<27x32x32xbf16, #tpu.memory_space<vmem>>, vector<1x32x32xbf16>
    %251 = vector.shape_cast %250 : vector<1x32x32xbf16> to vector<32x32xbf16>
    %cst_183 = arith.constant dense<0.000000e+00> : vector<4x32xf32>
    %252 = tpu.matmul %249, %251, %cst_183 {dimension_numbers = #tpu.dot_dimension_numbers<[1], [0], [0], [1], [0, 0, 1, 1], [], []>} : vector<4x32xbf16>, vector<32x32xbf16>, vector<4x32xf32> -> vector<4x32xf32>
    %253 = arith.addf %246, %252 : vector<4x32xf32>
    %c6_184 = arith.constant 6 : index
    %c0_185 = arith.constant 0 : index
    %254 = vector.load %arg17[%c6_184, %c0_185] : memref<16x32xbf16, #tpu.memory_space<vmem>>, vector<4x32xbf16>
    %c19 = arith.constant 19 : index
    %c0_186 = arith.constant 0 : index
    %c0_187 = arith.constant 0 : index
    %255 = vector.load %arg11[%c19, %c0_186, %c0_187] : memref<27x32x32xbf16, #tpu.memory_space<vmem>>, vector<1x32x32xbf16>
    %256 = vector.shape_cast %255 : vector<1x32x32xbf16> to vector<32x32xbf16>
    %cst_188 = arith.constant dense<0.000000e+00> : vector<4x32xf32>
    %257 = tpu.matmul %254, %256, %cst_188 {dimension_numbers = #tpu.dot_dimension_numbers<[1], [0], [0], [1], [0, 0, 1, 1], [], []>} : vector<4x32xbf16>, vector<32x32xbf16>, vector<4x32xf32> -> vector<4x32xf32>
    %258 = arith.addf %253, %257 : vector<4x32xf32>
    %c7_189 = arith.constant 7 : index
    %c0_190 = arith.constant 0 : index
    %259 = vector.load %arg17[%c7_189, %c0_190] : memref<16x32xbf16, #tpu.memory_space<vmem>>, vector<4x32xbf16>
    %260 = vector.broadcast %49 : vector<4x1xbf16> to vector<4x32xbf16>
    %261 = arith.mulf %259, %260 : vector<4x32xbf16>
    %c20 = arith.constant 20 : index
    %c0_191 = arith.constant 0 : index
    %c0_192 = arith.constant 0 : index
    %262 = vector.load %arg11[%c20, %c0_191, %c0_192] : memref<27x32x32xbf16, #tpu.memory_space<vmem>>, vector<1x32x32xbf16>
    %263 = vector.shape_cast %262 : vector<1x32x32xbf16> to vector<32x32xbf16>
    %cst_193 = arith.constant dense<0.000000e+00> : vector<4x32xf32>
    %264 = tpu.matmul %261, %263, %cst_193 {dimension_numbers = #tpu.dot_dimension_numbers<[1], [0], [0], [1], [0, 0, 1, 1], [], []>} : vector<4x32xbf16>, vector<32x32xbf16>, vector<4x32xf32> -> vector<4x32xf32>
    %265 = arith.addf %258, %264 : vector<4x32xf32>
    %c7_194 = arith.constant 7 : index
    %c0_195 = arith.constant 0 : index
    %266 = vector.load %arg17[%c7_194, %c0_195] : memref<16x32xbf16, #tpu.memory_space<vmem>>, vector<4x32xbf16>
    %267 = vector.broadcast %47 : vector<4x1xbf16> to vector<4x32xbf16>
    %268 = arith.mulf %266, %267 : vector<4x32xbf16>
    %c21 = arith.constant 21 : index
    %c0_196 = arith.constant 0 : index
    %c0_197 = arith.constant 0 : index
    %269 = vector.load %arg11[%c21, %c0_196, %c0_197] : memref<27x32x32xbf16, #tpu.memory_space<vmem>>, vector<1x32x32xbf16>
    %270 = vector.shape_cast %269 : vector<1x32x32xbf16> to vector<32x32xbf16>
    %cst_198 = arith.constant dense<0.000000e+00> : vector<4x32xf32>
    %271 = tpu.matmul %268, %270, %cst_198 {dimension_numbers = #tpu.dot_dimension_numbers<[1], [0], [0], [1], [0, 0, 1, 1], [], []>} : vector<4x32xbf16>, vector<32x32xbf16>, vector<4x32xf32> -> vector<4x32xf32>
    %272 = arith.addf %265, %271 : vector<4x32xf32>
    %c8_199 = arith.constant 8 : index
    %c0_200 = arith.constant 0 : index
    %273 = vector.load %arg17[%c8_199, %c0_200] : memref<16x32xbf16, #tpu.memory_space<vmem>>, vector<4x32xbf16>
    %c22 = arith.constant 22 : index
    %c0_201 = arith.constant 0 : index
    %c0_202 = arith.constant 0 : index
    %274 = vector.load %arg11[%c22, %c0_201, %c0_202] : memref<27x32x32xbf16, #tpu.memory_space<vmem>>, vector<1x32x32xbf16>
    %275 = vector.shape_cast %274 : vector<1x32x32xbf16> to vector<32x32xbf16>
    %cst_203 = arith.constant dense<0.000000e+00> : vector<4x32xf32>
    %276 = tpu.matmul %273, %275, %cst_203 {dimension_numbers = #tpu.dot_dimension_numbers<[1], [0], [0], [1], [0, 0, 1, 1], [], []>} : vector<4x32xbf16>, vector<32x32xbf16>, vector<4x32xf32> -> vector<4x32xf32>
    %277 = arith.addf %272, %276 : vector<4x32xf32>
    %c9_204 = arith.constant 9 : index
    %c0_205 = arith.constant 0 : index
    %278 = vector.load %arg17[%c9_204, %c0_205] : memref<16x32xbf16, #tpu.memory_space<vmem>>, vector<4x32xbf16>
    %279 = vector.broadcast %49 : vector<4x1xbf16> to vector<4x32xbf16>
    %280 = arith.mulf %278, %279 : vector<4x32xbf16>
    %c23 = arith.constant 23 : index
    %c0_206 = arith.constant 0 : index
    %c0_207 = arith.constant 0 : index
    %281 = vector.load %arg11[%c23, %c0_206, %c0_207] : memref<27x32x32xbf16, #tpu.memory_space<vmem>>, vector<1x32x32xbf16>
    %282 = vector.shape_cast %281 : vector<1x32x32xbf16> to vector<32x32xbf16>
    %cst_208 = arith.constant dense<0.000000e+00> : vector<4x32xf32>
    %283 = tpu.matmul %280, %282, %cst_208 {dimension_numbers = #tpu.dot_dimension_numbers<[1], [0], [0], [1], [0, 0, 1, 1], [], []>} : vector<4x32xbf16>, vector<32x32xbf16>, vector<4x32xf32> -> vector<4x32xf32>
    %284 = arith.addf %277, %283 : vector<4x32xf32>
    %c9_209 = arith.constant 9 : index
    %c0_210 = arith.constant 0 : index
    %285 = vector.load %arg17[%c9_209, %c0_210] : memref<16x32xbf16, #tpu.memory_space<vmem>>, vector<4x32xbf16>
    %286 = vector.broadcast %47 : vector<4x1xbf16> to vector<4x32xbf16>
    %287 = arith.mulf %285, %286 : vector<4x32xbf16>
    %c24 = arith.constant 24 : index
    %c0_211 = arith.constant 0 : index
    %c0_212 = arith.constant 0 : index
    %288 = vector.load %arg11[%c24, %c0_211, %c0_212] : memref<27x32x32xbf16, #tpu.memory_space<vmem>>, vector<1x32x32xbf16>
    %289 = vector.shape_cast %288 : vector<1x32x32xbf16> to vector<32x32xbf16>
    %cst_213 = arith.constant dense<0.000000e+00> : vector<4x32xf32>
    %290 = tpu.matmul %287, %289, %cst_213 {dimension_numbers = #tpu.dot_dimension_numbers<[1], [0], [0], [1], [0, 0, 1, 1], [], []>} : vector<4x32xbf16>, vector<32x32xbf16>, vector<4x32xf32> -> vector<4x32xf32>
    %291 = arith.addf %284, %290 : vector<4x32xf32>
    %c10_214 = arith.constant 10 : index
    %c0_215 = arith.constant 0 : index
    %292 = vector.load %arg17[%c10_214, %c0_215] : memref<16x32xbf16, #tpu.memory_space<vmem>>, vector<4x32xbf16>
    %c25 = arith.constant 25 : index
    %c0_216 = arith.constant 0 : index
    %c0_217 = arith.constant 0 : index
    %293 = vector.load %arg11[%c25, %c0_216, %c0_217] : memref<27x32x32xbf16, #tpu.memory_space<vmem>>, vector<1x32x32xbf16>
    %294 = vector.shape_cast %293 : vector<1x32x32xbf16> to vector<32x32xbf16>
    %cst_218 = arith.constant dense<0.000000e+00> : vector<4x32xf32>
    %295 = tpu.matmul %292, %294, %cst_218 {dimension_numbers = #tpu.dot_dimension_numbers<[1], [0], [0], [1], [0, 0, 1, 1], [], []>} : vector<4x32xbf16>, vector<32x32xbf16>, vector<4x32xf32> -> vector<4x32xf32>
    %296 = arith.addf %291, %295 : vector<4x32xf32>
    %c11_219 = arith.constant 11 : index
    %c0_220 = arith.constant 0 : index
    %297 = vector.load %arg17[%c11_219, %c0_220] : memref<16x32xbf16, #tpu.memory_space<vmem>>, vector<4x32xbf16>
    %298 = vector.broadcast %49 : vector<4x1xbf16> to vector<4x32xbf16>
    %299 = arith.mulf %297, %298 : vector<4x32xbf16>
    %c26 = arith.constant 26 : index
    %c0_221 = arith.constant 0 : index
    %c0_222 = arith.constant 0 : index
    %300 = vector.load %arg11[%c26, %c0_221, %c0_222] : memref<27x32x32xbf16, #tpu.memory_space<vmem>>, vector<1x32x32xbf16>
    %301 = vector.shape_cast %300 : vector<1x32x32xbf16> to vector<32x32xbf16>
    %cst_223 = arith.constant dense<0.000000e+00> : vector<4x32xf32>
    %302 = tpu.matmul %299, %301, %cst_223 {dimension_numbers = #tpu.dot_dimension_numbers<[1], [0], [0], [1], [0, 0, 1, 1], [], []>} : vector<4x32xbf16>, vector<32x32xbf16>, vector<4x32xf32> -> vector<4x32xf32>
    %303 = arith.addf %296, %302 : vector<4x32xf32>
    %c2_224 = arith.constant 2 : index
    %c0_225 = arith.constant 0 : index
    %c0_226 = arith.constant 0 : index
    %304 = vector.load %arg12[%c2_224, %c0_225, %c0_226] : memref<3x1x32xf32, #tpu.memory_space<vmem>>, vector<1x1x32xf32>
    %305 = vector.shape_cast %304 : vector<1x1x32xf32> to vector<1x32xf32>
    %306 = vector.broadcast %305 : vector<1x32xf32> to vector<4x32xf32>
    %307 = arith.addf %303, %306 : vector<4x32xf32>
    %cst_227 = arith.constant 5.000000e-01 : f32
    %308 = vector.broadcast %cst_227 : f32 to vector<4x32xf32>
    %309 = arith.mulf %308, %307 : vector<4x32xf32>
    %cst_228 = arith.constant 5.000000e-01 : f32
    %310 = vector.broadcast %cst_228 : f32 to vector<4x32xf32>
    %311 = arith.mulf %310, %307 : vector<4x32xf32>
    %312 = math.tanh %311 : vector<4x32xf32>
    %cst_229 = arith.constant 1.000000e+00 : f32
    %313 = vector.broadcast %cst_229 : f32 to vector<4x32xf32>
    %314 = arith.addf %313, %312 : vector<4x32xf32>
    %315 = arith.mulf %309, %314 : vector<4x32xf32>
    %316 = arith.addf %227, %315 : vector<4x32xf32>
    %317 = arith.truncf %316 : vector<4x32xf32> to vector<4x32xbf16>
    %c0_230 = arith.constant 0 : index
    %c0_231 = arith.constant 0 : index
    %318 = vector.load %arg13[%c0_230, %c0_231] : memref<32x64xbf16, #tpu.memory_space<vmem>>, vector<32x64xbf16>
    %cst_232 = arith.constant dense<0.000000e+00> : vector<4x64xf32>
    %319 = tpu.matmul %317, %318, %cst_232 {dimension_numbers = #tpu.dot_dimension_numbers<[1], [0], [0], [1], [0, 0, 1, 1], [], []>} : vector<4x32xbf16>, vector<32x64xbf16>, vector<4x64xf32> -> vector<4x64xf32>
    %320 = arith.truncf %41 : vector<4x32xf32> to vector<4x32xbf16>
    %c0_233 = arith.constant 0 : index
    %c0_234 = arith.constant 0 : index
    %321 = vector.load %arg14[%c0_233, %c0_234] : memref<32x64xbf16, #tpu.memory_space<vmem>>, vector<32x64xbf16>
    %cst_235 = arith.constant dense<0.000000e+00> : vector<4x64xf32>
    %322 = tpu.matmul %320, %321, %cst_235 {dimension_numbers = #tpu.dot_dimension_numbers<[1], [0], [0], [1], [0, 0, 1, 1], [], []>} : vector<4x32xbf16>, vector<32x64xbf16>, vector<4x64xf32> -> vector<4x64xf32>
    %323 = arith.addf %319, %322 : vector<4x64xf32>
    %c0_236 = arith.constant 0 : index
    %c0_237 = arith.constant 0 : index
    %324 = vector.load %arg15[%c0_236, %c0_237] : memref<1x64xf32, #tpu.memory_space<vmem>>, vector<1x64xf32>
    %325 = vector.broadcast %324 : vector<1x64xf32> to vector<4x64xf32>
    %326 = arith.addf %323, %325 : vector<4x64xf32>
    %cst_238 = arith.constant 5.000000e-01 : f32
    %327 = vector.broadcast %cst_238 : f32 to vector<4x64xf32>
    %328 = arith.mulf %327, %326 : vector<4x64xf32>
    %cst_239 = arith.constant 5.000000e-01 : f32
    %329 = vector.broadcast %cst_239 : f32 to vector<4x64xf32>
    %330 = arith.mulf %329, %326 : vector<4x64xf32>
    %331 = math.tanh %330 : vector<4x64xf32>
    %cst_240 = arith.constant 1.000000e+00 : f32
    %332 = vector.broadcast %cst_240 : f32 to vector<4x64xf32>
    %333 = arith.addf %332, %331 : vector<4x64xf32>
    %334 = arith.mulf %328, %333 : vector<4x64xf32>
    %335 = arith.truncf %334 : vector<4x64xf32> to vector<4x64xbf16>
    %c0_241 = arith.constant 0 : index
    %c0_242 = arith.constant 0 : index
    %c0_243 = arith.constant 0 : index
    %336 = vector.load %arg16[%c0_241, %c0_242, %c0_243] : memref<1x4x64xbf16, #tpu.memory_space<vmem>>, vector<1x4x64xbf16>
    %337 = vector.shape_cast %336 : vector<1x4x64xbf16> to vector<4x64xbf16>
    %338 = vector.shape_cast %335 : vector<4x64xbf16> to vector<1x4x64xbf16>
    tpu.vector_store %arg16[%c0_241, %c0_242, %c0_243], %338 {strides = array<i32>} : memref<1x4x64xbf16, #tpu.memory_space<vmem>>, vector<1x4x64xbf16>,
    return
  }
  func.func @transform_0(%arg0: i32) -> (i32, i32, i32) {
    %c0_i32 = arith.constant 0 : i32
    %c0_i32_0 = arith.constant 0 : i32
    %c0_i32_1 = arith.constant 0 : i32
    return %arg0, %c0_i32, %c0_i32_0 : i32, i32, i32
  }
  func.func @transform_1(%arg0: i32) -> (i32, i32, i32) {
    %c0_i32 = arith.constant 0 : i32
    %c0_i32_0 = arith.constant 0 : i32
    %c0_i32_1 = arith.constant 0 : i32
    %c0_i32_2 = arith.constant 0 : i32
    return %c0_i32, %c0_i32_0, %c0_i32_1 : i32, i32, i32
  }
  func.func @transform_2(%arg0: i32) -> (i32, i32) {
    %c0_i32 = arith.constant 0 : i32
    %c0_i32_0 = arith.constant 0 : i32
    %c0_i32_1 = arith.constant 0 : i32
    return %c0_i32, %c0_i32_0 : i32, i32
  }
  func.func @transform_3(%arg0: i32) -> (i32, i32) {
    %c0_i32 = arith.constant 0 : i32
    %c0_i32_0 = arith.constant 0 : i32
    %c0_i32_1 = arith.constant 0 : i32
    return %c0_i32, %c0_i32_0 : i32, i32
  }
  func.func @transform_4(%arg0: i32) -> (i32, i32) {
    %c0_i32 = arith.constant 0 : i32
    %c0_i32_0 = arith.constant 0 : i32
    %c0_i32_1 = arith.constant 0 : i32
    return %c0_i32, %c0_i32_0 : i32, i32
  }
  func.func @transform_5(%arg0: i32) -> (i32, i32) {
    %c0_i32 = arith.constant 0 : i32
    %c0_i32_0 = arith.constant 0 : i32
    %c0_i32_1 = arith.constant 0 : i32
    return %c0_i32, %c0_i32_0 : i32, i32
  }
  func.func @transform_6(%arg0: i32) -> (i32, i32) {
    %c0_i32 = arith.constant 0 : i32
    %c0_i32_0 = arith.constant 0 : i32
    %c0_i32_1 = arith.constant 0 : i32
    return %c0_i32, %c0_i32_0 : i32, i32
  }
  func.func @transform_7(%arg0: i32) -> (i32, i32) {
    %c0_i32 = arith.constant 0 : i32
    %c0_i32_0 = arith.constant 0 : i32
    %c0_i32_1 = arith.constant 0 : i32
    return %c0_i32, %c0_i32_0 : i32, i32
  }
  func.func @transform_8(%arg0: i32) -> (i32, i32, i32) {
    %c0_i32 = arith.constant 0 : i32
    %c0_i32_0 = arith.constant 0 : i32
    %c0_i32_1 = arith.constant 0 : i32
    %c0_i32_2 = arith.constant 0 : i32
    return %c0_i32, %c0_i32_0, %c0_i32_1 : i32, i32, i32
  }
  func.func @transform_9(%arg0: i32) -> (i32, i32, i32) {
    %c0_i32 = arith.constant 0 : i32
    %c0_i32_0 = arith.constant 0 : i32
    %c0_i32_1 = arith.constant 0 : i32
    %c0_i32_2 = arith.constant 0 : i32
    return %c0_i32, %c0_i32_0, %c0_i32_1 : i32, i32, i32
  }
  func.func @transform_10(%arg0: i32) -> (i32, i32, i32) {
    %c0_i32 = arith.constant 0 : i32
    %c0_i32_0 = arith.constant 0 : i32
    %c0_i32_1 = arith.constant 0 : i32
    %c0_i32_2 = arith.constant 0 : i32
    return %c0_i32, %c0_i32_0, %c0_i32_1 : i32, i32, i32
  }
  func.func @transform_11(%arg0: i32) -> (i32, i32, i32) {
    %c0_i32 = arith.constant 0 : i32
    %c0_i32_0 = arith.constant 0 : i32
    %c0_i32_1 = arith.constant 0 : i32
    %c0_i32_2 = arith.constant 0 : i32
    return %c0_i32, %c0_i32_0, %c0_i32_1 : i32, i32, i32
  }
  func.func @transform_12(%arg0: i32) -> (i32, i32) {
    %c0_i32 = arith.constant 0 : i32
    %c0_i32_0 = arith.constant 0 : i32
    %c0_i32_1 = arith.constant 0 : i32
    return %c0_i32, %c0_i32_0 : i32, i32
  }
  func.func @transform_13(%arg0: i32) -> (i32, i32) {
    %c0_i32 = arith.constant 0 : i32
    %c0_i32_0 = arith.constant 0 : i32
    %c0_i32_1 = arith.constant 0 : i32
    return %c0_i32, %c0_i32_0 : i32, i32
  }
  func.func @transform_14(%arg0: i32) -> (i32, i32) {
    %c0_i32 = arith.constant 0 : i32
    %c0_i32_0 = arith.constant 0 : i32
    %c0_i32_1 = arith.constant 0 : i32
    return %c0_i32, %c0_i32_0 : i32, i32
  }
  func.func @transform_15(%arg0: i32) -> (i32, i32, i32) {
    %c0_i32 = arith.constant 0 : i32
    %c0_i32_0 = arith.constant 0 : i32
    %c0_i32_1 = arith.constant 0 : i32
    return %arg0, %c0_i32, %c0_i32_0 : i32, i32, i32
  }
}

module attributes {stable_mosaic.version = 11 : i64} {
  func.func @_csp_stage_kernel(%arg0: i32, %arg1: memref<1x1x576xbf16, #tpu.memory_space<vmem>>, %arg2: memref<2x1x1xbf16, #tpu.memory_space<vmem>>, %arg3: memref<576x128xbf16, #tpu.memory_space<vmem>>, %arg4: memref<1x128xf32, #tpu.memory_space<vmem>>, %arg5: memref<128x64xbf16, #tpu.memory_space<vmem>>, %arg6: memref<1x64xf32, #tpu.memory_space<vmem>>, %arg7: memref<128x64xbf16, #tpu.memory_space<vmem>>, %arg8: memref<1x64xf32, #tpu.memory_space<vmem>>, %arg9: memref<1x64x64xbf16, #tpu.memory_space<vmem>>, %arg10: memref<1x1x64xf32, #tpu.memory_space<vmem>>, %arg11: memref<9x64x64xbf16, #tpu.memory_space<vmem>>, %arg12: memref<1x1x64xf32, #tpu.memory_space<vmem>>, %arg13: memref<64x128xbf16, #tpu.memory_space<vmem>>, %arg14: memref<64x128xbf16, #tpu.memory_space<vmem>>, %arg15: memref<1x128xf32, #tpu.memory_space<vmem>>, %arg16: memref<1x1x128xbf16, #tpu.memory_space<vmem>>, %arg17: memref<16x64xbf16, #tpu.memory_space<vmem>>) attributes {dimension_semantics = [#tpu.dimension_semantics<parallel>], iteration_bounds = array<i64: 2>, scalar_prefetch = 0 : i64, scratch_operands = 1 : i64, tpu.core_type = #tpu.core_type<tc>, window_params = [{transform_indices = @transform_0, window_bounds = array<i64: 1, 1, 576>}, {pipeline_mode = #tpu.pipeline_mode<synchronous>, transform_indices = @transform_1, window_bounds = array<i64: 2, 1, 1>}, {pipeline_mode = #tpu.pipeline_mode<synchronous>, transform_indices = @transform_2, window_bounds = array<i64: 576, 128>}, {pipeline_mode = #tpu.pipeline_mode<synchronous>, transform_indices = @transform_3, window_bounds = array<i64: 1, 128>}, {pipeline_mode = #tpu.pipeline_mode<synchronous>, transform_indices = @transform_4, window_bounds = array<i64: 128, 64>}, {pipeline_mode = #tpu.pipeline_mode<synchronous>, transform_indices = @transform_5, window_bounds = array<i64: 1, 64>}, {pipeline_mode = #tpu.pipeline_mode<synchronous>, transform_indices = @transform_6, window_bounds = array<i64: 128, 64>}, {pipeline_mode = #tpu.pipeline_mode<synchronous>, transform_indices = @transform_7, window_bounds = array<i64: 1, 64>}, {pipeline_mode = #tpu.pipeline_mode<synchronous>, transform_indices = @transform_8, window_bounds = array<i64: 1, 64, 64>}, {pipeline_mode = #tpu.pipeline_mode<synchronous>, transform_indices = @transform_9, window_bounds = array<i64: 1, 1, 64>}, {pipeline_mode = #tpu.pipeline_mode<synchronous>, transform_indices = @transform_10, window_bounds = array<i64: 9, 64, 64>}, {pipeline_mode = #tpu.pipeline_mode<synchronous>, transform_indices = @transform_11, window_bounds = array<i64: 1, 1, 64>}, {pipeline_mode = #tpu.pipeline_mode<synchronous>, transform_indices = @transform_12, window_bounds = array<i64: 64, 128>}, {pipeline_mode = #tpu.pipeline_mode<synchronous>, transform_indices = @transform_13, window_bounds = array<i64: 64, 128>}, {pipeline_mode = #tpu.pipeline_mode<synchronous>, transform_indices = @transform_14, window_bounds = array<i64: 1, 128>}, {transform_indices = @transform_15, window_bounds = array<i64: 1, 1, 128>}]} {
    %c0 = arith.constant 0 : index
    %c0_0 = arith.constant 0 : index
    %c0_1 = arith.constant 0 : index
    %0 = vector.load %arg1[%c0, %c0_0, %c0_1] : memref<1x1x576xbf16, #tpu.memory_space<vmem>>, vector<1x1x576xbf16>
    %1 = vector.shape_cast %0 : vector<1x1x576xbf16> to vector<1x576xbf16>
    %c0_2 = arith.constant 0 : index
    %c0_3 = arith.constant 0 : index
    %2 = vector.load %arg3[%c0_2, %c0_3] : memref<576x128xbf16, #tpu.memory_space<vmem>>, vector<576x128xbf16>
    %cst = arith.constant dense<0.000000e+00> : vector<1x128xf32>
    %3 = tpu.matmul %1, %2, %cst {dimension_numbers = #tpu.dot_dimension_numbers<[1], [0], [0], [1], [0, 0, 1, 1], [], []>} : vector<1x576xbf16>, vector<576x128xbf16>, vector<1x128xf32> -> vector<1x128xf32>
    %c0_4 = arith.constant 0 : index
    %c0_5 = arith.constant 0 : index
    %4 = vector.load %arg4[%c0_4, %c0_5] : memref<1x128xf32, #tpu.memory_space<vmem>>, vector<1x128xf32>
    %5 = arith.addf %3, %4 : vector<1x128xf32>
    %cst_6 = arith.constant 5.000000e-01 : f32
    %6 = vector.broadcast %cst_6 : f32 to vector<1x128xf32>
    %7 = arith.mulf %6, %5 : vector<1x128xf32>
    %cst_7 = arith.constant 5.000000e-01 : f32
    %8 = vector.broadcast %cst_7 : f32 to vector<1x128xf32>
    %9 = arith.mulf %8, %5 : vector<1x128xf32>
    %10 = math.tanh %9 : vector<1x128xf32>
    %cst_8 = arith.constant 1.000000e+00 : f32
    %11 = vector.broadcast %cst_8 : f32 to vector<1x128xf32>
    %12 = arith.addf %11, %10 : vector<1x128xf32>
    %13 = arith.mulf %7, %12 : vector<1x128xf32>
    %14 = arith.truncf %13 : vector<1x128xf32> to vector<1x128xbf16>
    %c0_9 = arith.constant 0 : index
    %c0_10 = arith.constant 0 : index
    %15 = vector.load %arg5[%c0_9, %c0_10] : memref<128x64xbf16, #tpu.memory_space<vmem>>, vector<128x64xbf16>
    %cst_11 = arith.constant dense<0.000000e+00> : vector<1x64xf32>
    %16 = tpu.matmul %14, %15, %cst_11 {dimension_numbers = #tpu.dot_dimension_numbers<[1], [0], [0], [1], [0, 0, 1, 1], [], []>} : vector<1x128xbf16>, vector<128x64xbf16>, vector<1x64xf32> -> vector<1x64xf32>
    %c0_12 = arith.constant 0 : index
    %c0_13 = arith.constant 0 : index
    %17 = vector.load %arg6[%c0_12, %c0_13] : memref<1x64xf32, #tpu.memory_space<vmem>>, vector<1x64xf32>
    %18 = arith.addf %16, %17 : vector<1x64xf32>
    %cst_14 = arith.constant 5.000000e-01 : f32
    %19 = vector.broadcast %cst_14 : f32 to vector<1x64xf32>
    %20 = arith.mulf %19, %18 : vector<1x64xf32>
    %cst_15 = arith.constant 5.000000e-01 : f32
    %21 = vector.broadcast %cst_15 : f32 to vector<1x64xf32>
    %22 = arith.mulf %21, %18 : vector<1x64xf32>
    %23 = math.tanh %22 : vector<1x64xf32>
    %cst_16 = arith.constant 1.000000e+00 : f32
    %24 = vector.broadcast %cst_16 : f32 to vector<1x64xf32>
    %25 = arith.addf %24, %23 : vector<1x64xf32>
    %26 = arith.mulf %20, %25 : vector<1x64xf32>
    %c0_17 = arith.constant 0 : index
    %c0_18 = arith.constant 0 : index
    %27 = vector.load %arg7[%c0_17, %c0_18] : memref<128x64xbf16, #tpu.memory_space<vmem>>, vector<128x64xbf16>
    %cst_19 = arith.constant dense<0.000000e+00> : vector<1x64xf32>
    %28 = tpu.matmul %14, %27, %cst_19 {dimension_numbers = #tpu.dot_dimension_numbers<[1], [0], [0], [1], [0, 0, 1, 1], [], []>} : vector<1x128xbf16>, vector<128x64xbf16>, vector<1x64xf32> -> vector<1x64xf32>
    %c0_20 = arith.constant 0 : index
    %c0_21 = arith.constant 0 : index
    %29 = vector.load %arg8[%c0_20, %c0_21] : memref<1x64xf32, #tpu.memory_space<vmem>>, vector<1x64xf32>
    %30 = arith.addf %28, %29 : vector<1x64xf32>
    %cst_22 = arith.constant 5.000000e-01 : f32
    %31 = vector.broadcast %cst_22 : f32 to vector<1x64xf32>
    %32 = arith.mulf %31, %30 : vector<1x64xf32>
    %cst_23 = arith.constant 5.000000e-01 : f32
    %33 = vector.broadcast %cst_23 : f32 to vector<1x64xf32>
    %34 = arith.mulf %33, %30 : vector<1x64xf32>
    %35 = math.tanh %34 : vector<1x64xf32>
    %cst_24 = arith.constant 1.000000e+00 : f32
    %36 = vector.broadcast %cst_24 : f32 to vector<1x64xf32>
    %37 = arith.addf %36, %35 : vector<1x64xf32>
    %38 = arith.mulf %32, %37 : vector<1x64xf32>
    %cst_25 = arith.constant 0.000000e+00 : bf16
    %39 = vector.broadcast %cst_25 : bf16 to vector<8x64xbf16>
    %c0_26 = arith.constant 0 : index
    %c0_27 = arith.constant 0 : index
    %40 = vector.load %arg17[%c0_26, %c0_27] : memref<16x64xbf16, #tpu.memory_space<vmem>>, vector<8x64xbf16>
    tpu.vector_store %arg17[%c0_26, %c0_27], %39 {strides = array<i32>} : memref<16x64xbf16, #tpu.memory_space<vmem>>, vector<8x64xbf16>,
    %cst_28 = arith.constant 0.000000e+00 : bf16
    %41 = vector.broadcast %cst_28 : bf16 to vector<7x64xbf16>
    %c9 = arith.constant 9 : index
    %c0_29 = arith.constant 0 : index
    %42 = vector.load %arg17[%c9, %c0_29] : memref<16x64xbf16, #tpu.memory_space<vmem>>, vector<7x64xbf16>
    tpu.vector_store %arg17[%c9, %c0_29], %41 {strides = array<i32>} : memref<16x64xbf16, #tpu.memory_space<vmem>>, vector<7x64xbf16>,
    %c0_30 = arith.constant 0 : index
    %c0_31 = arith.constant 0 : index
    %c0_32 = arith.constant 0 : index
    %43 = vector.load %arg2[%c0_30, %c0_31, %c0_32] : memref<2x1x1xbf16, #tpu.memory_space<vmem>>, vector<1x1x1xbf16>
    %44 = vector.shape_cast %43 : vector<1x1x1xbf16> to vector<1x1xbf16>
    %c1 = arith.constant 1 : index
    %c0_33 = arith.constant 0 : index
    %c0_34 = arith.constant 0 : index
    %45 = vector.load %arg2[%c1, %c0_33, %c0_34] : memref<2x1x1xbf16, #tpu.memory_space<vmem>>, vector<1x1x1xbf16>
    %46 = vector.shape_cast %45 : vector<1x1x1xbf16> to vector<1x1xbf16>
    %47 = arith.truncf %26 : vector<1x64xf32> to vector<1x64xbf16>
    %c0_35 = arith.constant 0 : index
    %c0_36 = arith.constant 0 : index
    %c0_37 = arith.constant 0 : index
    %48 = vector.load %arg9[%c0_35, %c0_36, %c0_37] : memref<1x64x64xbf16, #tpu.memory_space<vmem>>, vector<1x64x64xbf16>
    %49 = vector.shape_cast %48 : vector<1x64x64xbf16> to vector<64x64xbf16>
    %cst_38 = arith.constant dense<0.000000e+00> : vector<1x64xf32>
    %50 = tpu.matmul %47, %49, %cst_38 {dimension_numbers = #tpu.dot_dimension_numbers<[1], [0], [0], [1], [0, 0, 1, 1], [], []>} : vector<1x64xbf16>, vector<64x64xbf16>, vector<1x64xf32> -> vector<1x64xf32>
    %c0_39 = arith.constant 0 : index
    %c0_40 = arith.constant 0 : index
    %c0_41 = arith.constant 0 : index
    %51 = vector.load %arg10[%c0_39, %c0_40, %c0_41] : memref<1x1x64xf32, #tpu.memory_space<vmem>>, vector<1x1x64xf32>
    %52 = vector.shape_cast %51 : vector<1x1x64xf32> to vector<1x64xf32>
    %53 = arith.addf %50, %52 : vector<1x64xf32>
    %cst_42 = arith.constant 5.000000e-01 : f32
    %54 = vector.broadcast %cst_42 : f32 to vector<1x64xf32>
    %55 = arith.mulf %54, %53 : vector<1x64xf32>
    %cst_43 = arith.constant 5.000000e-01 : f32
    %56 = vector.broadcast %cst_43 : f32 to vector<1x64xf32>
    %57 = arith.mulf %56, %53 : vector<1x64xf32>
    %58 = math.tanh %57 : vector<1x64xf32>
    %cst_44 = arith.constant 1.000000e+00 : f32
    %59 = vector.broadcast %cst_44 : f32 to vector<1x64xf32>
    %60 = arith.addf %59, %58 : vector<1x64xf32>
    %61 = arith.mulf %55, %60 : vector<1x64xf32>
    %62 = arith.truncf %61 : vector<1x64xf32> to vector<1x64xbf16>
    %c8 = arith.constant 8 : index
    %c0_45 = arith.constant 0 : index
    %63 = vector.load %arg17[%c8, %c0_45] : memref<16x64xbf16, #tpu.memory_space<vmem>>, vector<1x64xbf16>
    tpu.vector_store %arg17[%c8, %c0_45], %62 {strides = array<i32>} : memref<16x64xbf16, #tpu.memory_space<vmem>>, vector<1x64xbf16>,
    %cst_46 = arith.constant 0.000000e+00 : f32
    %64 = vector.broadcast %cst_46 : f32 to vector<1x64xf32>
    %c6 = arith.constant 6 : index
    %c0_47 = arith.constant 0 : index
    %65 = vector.load %arg17[%c6, %c0_47] : memref<16x64xbf16, #tpu.memory_space<vmem>>, vector<1x64xbf16>
    %66 = vector.broadcast %44 : vector<1x1xbf16> to vector<1x64xbf16>
    %67 = arith.mulf %65, %66 : vector<1x64xbf16>
    %c0_48 = arith.constant 0 : index
    %c0_49 = arith.constant 0 : index
    %c0_50 = arith.constant 0 : index
    %68 = vector.load %arg11[%c0_48, %c0_49, %c0_50] : memref<9x64x64xbf16, #tpu.memory_space<vmem>>, vector<1x64x64xbf16>
    %69 = vector.shape_cast %68 : vector<1x64x64xbf16> to vector<64x64xbf16>
    %cst_51 = arith.constant dense<0.000000e+00> : vector<1x64xf32>
    %70 = tpu.matmul %67, %69, %cst_51 {dimension_numbers = #tpu.dot_dimension_numbers<[1], [0], [0], [1], [0, 0, 1, 1], [], []>} : vector<1x64xbf16>, vector<64x64xbf16>, vector<1x64xf32> -> vector<1x64xf32>
    %71 = arith.addf %64, %70 : vector<1x64xf32>
    %c7 = arith.constant 7 : index
    %c0_52 = arith.constant 0 : index
    %72 = vector.load %arg17[%c7, %c0_52] : memref<16x64xbf16, #tpu.memory_space<vmem>>, vector<1x64xbf16>
    %c1_53 = arith.constant 1 : index
    %c0_54 = arith.constant 0 : index
    %c0_55 = arith.constant 0 : index
    %73 = vector.load %arg11[%c1_53, %c0_54, %c0_55] : memref<9x64x64xbf16, #tpu.memory_space<vmem>>, vector<1x64x64xbf16>
    %74 = vector.shape_cast %73 : vector<1x64x64xbf16> to vector<64x64xbf16>
    %cst_56 = arith.constant dense<0.000000e+00> : vector<1x64xf32>
    %75 = tpu.matmul %72, %74, %cst_56 {dimension_numbers = #tpu.dot_dimension_numbers<[1], [0], [0], [1], [0, 0, 1, 1], [], []>} : vector<1x64xbf16>, vector<64x64xbf16>, vector<1x64xf32> -> vector<1x64xf32>
    %76 = arith.addf %71, %75 : vector<1x64xf32>
    %c8_57 = arith.constant 8 : index
    %c0_58 = arith.constant 0 : index
    %77 = vector.load %arg17[%c8_57, %c0_58] : memref<16x64xbf16, #tpu.memory_space<vmem>>, vector<1x64xbf16>
    %78 = vector.broadcast %46 : vector<1x1xbf16> to vector<1x64xbf16>
    %79 = arith.mulf %77, %78 : vector<1x64xbf16>
    %c2 = arith.constant 2 : index
    %c0_59 = arith.constant 0 : index
    %c0_60 = arith.constant 0 : index
    %80 = vector.load %arg11[%c2, %c0_59, %c0_60] : memref<9x64x64xbf16, #tpu.memory_space<vmem>>, vector<1x64x64xbf16>
    %81 = vector.shape_cast %80 : vector<1x64x64xbf16> to vector<64x64xbf16>
    %cst_61 = arith.constant dense<0.000000e+00> : vector<1x64xf32>
    %82 = tpu.matmul %79, %81, %cst_61 {dimension_numbers = #tpu.dot_dimension_numbers<[1], [0], [0], [1], [0, 0, 1, 1], [], []>} : vector<1x64xbf16>, vector<64x64xbf16>, vector<1x64xf32> -> vector<1x64xf32>
    %83 = arith.addf %76, %82 : vector<1x64xf32>
    %c7_62 = arith.constant 7 : index
    %c0_63 = arith.constant 0 : index
    %84 = vector.load %arg17[%c7_62, %c0_63] : memref<16x64xbf16, #tpu.memory_space<vmem>>, vector<1x64xbf16>
    %85 = vector.broadcast %44 : vector<1x1xbf16> to vector<1x64xbf16>
    %86 = arith.mulf %84, %85 : vector<1x64xbf16>
    %c3 = arith.constant 3 : index
    %c0_64 = arith.constant 0 : index
    %c0_65 = arith.constant 0 : index
    %87 = vector.load %arg11[%c3, %c0_64, %c0_65] : memref<9x64x64xbf16, #tpu.memory_space<vmem>>, vector<1x64x64xbf16>
    %88 = vector.shape_cast %87 : vector<1x64x64xbf16> to vector<64x64xbf16>
    %cst_66 = arith.constant dense<0.000000e+00> : vector<1x64xf32>
    %89 = tpu.matmul %86, %88, %cst_66 {dimension_numbers = #tpu.dot_dimension_numbers<[1], [0], [0], [1], [0, 0, 1, 1], [], []>} : vector<1x64xbf16>, vector<64x64xbf16>, vector<1x64xf32> -> vector<1x64xf32>
    %90 = arith.addf %83, %89 : vector<1x64xf32>
    %c8_67 = arith.constant 8 : index
    %c0_68 = arith.constant 0 : index
    %91 = vector.load %arg17[%c8_67, %c0_68] : memref<16x64xbf16, #tpu.memory_space<vmem>>, vector<1x64xbf16>
    %c4 = arith.constant 4 : index
    %c0_69 = arith.constant 0 : index
    %c0_70 = arith.constant 0 : index
    %92 = vector.load %arg11[%c4, %c0_69, %c0_70] : memref<9x64x64xbf16, #tpu.memory_space<vmem>>, vector<1x64x64xbf16>
    %93 = vector.shape_cast %92 : vector<1x64x64xbf16> to vector<64x64xbf16>
    %cst_71 = arith.constant dense<0.000000e+00> : vector<1x64xf32>
    %94 = tpu.matmul %91, %93, %cst_71 {dimension_numbers = #tpu.dot_dimension_numbers<[1], [0], [0], [1], [0, 0, 1, 1], [], []>} : vector<1x64xbf16>, vector<64x64xbf16>, vector<1x64xf32> -> vector<1x64xf32>
    %95 = arith.addf %90, %94 : vector<1x64xf32>
    %c9_72 = arith.constant 9 : index
    %c0_73 = arith.constant 0 : index
    %96 = vector.load %arg17[%c9_72, %c0_73] : memref<16x64xbf16, #tpu.memory_space<vmem>>, vector<1x64xbf16>
    %97 = vector.broadcast %46 : vector<1x1xbf16> to vector<1x64xbf16>
    %98 = arith.mulf %96, %97 : vector<1x64xbf16>
    %c5 = arith.constant 5 : index
    %c0_74 = arith.constant 0 : index
    %c0_75 = arith.constant 0 : index
    %99 = vector.load %arg11[%c5, %c0_74, %c0_75] : memref<9x64x64xbf16, #tpu.memory_space<vmem>>, vector<1x64x64xbf16>
    %100 = vector.shape_cast %99 : vector<1x64x64xbf16> to vector<64x64xbf16>
    %cst_76 = arith.constant dense<0.000000e+00> : vector<1x64xf32>
    %101 = tpu.matmul %98, %100, %cst_76 {dimension_numbers = #tpu.dot_dimension_numbers<[1], [0], [0], [1], [0, 0, 1, 1], [], []>} : vector<1x64xbf16>, vector<64x64xbf16>, vector<1x64xf32> -> vector<1x64xf32>
    %102 = arith.addf %95, %101 : vector<1x64xf32>
    %c8_77 = arith.constant 8 : index
    %c0_78 = arith.constant 0 : index
    %103 = vector.load %arg17[%c8_77, %c0_78] : memref<16x64xbf16, #tpu.memory_space<vmem>>, vector<1x64xbf16>
    %104 = vector.broadcast %44 : vector<1x1xbf16> to vector<1x64xbf16>
    %105 = arith.mulf %103, %104 : vector<1x64xbf16>
    %c6_79 = arith.constant 6 : index
    %c0_80 = arith.constant 0 : index
    %c0_81 = arith.constant 0 : index
    %106 = vector.load %arg11[%c6_79, %c0_80, %c0_81] : memref<9x64x64xbf16, #tpu.memory_space<vmem>>, vector<1x64x64xbf16>
    %107 = vector.shape_cast %106 : vector<1x64x64xbf16> to vector<64x64xbf16>
    %cst_82 = arith.constant dense<0.000000e+00> : vector<1x64xf32>
    %108 = tpu.matmul %105, %107, %cst_82 {dimension_numbers = #tpu.dot_dimension_numbers<[1], [0], [0], [1], [0, 0, 1, 1], [], []>} : vector<1x64xbf16>, vector<64x64xbf16>, vector<1x64xf32> -> vector<1x64xf32>
    %109 = arith.addf %102, %108 : vector<1x64xf32>
    %c9_83 = arith.constant 9 : index
    %c0_84 = arith.constant 0 : index
    %110 = vector.load %arg17[%c9_83, %c0_84] : memref<16x64xbf16, #tpu.memory_space<vmem>>, vector<1x64xbf16>
    %c7_85 = arith.constant 7 : index
    %c0_86 = arith.constant 0 : index
    %c0_87 = arith.constant 0 : index
    %111 = vector.load %arg11[%c7_85, %c0_86, %c0_87] : memref<9x64x64xbf16, #tpu.memory_space<vmem>>, vector<1x64x64xbf16>
    %112 = vector.shape_cast %111 : vector<1x64x64xbf16> to vector<64x64xbf16>
    %cst_88 = arith.constant dense<0.000000e+00> : vector<1x64xf32>
    %113 = tpu.matmul %110, %112, %cst_88 {dimension_numbers = #tpu.dot_dimension_numbers<[1], [0], [0], [1], [0, 0, 1, 1], [], []>} : vector<1x64xbf16>, vector<64x64xbf16>, vector<1x64xf32> -> vector<1x64xf32>
    %114 = arith.addf %109, %113 : vector<1x64xf32>
    %c10 = arith.constant 10 : index
    %c0_89 = arith.constant 0 : index
    %115 = vector.load %arg17[%c10, %c0_89] : memref<16x64xbf16, #tpu.memory_space<vmem>>, vector<1x64xbf16>
    %116 = vector.broadcast %46 : vector<1x1xbf16> to vector<1x64xbf16>
    %117 = arith.mulf %115, %116 : vector<1x64xbf16>
    %c8_90 = arith.constant 8 : index
    %c0_91 = arith.constant 0 : index
    %c0_92 = arith.constant 0 : index
    %118 = vector.load %arg11[%c8_90, %c0_91, %c0_92] : memref<9x64x64xbf16, #tpu.memory_space<vmem>>, vector<1x64x64xbf16>
    %119 = vector.shape_cast %118 : vector<1x64x64xbf16> to vector<64x64xbf16>
    %cst_93 = arith.constant dense<0.000000e+00> : vector<1x64xf32>
    %120 = tpu.matmul %117, %119, %cst_93 {dimension_numbers = #tpu.dot_dimension_numbers<[1], [0], [0], [1], [0, 0, 1, 1], [], []>} : vector<1x64xbf16>, vector<64x64xbf16>, vector<1x64xf32> -> vector<1x64xf32>
    %121 = arith.addf %114, %120 : vector<1x64xf32>
    %c0_94 = arith.constant 0 : index
    %c0_95 = arith.constant 0 : index
    %c0_96 = arith.constant 0 : index
    %122 = vector.load %arg12[%c0_94, %c0_95, %c0_96] : memref<1x1x64xf32, #tpu.memory_space<vmem>>, vector<1x1x64xf32>
    %123 = vector.shape_cast %122 : vector<1x1x64xf32> to vector<1x64xf32>
    %124 = arith.addf %121, %123 : vector<1x64xf32>
    %cst_97 = arith.constant 5.000000e-01 : f32
    %125 = vector.broadcast %cst_97 : f32 to vector<1x64xf32>
    %126 = arith.mulf %125, %124 : vector<1x64xf32>
    %cst_98 = arith.constant 5.000000e-01 : f32
    %127 = vector.broadcast %cst_98 : f32 to vector<1x64xf32>
    %128 = arith.mulf %127, %124 : vector<1x64xf32>
    %129 = math.tanh %128 : vector<1x64xf32>
    %cst_99 = arith.constant 1.000000e+00 : f32
    %130 = vector.broadcast %cst_99 : f32 to vector<1x64xf32>
    %131 = arith.addf %130, %129 : vector<1x64xf32>
    %132 = arith.mulf %126, %131 : vector<1x64xf32>
    %133 = arith.addf %26, %132 : vector<1x64xf32>
    %134 = arith.truncf %133 : vector<1x64xf32> to vector<1x64xbf16>
    %c0_100 = arith.constant 0 : index
    %c0_101 = arith.constant 0 : index
    %135 = vector.load %arg13[%c0_100, %c0_101] : memref<64x128xbf16, #tpu.memory_space<vmem>>, vector<64x128xbf16>
    %cst_102 = arith.constant dense<0.000000e+00> : vector<1x128xf32>
    %136 = tpu.matmul %134, %135, %cst_102 {dimension_numbers = #tpu.dot_dimension_numbers<[1], [0], [0], [1], [0, 0, 1, 1], [], []>} : vector<1x64xbf16>, vector<64x128xbf16>, vector<1x128xf32> -> vector<1x128xf32>
    %137 = arith.truncf %38 : vector<1x64xf32> to vector<1x64xbf16>
    %c0_103 = arith.constant 0 : index
    %c0_104 = arith.constant 0 : index
    %138 = vector.load %arg14[%c0_103, %c0_104] : memref<64x128xbf16, #tpu.memory_space<vmem>>, vector<64x128xbf16>
    %cst_105 = arith.constant dense<0.000000e+00> : vector<1x128xf32>
    %139 = tpu.matmul %137, %138, %cst_105 {dimension_numbers = #tpu.dot_dimension_numbers<[1], [0], [0], [1], [0, 0, 1, 1], [], []>} : vector<1x64xbf16>, vector<64x128xbf16>, vector<1x128xf32> -> vector<1x128xf32>
    %140 = arith.addf %136, %139 : vector<1x128xf32>
    %c0_106 = arith.constant 0 : index
    %c0_107 = arith.constant 0 : index
    %141 = vector.load %arg15[%c0_106, %c0_107] : memref<1x128xf32, #tpu.memory_space<vmem>>, vector<1x128xf32>
    %142 = arith.addf %140, %141 : vector<1x128xf32>
    %cst_108 = arith.constant 5.000000e-01 : f32
    %143 = vector.broadcast %cst_108 : f32 to vector<1x128xf32>
    %144 = arith.mulf %143, %142 : vector<1x128xf32>
    %cst_109 = arith.constant 5.000000e-01 : f32
    %145 = vector.broadcast %cst_109 : f32 to vector<1x128xf32>
    %146 = arith.mulf %145, %142 : vector<1x128xf32>
    %147 = math.tanh %146 : vector<1x128xf32>
    %cst_110 = arith.constant 1.000000e+00 : f32
    %148 = vector.broadcast %cst_110 : f32 to vector<1x128xf32>
    %149 = arith.addf %148, %147 : vector<1x128xf32>
    %150 = arith.mulf %144, %149 : vector<1x128xf32>
    %151 = arith.truncf %150 : vector<1x128xf32> to vector<1x128xbf16>
    %c0_111 = arith.constant 0 : index
    %c0_112 = arith.constant 0 : index
    %c0_113 = arith.constant 0 : index
    %152 = vector.load %arg16[%c0_111, %c0_112, %c0_113] : memref<1x1x128xbf16, #tpu.memory_space<vmem>>, vector<1x1x128xbf16>
    %153 = vector.shape_cast %152 : vector<1x1x128xbf16> to vector<1x128xbf16>
    %154 = vector.shape_cast %151 : vector<1x128xbf16> to vector<1x1x128xbf16>
    tpu.vector_store %arg16[%c0_111, %c0_112, %c0_113], %154 {strides = array<i32>} : memref<1x1x128xbf16, #tpu.memory_space<vmem>>, vector<1x1x128xbf16>,
    return
  }
  func.func @transform_0(%arg0: i32) -> (i32, i32, i32) {
    %c0_i32 = arith.constant 0 : i32
    %c0_i32_0 = arith.constant 0 : i32
    %c0_i32_1 = arith.constant 0 : i32
    return %arg0, %c0_i32, %c0_i32_0 : i32, i32, i32
  }
  func.func @transform_1(%arg0: i32) -> (i32, i32, i32) {
    %c0_i32 = arith.constant 0 : i32
    %c0_i32_0 = arith.constant 0 : i32
    %c0_i32_1 = arith.constant 0 : i32
    %c0_i32_2 = arith.constant 0 : i32
    return %c0_i32, %c0_i32_0, %c0_i32_1 : i32, i32, i32
  }
  func.func @transform_2(%arg0: i32) -> (i32, i32) {
    %c0_i32 = arith.constant 0 : i32
    %c0_i32_0 = arith.constant 0 : i32
    %c0_i32_1 = arith.constant 0 : i32
    return %c0_i32, %c0_i32_0 : i32, i32
  }
  func.func @transform_3(%arg0: i32) -> (i32, i32) {
    %c0_i32 = arith.constant 0 : i32
    %c0_i32_0 = arith.constant 0 : i32
    %c0_i32_1 = arith.constant 0 : i32
    return %c0_i32, %c0_i32_0 : i32, i32
  }
  func.func @transform_4(%arg0: i32) -> (i32, i32) {
    %c0_i32 = arith.constant 0 : i32
    %c0_i32_0 = arith.constant 0 : i32
    %c0_i32_1 = arith.constant 0 : i32
    return %c0_i32, %c0_i32_0 : i32, i32
  }
  func.func @transform_5(%arg0: i32) -> (i32, i32) {
    %c0_i32 = arith.constant 0 : i32
    %c0_i32_0 = arith.constant 0 : i32
    %c0_i32_1 = arith.constant 0 : i32
    return %c0_i32, %c0_i32_0 : i32, i32
  }
  func.func @transform_6(%arg0: i32) -> (i32, i32) {
    %c0_i32 = arith.constant 0 : i32
    %c0_i32_0 = arith.constant 0 : i32
    %c0_i32_1 = arith.constant 0 : i32
    return %c0_i32, %c0_i32_0 : i32, i32
  }
  func.func @transform_7(%arg0: i32) -> (i32, i32) {
    %c0_i32 = arith.constant 0 : i32
    %c0_i32_0 = arith.constant 0 : i32
    %c0_i32_1 = arith.constant 0 : i32
    return %c0_i32, %c0_i32_0 : i32, i32
  }
  func.func @transform_8(%arg0: i32) -> (i32, i32, i32) {
    %c0_i32 = arith.constant 0 : i32
    %c0_i32_0 = arith.constant 0 : i32
    %c0_i32_1 = arith.constant 0 : i32
    %c0_i32_2 = arith.constant 0 : i32
    return %c0_i32, %c0_i32_0, %c0_i32_1 : i32, i32, i32
  }
  func.func @transform_9(%arg0: i32) -> (i32, i32, i32) {
    %c0_i32 = arith.constant 0 : i32
    %c0_i32_0 = arith.constant 0 : i32
    %c0_i32_1 = arith.constant 0 : i32
    %c0_i32_2 = arith.constant 0 : i32
    return %c0_i32, %c0_i32_0, %c0_i32_1 : i32, i32, i32
  }
  func.func @transform_10(%arg0: i32) -> (i32, i32, i32) {
    %c0_i32 = arith.constant 0 : i32
    %c0_i32_0 = arith.constant 0 : i32
    %c0_i32_1 = arith.constant 0 : i32
    %c0_i32_2 = arith.constant 0 : i32
    return %c0_i32, %c0_i32_0, %c0_i32_1 : i32, i32, i32
  }
  func.func @transform_11(%arg0: i32) -> (i32, i32, i32) {
    %c0_i32 = arith.constant 0 : i32
    %c0_i32_0 = arith.constant 0 : i32
    %c0_i32_1 = arith.constant 0 : i32
    %c0_i32_2 = arith.constant 0 : i32
    return %c0_i32, %c0_i32_0, %c0_i32_1 : i32, i32, i32
  }
  func.func @transform_12(%arg0: i32) -> (i32, i32) {
    %c0_i32 = arith.constant 0 : i32
    %c0_i32_0 = arith.constant 0 : i32
    %c0_i32_1 = arith.constant 0 : i32
    return %c0_i32, %c0_i32_0 : i32, i32
  }
  func.func @transform_13(%arg0: i32) -> (i32, i32) {
    %c0_i32 = arith.constant 0 : i32
    %c0_i32_0 = arith.constant 0 : i32
    %c0_i32_1 = arith.constant 0 : i32
    return %c0_i32, %c0_i32_0 : i32, i32
  }
  func.func @transform_14(%arg0: i32) -> (i32, i32) {
    %c0_i32 = arith.constant 0 : i32
    %c0_i32_0 = arith.constant 0 : i32
    %c0_i32_1 = arith.constant 0 : i32
    return %c0_i32, %c0_i32_0 : i32, i32
  }
  func.func @transform_15(%arg0: i32) -> (i32, i32, i32) {
    %c0_i32 = arith.constant 0 : i32
    %c0_i32_0 = arith.constant 0 : i32
    %c0_i32_1 = arith.constant 0 : i32
    return %arg0, %c0_i32, %c0_i32_0 : i32, i32, i32
  }
}

</mosaic_0001>

<llo_original>
// kernel: _lambda_.5
$region0: #{_lambda_.5}
  #allocation0 [shape = 'u32[]', space=smem, size = 0x4, offset = 0x4, fixed_abs, tag = 'smem constant byte address 0x4 - core index']
  #allocation1 [shape = 'u32[72,128]{1,0:T(1,128)}', space=vmem, size = 0x9000, scoped, tag = 'internal scratch']
  %s0 = inlined_call_operand.vmem [shape: bf16[2,81,108], index: 0, kind: input, shape index: {}]
  %s1 = inlined_call_operand.vmem [shape: bf16[108,8], index: 1, kind: input, shape index: {}]
  %s2 = inlined_call_operand.vmem [shape: f32[1,8], index: 2, kind: input, shape index: {}]
  %s3 = inlined_call_operand.vmem [shape: bf16[2,81,8], index: 3, kind: output, shape index: {}]
  %s4 = sld [smem:[#allocation0]]
  $region45: #{_lambda_.5} parent=0
    _
  %s6 = ssub.s32 1, %s4
  %s7 = scalar_select 0, %s6, %s4
  loop: start=0, step=1, limit=4
  $region2: #{_lambda_.5} parent=0 // loop_pre_header
    _
  $region3: #{_lambda_.5} parent=0 // loop_header
    %s9 = sphi 0, %s13
    %p10 = scmp.ge.s32.totalorder %s9, 4
    %s19 = sphi 0, %s21
    %s22 = sphi 0, %s19
    %s23 = sphi 0, %s22
    %s39 = sphi 0, %s23
    %s43 = sphi 0, %s43
    %s45 = sphi 0, %s43
    %s46 = sphi 0, %s45
    %s60 = sphi 0, %s46
    %s64 = sphi 0, %s64
    %s66 = sphi 0, %s64
    %s67 = sphi 0, %s66
    %s81 = sphi 0, %s67
    %s87 = sphi 0, %s89
    %s90 = sphi 0, %s87
    %s91 = sphi 0, %s90
    %s107 = sphi 0, %s91
  $region4: #{_lambda_.5} parent=0 // loop_header_branch
    %12 = sbr.rel (%p10) target = $region8
  $region5: #{_lambda_.5} parent=0 // loop_body
    %s14 = ssub.s32 %s9, 1
    %s15 = ssub.s32 %s9, 2
    %s16 = sadd.s32 %s9, 1
    %s17 = ssub.s32 %s9, %s16
    %p18 = scmp.eq.s32.totalorder %s17, 0
    %s20 = sadd.s32 %s19, 1
    %s21 = scalar_select %p18, %s19, %s20
    %p24 = pneg %p18
    %p25 = scmp.eq.s32.totalorder %s9, 1
    %p26 = por %p24, %p25
    %p27 = scmp.ne.s32.totalorder %s19, %s22
    %p28 = scmp.eq.s32.totalorder %s9, 0
    %p29 = por %p27, %p28
    %p30 = scmp.ne.s32.totalorder %s19, %s22
    %p31 = scmp.eq.s32.totalorder %s14, 1
    %p32 = por %p30, %p31
    %p33 = scmp.ne.s32.totalorder %s22, %s23
    %p34 = scmp.eq.s32.totalorder %s14, 0
    %p35 = por %p33, %p34
    %p36 = scmp.ne.s32.totalorder %s22, %s23
    %p37 = scmp.eq.s32.totalorder %s15, 1
    %p38 = por %p36, %p37
    %p40 = scmp.ne.s32.totalorder %s23, %s39
    %p41 = scmp.eq.s32.totalorder %s15, 0
    %p42 = por %p40, %p41
    %s44 = sadd.s32 %s43, 1
    %p47 = scmp.eq.s32.totalorder %s9, 1
    %p48 = scmp.ne.s32.totalorder %s43, %s45
    %p49 = scmp.eq.s32.totalorder %s9, 0
    %p50 = por %p48, %p49
    %p51 = scmp.ne.s32.totalorder %s43, %s45
    %p52 = scmp.eq.s32.totalorder %s14, 1
    %p53 = por %p51, %p52
    %p54 = scmp.ne.s32.totalorder %s45, %s46
    %p55 = scmp.eq.s32.totalorder %s14, 0
    %p56 = por %p54, %p55
    %p57 = scmp.ne.s32.totalorder %s45, %s46
    %p58 = scmp.eq.s32.totalorder %s15, 1
    %p59 = por %p57, %p58
    %p61 = scmp.ne.s32.totalorder %s46, %s60
    %p62 = scmp.eq.s32.totalorder %s15, 0
    %p63 = por %p61, %p62
    %s65 = sadd.s32 %s64, 1
    %p68 = scmp.eq.s32.totalorder %s9, 1
    %p69 = scmp.ne.s32.totalorder %s64, %s66
    %p70 = scmp.eq.s32.totalorder %s9, 0
    %p71 = por %p69, %p70
    %p72 = scmp.ne.s32.totalorder %s64, %s66
    %p73 = scmp.eq.s32.totalorder %s14, 1
    %p74 = por %p72, %p73
    %p75 = scmp.ne.s32.totalorder %s66, %s67
    %p76 = scmp.eq.s32.totalorder %s14, 0
    %p77 = por %p75, %p76
    %p78 = scmp.ne.s32.totalorder %s66, %s67
    %p79 = scmp.eq.s32.totalorder %s15, 1
    %p80 = por %p78, %p79
    %p82 = scmp.ne.s32.totalorder %s67, %s81
    %p83 = scmp.eq.s32.totalorder %s15, 0
    %p84 = por %p82, %p83
    %s85 = ssub.s32 %s9, %s16
    %p86 = scmp.eq.s32.totalorder %s85, 0
    %s88 = sadd.s32 %s87, 1
    %s89 = scalar_select %p86, %s87, %s88
    %p92 = pneg %p86
    %p93 = scmp.eq.s32.totalorder %s9, 1
    %p94 = por %p92, %p93
    %p95 = scmp.ne.s32.totalorder %s87, %s90
    %p96 = scmp.eq.s32.totalorder %s9, 0
    %p97 = por %p95, %p96
    %p98 = scmp.ne.s32.totalorder %s87, %s90
    %p99 = scmp.eq.s32.totalorder %s14, 1
    %p100 = por %p98, %p99
    %p101 = scmp.ne.s32.totalorder %s90, %s91
    %p102 = scmp.eq.s32.totalorder %s14, 0
    %p103 = por %p101, %p102
    %p104 = scmp.ne.s32.totalorder %s90, %s91
    %p105 = scmp.eq.s32.totalorder %s15, 1
    %p106 = por %p104, %p105
    %p108 = scmp.ne.s32.totalorder %s91, %s107
    %p109 = scmp.eq.s32.totalorder %s15, 0
    %p110 = por %p108, %p109
    %p111 = scmp.le.s32.totalorder 1, %s9
    %p112 = scmp.lt.s32.totalorder %s9, 3
    %p113 = pnand %p111, %p112
    %p114 = pneg %p113
    // Predicated region
    $region9: #{_lambda_.5} parent=5 // pred_check
      _
    $region10: #{_lambda_.5} parent=5 // pred_check_branch
      %116 = sbr.rel (%p113) target = $region12
    $region11: #{_lambda_.5} parent=5 // pred_region
      %s117 = ssub.s32 %s9, 1
      // Predicated region
      $region13: #{_lambda_.5} parent=11 // pred_check
        %p118 = pneg %p56
      $region14: #{_lambda_.5} parent=11 // pred_check_branch
        %120 = sbr.rel (%p118) target = $region16
      $region15: #{_lambda_.5} parent=11 // pred_region
        _
      $region16: #{_lambda_.5} parent=11 // pred_fallthru
        _
      // Predicated region
      $region17: #{_lambda_.5} parent=11 // pred_check
        %p121 = pneg %p77
      $region18: #{_lambda_.5} parent=11 // pred_check_branch
        %123 = sbr.rel (%p121) target = $region20
      $region19: #{_lambda_.5} parent=11 // pred_region
        _
      $region20: #{_lambda_.5} parent=11 // pred_fallthru
        _
    $region12: #{_lambda_.5} parent=5 // pred_fallthru
      _
    %p124 = scmp.lt.s32.totalorder %s9, 2
    // Predicated region
    $region21: #{_lambda_.5} parent=5 // pred_check
      %p125 = pneg %p124
    $region22: #{_lambda_.5} parent=5 // pred_check_branch
      %127 = sbr.rel (%p125) target = $region24
    $region23: #{_lambda_.5} parent=5 // pred_region
      // Predicated region
      $region25: #{_lambda_.5} parent=23 // pred_check
        %p128 = pneg %p29
      $region26: #{_lambda_.5} parent=23 // pred_check_branch
        %130 = sbr.rel (%p128) target = $region28
      $region27: #{_lambda_.5} parent=23 // pred_region
        %p131 = scmp.lt.s32.totalorder %s9, 1
        %s132 = scalar_select %p131, %s9, 1
        %s133 = smul.addr %s132, 11
        %s134 = smul.addr %s133, 4
        %s135 = scalar_lea.vmem %s0, %s134
      $region28: #{_lambda_.5} parent=23 // pred_fallthru
        _
    $region24: #{_lambda_.5} parent=5 // pred_fallthru
      _
    %p136 = scmp.le.s32.totalorder 1, %s9
    %p137 = scmp.lt.s32.totalorder %s9, 3
    %p138 = pnand %p136, %p137
    %p139 = pneg %p138
    // Predicated region
    $region29: #{_lambda_.5} parent=5 // pred_check
      _
    $region30: #{_lambda_.5} parent=5 // pred_check_branch
      %141 = sbr.rel (%p138) target = $region32
    $region31: #{_lambda_.5} parent=5 // pred_region
      %s142 = ssub.s32 %s9, 1
      %p143 = scmp.lt.s32.totalorder %s14, 1
      %s144 = scalar_select %p143, %s14, 1
      %s145 = smul.addr %s144, 11
      %s146 = smul.addr %s145, 4
      %s147 = scalar_lea.vmem %s0, %s146
      %p148 = pneg %p35
      %p149 = pneg %p32
      %p150 = pneg %p56
      %p151 = pneg %p53
      %p152 = pneg %p77
      %p153 = pneg %p74
      %p154 = pneg %p103
      %p155 = pneg %p100
      %p156 = scmp.lt.s32.totalorder %s14, 1
      %s157 = scalar_select %p156, %s14, 1
      %s158 = smul.addr %s157, 11
      %s159 = smul.addr %s158, 4
      %s160 = scalar_lea.vmem %s3, %s159
      %p161 = scmp.lt.s32.totalorder %s14, 1
      %s162 = scalar_select %p161, %s14, 1
      %s163 = smul.addr %s162, 11
      %s164 = smul.addr %s163, 4
      %s165 = scalar_lea.vmem %s0, %s164
      %p166 = scmp.lt.s32.totalorder %s14, 1
      %s167 = scalar_select %p166, %s14, 1
      %s168 = smul.addr %s167, 11
      %s169 = smul.addr %s168, 4
      %s170 = scalar_lea.vmem %s3, %s169
      %v172 = vld [vmem:[%s165] sm:$0xf]
      %v173 = vld [vmem:[%s165 + $0x4] sm:$0xf]
      %v174 = vld [vmem:[%s165 + $0x8] sm:$0xf]
      %v175 = vld [vmem:[%s165 + $0xc] sm:$0xf]
      %v176 = vld [vmem:[%s165 + $0x10] sm:$0xf]
      %v177 = vld [vmem:[%s165 + $0x14] sm:$0xf]
      %v178 = vld [vmem:[%s165 + $0x18] sm:$0xf]
      %v179 = vld [vmem:[%s165 + $0x1c] sm:$0xf]
      %v180 = vld [vmem:[%s165 + $0x20] sm:$0xf]
      %v181 = vld [vmem:[%s165 + $0x24] sm:$0xf]
      %v182 = vld [vmem:[%s165 + $0x28] sm:$0x1]
      %v183 = vld [vmem:[%s1] sm:$0xf]
      %v184 = vld [vmem:[%s1 + $0x4] sm:$0xf]
      %v185 = vld [vmem:[%s1 + $0x8] sm:$0xf]
      %v186 = vld [vmem:[%s1 + $0xc] sm:$0xf]
      %v187 = vld [vmem:[%s1 + $0x10] sm:$0xf]
      %v188 = vld [vmem:[%s1 + $0x14] sm:$0xf]
      %v189 = vld [vmem:[%s1 + $0x18] sm:$0xf]
      %v190 = vld [vmem:[%s1 + $0x1c] sm:$0xf]
      %v191 = vld [vmem:[%s1 + $0x20] sm:$0xf]
      %v192 = vld [vmem:[%s1 + $0x24] sm:$0xf]
      %v193 = vld [vmem:[%s1 + $0x28] sm:$0xf]
      %v194 = vld [vmem:[%s1 + $0x2c] sm:$0xf]
      %v195 = vld [vmem:[%s1 + $0x30] sm:$0xf]
      %v196 = vld [vmem:[%s1 + $0x34] sm:$0x3]
      %v197 = vld [vmem:[%s2] sm:$0x1]
      %v199 = vperm.slane %v197, 0
      %v212 = vunpack.c.l.b16 %v172
      %v213 = vunpack.c.l.b16 %v173
      %v214 = vunpack.c.l.b16 %v174
      %v215 = vunpack.c.l.b16 %v175
      %v216 = vunpack.c.l.b16 %v176
      %v217 = vunpack.c.l.b16 %v177
      %v218 = vunpack.c.l.b16 %v178
      %v219 = vunpack.c.l.b16 %v179
      %v220 = vunpack.c.l.b16 %v180
      %v221 = vunpack.c.l.b16 %v181
      %v222 = vunpack.c.l.b16 %v182
      %v223 = vpack.c.b16 %v213, %v212
      %v224 = vpack.c.b16 %v215, %v214
      %v225 = vpack.c.b16 %v217, %v216
      %v226 = vpack.c.b16 %v219, %v218
      %v227 = vpack.c.b16 %v221, %v220
      %v228 = vpack.c.b16 %v222, %v222
      %v243 = vunpack.c.l.b16 %v183
      %v244 = vunpack.c.l.b16 %v184
      %v245 = vunpack.c.l.b16 %v185
      %v246 = vunpack.c.l.b16 %v186
      %v247 = vunpack.c.l.b16 %v187
      %v248 = vunpack.c.l.b16 %v188
      %v249 = vunpack.c.l.b16 %v189
      %v250 = vunpack.c.l.b16 %v190
      %v251 = vunpack.c.l.b16 %v191
      %v252 = vunpack.c.l.b16 %v192
      %v253 = vunpack.c.l.b16 %v193
      %v254 = vunpack.c.l.b16 %v194
      %v255 = vunpack.c.l.b16 %v195
      %v256 = vunpack.c.l.b16 %v196
      %v257 = vpack.c.b16 %v244, %v243
      %v258 = vpack.c.b16 %v246, %v245
      %v259 = vpack.c.b16 %v248, %v247
      %v260 = vpack.c.b16 %v250, %v249
      %v261 = vpack.c.b16 %v252, %v251
      %v262 = vpack.c.b16 %v254, %v253
      %v263 = vpack.c.b16 %v256, %v255
      %vm270 = vcmask 883712
      %v272 = vsel %vm270, %v223, 0
      %v275 = vsel %vm270, %v224, 0
      %v278 = vsel %vm270, %v225, 0
      %v281 = vsel %vm270, %v226, 0
      %v284 = vsel %vm270, %v227, 0
      %v287 = vsel %vm270, %v228, 0
      %vm289 = vcmask 1045504
      %v291 = vsel %vm289, %v263, 0
      %293 = vmatpush.bf16.msra.mxu0 0
      %294 = vmatpush.bf16.msra.mxu0 %v291
      %295 = vmatpush.bf16.msra.mxu0 %v262
      %296 = vmatpush.bf16.msra.mxu0 %v261
      %297 = vmatpush.bf16.msra.mxu0 %v260
      %298 = vmatpush.bf16.msra.mxu0 %v259
      %299 = vmatpush.bf16.msra.mxu0 %v258
      %300 = vmatpush.bf16.msra.mxu0 %v257
      %301 = vmatmul.bf16.gmra.mxu0 %v272
      %v302 = vpop.f32.mrf.mxu0
      %v303 = vadd.f32 %v199, %v302
      %v304 = vpop.f32.mrf.mxu0
      %v305 = vadd.f32 %v199, %v304
      %306 = vmatmul.bf16.gmra.mxu0 %v275
      %v307 = vpop.f32.mrf.mxu0
      %v308 = vadd.f32 %v199, %v307
      %v309 = vpop.f32.mrf.mxu0
      %v310 = vadd.f32 %v199, %v309
      %311 = vmatmul.bf16.gmra.mxu0 %v278
      %v312 = vpop.f32.mrf.mxu0
      %v313 = vadd.f32 %v199, %v312
      %v314 = vpop.f32.mrf.mxu0
      %v315 = vadd.f32 %v199, %v314
      %316 = vmatmul.bf16.gmra.mxu0 %v281
      %v317 = vpop.f32.mrf.mxu0
      %v318 = vadd.f32 %v199, %v317
      %v319 = vpop.f32.mrf.mxu0
      %v320 = vadd.f32 %v199, %v319
      %321 = vmatmul.bf16.gmra.mxu0 %v284
      %v322 = vpop.f32.mrf.mxu0
      %v323 = vadd.f32 %v199, %v322
      %v324 = vpop.f32.mrf.mxu0
      %v325 = vadd.f32 %v199, %v324
      %326 = vmatmul.bf16.gmra.mxu0 %v287
      %v327 = vpop.f32.mrf.mxu0
      %v328 = vadd.f32 %v199, %v327
      %v329 = vpop.f32.mrf.mxu0
      %330 = vdwg.mxu0
      %v331 = vmul.f32 %v303, 0.5
      %v332 = vmul.f32 %v305, 0.5
      %v333 = vmul.f32 %v308, 0.5
      %v334 = vmul.f32 %v310, 0.5
      %v335 = vmul.f32 %v313, 0.5
      %v336 = vmul.f32 %v315, 0.5
      %v337 = vmul.f32 %v318, 0.5
      %v338 = vmul.f32 %v320, 0.5
      %v339 = vmul.f32 %v323, 0.5
      %v340 = vmul.f32 %v325, 0.5
      %v341 = vmul.f32 %v328, 0.5
      %v342 = vtanh.pop %v331
      %v343 = vtanh.pop %v332
      %v344 = vtanh.pop %v333
      %v345 = vtanh.pop %v334
      %v346 = vtanh.pop %v335
      %v347 = vtanh.pop %v336
      %v348 = vtanh.pop %v337
      %v349 = vtanh.pop %v338
      %v350 = vtanh.pop %v339
      %v351 = vtanh.pop %v340
      %v352 = vtanh.pop %v341
      %v353 = vadd.f32 %v342, 1.0
      %v354 = vadd.f32 %v343, 1.0
      %v355 = vadd.f32 %v344, 1.0
      %v356 = vadd.f32 %v345, 1.0
      %v357 = vadd.f32 %v346, 1.0
      %v358 = vadd.f32 %v347, 1.0
      %v359 = vadd.f32 %v348, 1.0
      %v360 = vadd.f32 %v349, 1.0
      %v361 = vadd.f32 %v350, 1.0
      %v362 = vadd.f32 %v351, 1.0
      %v363 = vadd.f32 %v352, 1.0
      %v364 = vmul.f32 %v331, %v353
      %v365 = vmul.f32 %v332, %v354
      %v366 = vmul.f32 %v333, %v355
      %v367 = vmul.f32 %v334, %v356
      %v368 = vmul.f32 %v335, %v357
      %v369 = vmul.f32 %v336, %v358
      %v370 = vmul.f32 %v337, %v359
      %v371 = vmul.f32 %v338, %v360
      %v372 = vmul.f32 %v339, %v361
      %v373 = vmul.f32 %v340, %v362
      %v374 = vmul.f32 %v341, %v363
      %v375 = vpack.c.bf16 %v364, %v364
      %v376 = vpack.c.bf16 %v365, %v365
      %v377 = vpack.c.bf16 %v366, %v366
      %v378 = vpack.c.bf16 %v367, %v367
      %v379 = vpack.c.bf16 %v368, %v368
      %v380 = vpack.c.bf16 %v369, %v369
      %v381 = vpack.c.bf16 %v370, %v370
      %v382 = vpack.c.bf16 %v371, %v371
      %v383 = vpack.c.bf16 %v372, %v372
      %v384 = vpack.c.bf16 %v373, %v373
      %v385 = vpack.c.bf16 %v374, %v374
      %vm386 = vcmask 60416
      %387 = vst.msk [vmem:[%s170] sm:$0xf] %vm386, %v375
      %388 = vst.msk [vmem:[%s170 + $0x4] sm:$0xf] %vm386, %v376
      %389 = vst.msk [vmem:[%s170 + $0x8] sm:$0xf] %vm386, %v377
      %390 = vst.msk [vmem:[%s170 + $0xc] sm:$0xf] %vm386, %v378
      %391 = vst.msk [vmem:[%s170 + $0x10] sm:$0xf] %vm386, %v379
      %392 = vst.msk [vmem:[%s170 + $0x14] sm:$0xf] %vm386, %v380
      %393 = vst.msk [vmem:[%s170 + $0x18] sm:$0xf] %vm386, %v381
      %394 = vst.msk [vmem:[%s170 + $0x1c] sm:$0xf] %vm386, %v382
      %395 = vst.msk [vmem:[%s170 + $0x20] sm:$0xf] %vm386, %v383
      %396 = vst.msk [vmem:[%s170 + $0x24] sm:$0xf] %vm386, %v384
      %vm397 = vcmask 57344
      %vm398 = vsmask.f32 256
      %vm399 = vmand %vm397, %vm398
      %v400 = vld [vmem:[%s170 + $0x28] sm:$0x1]
      %v401 = vsel %vm399, %v385, %v400
      %402 = vst [vmem:[%s170 + $0x28] sm:$0x1] %v401
      %p403 = scmp.lt.s32.totalorder %s14, 1
      %s404 = scalar_select %p403, %s14, 1
      %s405 = smul.addr %s404, 11
      %s406 = smul.addr %s405, 4
      %s407 = scalar_lea.vmem %s3, %s406
      // Predicated region
      $region33: #{_lambda_.5} parent=31 // pred_check
        %p408 = pneg %p100
      $region34: #{_lambda_.5} parent=31 // pred_check_branch
        %410 = sbr.rel (%p408) target = $region36
      $region35: #{_lambda_.5} parent=31 // pred_region
        _
      $region36: #{_lambda_.5} parent=31 // pred_fallthru
        _
    $region32: #{_lambda_.5} parent=5 // pred_fallthru
      _
    %p411 = scmp.le.s32.totalorder 2, %s9
    // Predicated region
    $region37: #{_lambda_.5} parent=5 // pred_check
      %p412 = pneg %p411
    $region38: #{_lambda_.5} parent=5 // pred_check_branch
      %414 = sbr.rel (%p412) target = $region40
    $region39: #{_lambda_.5} parent=5 // pred_region
      %s415 = ssub.s32 %s9, 2
      // Predicated region
      $region41: #{_lambda_.5} parent=39 // pred_check
        %p416 = pneg %p106
      $region42: #{_lambda_.5} parent=39 // pred_check_branch
        %418 = sbr.rel (%p416) target = $region44
      $region43: #{_lambda_.5} parent=39 // pred_region
        %p419 = scmp.lt.s32.totalorder %s15, 1
        %s420 = scalar_select %p419, %s15, 1
        %s421 = smul.addr %s420, 11
        %s422 = smul.addr %s421, 4
        %s423 = scalar_lea.vmem %s3, %s422
      $region44: #{_lambda_.5} parent=39 // pred_fallthru
        _
    $region40: #{_lambda_.5} parent=5 // pred_fallthru
      _
  $region6: #{_lambda_.5} parent=0 // loop_footer
    %s13 = sadd.s32 1, %s9
  $region7: #{_lambda_.5} parent=0 // loop_footer_branch
    %8 = sbr.rel target = $region3
  $region8: #{_lambda_.5} parent=0 // loop_exit
    _

// kernel: _lambda_.6
$region0: #{_lambda_.6}
  #allocation0 [shape = 'u32[]', space=smem, size = 0x4, offset = 0x4, fixed_abs, tag = 'smem constant byte address 0x4 - core index']
  #allocation1 [shape = 'u32[72,128]{1,0:T(1,128)}', space=vmem, size = 0x9000, scoped, tag = 'internal scratch']
  #allocation2 [shape = 'bf16[40,8]{1,0:T(8,128)(2,1)}', space=vmem, size = 0x2800, scoped, tag = 'scratch operand']
  %s0 = inlined_call_operand.vmem [shape: bf16[2,25,72], index: 0, kind: input, shape index: {}]
  %s1 = inlined_call_operand.vmem [shape: bf16[2,25,1], index: 1, kind: input, shape index: {}]
  %s2 = inlined_call_operand.vmem [shape: bf16[72,16], index: 2, kind: input, shape index: {}]
  %s3 = inlined_call_operand.hbm [shape: f32[1,16], index: 3, kind: input, shape index: {}]
  %s4 = inlined_call_operand.vmem [shape: bf16[16,8], index: 4, kind: input, shape index: {}]
  %s5 = inlined_call_operand.hbm [shape: f32[1,8], index: 5, kind: input, shape index: {}]
  %s6 = inlined_call_operand.vmem [shape: bf16[16,8], index: 6, kind: input, shape index: {}]
  %s7 = inlined_call_operand.hbm [shape: f32[1,8], index: 7, kind: input, shape index: {}]
  %s8 = inlined_call_operand.vmem [shape: bf16[1,8,8], index: 8, kind: input, shape index: {}]
  %s9 = inlined_call_operand.hbm [shape: f32[1,1,8], index: 9, kind: input, shape index: {}]
  %s10 = inlined_call_operand.vmem [shape: bf16[9,8,8], index: 10, kind: input, shape index: {}]
  %s11 = inlined_call_operand.hbm [shape: f32[1,1,8], index: 11, kind: input, shape index: {}]
  %s12 = inlined_call_operand.vmem [shape: bf16[8,16], index: 12, kind: input, shape index: {}]
  %s13 = inlined_call_operand.vmem [shape: bf16[8,16], index: 13, kind: input, shape index: {}]
  %s14 = inlined_call_operand.hbm [shape: f32[1,16], index: 14, kind: input, shape index: {}]
  %s15 = inlined_call_operand.vmem [shape: bf16[2,25,16], index: 15, kind: output, shape index: {}]
  %s16 = sld [smem:[#allocation0]]
  $region117: #{_lambda_.6} parent=0
    _
  %s18 = ssub.s32 1, %s16
  %s19 = scalar_select 0, %s18, %s16
  $region1: #{_lambda_.6} parent=0
    #allocation3 [shape = 'u8[512]{0}', space=vmem, size = 0x400, scoped, tag = 'input window, operand 3, single buffered']
    #allocation4 [shape = 's32[2]{0}', space=sflag, size = 0x8, scoped, tag = 'scoped memory for _lambda_.6']
    #allocation5 [shape = 'u8[512]{0}', space=vmem, size = 0x400, scoped, tag = 'input window, operand 5, single buffered']
    #allocation6 [shape = 's32[1]{0}', space=sflag, size = 0x4, scoped, tag = 'scoped memory for _lambda_.6']
    #allocation7 [shape = 'u8[512]{0}', space=vmem, size = 0x400, scoped, tag = 'input window, operand 7, single buffered']
    #allocation8 [shape = 'u8[512]{0}', space=vmem, size = 0x400, scoped, tag = 'input window, operand 9, single buffered']
    #allocation9 [shape = 's32[1]{0}', space=sflag, size = 0x4, scoped, tag = 'scoped memory for _lambda_.6']
    #allocation10 [shape = 'u8[512]{0}', space=vmem, size = 0x400, scoped, tag = 'input window, operand 11, single buffered']
    #allocation11 [shape = 'u8[512]{0}', space=vmem, size = 0x400, scoped, tag = 'input window, operand 14, single buffered']
    #allocation12 [shape = 's32[1]{0}', space=sflag, size = 0x4, scoped, tag = 'scoped memory for _lambda_.6']
    %20 = vsyncpa [#allocation4], 0
    %21 = vsyncpa [#allocation6], 0
    %22 = vsyncpa [#allocation9], 0
    %23 = vsyncpa [#allocation12], 0
    loop: start=0, step=1, limit=4
    $region2: #{_lambda_.6} parent=1 // loop_pre_header
      _
    $region3: #{_lambda_.6} parent=1 // loop_header
      %s25 = sphi 0, %s29
      %p26 = scmp.ge.s32.totalorder %s25, 4
      %s35 = sphi 0, %s37
      %s38 = sphi 0, %s35
      %s39 = sphi 0, %s38
      %s55 = sphi 0, %s39
      %s59 = sphi 0, %s59
      %s61 = sphi 0, %s59
      %s62 = sphi 0, %s61
      %s76 = sphi 0, %s62
      %s80 = sphi 0, %s80
      %s82 = sphi 0, %s80
      %s83 = sphi 0, %s82
      %s97 = sphi 0, %s83
      %s101 = sphi 0, %s101
      %s103 = sphi 0, %s101
      %s104 = sphi 0, %s103
      %s118 = sphi 0, %s104
      %s122 = sphi 0, %s122
      %s124 = sphi 0, %s122
      %s125 = sphi 0, %s124
      %s139 = sphi 0, %s125
      %s143 = sphi 0, %s143
      %s145 = sphi 0, %s143
      %s146 = sphi 0, %s145
      %s160 = sphi 0, %s146
      %s164 = sphi 0, %s164
      %s166 = sphi 0, %s164
      %s167 = sphi 0, %s166
      %s181 = sphi 0, %s167
      %s185 = sphi 0, %s185
      %s187 = sphi 0, %s185
      %s188 = sphi 0, %s187
      %s202 = sphi 0, %s188
      %s206 = sphi 0, %s206
      %s208 = sphi 0, %s206
      %s209 = sphi 0, %s208
      %s223 = sphi 0, %s209
      %s227 = sphi 0, %s227
      %s229 = sphi 0, %s227
      %s230 = sphi 0, %s229
      %s244 = sphi 0, %s230
      %s248 = sphi 0, %s248
      %s250 = sphi 0, %s248
      %s251 = sphi 0, %s250
      %s265 = sphi 0, %s251
      %s269 = sphi 0, %s269
      %s271 = sphi 0, %s269
      %s272 = sphi 0, %s271
      %s286 = sphi 0, %s272
      %s290 = sphi 0, %s290
      %s292 = sphi 0, %s290
      %s293 = sphi 0, %s292
      %s307 = sphi 0, %s293
      %s311 = sphi 0, %s311
      %s313 = sphi 0, %s311
      %s314 = sphi 0, %s313
      %s328 = sphi 0, %s314
      %s332 = sphi 0, %s332
      %s334 = sphi 0, %s332
      %s335 = sphi 0, %s334
      %s349 = sphi 0, %s335
      %s355 = sphi 0, %s357
      %s358 = sphi 0, %s355
      %s359 = sphi 0, %s358
      %s375 = sphi 0, %s359
    $region4: #{_lambda_.6} parent=1 // loop_header_branch
      %28 = sbr.rel (%p26) target = $region8
    $region5: #{_lambda_.6} parent=1 // loop_body
      %s30 = ssub.s32 %s25, 1
      %s31 = ssub.s32 %s25, 2
      %s32 = sadd.s32 %s25, 1
      %s33 = ssub.s32 %s25, %s32
      %p34 = scmp.eq.s32.totalorder %s33, 0
      %s36 = sadd.s32 %s35, 1
      %s37 = scalar_select %p34, %s35, %s36
      %p40 = pneg %p34
      %p41 = scmp.eq.s32.totalorder %s25, 1
      %p42 = por %p40, %p41
      %p43 = scmp.ne.s32.totalorder %s35, %s38
      %p44 = scmp.eq.s32.totalorder %s25, 0
      %p45 = por %p43, %p44
      %p46 = scmp.ne.s32.totalorder %s35, %s38
      %p47 = scmp.eq.s32.totalorder %s30, 1
      %p48 = por %p46, %p47
      %p49 = scmp.ne.s32.totalorder %s38, %s39
      %p50 = scmp.eq.s32.totalorder %s30, 0
      %p51 = por %p49, %p50
      %p52 = scmp.ne.s32.totalorder %s38, %s39
      %p53 = scmp.eq.s32.totalorder %s31, 1
      %p54 = por %p52, %p53
      %p56 = scmp.ne.s32.totalorder %s39, %s55
      %p57 = scmp.eq.s32.totalorder %s31, 0
      %p58 = por %p56, %p57
      %s60 = sadd.s32 %s59, 1
      %p63 = scmp.eq.s32.totalorder %s25, 1
      %p64 = scmp.ne.s32.totalorder %s59, %s61
      %p65 = scmp.eq.s32.totalorder %s25, 0
      %p66 = por %p64, %p65
      %p67 = scmp.ne.s32.totalorder %s59, %s61
      %p68 = scmp.eq.s32.totalorder %s30, 1
      %p69 = por %p67, %p68
      %p70 = scmp.ne.s32.totalorder %s61, %s62
      %p71 = scmp.eq.s32.totalorder %s30, 0
      %p72 = por %p70, %p71
      %p73 = scmp.ne.s32.totalorder %s61, %s62
      %p74 = scmp.eq.s32.totalorder %s31, 1
      %p75 = por %p73, %p74
      %p77 = scmp.ne.s32.totalorder %s62, %s76
      %p78 = scmp.eq.s32.totalorder %s31, 0
      %p79 = por %p77, %p78
      %s81 = sadd.s32 %s80, 1
      %p84 = scmp.eq.s32.totalorder %s25, 1
      %p85 = scmp.ne.s32.totalorder %s80, %s82
      %p86 = scmp.eq.s32.totalorder %s25, 0
      %p87 = por %p85, %p86
      %p88 = scmp.ne.s32.totalorder %s80, %s82
      %p89 = scmp.eq.s32.totalorder %s30, 1
      %p90 = por %p88, %p89
      %p91 = scmp.ne.s32.totalorder %s82, %s83
      %p92 = scmp.eq.s32.totalorder %s30, 0
      %p93 = por %p91, %p92
      %p94 = scmp.ne.s32.totalorder %s82, %s83
      %p95 = scmp.eq.s32.totalorder %s31, 1
      %p96 = por %p94, %p95
      %p98 = scmp.ne.s32.totalorder %s83, %s97
      %p99 = scmp.eq.s32.totalorder %s31, 0
      %p100 = por %p98, %p99
      %s102 = sadd.s32 %s101, 1
      %p105 = scmp.eq.s32.totalorder %s25, 1
      %p106 = scmp.ne.s32.totalorder %s101, %s103
      %p107 = scmp.eq.s32.totalorder %s25, 0
      %p108 = por %p106, %p107
      %p109 = scmp.ne.s32.totalorder %s101, %s103
      %p110 = scmp.eq.s32.totalorder %s30, 1
      %p111 = por %p109, %p110
      %p112 = scmp.ne.s32.totalorder %s103, %s104
      %p113 = scmp.eq.s32.totalorder %s30, 0
      %p114 = por %p112, %p113
      %p115 = scmp.ne.s32.totalorder %s103, %s104
      %p116 = scmp.eq.s32.totalorder %s31, 1
      %p117 = por %p115, %p116
      %p119 = scmp.ne.s32.totalorder %s104, %s118
      %p120 = scmp.eq.s32.totalorder %s31, 0
      %p121 = por %p119, %p120
      %s123 = sadd.s32 %s122, 1
      %p126 = scmp.eq.s32.totalorder %s25, 1
      %p127 = scmp.ne.s32.totalorder %s122, %s124
      %p128 = scmp.eq.s32.totalorder %s25, 0
      %p129 = por %p127, %p128
      %p130 = scmp.ne.s32.totalorder %s122, %s124
      %p131 = scmp.eq.s32.totalorder %s30, 1
      %p132 = por %p130, %p131
      %p133 = scmp.ne.s32.totalorder %s124, %s125
      %p134 = scmp.eq.s32.totalorder %s30, 0
      %p135 = por %p133, %p134
      %p136 = scmp.ne.s32.totalorder %s124, %s125
      %p137 = scmp.eq.s32.totalorder %s31, 1
      %p138 = por %p136, %p137
      %p140 = scmp.ne.s32.totalorder %s125, %s139
      %p141 = scmp.eq.s32.totalorder %s31, 0
      %p142 = por %p140, %p141
      %s144 = sadd.s32 %s143, 1
      %p147 = scmp.eq.s32.totalorder %s25, 1
      %p148 = scmp.ne.s32.totalorder %s143, %s145
      %p149 = scmp.eq.s32.totalorder %s25, 0
      %p150 = por %p148, %p149
      %p151 = scmp.ne.s32.totalorder %s143, %s145
      %p152 = scmp.eq.s32.totalorder %s30, 1
      %p153 = por %p151, %p152
      %p154 = scmp.ne.s32.totalorder %s145, %s146
      %p155 = scmp.eq.s32.totalorder %s30, 0
      %p156 = por %p154, %p155
      %p157 = scmp.ne.s32.totalorder %s145, %s146
      %p158 = scmp.eq.s32.totalorder %s31, 1
      %p159 = por %p157, %p158
      %p161 = scmp.ne.s32.totalorder %s146, %s160
      %p162 = scmp.eq.s32.totalorder %s31, 0
      %p163 = por %p161, %p162
      %s165 = sadd.s32 %s164, 1
      %p168 = scmp.eq.s32.totalorder %s25, 1
      %p169 = scmp.ne.s32.totalorder %s164, %s166
      %p170 = scmp.eq.s32.totalorder %s25, 0
      %p171 = por %p169, %p170
      %p172 = scmp.ne.s32.totalorder %s164, %s166
      %p173 = scmp.eq.s32.totalorder %s30, 1
      %p174 = por %p172, %p173
      %p175 = scmp.ne.s32.totalorder %s166, %s167
      %p176 = scmp.eq.s32.totalorder %s30, 0
      %p177 = por %p175, %p176
      %p178 = scmp.ne.s32.totalorder %s166, %s167
      %p179 = scmp.eq.s32.totalorder %s31, 1
      %p180 = por %p178, %p179
      %p182 = scmp.ne.s32.totalorder %s167, %s181
      %p183 = scmp.eq.s32.totalorder %s31, 0
      %p184 = por %p182, %p183
      %s186 = sadd.s32 %s185, 1
      %p189 = scmp.eq.s32.totalorder %s25, 1
      %p190 = scmp.ne.s32.totalorder %s185, %s187
      %p191 = scmp.eq.s32.totalorder %s25, 0
      %p192 = por %p190, %p191
      %p193 = scmp.ne.s32.totalorder %s185, %s187
      %p194 = scmp.eq.s32.totalorder %s30, 1
      %p195 = por %p193, %p194
      %p196 = scmp.ne.s32.totalorder %s187, %s188
      %p197 = scmp.eq.s32.totalorder %s30, 0
      %p198 = por %p196, %p197
      %p199 = scmp.ne.s32.totalorder %s187, %s188
      %p200 = scmp.eq.s32.totalorder %s31, 1
      %p201 = por %p199, %p200
      %p203 = scmp.ne.s32.totalorder %s188, %s202
      %p204 = scmp.eq.s32.totalorder %s31, 0
      %p205 = por %p203, %p204
      %s207 = sadd.s32 %s206, 1
      %p210 = scmp.eq.s32.totalorder %s25, 1
      %p211 = scmp.ne.s32.totalorder %s206, %s208
      %p212 = scmp.eq.s32.totalorder %s25, 0
      %p213 = por %p211, %p212
      %p214 = scmp.ne.s32.totalorder %s206, %s208
      %p215 = scmp.eq.s32.totalorder %s30, 1
      %p216 = por %p214, %p215
      %p217 = scmp.ne.s32.totalorder %s208, %s209
      %p218 = scmp.eq.s32.totalorder %s30, 0
      %p219 = por %p217, %p218
      %p220 = scmp.ne.s32.totalorder %s208, %s209
      %p221 = scmp.eq.s32.totalorder %s31, 1
      %p222 = por %p220, %p221
      %p224 = scmp.ne.s32.totalorder %s209, %s223
      %p225 = scmp.eq.s32.totalorder %s31, 0
      %p226 = por %p224, %p225
      %s228 = sadd.s32 %s227, 1
      %p231 = scmp.eq.s32.totalorder %s25, 1
      %p232 = scmp.ne.s32.totalorder %s227, %s229
      %p233 = scmp.eq.s32.totalorder %s25, 0
      %p234 = por %p232, %p233
      %p235 = scmp.ne.s32.totalorder %s227, %s229
      %p236 = scmp.eq.s32.totalorder %s30, 1
      %p237 = por %p235, %p236
      %p238 = scmp.ne.s32.totalorder %s229, %s230
      %p239 = scmp.eq.s32.totalorder %s30, 0
      %p240 = por %p238, %p239
      %p241 = scmp.ne.s32.totalorder %s229, %s230
      %p242 = scmp.eq.s32.totalorder %s31, 1
      %p243 = por %p241, %p242
      %p245 = scmp.ne.s32.totalorder %s230, %s244
      %p246 = scmp.eq.s32.totalorder %s31, 0
      %p247 = por %p245, %p246
      %s249 = sadd.s32 %s248, 1
      %p252 = scmp.eq.s32.totalorder %s25, 1
      %p253 = scmp.ne.s32.totalorder %s248, %s250
      %p254 = scmp.eq.s32.totalorder %s25, 0
      %p255 = por %p253, %p254
      %p256 = scmp.ne.s32.totalorder %s248, %s250
      %p257 = scmp.eq.s32.totalorder %s30, 1
      %p258 = por %p256, %p257
      %p259 = scmp.ne.s32.totalorder %s250, %s251
      %p260 = scmp.eq.s32.totalorder %s30, 0
      %p261 = por %p259, %p260
      %p262 = scmp.ne.s32.totalorder %s250, %s251
      %p263 = scmp.eq.s32.totalorder %s31, 1
      %p264 = por %p262, %p263
      %p266 = scmp.ne.s32.totalorder %s251, %s265
      %p267 = scmp.eq.s32.totalorder %s31, 0
      %p268 = por %p266, %p267
      %s270 = sadd.s32 %s269, 1
      %p273 = scmp.eq.s32.totalorder %s25, 1
      %p274 = scmp.ne.s32.totalorder %s269, %s271
      %p275 = scmp.eq.s32.totalorder %s25, 0
      %p276 = por %p274, %p275
      %p277 = scmp.ne.s32.totalorder %s269, %s271
      %p278 = scmp.eq.s32.totalorder %s30, 1
      %p279 = por %p277, %p278
      %p280 = scmp.ne.s32.totalorder %s271, %s272
      %p281 = scmp.eq.s32.totalorder %s30, 0
      %p282 = por %p280, %p281
      %p283 = scmp.ne.s32.totalorder %s271, %s272
      %p284 = scmp.eq.s32.totalorder %s31, 1
      %p285 = por %p283, %p284
      %p287 = scmp.ne.s32.totalorder %s272, %s286
      %p288 = scmp.eq.s32.totalorder %s31, 0
      %p289 = por %p287, %p288
      %s291 = sadd.s32 %s290, 1
      %p294 = scmp.eq.s32.totalorder %s25, 1
      %p295 = scmp.ne.s32.totalorder %s290, %s292
      %p296 = scmp.eq.s32.totalorder %s25, 0
      %p297 = por %p295, %p296
      %p298 = scmp.ne.s32.totalorder %s290, %s292
      %p299 = scmp.eq.s32.totalorder %s30, 1
      %p300 = por %p298, %p299
      %p301 = scmp.ne.s32.totalorder %s292, %s293
      %p302 = scmp.eq.s32.totalorder %s30, 0
      %p303 = por %p301, %p302
      %p304 = scmp.ne.s32.totalorder %s292, %s293
      %p305 = scmp.eq.s32.totalorder %s31, 1
      %p306 = por %p304, %p305
      %p308 = scmp.ne.s32.totalorder %s293, %s307
      %p309 = scmp.eq.s32.totalorder %s31, 0
      %p310 = por %p308, %p309
      %s312 = sadd.s32 %s311, 1
      %p315 = scmp.eq.s32.totalorder %s25, 1
      %p316 = scmp.ne.s32.totalorder %s311, %s313
      %p317 = scmp.eq.s32.totalorder %s25, 0
      %p318 = por %p316, %p317
      %p319 = scmp.ne.s32.totalorder %s311, %s313
      %p320 = scmp.eq.s32.totalorder %s30, 1
      %p321 = por %p319, %p320
      %p322 = scmp.ne.s32.totalorder %s313, %s314
      %p323 = scmp.eq.s32.totalorder %s30, 0
      %p324 = por %p322, %p323
      %p325 = scmp.ne.s32.totalorder %s313, %s314
      %p326 = scmp.eq.s32.totalorder %s31, 1
      %p327 = por %p325, %p326
      %p329 = scmp.ne.s32.totalorder %s314, %s328
      %p330 = scmp.eq.s32.totalorder %s31, 0
      %p331 = por %p329, %p330
      %s333 = sadd.s32 %s332, 1
      %p336 = scmp.eq.s32.totalorder %s25, 1
      %p337 = scmp.ne.s32.totalorder %s332, %s334
      %p338 = scmp.eq.s32.totalorder %s25, 0
      %p339 = por %p337, %p338
      %p340 = scmp.ne.s32.totalorder %s332, %s334
      %p341 = scmp.eq.s32.totalorder %s30, 1
      %p342 = por %p340, %p341
      %p343 = scmp.ne.s32.totalorder %s334, %s335
      %p344 = scmp.eq.s32.totalorder %s30, 0
      %p345 = por %p343, %p344
      %p346 = scmp.ne.s32.totalorder %s334, %s335
      %p347 = scmp.eq.s32.totalorder %s31, 1
      %p348 = por %p346, %p347
      %p350 = scmp.ne.s32.totalorder %s335, %s349
      %p351 = scmp.eq.s32.totalorder %s31, 0
      %p352 = por %p350, %p351
      %s353 = ssub.s32 %s25, %s32
      %p354 = scmp.eq.s32.totalorder %s353, 0
      %s356 = sadd.s32 %s355, 1
      %s357 = scalar_select %p354, %s355, %s356
      %p360 = pneg %p354
      %p361 = scmp.eq.s32.totalorder %s25, 1
      %p362 = por %p360, %p361
      %p363 = scmp.ne.s32.totalorder %s355, %s358
      %p364 = scmp.eq.s32.totalorder %s25, 0
      %p365 = por %p363, %p364
      %p366 = scmp.ne.s32.totalorder %s355, %s358
      %p367 = scmp.eq.s32.totalorder %s30, 1
      %p368 = por %p366, %p367
      %p369 = scmp.ne.s32.totalorder %s358, %s359
      %p370 = scmp.eq.s32.totalorder %s30, 0
      %p371 = por %p369, %p370
      %p372 = scmp.ne.s32.totalorder %s358, %s359
      %p373 = scmp.eq.s32.totalorder %s31, 1
      %p374 = por %p372, %p373
      %p376 = scmp.ne.s32.totalorder %s359, %s375
      %p377 = scmp.eq.s32.totalorder %s31, 0
      %p378 = por %p376, %p377
      %p379 = scmp.le.s32.totalorder 1, %s25
      %p380 = scmp.lt.s32.totalorder %s25, 3
      %p381 = pnand %p379, %p380
      %p382 = pneg %p381
      // Predicated region
      $region9: #{_lambda_.6} parent=5 // pred_check
        _
      $region10: #{_lambda_.6} parent=5 // pred_check_branch
        %384 = sbr.rel (%p381) target = $region12
      $region11: #{_lambda_.6} parent=5 // pred_region
        %s385 = ssub.s32 %s25, 1
        // Predicated region
        $region13: #{_lambda_.6} parent=11 // pred_check
          %p386 = pneg %p72
        $region14: #{_lambda_.6} parent=11 // pred_check_branch
          %388 = sbr.rel (%p386) target = $region16
        $region15: #{_lambda_.6} parent=11 // pred_region
          _
        $region16: #{_lambda_.6} parent=11 // pred_fallthru
          _
        // Predicated region
        $region17: #{_lambda_.6} parent=11 // pred_check
          %p389 = pneg %p93
        $region18: #{_lambda_.6} parent=11 // pred_check_branch
          %391 = sbr.rel (%p389) target = $region20
        $region19: #{_lambda_.6} parent=11 // pred_region
          _
        $region20: #{_lambda_.6} parent=11 // pred_fallthru
          _
        // Predicated region
        $region21: #{_lambda_.6} parent=11 // pred_check
          %p392 = pneg %p114
        $region22: #{_lambda_.6} parent=11 // pred_check_branch
          %394 = sbr.rel (%p392) target = $region24
        $region23: #{_lambda_.6} parent=11 // pred_region
          %396 = vsyncadd [#allocation4], 0
          %s398 = sshll.u32 %s3, 4
          %s399 = int_to_ptr.hbm [resolvable:$true] %s398
          %s400 = sshll.u32 [#allocation3], 4
          %s401 = int_to_ptr.vmem [resolvable:$true] %s400
          %403 = dma.hbm_to_vmem [thread:$0]  %s399, 16, %s401, [#allocation4]
        $region24: #{_lambda_.6} parent=11 // pred_fallthru
          _
        // Predicated region
        $region25: #{_lambda_.6} parent=11 // pred_check
          %p404 = pneg %p135
        $region26: #{_lambda_.6} parent=11 // pred_check_branch
          %406 = sbr.rel (%p404) target = $region28
        $region27: #{_lambda_.6} parent=11 // pred_region
          _
        $region28: #{_lambda_.6} parent=11 // pred_fallthru
          _
        // Predicated region
        $region29: #{_lambda_.6} parent=11 // pred_check
          %p407 = pneg %p156
        $region30: #{_lambda_.6} parent=11 // pred_check_branch
          %409 = sbr.rel (%p407) target = $region32
        $region31: #{_lambda_.6} parent=11 // pred_region
          %411 = vsyncadd [#allocation6], 0
          %s413 = sshll.u32 %s5, 4
          %s414 = int_to_ptr.hbm [resolvable:$true] %s413
          %s415 = sshll.u32 [#allocation5], 4
          %s416 = int_to_ptr.vmem [resolvable:$true] %s415
          %418 = dma.hbm_to_vmem [thread:$0]  %s414, 16, %s416, [#allocation6]
        $region32: #{_lambda_.6} parent=11 // pred_fallthru
          _
        // Predicated region
        $region33: #{_lambda_.6} parent=11 // pred_check
          %p419 = pneg %p177
        $region34: #{_lambda_.6} parent=11 // pred_check_branch
          %421 = sbr.rel (%p419) target = $region36
        $region35: #{_lambda_.6} parent=11 // pred_region
          _
        $region36: #{_lambda_.6} parent=11 // pred_fallthru
          _
        // Predicated region
        $region37: #{_lambda_.6} parent=11 // pred_check
          %p422 = pneg %p198
        $region38: #{_lambda_.6} parent=11 // pred_check_branch
          %424 = sbr.rel (%p422) target = $region40
        $region39: #{_lambda_.6} parent=11 // pred_region
          %426 = vsyncadd [#allocation6], 0
          %s428 = sshll.u32 %s7, 4
          %s429 = int_to_ptr.hbm [resolvable:$true] %s428
          %s430 = sshll.u32 [#allocation7], 4
          %s431 = int_to_ptr.vmem [resolvable:$true] %s430
          %433 = dma.hbm_to_vmem [thread:$0]  %s429, 16, %s431, [#allocation6]
        $region40: #{_lambda_.6} parent=11 // pred_fallthru
          _
        // Predicated region
        $region41: #{_lambda_.6} parent=11 // pred_check
          %p434 = pneg %p219
        $region42: #{_lambda_.6} parent=11 // pred_check_branch
          %436 = sbr.rel (%p434) target = $region44
        $region43: #{_lambda_.6} parent=11 // pred_region
          _
        $region44: #{_lambda_.6} parent=11 // pred_fallthru
          _
        // Predicated region
        $region45: #{_lambda_.6} parent=11 // pred_check
          %p437 = pneg %p240
        $region46: #{_lambda_.6} parent=11 // pred_check_branch
          %439 = sbr.rel (%p437) target = $region48
        $region47: #{_lambda_.6} parent=11 // pred_region
          %441 = vsyncadd [#allocation9], 0
          %s443 = sshll.u32 %s9, 4
          %s444 = int_to_ptr.hbm [resolvable:$true] %s443
          %s445 = sshll.u32 [#allocation8], 4
          %s446 = int_to_ptr.vmem [resolvable:$true] %s445
          %448 = dma.hbm_to_vmem [thread:$0]  %s444, 16, %s446, [#allocation9]
        $region48: #{_lambda_.6} parent=11 // pred_fallthru
          _
        // Predicated region
        $region49: #{_lambda_.6} parent=11 // pred_check
          %p449 = pneg %p261
        $region50: #{_lambda_.6} parent=11 // pred_check_branch
          %451 = sbr.rel (%p449) target = $region52
        $region51: #{_lambda_.6} parent=11 // pred_region
          _
        $region52: #{_lambda_.6} parent=11 // pred_fallthru
          _
        // Predicated region
        $region53: #{_lambda_.6} parent=11 // pred_check
          %p452 = pneg %p282
        $region54: #{_lambda_.6} parent=11 // pred_check_branch
          %454 = sbr.rel (%p452) target = $region56
        $region55: #{_lambda_.6} parent=11 // pred_region
          %456 = vsyncadd [#allocation9], 0
          %s458 = sshll.u32 %s11, 4
          %s459 = int_to_ptr.hbm [resolvable:$true] %s458
          %s460 = sshll.u32 [#allocation10], 4
          %s461 = int_to_ptr.vmem [resolvable:$true] %s460
          %463 = dma.hbm_to_vmem [thread:$0]  %s459, 16, %s461, [#allocation9]
        $region56: #{_lambda_.6} parent=11 // pred_fallthru
          _
        // Predicated region
        $region57: #{_lambda_.6} parent=11 // pred_check
          %p464 = pneg %p303
        $region58: #{_lambda_.6} parent=11 // pred_check_branch
          %466 = sbr.rel (%p464) target = $region60
        $region59: #{_lambda_.6} parent=11 // pred_region
          _
        $region60: #{_lambda_.6} parent=11 // pred_fallthru
          _
        // Predicated region
        $region61: #{_lambda_.6} parent=11 // pred_check
          %p467 = pneg %p324
        $region62: #{_lambda_.6} parent=11 // pred_check_branch
          %469 = sbr.rel (%p467) target = $region64
        $region63: #{_lambda_.6} parent=11 // pred_region
          _
        $region64: #{_lambda_.6} parent=11 // pred_fallthru
          _
        // Predicated region
        $region65: #{_lambda_.6} parent=11 // pred_check
          %p470 = pneg %p345
        $region66: #{_lambda_.6} parent=11 // pred_check_branch
          %472 = sbr.rel (%p470) target = $region68
        $region67: #{_lambda_.6} parent=11 // pred_region
          %474 = vsyncadd [#allocation12], 0
          %s476 = sshll.u32 %s14, 4
          %s477 = int_to_ptr.hbm [resolvable:$true] %s476
          %s478 = sshll.u32 [#allocation11], 4
          %s479 = int_to_ptr.vmem [resolvable:$true] %s478
          %481 = dma.hbm_to_vmem [thread:$0]  %s477, 16, %s479, [#allocation12]
        $region68: #{_lambda_.6} parent=11 // pred_fallthru
          _
      $region12: #{_lambda_.6} parent=5 // pred_fallthru
        _
      %p482 = scmp.lt.s32.totalorder %s25, 2
      // Predicated region
      $region69: #{_lambda_.6} parent=5 // pred_check
        %p483 = pneg %p482
      $region70: #{_lambda_.6} parent=5 // pred_check_branch
        %485 = sbr.rel (%p483) target = $region72
      $region71: #{_lambda_.6} parent=5 // pred_region
        // Predicated region
        $region73: #{_lambda_.6} parent=71 // pred_check
          %p486 = pneg %p45
        $region74: #{_lambda_.6} parent=71 // pred_check_branch
          %488 = sbr.rel (%p486) target = $region76
        $region75: #{_lambda_.6} parent=71 // pred_region
          %p489 = scmp.lt.s32.totalorder %s25, 1
          %s490 = scalar_select %p489, %s25, 1
          %s491 = smul.addr %s490, 4
          %s492 = smul.addr %s491, 4
          %s493 = scalar_lea.vmem %s0, %s492
        $region76: #{_lambda_.6} parent=71 // pred_fallthru
          _
      $region72: #{_lambda_.6} parent=5 // pred_fallthru
        _
      %p494 = scmp.le.s32.totalorder 1, %s25
      %p495 = scmp.lt.s32.totalorder %s25, 3
      %p496 = pnand %p494, %p495
      %p497 = pneg %p496
      // Predicated region
      $region77: #{_lambda_.6} parent=5 // pred_check
        _
      $region78: #{_lambda_.6} parent=5 // pred_check_branch
        %499 = sbr.rel (%p496) target = $region80
      $region79: #{_lambda_.6} parent=5 // pred_region
        %s500 = ssub.s32 %s25, 1
        // Predicated region
        $region81: #{_lambda_.6} parent=79 // pred_check
          %p501 = pneg %p114
        $region82: #{_lambda_.6} parent=79 // pred_check_branch
          %503 = sbr.rel (%p501) target = $region84
        $region83: #{_lambda_.6} parent=79 // pred_region
          %505 = dma.done [#allocation4], 16
        $region84: #{_lambda_.6} parent=79 // pred_fallthru
          _
        // Predicated region
        $region85: #{_lambda_.6} parent=79 // pred_check
          %p506 = pneg %p156
        $region86: #{_lambda_.6} parent=79 // pred_check_branch
          %508 = sbr.rel (%p506) target = $region88
        $region87: #{_lambda_.6} parent=79 // pred_region
          %510 = dma.done [#allocation6], 16
        $region88: #{_lambda_.6} parent=79 // pred_fallthru
          _
        // Predicated region
        $region89: #{_lambda_.6} parent=79 // pred_check
          %p511 = pneg %p198
        $region90: #{_lambda_.6} parent=79 // pred_check_branch
          %513 = sbr.rel (%p511) target = $region92
        $region91: #{_lambda_.6} parent=79 // pred_region
          %515 = dma.done [#allocation6], 16
        $region92: #{_lambda_.6} parent=79 // pred_fallthru
          _
        // Predicated region
        $region93: #{_lambda_.6} parent=79 // pred_check
          %p516 = pneg %p240
        $region94: #{_lambda_.6} parent=79 // pred_check_branch
          %518 = sbr.rel (%p516) target = $region96
        $region95: #{_lambda_.6} parent=79 // pred_region
          %520 = dma.done [#allocation9], 16
        $region96: #{_lambda_.6} parent=79 // pred_fallthru
          _
        // Predicated region
        $region97: #{_lambda_.6} parent=79 // pred_check
          %p521 = pneg %p282
        $region98: #{_lambda_.6} parent=79 // pred_check_branch
          %523 = sbr.rel (%p521) target = $region100
        $region99: #{_lambda_.6} parent=79 // pred_region
          %525 = dma.done [#allocation9], 16
        $region100: #{_lambda_.6} parent=79 // pred_fallthru
          _
        // Predicated region
        $region101: #{_lambda_.6} parent=79 // pred_check
          %p526 = pneg %p345
        $region102: #{_lambda_.6} parent=79 // pred_check_branch
          %528 = sbr.rel (%p526) target = $region104
        $region103: #{_lambda_.6} parent=79 // pred_region
          %530 = dma.done [#allocation12], 16
        $region104: #{_lambda_.6} parent=79 // pred_fallthru
          _
        %p531 = scmp.lt.s32.totalorder %s30, 1
        %s532 = scalar_select %p531, %s30, 1
        %s533 = smul.addr %s532, 4
        %s534 = smul.addr %s533, 4
        %s535 = scalar_lea.vmem %s0, %s534
        %p536 = pneg %p51
        %p537 = pneg %p48
        %p538 = pneg %p72
        %p539 = pneg %p69
        %p540 = pneg %p93
        %p541 = pneg %p90
        %p542 = pneg %p114
        %p543 = pneg %p111
        %p544 = pneg %p135
        %p545 = pneg %p132
        %p546 = pneg %p156
        %p547 = pneg %p153
        %p548 = pneg %p177
        %p549 = pneg %p174
        %p550 = pneg %p198
        %p551 = pneg %p195
        %p552 = pneg %p219
        %p553 = pneg %p216
        %p554 = pneg %p240
        %p555 = pneg %p237
        %p556 = pneg %p261
        %p557 = pneg %p258
        %p558 = pneg %p282
        %p559 = pneg %p279
        %p560 = pneg %p303
        %p561 = pneg %p300
        %p562 = pneg %p324
        %p563 = pneg %p321
        %p564 = pneg %p345
        %p565 = pneg %p342
        %p566 = pneg %p371
        %p567 = pneg %p368
        %p568 = scmp.lt.s32.totalorder %s30, 1
        %s569 = scalar_select %p568, %s30, 1
        %s570 = smul.addr %s569, 4
        %s571 = smul.addr %s570, 4
        %s572 = scalar_lea.vmem %s15, %s571
        %p573 = scmp.lt.s32.totalorder %s30, 1
        %s574 = scalar_select %p573, %s30, 1
        %s575 = smul.addr %s574, 4
        %s576 = smul.addr %s575, 4
        %s577 = scalar_lea.vmem %s0, %s576
        %p578 = scmp.lt.s32.totalorder %s30, 1
        %s579 = scalar_select %p578, %s30, 1
        %s580 = smul.addr %s579, 4
        %s581 = smul.addr %s580, 4
        %s582 = scalar_lea.vmem %s15, %s581
        %v584 = vld [vmem:[%s577] sm:$0xf]
        %v585 = vld [vmem:[%s577 + $0x4] sm:$0xf]
        %v586 = vld [vmem:[%s577 + $0x8] sm:$0xf]
        %v587 = vld [vmem:[%s577 + $0xc] sm:$0x1]
        %v588 = vld [vmem:[%s2] sm:$0xf]
        %v589 = vld [vmem:[%s2 + $0x4] sm:$0xf]
        %v590 = vld [vmem:[%s2 + $0x8] sm:$0xf]
        %v591 = vld [vmem:[%s2 + $0xc] sm:$0xf]
        %v592 = vld [vmem:[%s2 + $0x10] sm:$0xf]
        %v593 = vld [vmem:[%s2 + $0x14] sm:$0xf]
        %v594 = vld [vmem:[%s2 + $0x18] sm:$0xf]
        %v595 = vld [vmem:[%s2 + $0x1c] sm:$0xf]
        %v596 = vld [vmem:[%s2 + $0x20] sm:$0xf]
        %v597 = vld [vmem:[#allocation3] sm:$0x1]
        %v599 = vperm.slane %v597, 0
        %v605 = vunpack.c.l.b16 %v584
        %v606 = vunpack.c.l.b16 %v585
        %v607 = vunpack.c.l.b16 %v586
        %v608 = vunpack.c.l.b16 %v587
        %v609 = vpack.c.b16 %v606, %v605
        %v610 = vpack.c.b16 %v608, %v607
        %v620 = vunpack.c.l.b16 %v588
        %v621 = vunpack.c.l.b16 %v589
        %v622 = vunpack.c.l.b16 %v590
        %v623 = vunpack.c.l.b16 %v591
        %v624 = vunpack.c.l.b16 %v592
        %v625 = vunpack.c.l.b16 %v593
        %v626 = vunpack.c.l.b16 %v594
        %v627 = vunpack.c.l.b16 %v595
        %v628 = vunpack.c.l.b16 %v596
        %v629 = vpack.c.b16 %v621, %v620
        %v630 = vpack.c.b16 %v623, %v622
        %v631 = vpack.c.b16 %v625, %v624
        %v632 = vpack.c.b16 %v627, %v626
        %v633 = vpack.c.b16 %v628, %v628
        %vm638 = vcmask 588800
        %v640 = vsel %vm638, %v609, 0
        %v643 = vsel %vm638, %v610, 0
        %vm645 = vcmask 1043456
        %v647 = vsel %vm645, %v633, 0
        %649 = vmatpush.bf16.msra.mxu0 0
        %650 = vmatpush.bf16.msra.mxu0 0
        %651 = vmatpush.bf16.msra.mxu0 0
        %652 = vmatpush.bf16.msra.mxu0 %v647
        %653 = vmatpush.bf16.msra.mxu0 %v632
        %654 = vmatpush.bf16.msra.mxu0 %v631
        %655 = vmatpush.bf16.msra.mxu0 %v630
        %656 = vmatpush.bf16.msra.mxu0 %v629
        %657 = vmatmul.bf16.gmra.mxu0 %v640
        %v658 = vpop.f32.mrf.mxu0
        %v659 = vadd.f32 %v599, %v658
        %v660 = vpop.f32.mrf.mxu0
        %v661 = vadd.f32 %v599, %v660
        %662 = vmatmul.bf16.gmra.mxu0 %v643
        %v663 = vpop.f32.mrf.mxu0
        %v664 = vadd.f32 %v599, %v663
        %v665 = vpop.f32.mrf.mxu0
        %v666 = vadd.f32 %v599, %v665
        %667 = vdwg.mxu0
        %v668 = vmul.f32 %v659, 0.5
        %v669 = vmul.f32 %v661, 0.5
        %v670 = vmul.f32 %v664, 0.5
        %v671 = vmul.f32 %v666, 0.5
        %v672 = vtanh.pop %v668
        %v673 = vtanh.pop %v669
        %v674 = vtanh.pop %v670
        %v675 = vtanh.pop %v671
        %v676 = vadd.f32 %v672, 1.0
        %v677 = vadd.f32 %v673, 1.0
        %v678 = vadd.f32 %v674, 1.0
        %v679 = vadd.f32 %v675, 1.0
        %v680 = vmul.f32 %v668, %v676
        %v681 = vmul.f32 %v669, %v677
        %v682 = vmul.f32 %v670, %v678
        %v683 = vmul.f32 %v671, %v679
        %v684 = vpack.c.bf16 %v681, %v680
        %v685 = vpack.c.bf16 %v683, %v682
        %v686 = vld [vmem:[%s4] sm:$0xf]
        %v687 = vld [vmem:[%s4 + $0x4] sm:$0xf]
        %v688 = vld [vmem:[#allocation5] sm:$0x1]
        %v690 = vperm.slane %v688, 0
        %v694 = vunpack.c.l.b16 %v686
        %v695 = vunpack.c.l.b16 %v687
        %v696 = vpack.c.b16 %v695, %v694
        %vm698 = vcmask 130048
        %v700 = vsel %vm698, %v684, 0
        %v703 = vsel %vm698, %v685, 0
        %705 = vmatpush.bf16.msra.mxu0 0
        %706 = vmatpush.bf16.msra.mxu0 0
        %707 = vmatpush.bf16.msra.mxu0 0
        %708 = vmatpush.bf16.msra.mxu0 0
        %709 = vmatpush.bf16.msra.mxu0 0
        %710 = vmatpush.bf16.msra.mxu0 0
        %711 = vmatpush.bf16.msra.mxu0 0
        %712 = vmatpush.bf16.msra.mxu0 %v696
        %713 = vmatmul.bf16.gmra.mxu0 %v700
        %v714 = vpop.f32.mrf.mxu0
        %v715 = vadd.f32 %v690, %v714
        %v716 = vpop.f32.mrf.mxu0
        %v717 = vadd.f32 %v690, %v716
        %718 = vmatmul.bf16.gmra.mxu0 %v703
        %v719 = vpop.f32.mrf.mxu0
        %v720 = vadd.f32 %v690, %v719
        %v721 = vpop.f32.mrf.mxu0
        %v722 = vadd.f32 %v690, %v721
        %723 = vdwg.mxu0
        %v724 = vmul.f32 %v715, 0.5
        %v725 = vmul.f32 %v717, 0.5
        %v726 = vmul.f32 %v720, 0.5
        %v727 = vmul.f32 %v722, 0.5
        %v728 = vtanh.pop %v724
        %v729 = vtanh.pop %v725
        %v730 = vtanh.pop %v726
        %v731 = vtanh.pop %v727
        %v732 = vadd.f32 %v728, 1.0
        %v733 = vadd.f32 %v729, 1.0
        %v734 = vadd.f32 %v730, 1.0
        %v735 = vadd.f32 %v731, 1.0
        %v736 = vmul.f32 %v724, %v732
        %v737 = vmul.f32 %v725, %v733
        %v738 = vmul.f32 %v726, %v734
        %v739 = vmul.f32 %v727, %v735
        %v740 = vld [vmem:[%s6] sm:$0xf]
        %v741 = vld [vmem:[%s6 + $0x4] sm:$0xf]
        %v742 = vld [vmem:[#allocation7] sm:$0x1]
        %v744 = vperm.slane %v742, 0
        %v748 = vunpack.c.l.b16 %v740
        %v749 = vunpack.c.l.b16 %v741
        %v750 = vpack.c.b16 %v749, %v748
        %752 = vmatpush.bf16.msra.mxu0 0
        %753 = vmatpush.bf16.msra.mxu0 0
        %754 = vmatpush.bf16.msra.mxu0 0
        %755 = vmatpush.bf16.msra.mxu0 0
        %756 = vmatpush.bf16.msra.mxu0 0
        %757 = vmatpush.bf16.msra.mxu0 0
        %758 = vmatpush.bf16.msra.mxu0 0
        %759 = vmatpush.bf16.msra.mxu0 %v750
        %760 = vmatmul.bf16.gmra.mxu0 %v700
        %v761 = vpop.f32.mrf.mxu0
        %v762 = vadd.f32 %v744, %v761
        %v763 = vpop.f32.mrf.mxu0
        %v764 = vadd.f32 %v744, %v763
        %765 = vmatmul.bf16.gmra.mxu0 %v703
        %v766 = vpop.f32.mrf.mxu0
        %v767 = vadd.f32 %v744, %v766
        %v768 = vpop.f32.mrf.mxu0
        %v769 = vadd.f32 %v744, %v768
        %770 = vdwg.mxu0
        %v771 = vmul.f32 %v762, 0.5
        %v772 = vmul.f32 %v764, 0.5
        %v773 = vmul.f32 %v767, 0.5
        %v774 = vmul.f32 %v769, 0.5
        %v775 = vtanh.pop %v771
        %v776 = vtanh.pop %v772
        %v777 = vtanh.pop %v773
        %v778 = vtanh.pop %v774
        %v779 = vadd.f32 %v775, 1.0
        %v780 = vadd.f32 %v776, 1.0
        %v781 = vadd.f32 %v777, 1.0
        %v782 = vadd.f32 %v778, 1.0
        %v783 = vmul.f32 %v771, %v779
        %v784 = vmul.f32 %v772, %v780
        %v785 = vmul.f32 %v773, %v781
        %v786 = vmul.f32 %v774, %v782
        %vm787 = vcmask 60416
        %788 = vst.msk [vmem:[#allocation2] sm:$0xf] %vm787, 0
        %vm789 = vcmask 60416
        %vm790 = vsmask.f32 7938
        %vm791 = vmand %vm789, %vm790
        %v792 = vld [vmem:[#allocation2 + $0x10] sm:$0xf]
        %v793 = vsel %vm791, 0, %v792
        %794 = vst [vmem:[#allocation2 + $0x10] sm:$0xf] %v793
        %v795 = vld [vmem:[%s1] sm:$0xf]
        %v796 = vld [vmem:[%s1 + $0x4] sm:$0xf]
        %v797 = vld [vmem:[%s1 + $0x8] sm:$0xf]
        %v798 = vld [vmem:[%s1 + $0xc] sm:$0x1]
        %s799 = scalar_lea.vmem %s1, 16
        %v800 = vld [vmem:[%s799] sm:$0xf]
        %v801 = vld [vmem:[%s799 + $0x4] sm:$0xf]
        %v802 = vld [vmem:[%s799 + $0x8] sm:$0xf]
        %v803 = vld [vmem:[%s799 + $0xc] sm:$0x1]
        %v804 = vpack.c.bf16 %v737, %v736
        %v805 = vpack.c.bf16 %v739, %v738
        %v806 = vld [vmem:[%s8] sm:$0xf]
        %v807 = vld [vmem:[#allocation8] sm:$0x1]
        %v809 = vperm.slane %v807, 0
        %vm811 = vcmask 64512
        %v813 = vsel %vm811, %v804, 0
        %v816 = vsel %vm811, %v805, 0
        %v819 = vsel %vm645, %v806, 0
        %821 = vmatpush.bf16.msra.mxu0 0
        %822 = vmatpush.bf16.msra.mxu0 0
        %823 = vmatpush.bf16.msra.mxu0 0
        %824 = vmatpush.bf16.msra.mxu0 0
        %825 = vmatpush.bf16.msra.mxu0 0
        %826 = vmatpush.bf16.msra.mxu0 0
        %827 = vmatpush.bf16.msra.mxu0 0
        %828 = vmatpush.bf16.msra.mxu0 %v819
        %829 = vmatmul.bf16.gmra.mxu0 %v813
        %v830 = vpop.f32.mrf.mxu0
        %v831 = vadd.f32 %v809, %v830
        %v832 = vpop.f32.mrf.mxu0
        %v833 = vadd.f32 %v809, %v832
        %834 = vmatmul.bf16.gmra.mxu0 %v816
        %v835 = vpop.f32.mrf.mxu0
        %v836 = vadd.f32 %v809, %v835
        %v837 = vpop.f32.mrf.mxu0
        %v838 = vadd.f32 %v809, %v837
        %839 = vdwg.mxu0
        %v840 = vmul.f32 %v831, 0.5
        %v841 = vmul.f32 %v833, 0.5
        %v842 = vmul.f32 %v836, 0.5
        %v843 = vmul.f32 %v838, 0.5
        %v844 = vtanh.pop %v840
        %v845 = vtanh.pop %v841
        %v846 = vtanh.pop %v842
        %v847 = vtanh.pop %v843
        %v848 = vadd.f32 %v844, 1.0
        %v849 = vadd.f32 %v845, 1.0
        %v850 = vadd.f32 %v846, 1.0
        %v851 = vadd.f32 %v847, 1.0
        %v852 = vmul.f32 %v840, %v848
        %v853 = vmul.f32 %v841, %v849
        %v854 = vmul.f32 %v842, %v850
        %v855 = vmul.f32 %v843, %v851
        %v856 = vpack.c.bf16 %v852, %v852
        %v857 = vpack.c.bf16 %v853, %v853
        %v858 = vpack.c.bf16 %v854, %v854
        %v859 = vpack.c.bf16 %v855, %v855
        %860 = vst.msk [vmem:[#allocation2 + $0x4] sm:$0xf] %vm787, %v856
        %861 = vst.msk [vmem:[#allocation2 + $0x8] sm:$0xf] %vm787, %v857
        %862 = vst.msk [vmem:[#allocation2 + $0xc] sm:$0xf] %vm787, %v858
        %vm863 = vcmask 57344
        %vm864 = vsmask.f32 256
        %vm865 = vmand %vm863, %vm864
        %v866 = vld [vmem:[#allocation2 + $0x10] sm:$0x1]
        %v867 = vsel %vm865, %v859, %v866
        %868 = vst [vmem:[#allocation2 + $0x10] sm:$0x1] %v867
        %v869 = vld [vmem:[#allocation2] sm:$0xe]
        %v870 = vld [vmem:[#allocation2 + $0x4] sm:$0xf]
        %v871 = vld [vmem:[#allocation2 + $0x8] sm:$0xf]
        %v872 = vld [vmem:[#allocation2 + $0xc] sm:$0x3]
        %874 = vset.pattern.permute.xlu0 0
        %875 = vperm.xlu0 %874, %v795
        %v876 = vpop.permute.xlu0 %875
        %v879 = vunpack.c.l.s4 839922192
        %v880 = vunpack.c.0.s8 %v879
        %v881 = vperm.slane %v876, %v880
        %883 = vset.pattern.permute.xlu0 0
        %884 = vperm.xlu0 %883, %v796
        %v885 = vpop.permute.xlu0 %884
        %v888 = vunpack.c.l.s4 839922192
        %v889 = vunpack.c.0.s8 %v888
        %v890 = vperm.slane %v885, %v889
        %892 = vset.pattern.permute.xlu0 0
        %893 = vperm.xlu0 %892, %v797
        %v894 = vpop.permute.xlu0 %893
        %v897 = vunpack.c.l.s4 839922192
        %v898 = vunpack.c.0.s8 %v897
        %v899 = vperm.slane %v894, %v898
        %901 = vset.pattern.permute.xlu0 0
        %902 = vperm.xlu0 %901, %v798
        %v903 = vpop.permute.xlu0 %902
        %v906 = vunpack.c.l.s4 839922192
        %v907 = vunpack.c.0.s8 %v906
        %v908 = vperm.slane %v903, %v907
        %v909 = vunpack.c.l.bf16 %v869
        %v910 = vunpack.c.l.bf16 %v870
        %v911 = vunpack.c.l.bf16 %v871
        %v912 = vunpack.c.l.bf16 %v872
        %v913 = vunpack.c.l.bf16 %v881
        %v914 = vunpack.c.l.bf16 %v890
        %v915 = vunpack.c.l.bf16 %v899
        %v916 = vunpack.c.l.bf16 %v908
        %vm921 = vcmask 1041408
        %v922 = vrot.slane %v913, 6
        %v923 = vrot.slane %v914, 6
        %v924 = vsel %vm921, %v922, %v923
        %v925 = vrot.slane %v915, 6
        %v926 = vsel %vm921, %v923, %v925
        %v927 = vrot.slane %v916, 6
        %v928 = vsel %vm921, %v925, %v927
        %v933 = vmul.f32 %v909, %v922
        %v934 = vmul.f32 %v910, %v924
        %v935 = vmul.f32 %v911, %v926
        %v936 = vmul.f32 %v912, %v928
        %v937 = vpack.c.bf16 %v934, %v933
        %v938 = vpack.c.bf16 %v936, %v935
        %v939 = vld [vmem:[%s10] sm:$0xf]
        %s940 = scalar_lea.vmem %s10, 4
        %v941 = vld [vmem:[%s940] sm:$0xf]
        %v946 = vunpack.c.l.b16 %v869
        %v947 = vunpack.c.l.b16 %v870
        %v948 = vunpack.c.l.b16 %v871
        %v949 = vunpack.c.l.b16 %v872
        %v950 = vpack.c.b16 %v947, %v946
        %v951 = vpack.c.b16 %v949, %v948
        %vm952 = vsmask.f32 6400
        %v954 = vshrl.u32 %v950, 16
        %v956 = vrot.slane %v954, 1
        %v957 = vshll.u32 %v950, 16
        %v959 = vrot.slane %v957, 2
        %v960 = vor.u32 %v956, %v959
        %v962 = vshrl.u32 %v951, 16
        %v964 = vrot.slane %v962, 1
        %v965 = vshll.u32 %v951, 16
        %v967 = vrot.slane %v965, 2
        %v968 = vor.u32 %v964, %v967
        %v969 = vsel %vm952, %v960, %v968
        %v971 = vsel %vm811, %v969, 0
        %v974 = vsel %vm811, %v968, 0
        %v977 = vsel %vm645, %v941, 0
        %979 = vmatpush.bf16.msra.mxu0 0
        %980 = vmatpush.bf16.msra.mxu0 0
        %981 = vmatpush.bf16.msra.mxu0 0
        %982 = vmatpush.bf16.msra.mxu0 0
        %983 = vmatpush.bf16.msra.mxu0 0
        %984 = vmatpush.bf16.msra.mxu0 0
        %985 = vmatpush.bf16.msra.mxu0 0
        %986 = vmatpush.bf16.msra.mxu0 %v977
        %987 = vmatmul.bf16.gmra.mxu0 %v971
        %v988 = vpop.f32.mrf.mxu0
        %v989 = vadd.f32 0.0, %v988
        %v990 = vpop.f32.mrf.mxu0
        %v991 = vadd.f32 0.0, %v990
        %992 = vmatmul.bf16.gmra.mxu0 %v974
        %v993 = vpop.f32.mrf.mxu0
        %v994 = vadd.f32 0.0, %v993
        %v995 = vpop.f32.mrf.mxu0
        %v996 = vadd.f32 0.0, %v995
        %997 = vdwg.mxu0
        %vm1000 = vcmask 1046528
        %v1001 = vrot.slane %v937, 1
        %v1002 = vrot.slane %v938, 1
        %v1003 = vsel %vm1000, %v1001, %v1002
        %v1005 = vsel %vm811, %v1003, 0
        %v1008 = vsel %vm811, %v1002, 0
        %v1011 = vsel %vm645, %v939, 0
        %1013 = vmatpush.bf16.msra.mxu0 0
        %1014 = vmatpush.bf16.msra.mxu0 0
        %1015 = vmatpush.bf16.msra.mxu0 0
        %1016 = vmatpush.bf16.msra.mxu0 0
        %1017 = vmatpush.bf16.msra.mxu0 0
        %1018 = vmatpush.bf16.msra.mxu0 0
        %1019 = vmatpush.bf16.msra.mxu0 0
        %1020 = vmatpush.bf16.msra.mxu0 %v1011
        %1021 = vmatmul.bf16.gmra.mxu0 %v1005
        %v1022 = vpop.f32.mrf.mxu0
        %v1023 = vadd.f32 %v989, %v1022
        %v1024 = vpop.f32.mrf.mxu0
        %v1025 = vadd.f32 %v991, %v1024
        %1026 = vmatmul.bf16.gmra.mxu0 %v1008
        %v1027 = vpop.f32.mrf.mxu0
        %v1028 = vadd.f32 %v994, %v1027
        %v1029 = vpop.f32.mrf.mxu0
        %v1030 = vadd.f32 %v996, %v1029
        %1031 = vdwg.mxu0
        %v1032 = vld [vmem:[#allocation2] sm:$0xc]
        %v1033 = vld [vmem:[#allocation2 + $0xc] sm:$0x7]
        %1035 = vset.pattern.permute.xlu0 0
        %1036 = vperm.xlu0 %1035, %v800
        %v1037 = vpop.permute.xlu0 %1036
        %v1040 = vunpack.c.l.s4 839922192
        %v1041 = vunpack.c.0.s8 %v1040
        %v1042 = vperm.slane %v1037, %v1041
        %1044 = vset.pattern.permute.xlu0 0
        %1045 = vperm.xlu0 %1044, %v801
        %v1046 = vpop.permute.xlu0 %1045
        %v1049 = vunpack.c.l.s4 839922192
        %v1050 = vunpack.c.0.s8 %v1049
        %v1051 = vperm.slane %v1046, %v1050
        %1053 = vset.pattern.permute.xlu0 0
        %1054 = vperm.xlu0 %1053, %v802
        %v1055 = vpop.permute.xlu0 %1054
        %v1058 = vunpack.c.l.s4 839922192
        %v1059 = vunpack.c.0.s8 %v1058
        %v1060 = vperm.slane %v1055, %v1059
        %1062 = vset.pattern.permute.xlu0 0
        %1063 = vperm.xlu0 %1062, %v803
        %v1064 = vpop.permute.xlu0 %1063
        %v1067 = vunpack.c.l.s4 839922192
        %v1068 = vunpack.c.0.s8 %v1067
        %v1069 = vperm.slane %v1064, %v1068
        %v1070 = vunpack.c.l.bf16 %v1032
        %v1071 = vunpack.c.l.bf16 %v1033
        %v1072 = vunpack.c.l.bf16 %v1042
        %v1073 = vunpack.c.l.bf16 %v1051
        %v1074 = vunpack.c.l.bf16 %v1060
        %v1075 = vunpack.c.l.bf16 %v1069
        %v1080 = vrot.slane %v1072, 4
        %v1081 = vrot.slane %v1073, 4
        %v1082 = vsel %vm645, %v1080, %v1081
        %v1083 = vrot.slane %v1074, 4
        %v1084 = vsel %vm645, %v1081, %v1083
        %v1085 = vrot.slane %v1075, 4
        %v1086 = vsel %vm645, %v1083, %v1085
        %v1091 = vmul.f32 %v1070, %v1080
        %v1092 = vmul.f32 %v910, %v1082
        %v1093 = vmul.f32 %v911, %v1084
        %v1094 = vmul.f32 %v1071, %v1086
        %v1095 = vpack.c.bf16 %v1092, %v1091
        %v1096 = vpack.c.bf16 %v1094, %v1093
        %s1097 = scalar_lea.vmem %s10, 8
        %v1098 = vld [vmem:[%s1097] sm:$0xf]
        %vm1101 = vcmask 1045504
        %v1102 = vrot.slane %v1095, 2
        %v1103 = vrot.slane %v1096, 2
        %v1104 = vsel %vm1101, %v1102, %v1103
        %v1106 = vsel %vm811, %v1104, 0
        %v1109 = vsel %vm811, %v1103, 0
        %v1112 = vsel %vm645, %v1098, 0
        %1114 = vmatpush.bf16.msra.mxu0 0
        %1115 = vmatpush.bf16.msra.mxu0 0
        %1116 = vmatpush.bf16.msra.mxu0 0
        %1117 = vmatpush.bf16.msra.mxu0 0
        %1118 = vmatpush.bf16.msra.mxu0 0
        %1119 = vmatpush.bf16.msra.mxu0 0
        %1120 = vmatpush.bf16.msra.mxu0 0
        %1121 = vmatpush.bf16.msra.mxu0 %v1112
        %1122 = vmatmul.bf16.gmra.mxu0 %v1106
        %v1123 = vpop.f32.mrf.mxu0
        %v1124 = vadd.f32 0.0, %v1123
        %v1125 = vpop.f32.mrf.mxu0
        %v1126 = vadd.f32 0.0, %v1125
        %1127 = vmatmul.bf16.gmra.mxu0 %v1109
        %v1128 = vpop.f32.mrf.mxu0
        %v1129 = vadd.f32 0.0, %v1128
        %v1130 = vpop.f32.mrf.mxu0
        %v1131 = vadd.f32 0.0, %v1130
        %1132 = vdwg.mxu0
        %v1133 = vadd.f32 %v1023, %v1124
        %v1134 = vadd.f32 %v1025, %v1126
        %v1135 = vadd.f32 %v1028, %v1129
        %v1136 = vadd.f32 %v1030, %v1131
        %v1137 = vld [vmem:[#allocation2] sm:$0x8]
        %v1138 = vld [vmem:[#allocation2 + $0xc] sm:$0xf]
        %v1139 = vunpack.c.l.bf16 %v1137
        %v1140 = vunpack.c.l.bf16 %v1138
        %vm1141 = vcmask 1046528
        %v1142 = vrot.slane %v913, 1
        %v1143 = vrot.slane %v914, 1
        %v1144 = vsel %vm1141, %v1142, %v1143
        %v1145 = vrot.slane %v915, 1
        %v1146 = vsel %vm1141, %v1143, %v1145
        %v1147 = vrot.slane %v916, 1
        %v1148 = vsel %vm1141, %v1145, %v1147
        %v1153 = vmul.f32 %v1139, %v1142
        %v1154 = vmul.f32 %v910, %v1144
        %v1155 = vmul.f32 %v911, %v1146
        %v1156 = vmul.f32 %v1140, %v1148
        %v1157 = vpack.c.bf16 %v1154, %v1153
        %v1158 = vpack.c.bf16 %v1156, %v1155
        %s1159 = scalar_lea.vmem %s10, 12
        %v1160 = vld [vmem:[%s1159] sm:$0xf]
        %vm1161 = vsmask.f32 4352
        %v1163 = vshrl.u32 %v1157, 16
        %v1165 = vrot.slane %v1163, 3
        %v1166 = vshll.u32 %v1157, 16
        %v1168 = vrot.slane %v1166, 4
        %v1169 = vor.u32 %v1165, %v1168
        %v1171 = vshrl.u32 %v1158, 16
        %v1173 = vrot.slane %v1171, 3
        %v1174 = vshll.u32 %v1158, 16
        %v1176 = vrot.slane %v1174, 4
        %v1177 = vor.u32 %v1173, %v1176
        %v1178 = vsel %vm1161, %v1169, %v1177
        %v1180 = vsel %vm811, %v1178, 0
        %v1183 = vsel %vm811, %v1177, 0
        %v1186 = vsel %vm645, %v1160, 0
        %1188 = vmatpush.bf16.msra.mxu0 0
        %1189 = vmatpush.bf16.msra.mxu0 0
        %1190 = vmatpush.bf16.msra.mxu0 0
        %1191 = vmatpush.bf16.msra.mxu0 0
        %1192 = vmatpush.bf16.msra.mxu0 0
        %1193 = vmatpush.bf16.msra.mxu0 0
        %1194 = vmatpush.bf16.msra.mxu0 0
        %1195 = vmatpush.bf16.msra.mxu0 %v1186
        %1196 = vmatmul.bf16.gmra.mxu0 %v1180
        %v1197 = vpop.f32.mrf.mxu0
        %v1198 = vadd.f32 0.0, %v1197
        %v1199 = vpop.f32.mrf.mxu0
        %v1200 = vadd.f32 0.0, %v1199
        %1201 = vmatmul.bf16.gmra.mxu0 %v1183
        %v1202 = vpop.f32.mrf.mxu0
        %v1203 = vadd.f32 0.0, %v1202
        %v1204 = vpop.f32.mrf.mxu0
        %v1205 = vadd.f32 0.0, %v1204
        %1206 = vdwg.mxu0
        %v1207 = vadd.f32 %v1133, %v1198
        %v1208 = vadd.f32 %v1134, %v1200
        %v1209 = vadd.f32 %v1135, %v1203
        %v1210 = vadd.f32 %v1136, %v1205
        %v1211 = vld [vmem:[#allocation2 + $0x4] sm:$0xf]
        %v1212 = vld [vmem:[#allocation2 + $0x8] sm:$0xf]
        %v1213 = vld [vmem:[#allocation2 + $0xc] sm:$0xf]
        %v1214 = vld [vmem:[#allocation2 + $0x10] sm:$0x1]
        %s1215 = scalar_lea.vmem %s10, 16
        %v1216 = vld [vmem:[%s1215] sm:$0xf]
        %v1221 = vunpack.c.l.b16 %v1211
        %v1222 = vunpack.c.l.b16 %v1212
        %v1223 = vunpack.c.l.b16 %v1213
        %v1224 = vunpack.c.l.b16 %v1214
        %v1225 = vpack.c.b16 %v1222, %v1221
        %v1226 = vpack.c.b16 %v1224, %v1223
        %v1228 = vsel %vm811, %v1225, 0
        %v1231 = vsel %vm811, %v1226, 0
        %v1234 = vsel %vm645, %v1216, 0
        %1236 = vmatpush.bf16.msra.mxu0 0
        %1237 = vmatpush.bf16.msra.mxu0 0
        %1238 = vmatpush.bf16.msra.mxu0 0
        %1239 = vmatpush.bf16.msra.mxu0 0
        %1240 = vmatpush.bf16.msra.mxu0 0
        %1241 = vmatpush.bf16.msra.mxu0 0
        %1242 = vmatpush.bf16.msra.mxu0 0
        %1243 = vmatpush.bf16.msra.mxu0 %v1234
        %1244 = vmatmul.bf16.gmra.mxu0 %v1228
        %v1245 = vpop.f32.mrf.mxu0
        %v1246 = vadd.f32 0.0, %v1245
        %v1247 = vpop.f32.mrf.mxu0
        %v1248 = vadd.f32 0.0, %v1247
        %1249 = vmatmul.bf16.gmra.mxu0 %v1231
        %v1250 = vpop.f32.mrf.mxu0
        %v1251 = vadd.f32 0.0, %v1250
        %v1252 = vpop.f32.mrf.mxu0
        %v1253 = vadd.f32 0.0, %v1252
        %1254 = vdwg.mxu0
        %v1255 = vadd.f32 %v1207, %v1246
        %v1256 = vadd.f32 %v1208, %v1248
        %v1257 = vadd.f32 %v1209, %v1251
        %v1258 = vadd.f32 %v1210, %v1253
        %v1259 = vunpack.c.l.bf16 %v1211
        %v1260 = vunpack.c.l.bf16 %v1212
        %v1261 = vunpack.c.l.bf16 %v1213
        %v1262 = vunpack.c.l.bf16 %v1214
        %vm1263 = vcmask 1040384
        %v1264 = vrot.slane %v1072, 7
        %v1265 = vrot.slane %v1073, 7
        %v1266 = vsel %vm1263, %v1264, %v1265
        %v1267 = vrot.slane %v1074, 7
        %v1268 = vsel %vm1263, %v1265, %v1267
        %v1269 = vrot.slane %v1075, 7
        %v1270 = vsel %vm1263, %v1267, %v1269
        %v1275 = vmul.f32 %v1259, %v1264
        %v1276 = vmul.f32 %v1260, %v1266
        %v1277 = vmul.f32 %v1261, %v1268
        %v1278 = vmul.f32 %v1262, %v1270
        %v1279 = vpack.c.bf16 %v1276, %v1275
        %v1280 = vpack.c.bf16 %v1278, %v1277
        %s1281 = scalar_lea.vmem %s10, 20
        %v1282 = vld [vmem:[%s1281] sm:$0xf]
        %vm1283 = vsmask.f32 7424
        %v1285 = vshrl.u32 %v1279, 16
        %v1287 = vshll.u32 %v1279, 16
        %v1289 = vrot.slane %v1287, 1
        %v1290 = vor.u32 %v1285, %v1289
        %v1292 = vshll.u32 %v1280, 16
        %v1294 = vrot.slane %v1292, 1
        %v1295 = vsel %vm1283, %v1290, %v1294
        %v1296 = vshrl.u32 %v1280, 16
        %v1298 = vor.u32 %v1296, %v1294
        %v1300 = vsel %vm811, %v1295, 0
        %v1303 = vsel %vm811, %v1298, 0
        %v1306 = vsel %vm645, %v1282, 0
        %1308 = vmatpush.bf16.msra.mxu0 0
        %1309 = vmatpush.bf16.msra.mxu0 0
        %1310 = vmatpush.bf16.msra.mxu0 0
        %1311 = vmatpush.bf16.msra.mxu0 0
        %1312 = vmatpush.bf16.msra.mxu0 0
        %1313 = vmatpush.bf16.msra.mxu0 0
        %1314 = vmatpush.bf16.msra.mxu0 0
        %1315 = vmatpush.bf16.msra.mxu0 %v1306
        %1316 = vmatmul.bf16.gmra.mxu0 %v1300
        %v1317 = vpop.f32.mrf.mxu0
        %v1318 = vadd.f32 0.0, %v1317
        %v1319 = vpop.f32.mrf.mxu0
        %v1320 = vadd.f32 0.0, %v1319
        %1321 = vmatmul.bf16.gmra.mxu0 %v1303
        %v1322 = vpop.f32.mrf.mxu0
        %v1323 = vadd.f32 0.0, %v1322
        %v1324 = vpop.f32.mrf.mxu0
        %v1325 = vadd.f32 0.0, %v1324
        %1326 = vdwg.mxu0
        %v1327 = vadd.f32 %v1255, %v1318
        %v1328 = vadd.f32 %v1256, %v1320
        %v1329 = vadd.f32 %v1257, %v1323
        %v1330 = vadd.f32 %v1258, %v1325
        %v1331 = vld [vmem:[#allocation2 + $0x4] sm:$0xc]
        %v1332 = vld [vmem:[#allocation2 + $0x10] sm:$0x7]
        %v1333 = vunpack.c.l.bf16 %v1331
        %v1334 = vunpack.c.l.bf16 %v1332
        %v1335 = vrot.slane %v913, 4
        %v1336 = vrot.slane %v914, 4
        %v1337 = vsel %vm645, %v1335, %v1336
        %v1338 = vrot.slane %v915, 4
        %v1339 = vsel %vm645, %v1336, %v1338
        %v1340 = vrot.slane %v916, 4
        %v1341 = vsel %vm645, %v1338, %v1340
        %v1346 = vmul.f32 %v1333, %v1335
        %v1347 = vmul.f32 %v1260, %v1337
        %v1348 = vmul.f32 %v1261, %v1339
        %v1349 = vmul.f32 %v1334, %v1341
        %v1350 = vpack.c.bf16 %v1347, %v1346
        %v1351 = vpack.c.bf16 %v1349, %v1348
        %s1352 = scalar_lea.vmem %s10, 24
        %v1353 = vld [vmem:[%s1352] sm:$0xf]
        %v1356 = vrot.slane %v1350, 2
        %v1357 = vrot.slane %v1351, 2
        %v1358 = vsel %vm1101, %v1356, %v1357
        %v1360 = vsel %vm811, %v1358, 0
        %v1363 = vsel %vm811, %v1357, 0
        %v1366 = vsel %vm645, %v1353, 0
        %1368 = vmatpush.bf16.msra.mxu0 0
        %1369 = vmatpush.bf16.msra.mxu0 0
        %1370 = vmatpush.bf16.msra.mxu0 0
        %1371 = vmatpush.bf16.msra.mxu0 0
        %1372 = vmatpush.bf16.msra.mxu0 0
        %1373 = vmatpush.bf16.msra.mxu0 0
        %1374 = vmatpush.bf16.msra.mxu0 0
        %1375 = vmatpush.bf16.msra.mxu0 %v1366
        %1376 = vmatmul.bf16.gmra.mxu0 %v1360
        %v1377 = vpop.f32.mrf.mxu0
        %v1378 = vadd.f32 0.0, %v1377
        %v1379 = vpop.f32.mrf.mxu0
        %v1380 = vadd.f32 0.0, %v1379
        %1381 = vmatmul.bf16.gmra.mxu0 %v1363
        %v1382 = vpop.f32.mrf.mxu0
        %v1383 = vadd.f32 0.0, %v1382
        %v1384 = vpop.f32.mrf.mxu0
        %v1385 = vadd.f32 0.0, %v1384
        %1386 = vdwg.mxu0
        %v1387 = vadd.f32 %v1327, %v1378
        %v1388 = vadd.f32 %v1328, %v1380
        %v1389 = vadd.f32 %v1329, %v1383
        %v1390 = vadd.f32 %v1330, %v1385
        %s1391 = scalar_lea.vmem %s10, 28
        %v1392 = vld [vmem:[%s1391] sm:$0xf]
        %v1395 = vunpack.c.l.b16 %v1331
        %v1396 = vunpack.c.l.b16 %v1332
        %v1397 = vpack.c.b16 %v1222, %v1395
        %v1398 = vpack.c.b16 %v1396, %v1223
        %vm1399 = vsmask.f32 5376
        %v1401 = vshrl.u32 %v1397, 16
        %v1403 = vrot.slane %v1401, 2
        %v1404 = vshll.u32 %v1397, 16
        %v1406 = vrot.slane %v1404, 3
        %v1407 = vor.u32 %v1403, %v1406
        %v1409 = vshrl.u32 %v1398, 16
        %v1411 = vrot.slane %v1409, 2
        %v1412 = vshll.u32 %v1398, 16
        %v1414 = vrot.slane %v1412, 3
        %v1415 = vor.u32 %v1411, %v1414
        %v1416 = vsel %vm1399, %v1407, %v1415
        %v1418 = vsel %vm811, %v1416, 0
        %v1421 = vsel %vm811, %v1415, 0
        %v1424 = vsel %vm645, %v1392, 0
        %1426 = vmatpush.bf16.msra.mxu0 0
        %1427 = vmatpush.bf16.msra.mxu0 0
        %1428 = vmatpush.bf16.msra.mxu0 0
        %1429 = vmatpush.bf16.msra.mxu0 0
        %1430 = vmatpush.bf16.msra.mxu0 0
        %1431 = vmatpush.bf16.msra.mxu0 0
        %1432 = vmatpush.bf16.msra.mxu0 0
        %1433 = vmatpush.bf16.msra.mxu0 %v1424
        %1434 = vmatmul.bf16.gmra.mxu0 %v1418
        %v1435 = vpop.f32.mrf.mxu0
        %v1436 = vadd.f32 0.0, %v1435
        %v1437 = vpop.f32.mrf.mxu0
        %v1438 = vadd.f32 0.0, %v1437
        %1439 = vmatmul.bf16.gmra.mxu0 %v1421
        %v1440 = vpop.f32.mrf.mxu0
        %v1441 = vadd.f32 0.0, %v1440
        %v1442 = vpop.f32.mrf.mxu0
        %v1443 = vadd.f32 0.0, %v1442
        %1444 = vdwg.mxu0
        %v1445 = vadd.f32 %v1387, %v1436
        %v1446 = vadd.f32 %v1388, %v1438
        %v1447 = vadd.f32 %v1389, %v1441
        %v1448 = vadd.f32 %v1390, %v1443
        %v1449 = vld [vmem:[#allocation2 + $0x4] sm:$0x8]
        %v1450 = vld [vmem:[#allocation2 + $0x10] sm:$0xf]
        %v1451 = vunpack.c.l.bf16 %v1449
        %v1452 = vunpack.c.l.bf16 %v1450
        %vm1453 = vcmask 1045504
        %v1454 = vrot.slane %v1072, 2
        %v1455 = vrot.slane %v1073, 2
        %v1456 = vsel %vm1453, %v1454, %v1455
        %v1457 = vrot.slane %v1074, 2
        %v1458 = vsel %vm1453, %v1455, %v1457
        %v1459 = vrot.slane %v1075, 2
        %v1460 = vsel %vm1453, %v1457, %v1459
        %v1465 = vmul.f32 %v1451, %v1454
        %v1466 = vmul.f32 %v1260, %v1456
        %v1467 = vmul.f32 %v1261, %v1458
        %v1468 = vmul.f32 %v1452, %v1460
        %v1469 = vpack.c.bf16 %v1466, %v1465
        %v1470 = vpack.c.bf16 %v1468, %v1467
        %s1471 = scalar_lea.vmem %s10, 32
        %v1472 = vld [vmem:[%s1471] sm:$0xf]
        %vm1475 = vcmask 1044480
        %v1476 = vrot.slane %v1469, 3
        %v1477 = vrot.slane %v1470, 3
        %v1478 = vsel %vm1475, %v1476, %v1477
        %v1480 = vsel %vm811, %v1478, 0
        %v1483 = vsel %vm811, %v1477, 0
        %v1486 = vsel %vm645, %v1472, 0
        %1488 = vmatpush.bf16.msra.mxu0 0
        %1489 = vmatpush.bf16.msra.mxu0 0
        %1490 = vmatpush.bf16.msra.mxu0 0
        %1491 = vmatpush.bf16.msra.mxu0 0
        %1492 = vmatpush.bf16.msra.mxu0 0
        %1493 = vmatpush.bf16.msra.mxu0 0
        %1494 = vmatpush.bf16.msra.mxu0 0
        %1495 = vmatpush.bf16.msra.mxu0 %v1486
        %1496 = vmatmul.bf16.gmra.mxu0 %v1480
        %v1497 = vpop.f32.mrf.mxu0
        %v1498 = vadd.f32 0.0, %v1497
        %v1499 = vpop.f32.mrf.mxu0
        %v1500 = vadd.f32 0.0, %v1499
        %1501 = vmatmul.bf16.gmra.mxu0 %v1483
        %v1502 = vpop.f32.mrf.mxu0
        %v1503 = vadd.f32 0.0, %v1502
        %v1504 = vpop.f32.mrf.mxu0
        %v1505 = vadd.f32 0.0, %v1504
        %1506 = vdwg.mxu0
        %v1507 = vadd.f32 %v1445, %v1498
        %v1508 = vadd.f32 %v1446, %v1500
        %v1509 = vadd.f32 %v1447, %v1503
        %v1510 = vadd.f32 %v1448, %v1505
        %v1511 = vld [vmem:[#allocation10] sm:$0x1]
        %v1513 = vperm.slane %v1511, 0
        %v1515 = vadd.f32 %v1507, %v1513
        %v1516 = vadd.f32 %v1508, %v1513
        %v1517 = vadd.f32 %v1509, %v1513
        %v1518 = vadd.f32 %v1510, %v1513
        %v1519 = vmul.f32 %v1515, 0.5
        %v1520 = vmul.f32 %v1516, 0.5
        %v1521 = vmul.f32 %v1517, 0.5
        %v1522 = vmul.f32 %v1518, 0.5
        %v1523 = vtanh.pop %v1519
        %v1524 = vtanh.pop %v1520
        %v1525 = vtanh.pop %v1521
        %v1526 = vtanh.pop %v1522
        %v1527 = vadd.f32 %v1523, 1.0
        %v1528 = vadd.f32 %v1524, 1.0
        %v1529 = vadd.f32 %v1525, 1.0
        %v1530 = vadd.f32 %v1526, 1.0
        %v1531 = vmul.f32 %v1519, %v1527
        %v1532 = vmul.f32 %v1520, %v1528
        %v1533 = vmul.f32 %v1521, %v1529
        %v1534 = vmul.f32 %v1522, %v1530
        %v1535 = vadd.f32 %v736, %v1531
        %v1536 = vadd.f32 %v737, %v1532
        %v1537 = vadd.f32 %v738, %v1533
        %v1538 = vadd.f32 %v739, %v1534
        %v1539 = vpack.c.bf16 %v1536, %v1535
        %v1540 = vpack.c.bf16 %v1538, %v1537
        %v1541 = vld [vmem:[%s12] sm:$0xf]
        %v1542 = vpack.c.bf16 %v784, %v783
        %v1543 = vpack.c.bf16 %v786, %v785
        %v1544 = vld [vmem:[%s13] sm:$0xf]
        %v1546 = vsel %vm811, %v1542, 0
        %v1549 = vsel %vm811, %v1543, 0
        %v1552 = vsel %vm645, %v1544, 0
        %1554 = vmatpush.bf16.msra.mxu0 0
        %1555 = vmatpush.bf16.msra.mxu0 0
        %1556 = vmatpush.bf16.msra.mxu0 0
        %1557 = vmatpush.bf16.msra.mxu0 0
        %1558 = vmatpush.bf16.msra.mxu0 0
        %1559 = vmatpush.bf16.msra.mxu0 0
        %1560 = vmatpush.bf16.msra.mxu0 0
        %1561 = vmatpush.bf16.msra.mxu0 %v1552
        %1562 = vmatmul.bf16.gmra.mxu0 %v1546
        %v1563 = vpop.f32.mrf.mxu0
        %v1564 = vadd.f32 0.0, %v1563
        %v1565 = vpop.f32.mrf.mxu0
        %v1566 = vadd.f32 0.0, %v1565
        %1567 = vmatmul.bf16.gmra.mxu0 %v1549
        %v1568 = vpop.f32.mrf.mxu0
        %v1569 = vadd.f32 0.0, %v1568
        %v1570 = vpop.f32.mrf.mxu0
        %v1571 = vadd.f32 0.0, %v1570
        %1572 = vdwg.mxu0
        %v1574 = vsel %vm811, %v1539, 0
        %v1577 = vsel %vm811, %v1540, 0
        %v1580 = vsel %vm645, %v1541, 0
        %1582 = vmatpush.bf16.msra.mxu0 0
        %1583 = vmatpush.bf16.msra.mxu0 0
        %1584 = vmatpush.bf16.msra.mxu0 0
        %1585 = vmatpush.bf16.msra.mxu0 0
        %1586 = vmatpush.bf16.msra.mxu0 0
        %1587 = vmatpush.bf16.msra.mxu0 0
        %1588 = vmatpush.bf16.msra.mxu0 0
        %1589 = vmatpush.bf16.msra.mxu0 %v1580
        %1590 = vmatmul.bf16.gmra.mxu0 %v1574
        %v1591 = vpop.f32.mrf.mxu0
        %v1592 = vadd.f32 %v1564, %v1591
        %v1593 = vpop.f32.mrf.mxu0
        %v1594 = vadd.f32 %v1566, %v1593
        %1595 = vmatmul.bf16.gmra.mxu0 %v1577
        %v1596 = vpop.f32.mrf.mxu0
        %v1597 = vadd.f32 %v1569, %v1596
        %v1598 = vpop.f32.mrf.mxu0
        %v1599 = vadd.f32 %v1571, %v1598
        %1600 = vdwg.mxu0
        %v1601 = vld [vmem:[#allocation11] sm:$0x1]
        %v1603 = vperm.slane %v1601, 0
        %v1605 = vadd.f32 %v1592, %v1603
        %v1606 = vadd.f32 %v1594, %v1603
        %v1607 = vadd.f32 %v1597, %v1603
        %v1608 = vadd.f32 %v1599, %v1603
        %v1609 = vmul.f32 %v1605, 0.5
        %v1610 = vmul.f32 %v1606, 0.5
        %v1611 = vmul.f32 %v1607, 0.5
        %v1612 = vmul.f32 %v1608, 0.5
        %v1613 = vtanh.pop %v1609
        %v1614 = vtanh.pop %v1610
        %v1615 = vtanh.pop %v1611
        %v1616 = vtanh.pop %v1612
        %v1617 = vadd.f32 %v1613, 1.0
        %v1618 = vadd.f32 %v1614, 1.0
        %v1619 = vadd.f32 %v1615, 1.0
        %v1620 = vadd.f32 %v1616, 1.0
        %v1621 = vmul.f32 %v1609, %v1617
        %v1622 = vmul.f32 %v1610, %v1618
        %v1623 = vmul.f32 %v1611, %v1619
        %v1624 = vmul.f32 %v1612, %v1620
        %v1625 = vpack.c.bf16 %v1621, %v1621
        %v1626 = vpack.c.bf16 %v1622, %v1622
        %v1627 = vpack.c.bf16 %v1623, %v1623
        %v1628 = vpack.c.bf16 %v1624, %v1624
        %vm1629 = vcmask 125952
        %1630 = vst.msk [vmem:[%s582] sm:$0xf] %vm1629, %v1625
        %1631 = vst.msk [vmem:[%s582 + $0x4] sm:$0xf] %vm1629, %v1626
        %1632 = vst.msk [vmem:[%s582 + $0x8] sm:$0xf] %vm1629, %v1627
        %vm1633 = vcmask 122880
        %vm1634 = vmand %vm1633, %vm864
        %v1635 = vld [vmem:[%s582 + $0xc] sm:$0x1]
        %v1636 = vsel %vm1634, %v1628, %v1635
        %1637 = vst [vmem:[%s582 + $0xc] sm:$0x1] %v1636
        %p1638 = scmp.lt.s32.totalorder %s30, 1
        %s1639 = scalar_select %p1638, %s30, 1
        %s1640 = smul.addr %s1639, 4
        %s1641 = smul.addr %s1640, 4
        %s1642 = scalar_lea.vmem %s15, %s1641
        // Predicated region
        $region105: #{_lambda_.6} parent=79 // pred_check
          %p1643 = pneg %p368
        $region106: #{_lambda_.6} parent=79 // pred_check_branch
          %1645 = sbr.rel (%p1643) target = $region108
        $region107: #{_lambda_.6} parent=79 // pred_region
          _
        $region108: #{_lambda_.6} parent=79 // pred_fallthru
          _
      $region80: #{_lambda_.6} parent=5 // pred_fallthru
        _
      %p1646 = scmp.le.s32.totalorder 2, %s25
      // Predicated region
      $region109: #{_lambda_.6} parent=5 // pred_check
        %p1647 = pneg %p1646
      $region110: #{_lambda_.6} parent=5 // pred_check_branch
        %1649 = sbr.rel (%p1647) target = $region112
      $region111: #{_lambda_.6} parent=5 // pred_region
        %s1650 = ssub.s32 %s25, 2
        // Predicated region
        $region113: #{_lambda_.6} parent=111 // pred_check
          %p1651 = pneg %p374
        $region114: #{_lambda_.6} parent=111 // pred_check_branch
          %1653 = sbr.rel (%p1651) target = $region116
        $region115: #{_lambda_.6} parent=111 // pred_region
          %p1654 = scmp.lt.s32.totalorder %s31, 1
          %s1655 = scalar_select %p1654, %s31, 1
          %s1656 = smul.addr %s1655, 4
          %s1657 = smul.addr %s1656, 4
          %s1658 = scalar_lea.vmem %s15, %s1657
        $region116: #{_lambda_.6} parent=111 // pred_fallthru
          _
      $region112: #{_lambda_.6} parent=5 // pred_fallthru
        _
    $region6: #{_lambda_.6} parent=1 // loop_footer
      %s29 = sadd.s32 1, %s25
    $region7: #{_lambda_.6} parent=1 // loop_footer_branch
      %24 = sbr.rel target = $region3
    $region8: #{_lambda_.6} parent=1 // loop_exit
      _
    %1659 = vsyncpa [#allocation4], 1
    %s1660 = scalar_lea.sflag [#allocation4], 1
    %1661 = vsyncpa %s1660, 1
    %1662 = vsyncpa [#allocation6], 1
    %1663 = vsyncpa [#allocation9], 1
    %1664 = vsyncpa [#allocation12], 1

// kernel: _lambda_.7
$region0: #{_lambda_.7}
  #allocation0 [shape = 'u32[]', space=smem, size = 0x4, offset = 0x4, fixed_abs, tag = 'smem constant byte address 0x4 - core index']
  #allocation1 [shape = 'u32[72,128]{1,0:T(1,128)}', space=vmem, size = 0x9000, scoped, tag = 'internal scratch']
  #allocation2 [shape = 'bf16[24,16]{1,0:T(8,128)(2,1)}', space=vmem, size = 0x1800, scoped, tag = 'scratch operand']
  %s0 = inlined_call_operand.vmem [shape: bf16[2,9,144], index: 0, kind: input, shape index: {}]
  %s1 = inlined_call_operand.vmem [shape: bf16[2,9,1], index: 1, kind: input, shape index: {}]
  %s2 = inlined_call_operand.vmem [shape: bf16[144,32], index: 2, kind: input, shape index: {}]
  %s3 = inlined_call_operand.hbm [shape: f32[1,32], index: 3, kind: input, shape index: {}]
  %s4 = inlined_call_operand.vmem [shape: bf16[32,16], index: 4, kind: input, shape index: {}]
  %s5 = inlined_call_operand.hbm [shape: f32[1,16], index: 5, kind: input, shape index: {}]
  %s6 = inlined_call_operand.vmem [shape: bf16[32,16], index: 6, kind: input, shape index: {}]
  %s7 = inlined_call_operand.hbm [shape: f32[1,16], index: 7, kind: input, shape index: {}]
  %s8 = inlined_call_operand.vmem [shape: bf16[2,16,16], index: 8, kind: input, shape index: {}]
  %s9 = inlined_call_operand.vmem [shape: f32[2,1,16], index: 9, kind: input, shape index: {}]
  %s10 = inlined_call_operand.vmem [shape: bf16[18,16,16], index: 10, kind: input, shape index: {}]
  %s11 = inlined_call_operand.vmem [shape: f32[2,1,16], index: 11, kind: input, shape index: {}]
  %s12 = inlined_call_operand.vmem [shape: bf16[16,32], index: 12, kind: input, shape index: {}]
  %s13 = inlined_call_operand.vmem [shape: bf16[16,32], index: 13, kind: input, shape index: {}]
  %s14 = inlined_call_operand.hbm [shape: f32[1,32], index: 14, kind: input, shape index: {}]
  %s15 = inlined_call_operand.vmem [shape: bf16[2,9,32], index: 15, kind: output, shape index: {}]
  %s16 = sld [smem:[#allocation0]]
  $region109: #{_lambda_.7} parent=0
    _
  %s18 = ssub.s32 1, %s16
  %s19 = scalar_select 0, %s18, %s16
  $region1: #{_lambda_.7} parent=0
    #allocation3 [shape = 'u8[512]{0}', space=vmem, size = 0x400, scoped, tag = 'input window, operand 3, single buffered']
    #allocation4 [shape = 's32[2]{0}', space=sflag, size = 0x8, scoped, tag = 'scoped memory for _lambda_.7']
    #allocation5 [shape = 'u8[512]{0}', space=vmem, size = 0x400, scoped, tag = 'input window, operand 5, single buffered']
    #allocation6 [shape = 's32[1]{0}', space=sflag, size = 0x4, scoped, tag = 'scoped memory for _lambda_.7']
    #allocation7 [shape = 'u8[512]{0}', space=vmem, size = 0x400, scoped, tag = 'input window, operand 7, single buffered']
    #allocation8 [shape = 'u8[512]{0}', space=vmem, size = 0x400, scoped, tag = 'input window, operand 14, single buffered']
    #allocation9 [shape = 's32[1]{0}', space=sflag, size = 0x4, scoped, tag = 'scoped memory for _lambda_.7']
    %20 = vsyncpa [#allocation4], 0
    %21 = vsyncpa [#allocation6], 0
    %22 = vsyncpa [#allocation9], 0
    loop: start=0, step=1, limit=4
    $region2: #{_lambda_.7} parent=1 // loop_pre_header
      _
    $region3: #{_lambda_.7} parent=1 // loop_header
      %s24 = sphi 0, %s28
      %p25 = scmp.ge.s32.totalorder %s24, 4
      %s34 = sphi 0, %s36
      %s37 = sphi 0, %s34
      %s38 = sphi 0, %s37
      %s54 = sphi 0, %s38
      %s58 = sphi 0, %s58
      %s60 = sphi 0, %s58
      %s61 = sphi 0, %s60
      %s75 = sphi 0, %s61
      %s79 = sphi 0, %s79
      %s81 = sphi 0, %s79
      %s82 = sphi 0, %s81
      %s96 = sphi 0, %s82
      %s100 = sphi 0, %s100
      %s102 = sphi 0, %s100
      %s103 = sphi 0, %s102
      %s117 = sphi 0, %s103
      %s121 = sphi 0, %s121
      %s123 = sphi 0, %s121
      %s124 = sphi 0, %s123
      %s138 = sphi 0, %s124
      %s142 = sphi 0, %s142
      %s144 = sphi 0, %s142
      %s145 = sphi 0, %s144
      %s159 = sphi 0, %s145
      %s163 = sphi 0, %s163
      %s165 = sphi 0, %s163
      %s166 = sphi 0, %s165
      %s180 = sphi 0, %s166
      %s184 = sphi 0, %s184
      %s186 = sphi 0, %s184
      %s187 = sphi 0, %s186
      %s201 = sphi 0, %s187
      %s205 = sphi 0, %s205
      %s207 = sphi 0, %s205
      %s208 = sphi 0, %s207
      %s222 = sphi 0, %s208
      %s226 = sphi 0, %s226
      %s228 = sphi 0, %s226
      %s229 = sphi 0, %s228
      %s243 = sphi 0, %s229
      %s247 = sphi 0, %s247
      %s249 = sphi 0, %s247
      %s250 = sphi 0, %s249
      %s264 = sphi 0, %s250
      %s268 = sphi 0, %s268
      %s270 = sphi 0, %s268
      %s271 = sphi 0, %s270
      %s285 = sphi 0, %s271
      %s289 = sphi 0, %s289
      %s291 = sphi 0, %s289
      %s292 = sphi 0, %s291
      %s306 = sphi 0, %s292
      %s310 = sphi 0, %s310
      %s312 = sphi 0, %s310
      %s313 = sphi 0, %s312
      %s327 = sphi 0, %s313
      %s331 = sphi 0, %s331
      %s333 = sphi 0, %s331
      %s334 = sphi 0, %s333
      %s348 = sphi 0, %s334
      %s354 = sphi 0, %s356
      %s357 = sphi 0, %s354
      %s358 = sphi 0, %s357
      %s374 = sphi 0, %s358
    $region4: #{_lambda_.7} parent=1 // loop_header_branch
      %27 = sbr.rel (%p25) target = $region8
    $region5: #{_lambda_.7} parent=1 // loop_body
      %s29 = ssub.s32 %s24, 1
      %s30 = ssub.s32 %s24, 2
      %s31 = sadd.s32 %s24, 1
      %s32 = ssub.s32 %s24, %s31
      %p33 = scmp.eq.s32.totalorder %s32, 0
      %s35 = sadd.s32 %s34, 1
      %s36 = scalar_select %p33, %s34, %s35
      %p39 = pneg %p33
      %p40 = scmp.eq.s32.totalorder %s24, 1
      %p41 = por %p39, %p40
      %p42 = scmp.ne.s32.totalorder %s34, %s37
      %p43 = scmp.eq.s32.totalorder %s24, 0
      %p44 = por %p42, %p43
      %p45 = scmp.ne.s32.totalorder %s34, %s37
      %p46 = scmp.eq.s32.totalorder %s29, 1
      %p47 = por %p45, %p46
      %p48 = scmp.ne.s32.totalorder %s37, %s38
      %p49 = scmp.eq.s32.totalorder %s29, 0
      %p50 = por %p48, %p49
      %p51 = scmp.ne.s32.totalorder %s37, %s38
      %p52 = scmp.eq.s32.totalorder %s30, 1
      %p53 = por %p51, %p52
      %p55 = scmp.ne.s32.totalorder %s38, %s54
      %p56 = scmp.eq.s32.totalorder %s30, 0
      %p57 = por %p55, %p56
      %s59 = sadd.s32 %s58, 1
      %p62 = scmp.eq.s32.totalorder %s24, 1
      %p63 = scmp.ne.s32.totalorder %s58, %s60
      %p64 = scmp.eq.s32.totalorder %s24, 0
      %p65 = por %p63, %p64
      %p66 = scmp.ne.s32.totalorder %s58, %s60
      %p67 = scmp.eq.s32.totalorder %s29, 1
      %p68 = por %p66, %p67
      %p69 = scmp.ne.s32.totalorder %s60, %s61
      %p70 = scmp.eq.s32.totalorder %s29, 0
      %p71 = por %p69, %p70
      %p72 = scmp.ne.s32.totalorder %s60, %s61
      %p73 = scmp.eq.s32.totalorder %s30, 1
      %p74 = por %p72, %p73
      %p76 = scmp.ne.s32.totalorder %s61, %s75
      %p77 = scmp.eq.s32.totalorder %s30, 0
      %p78 = por %p76, %p77
      %s80 = sadd.s32 %s79, 1
      %p83 = scmp.eq.s32.totalorder %s24, 1
      %p84 = scmp.ne.s32.totalorder %s79, %s81
      %p85 = scmp.eq.s32.totalorder %s24, 0
      %p86 = por %p84, %p85
      %p87 = scmp.ne.s32.totalorder %s79, %s81
      %p88 = scmp.eq.s32.totalorder %s29, 1
      %p89 = por %p87, %p88
      %p90 = scmp.ne.s32.totalorder %s81, %s82
      %p91 = scmp.eq.s32.totalorder %s29, 0
      %p92 = por %p90, %p91
      %p93 = scmp.ne.s32.totalorder %s81, %s82
      %p94 = scmp.eq.s32.totalorder %s30, 1
      %p95 = por %p93, %p94
      %p97 = scmp.ne.s32.totalorder %s82, %s96
      %p98 = scmp.eq.s32.totalorder %s30, 0
      %p99 = por %p97, %p98
      %s101 = sadd.s32 %s100, 1
      %p104 = scmp.eq.s32.totalorder %s24, 1
      %p105 = scmp.ne.s32.totalorder %s100, %s102
      %p106 = scmp.eq.s32.totalorder %s24, 0
      %p107 = por %p105, %p106
      %p108 = scmp.ne.s32.totalorder %s100, %s102
      %p109 = scmp.eq.s32.totalorder %s29, 1
      %p110 = por %p108, %p109
      %p111 = scmp.ne.s32.totalorder %s102, %s103
      %p112 = scmp.eq.s32.totalorder %s29, 0
      %p113 = por %p111, %p112
      %p114 = scmp.ne.s32.totalorder %s102, %s103
      %p115 = scmp.eq.s32.totalorder %s30, 1
      %p116 = por %p114, %p115
      %p118 = scmp.ne.s32.totalorder %s103, %s117
      %p119 = scmp.eq.s32.totalorder %s30, 0
      %p120 = por %p118, %p119
      %s122 = sadd.s32 %s121, 1
      %p125 = scmp.eq.s32.totalorder %s24, 1
      %p126 = scmp.ne.s32.totalorder %s121, %s123
      %p127 = scmp.eq.s32.totalorder %s24, 0
      %p128 = por %p126, %p127
      %p129 = scmp.ne.s32.totalorder %s121, %s123
      %p130 = scmp.eq.s32.totalorder %s29, 1
      %p131 = por %p129, %p130
      %p132 = scmp.ne.s32.totalorder %s123, %s124
      %p133 = scmp.eq.s32.totalorder %s29, 0
      %p134 = por %p132, %p133
      %p135 = scmp.ne.s32.totalorder %s123, %s124
      %p136 = scmp.eq.s32.totalorder %s30, 1
      %p137 = por %p135, %p136
      %p139 = scmp.ne.s32.totalorder %s124, %s138
      %p140 = scmp.eq.s32.totalorder %s30, 0
      %p141 = por %p139, %p140
      %s143 = sadd.s32 %s142, 1
      %p146 = scmp.eq.s32.totalorder %s24, 1
      %p147 = scmp.ne.s32.totalorder %s142, %s144
      %p148 = scmp.eq.s32.totalorder %s24, 0
      %p149 = por %p147, %p148
      %p150 = scmp.ne.s32.totalorder %s142, %s144
      %p151 = scmp.eq.s32.totalorder %s29, 1
      %p152 = por %p150, %p151
      %p153 = scmp.ne.s32.totalorder %s144, %s145
      %p154 = scmp.eq.s32.totalorder %s29, 0
      %p155 = por %p153, %p154
      %p156 = scmp.ne.s32.totalorder %s144, %s145
      %p157 = scmp.eq.s32.totalorder %s30, 1
      %p158 = por %p156, %p157
      %p160 = scmp.ne.s32.totalorder %s145, %s159
      %p161 = scmp.eq.s32.totalorder %s30, 0
      %p162 = por %p160, %p161
      %s164 = sadd.s32 %s163, 1
      %p167 = scmp.eq.s32.totalorder %s24, 1
      %p168 = scmp.ne.s32.totalorder %s163, %s165
      %p169 = scmp.eq.s32.totalorder %s24, 0
      %p170 = por %p168, %p169
      %p171 = scmp.ne.s32.totalorder %s163, %s165
      %p172 = scmp.eq.s32.totalorder %s29, 1
      %p173 = por %p171, %p172
      %p174 = scmp.ne.s32.totalorder %s165, %s166
      %p175 = scmp.eq.s32.totalorder %s29, 0
      %p176 = por %p174, %p175
      %p177 = scmp.ne.s32.totalorder %s165, %s166
      %p178 = scmp.eq.s32.totalorder %s30, 1
      %p179 = por %p177, %p178
      %p181 = scmp.ne.s32.totalorder %s166, %s180
      %p182 = scmp.eq.s32.totalorder %s30, 0
      %p183 = por %p181, %p182
      %s185 = sadd.s32 %s184, 1
      %p188 = scmp.eq.s32.totalorder %s24, 1
      %p189 = scmp.ne.s32.totalorder %s184, %s186
      %p190 = scmp.eq.s32.totalorder %s24, 0
      %p191 = por %p189, %p190
      %p192 = scmp.ne.s32.totalorder %s184, %s186
      %p193 = scmp.eq.s32.totalorder %s29, 1
      %p194 = por %p192, %p193
      %p195 = scmp.ne.s32.totalorder %s186, %s187
      %p196 = scmp.eq.s32.totalorder %s29, 0
      %p197 = por %p195, %p196
      %p198 = scmp.ne.s32.totalorder %s186, %s187
      %p199 = scmp.eq.s32.totalorder %s30, 1
      %p200 = por %p198, %p199
      %p202 = scmp.ne.s32.totalorder %s187, %s201
      %p203 = scmp.eq.s32.totalorder %s30, 0
      %p204 = por %p202, %p203
      %s206 = sadd.s32 %s205, 1
      %p209 = scmp.eq.s32.totalorder %s24, 1
      %p210 = scmp.ne.s32.totalorder %s205, %s207
      %p211 = scmp.eq.s32.totalorder %s24, 0
      %p212 = por %p210, %p211
      %p213 = scmp.ne.s32.totalorder %s205, %s207
      %p214 = scmp.eq.s32.totalorder %s29, 1
      %p215 = por %p213, %p214
      %p216 = scmp.ne.s32.totalorder %s207, %s208
      %p217 = scmp.eq.s32.totalorder %s29, 0
      %p218 = por %p216, %p217
      %p219 = scmp.ne.s32.totalorder %s207, %s208
      %p220 = scmp.eq.s32.totalorder %s30, 1
      %p221 = por %p219, %p220
      %p223 = scmp.ne.s32.totalorder %s208, %s222
      %p224 = scmp.eq.s32.totalorder %s30, 0
      %p225 = por %p223, %p224
      %s227 = sadd.s32 %s226, 1
      %p230 = scmp.eq.s32.totalorder %s24, 1
      %p231 = scmp.ne.s32.totalorder %s226, %s228
      %p232 = scmp.eq.s32.totalorder %s24, 0
      %p233 = por %p231, %p232
      %p234 = scmp.ne.s32.totalorder %s226, %s228
      %p235 = scmp.eq.s32.totalorder %s29, 1
      %p236 = por %p234, %p235
      %p237 = scmp.ne.s32.totalorder %s228, %s229
      %p238 = scmp.eq.s32.totalorder %s29, 0
      %p239 = por %p237, %p238
      %p240 = scmp.ne.s32.totalorder %s228, %s229
      %p241 = scmp.eq.s32.totalorder %s30, 1
      %p242 = por %p240, %p241
      %p244 = scmp.ne.s32.totalorder %s229, %s243
      %p245 = scmp.eq.s32.totalorder %s30, 0
      %p246 = por %p244, %p245
      %s248 = sadd.s32 %s247, 1
      %p251 = scmp.eq.s32.totalorder %s24, 1
      %p252 = scmp.ne.s32.totalorder %s247, %s249
      %p253 = scmp.eq.s32.totalorder %s24, 0
      %p254 = por %p252, %p253
      %p255 = scmp.ne.s32.totalorder %s247, %s249
      %p256 = scmp.eq.s32.totalorder %s29, 1
      %p257 = por %p255, %p256
      %p258 = scmp.ne.s32.totalorder %s249, %s250
      %p259 = scmp.eq.s32.totalorder %s29, 0
      %p260 = por %p258, %p259
      %p261 = scmp.ne.s32.totalorder %s249, %s250
      %p262 = scmp.eq.s32.totalorder %s30, 1
      %p263 = por %p261, %p262
      %p265 = scmp.ne.s32.totalorder %s250, %s264
      %p266 = scmp.eq.s32.totalorder %s30, 0
      %p267 = por %p265, %p266
      %s269 = sadd.s32 %s268, 1
      %p272 = scmp.eq.s32.totalorder %s24, 1
      %p273 = scmp.ne.s32.totalorder %s268, %s270
      %p274 = scmp.eq.s32.totalorder %s24, 0
      %p275 = por %p273, %p274
      %p276 = scmp.ne.s32.totalorder %s268, %s270
      %p277 = scmp.eq.s32.totalorder %s29, 1
      %p278 = por %p276, %p277
      %p279 = scmp.ne.s32.totalorder %s270, %s271
      %p280 = scmp.eq.s32.totalorder %s29, 0
      %p281 = por %p279, %p280
      %p282 = scmp.ne.s32.totalorder %s270, %s271
      %p283 = scmp.eq.s32.totalorder %s30, 1
      %p284 = por %p282, %p283
      %p286 = scmp.ne.s32.totalorder %s271, %s285
      %p287 = scmp.eq.s32.totalorder %s30, 0
      %p288 = por %p286, %p287
      %s290 = sadd.s32 %s289, 1
      %p293 = scmp.eq.s32.totalorder %s24, 1
      %p294 = scmp.ne.s32.totalorder %s289, %s291
      %p295 = scmp.eq.s32.totalorder %s24, 0
      %p296 = por %p294, %p295
      %p297 = scmp.ne.s32.totalorder %s289, %s291
      %p298 = scmp.eq.s32.totalorder %s29, 1
      %p299 = por %p297, %p298
      %p300 = scmp.ne.s32.totalorder %s291, %s292
      %p301 = scmp.eq.s32.totalorder %s29, 0
      %p302 = por %p300, %p301
      %p303 = scmp.ne.s32.totalorder %s291, %s292
      %p304 = scmp.eq.s32.totalorder %s30, 1
      %p305 = por %p303, %p304
      %p307 = scmp.ne.s32.totalorder %s292, %s306
      %p308 = scmp.eq.s32.totalorder %s30, 0
      %p309 = por %p307, %p308
      %s311 = sadd.s32 %s310, 1
      %p314 = scmp.eq.s32.totalorder %s24, 1
      %p315 = scmp.ne.s32.totalorder %s310, %s312
      %p316 = scmp.eq.s32.totalorder %s24, 0
      %p317 = por %p315, %p316
      %p318 = scmp.ne.s32.totalorder %s310, %s312
      %p319 = scmp.eq.s32.totalorder %s29, 1
      %p320 = por %p318, %p319
      %p321 = scmp.ne.s32.totalorder %s312, %s313
      %p322 = scmp.eq.s32.totalorder %s29, 0
      %p323 = por %p321, %p322
      %p324 = scmp.ne.s32.totalorder %s312, %s313
      %p325 = scmp.eq.s32.totalorder %s30, 1
      %p326 = por %p324, %p325
      %p328 = scmp.ne.s32.totalorder %s313, %s327
      %p329 = scmp.eq.s32.totalorder %s30, 0
      %p330 = por %p328, %p329
      %s332 = sadd.s32 %s331, 1
      %p335 = scmp.eq.s32.totalorder %s24, 1
      %p336 = scmp.ne.s32.totalorder %s331, %s333
      %p337 = scmp.eq.s32.totalorder %s24, 0
      %p338 = por %p336, %p337
      %p339 = scmp.ne.s32.totalorder %s331, %s333
      %p340 = scmp.eq.s32.totalorder %s29, 1
      %p341 = por %p339, %p340
      %p342 = scmp.ne.s32.totalorder %s333, %s334
      %p343 = scmp.eq.s32.totalorder %s29, 0
      %p344 = por %p342, %p343
      %p345 = scmp.ne.s32.totalorder %s333, %s334
      %p346 = scmp.eq.s32.totalorder %s30, 1
      %p347 = por %p345, %p346
      %p349 = scmp.ne.s32.totalorder %s334, %s348
      %p350 = scmp.eq.s32.totalorder %s30, 0
      %p351 = por %p349, %p350
      %s352 = ssub.s32 %s24, %s31
      %p353 = scmp.eq.s32.totalorder %s352, 0
      %s355 = sadd.s32 %s354, 1
      %s356 = scalar_select %p353, %s354, %s355
      %p359 = pneg %p353
      %p360 = scmp.eq.s32.totalorder %s24, 1
      %p361 = por %p359, %p360
      %p362 = scmp.ne.s32.totalorder %s354, %s357
      %p363 = scmp.eq.s32.totalorder %s24, 0
      %p364 = por %p362, %p363
      %p365 = scmp.ne.s32.totalorder %s354, %s357
      %p366 = scmp.eq.s32.totalorder %s29, 1
      %p367 = por %p365, %p366
      %p368 = scmp.ne.s32.totalorder %s357, %s358
      %p369 = scmp.eq.s32.totalorder %s29, 0
      %p370 = por %p368, %p369
      %p371 = scmp.ne.s32.totalorder %s357, %s358
      %p372 = scmp.eq.s32.totalorder %s30, 1
      %p373 = por %p371, %p372
      %p375 = scmp.ne.s32.totalorder %s358, %s374
      %p376 = scmp.eq.s32.totalorder %s30, 0
      %p377 = por %p375, %p376
      %p378 = scmp.le.s32.totalorder 1, %s24
      %p379 = scmp.lt.s32.totalorder %s24, 3
      %p380 = pnand %p378, %p379
      %p381 = pneg %p380
      // Predicated region
      $region9: #{_lambda_.7} parent=5 // pred_check
        _
      $region10: #{_lambda_.7} parent=5 // pred_check_branch
        %383 = sbr.rel (%p380) target = $region12
      $region11: #{_lambda_.7} parent=5 // pred_region
        %s384 = ssub.s32 %s24, 1
        // Predicated region
        $region13: #{_lambda_.7} parent=11 // pred_check
          %p385 = pneg %p71
        $region14: #{_lambda_.7} parent=11 // pred_check_branch
          %387 = sbr.rel (%p385) target = $region16
        $region15: #{_lambda_.7} parent=11 // pred_region
          _
        $region16: #{_lambda_.7} parent=11 // pred_fallthru
          _
        // Predicated region
        $region17: #{_lambda_.7} parent=11 // pred_check
          %p388 = pneg %p92
        $region18: #{_lambda_.7} parent=11 // pred_check_branch
          %390 = sbr.rel (%p388) target = $region20
        $region19: #{_lambda_.7} parent=11 // pred_region
          _
        $region20: #{_lambda_.7} parent=11 // pred_fallthru
          _
        // Predicated region
        $region21: #{_lambda_.7} parent=11 // pred_check
          %p391 = pneg %p113
        $region22: #{_lambda_.7} parent=11 // pred_check_branch
          %393 = sbr.rel (%p391) target = $region24
        $region23: #{_lambda_.7} parent=11 // pred_region
          %395 = vsyncadd [#allocation4], 0
          %s397 = sshll.u32 %s3, 4
          %s398 = int_to_ptr.hbm [resolvable:$true] %s397
          %s399 = sshll.u32 [#allocation3], 4
          %s400 = int_to_ptr.vmem [resolvable:$true] %s399
          %402 = dma.hbm_to_vmem [thread:$0]  %s398, 16, %s400, [#allocation4]
        $region24: #{_lambda_.7} parent=11 // pred_fallthru
          _
        // Predicated region
        $region25: #{_lambda_.7} parent=11 // pred_check
          %p403 = pneg %p134
        $region26: #{_lambda_.7} parent=11 // pred_check_branch
          %405 = sbr.rel (%p403) target = $region28
        $region27: #{_lambda_.7} parent=11 // pred_region
          _
        $region28: #{_lambda_.7} parent=11 // pred_fallthru
          _
        // Predicated region
        $region29: #{_lambda_.7} parent=11 // pred_check
          %p406 = pneg %p155
        $region30: #{_lambda_.7} parent=11 // pred_check_branch
          %408 = sbr.rel (%p406) target = $region32
        $region31: #{_lambda_.7} parent=11 // pred_region
          %410 = vsyncadd [#allocation6], 0
          %s412 = sshll.u32 %s5, 4
          %s413 = int_to_ptr.hbm [resolvable:$true] %s412
          %s414 = sshll.u32 [#allocation5], 4
          %s415 = int_to_ptr.vmem [resolvable:$true] %s414
          %417 = dma.hbm_to_vmem [thread:$0]  %s413, 16, %s415, [#allocation6]
        $region32: #{_lambda_.7} parent=11 // pred_fallthru
          _
        // Predicated region
        $region33: #{_lambda_.7} parent=11 // pred_check
          %p418 = pneg %p176
        $region34: #{_lambda_.7} parent=11 // pred_check_branch
          %420 = sbr.rel (%p418) target = $region36
        $region35: #{_lambda_.7} parent=11 // pred_region
          _
        $region36: #{_lambda_.7} parent=11 // pred_fallthru
          _
        // Predicated region
        $region37: #{_lambda_.7} parent=11 // pred_check
          %p421 = pneg %p197
        $region38: #{_lambda_.7} parent=11 // pred_check_branch
          %423 = sbr.rel (%p421) target = $region40
        $region39: #{_lambda_.7} parent=11 // pred_region
          %425 = vsyncadd [#allocation6], 0
          %s427 = sshll.u32 %s7, 4
          %s428 = int_to_ptr.hbm [resolvable:$true] %s427
          %s429 = sshll.u32 [#allocation7], 4
          %s430 = int_to_ptr.vmem [resolvable:$true] %s429
          %432 = dma.hbm_to_vmem [thread:$0]  %s428, 16, %s430, [#allocation6]
        $region40: #{_lambda_.7} parent=11 // pred_fallthru
          _
        // Predicated region
        $region41: #{_lambda_.7} parent=11 // pred_check
          %p433 = pneg %p218
        $region42: #{_lambda_.7} parent=11 // pred_check_branch
          %435 = sbr.rel (%p433) target = $region44
        $region43: #{_lambda_.7} parent=11 // pred_region
          _
        $region44: #{_lambda_.7} parent=11 // pred_fallthru
          _
        // Predicated region
        $region45: #{_lambda_.7} parent=11 // pred_check
          %p436 = pneg %p239
        $region46: #{_lambda_.7} parent=11 // pred_check_branch
          %438 = sbr.rel (%p436) target = $region48
        $region47: #{_lambda_.7} parent=11 // pred_region
          _
        $region48: #{_lambda_.7} parent=11 // pred_fallthru
          _
        // Predicated region
        $region49: #{_lambda_.7} parent=11 // pred_check
          %p439 = pneg %p260
        $region50: #{_lambda_.7} parent=11 // pred_check_branch
          %441 = sbr.rel (%p439) target = $region52
        $region51: #{_lambda_.7} parent=11 // pred_region
          _
        $region52: #{_lambda_.7} parent=11 // pred_fallthru
          _
        // Predicated region
        $region53: #{_lambda_.7} parent=11 // pred_check
          %p442 = pneg %p281
        $region54: #{_lambda_.7} parent=11 // pred_check_branch
          %444 = sbr.rel (%p442) target = $region56
        $region55: #{_lambda_.7} parent=11 // pred_region
          _
        $region56: #{_lambda_.7} parent=11 // pred_fallthru
          _
        // Predicated region
        $region57: #{_lambda_.7} parent=11 // pred_check
          %p445 = pneg %p302
        $region58: #{_lambda_.7} parent=11 // pred_check_branch
          %447 = sbr.rel (%p445) target = $region60
        $region59: #{_lambda_.7} parent=11 // pred_region
          _
        $region60: #{_lambda_.7} parent=11 // pred_fallthru
          _
        // Predicated region
        $region61: #{_lambda_.7} parent=11 // pred_check
          %p448 = pneg %p323
        $region62: #{_lambda_.7} parent=11 // pred_check_branch
          %450 = sbr.rel (%p448) target = $region64
        $region63: #{_lambda_.7} parent=11 // pred_region
          _
        $region64: #{_lambda_.7} parent=11 // pred_fallthru
          _
        // Predicated region
        $region65: #{_lambda_.7} parent=11 // pred_check
          %p451 = pneg %p344
        $region66: #{_lambda_.7} parent=11 // pred_check_branch
          %453 = sbr.rel (%p451) target = $region68
        $region67: #{_lambda_.7} parent=11 // pred_region
          %455 = vsyncadd [#allocation9], 0
          %s457 = sshll.u32 %s14, 4
          %s458 = int_to_ptr.hbm [resolvable:$true] %s457
          %s459 = sshll.u32 [#allocation8], 4
          %s460 = int_to_ptr.vmem [resolvable:$true] %s459
          %462 = dma.hbm_to_vmem [thread:$0]  %s458, 16, %s460, [#allocation9]
        $region68: #{_lambda_.7} parent=11 // pred_fallthru
          _
      $region12: #{_lambda_.7} parent=5 // pred_fallthru
        _
      %p463 = scmp.lt.s32.totalorder %s24, 2
      // Predicated region
      $region69: #{_lambda_.7} parent=5 // pred_check
        %p464 = pneg %p463
      $region70: #{_lambda_.7} parent=5 // pred_check_branch
        %466 = sbr.rel (%p464) target = $region72
      $region71: #{_lambda_.7} parent=5 // pred_region
        // Predicated region
        $region73: #{_lambda_.7} parent=71 // pred_check
          %p467 = pneg %p44
        $region74: #{_lambda_.7} parent=71 // pred_check_branch
          %469 = sbr.rel (%p467) target = $region76
        $region75: #{_lambda_.7} parent=71 // pred_region
          %p470 = scmp.lt.s32.totalorder %s24, 1
          %s471 = scalar_select %p470, %s24, 1
          %s472 = smul.addr %s471, 4
          %s473 = smul.addr %s472, 4
          %s474 = scalar_lea.vmem %s0, %s473
        $region76: #{_lambda_.7} parent=71 // pred_fallthru
          _
      $region72: #{_lambda_.7} parent=5 // pred_fallthru
        _
      %p475 = scmp.le.s32.totalorder 1, %s24
      %p476 = scmp.lt.s32.totalorder %s24, 3
      %p477 = pnand %p475, %p476
      %p478 = pneg %p477
      // Predicated region
      $region77: #{_lambda_.7} parent=5 // pred_check
        _
      $region78: #{_lambda_.7} parent=5 // pred_check_branch
        %480 = sbr.rel (%p477) target = $region80
      $region79: #{_lambda_.7} parent=5 // pred_region
        %s481 = ssub.s32 %s24, 1
        // Predicated region
        $region81: #{_lambda_.7} parent=79 // pred_check
          %p482 = pneg %p113
        $region82: #{_lambda_.7} parent=79 // pred_check_branch
          %484 = sbr.rel (%p482) target = $region84
        $region83: #{_lambda_.7} parent=79 // pred_region
          %486 = dma.done [#allocation4], 16
        $region84: #{_lambda_.7} parent=79 // pred_fallthru
          _
        // Predicated region
        $region85: #{_lambda_.7} parent=79 // pred_check
          %p487 = pneg %p155
        $region86: #{_lambda_.7} parent=79 // pred_check_branch
          %489 = sbr.rel (%p487) target = $region88
        $region87: #{_lambda_.7} parent=79 // pred_region
          %491 = dma.done [#allocation6], 16
        $region88: #{_lambda_.7} parent=79 // pred_fallthru
          _
        // Predicated region
        $region89: #{_lambda_.7} parent=79 // pred_check
          %p492 = pneg %p197
        $region90: #{_lambda_.7} parent=79 // pred_check_branch
          %494 = sbr.rel (%p492) target = $region92
        $region91: #{_lambda_.7} parent=79 // pred_region
          %496 = dma.done [#allocation6], 16
        $region92: #{_lambda_.7} parent=79 // pred_fallthru
          _
        // Predicated region
        $region93: #{_lambda_.7} parent=79 // pred_check
          %p497 = pneg %p344
        $region94: #{_lambda_.7} parent=79 // pred_check_branch
          %499 = sbr.rel (%p497) target = $region96
        $region95: #{_lambda_.7} parent=79 // pred_region
          %501 = dma.done [#allocation9], 16
        $region96: #{_lambda_.7} parent=79 // pred_fallthru
          _
        %p502 = scmp.lt.s32.totalorder %s29, 1
        %s503 = scalar_select %p502, %s29, 1
        %s504 = smul.addr %s503, 4
        %s505 = smul.addr %s504, 4
        %s506 = scalar_lea.vmem %s0, %s505
        %p507 = pneg %p50
        %p508 = pneg %p47
        %p509 = pneg %p71
        %p510 = pneg %p68
        %p511 = pneg %p92
        %p512 = pneg %p89
        %p513 = pneg %p113
        %p514 = pneg %p110
        %p515 = pneg %p134
        %p516 = pneg %p131
        %p517 = pneg %p155
        %p518 = pneg %p152
        %p519 = pneg %p176
        %p520 = pneg %p173
        %p521 = pneg %p197
        %p522 = pneg %p194
        %p523 = pneg %p218
        %p524 = pneg %p215
        %p525 = pneg %p239
        %p526 = pneg %p236
        %p527 = pneg %p260
        %p528 = pneg %p257
        %p529 = pneg %p281
        %p530 = pneg %p278
        %p531 = pneg %p302
        %p532 = pneg %p299
        %p533 = pneg %p323
        %p534 = pneg %p320
        %p535 = pneg %p344
        %p536 = pneg %p341
        %p537 = pneg %p370
        %p538 = pneg %p367
        %p539 = scmp.lt.s32.totalorder %s29, 1
        %s540 = scalar_select %p539, %s29, 1
        %s541 = smul.addr %s540, 2
        %s542 = smul.addr %s541, 4
        %s543 = scalar_lea.vmem %s15, %s542
        %p544 = scmp.lt.s32.totalorder %s29, 1
        %s545 = scalar_select %p544, %s29, 1
        %s546 = smul.addr %s545, 4
        %s547 = smul.addr %s546, 4
        %s548 = scalar_lea.vmem %s0, %s547
        %p549 = scmp.lt.s32.totalorder %s29, 1
        %s550 = scalar_select %p549, %s29, 1
        %s551 = smul.addr %s550, 2
        %s552 = smul.addr %s551, 4
        %s553 = scalar_lea.vmem %s15, %s552
        %v555 = vld [vmem:[%s548] sm:$0xff]
        %v556 = vld [vmem:[%s548 + $0x8] sm:$0x11]
        %v557 = vld [vmem:[%s2] sm:$0xf]
        %v558 = vld [vmem:[%s2 + $0x4] sm:$0xf]
        %v559 = vld [vmem:[%s2 + $0x8] sm:$0xf]
        %v560 = vld [vmem:[%s2 + $0xc] sm:$0xf]
        %v561 = vld [vmem:[%s2 + $0x10] sm:$0xf]
        %v562 = vld [vmem:[%s2 + $0x14] sm:$0xf]
        %v563 = vld [vmem:[%s2 + $0x18] sm:$0xf]
        %v564 = vld [vmem:[%s2 + $0x1c] sm:$0xf]
        %v565 = vld [vmem:[%s2 + $0x20] sm:$0xf]
        %v566 = vld [vmem:[%s2 + $0x24] sm:$0xf]
        %v567 = vld [vmem:[%s2 + $0x28] sm:$0xf]
        %v568 = vld [vmem:[%s2 + $0x2c] sm:$0xf]
        %v569 = vld [vmem:[%s2 + $0x30] sm:$0xf]
        %v570 = vld [vmem:[%s2 + $0x34] sm:$0xf]
        %v571 = vld [vmem:[%s2 + $0x38] sm:$0xf]
        %v572 = vld [vmem:[%s2 + $0x3c] sm:$0xf]
        %v573 = vld [vmem:[%s2 + $0x40] sm:$0xf]
        %v574 = vld [vmem:[%s2 + $0x44] sm:$0xf]
        %v575 = vld [vmem:[#allocation3] sm:$0x1]
        %v577 = vperm.slane %v575, 0
        %v581 = vunpack.c.l.b16 %v555
        %v582 = vunpack.c.h.b16 %v555
        %v583 = vunpack.c.l.b16 %v556
        %v584 = vunpack.c.h.b16 %v556
        %v585 = vpack.c.b16 %v583, %v581
        %v586 = vpack.c.b16 %v584, %v582
        %v606 = vunpack.c.l.b16 %v557
        %v607 = vunpack.c.l.b16 %v558
        %v608 = vunpack.c.l.b16 %v559
        %v609 = vunpack.c.l.b16 %v560
        %v610 = vunpack.c.l.b16 %v561
        %v611 = vunpack.c.l.b16 %v562
        %v612 = vunpack.c.l.b16 %v563
        %v613 = vunpack.c.l.b16 %v564
        %v614 = vunpack.c.l.b16 %v565
        %v615 = vunpack.c.l.b16 %v566
        %v616 = vunpack.c.l.b16 %v567
        %v617 = vunpack.c.l.b16 %v568
        %v618 = vunpack.c.l.b16 %v569
        %v619 = vunpack.c.l.b16 %v570
        %v620 = vunpack.c.l.b16 %v571
        %v621 = vunpack.c.l.b16 %v572
        %v622 = vunpack.c.l.b16 %v573
        %v623 = vunpack.c.l.b16 %v574
        %v624 = vpack.c.b16 %v607, %v606
        %v625 = vpack.c.b16 %v609, %v608
        %v626 = vpack.c.b16 %v611, %v610
        %v627 = vpack.c.b16 %v613, %v612
        %v628 = vpack.c.b16 %v615, %v614
        %v629 = vpack.c.b16 %v617, %v616
        %v630 = vpack.c.b16 %v619, %v618
        %v631 = vpack.c.b16 %v621, %v620
        %v632 = vpack.c.b16 %v623, %v622
        %vm642 = vcmask 130048
        %v644 = vsel %vm642, %v586, 0
        %646 = vmatpush.bf16.msra.mxu0 %v631
        %647 = vmatpush.bf16.msra.mxu0 %v630
        %648 = vmatpush.bf16.msra.mxu0 %v629
        %649 = vmatpush.bf16.msra.mxu0 %v628
        %650 = vmatpush.bf16.msra.mxu0 %v627
        %651 = vmatpush.bf16.msra.mxu0 %v626
        %652 = vmatpush.bf16.msra.mxu0 %v625
        %653 = vmatpush.bf16.msra.mxu0 %v624
        %654 = vmatmul.bf16.gmra.mxu0 %v585
        %v655 = vpop.f32.mrf.mxu0
        %v656 = vadd.f32 %v577, %v655
        %v657 = vpop.f32.mrf.mxu0
        %v658 = vadd.f32 %v577, %v657
        %659 = vdwg.mxu0
        %660 = vmatpush.bf16.msra.mxu0 0
        %661 = vmatpush.bf16.msra.mxu0 0
        %662 = vmatpush.bf16.msra.mxu0 0
        %663 = vmatpush.bf16.msra.mxu0 0
        %664 = vmatpush.bf16.msra.mxu0 0
        %665 = vmatpush.bf16.msra.mxu0 0
        %666 = vmatpush.bf16.msra.mxu0 0
        %667 = vmatpush.bf16.msra.mxu0 %v632
        %668 = vmatmul.bf16.gmra.mxu0 %v644
        %v669 = vpop.f32.mrf.mxu0
        %v670 = vadd.f32 %v656, %v669
        %v671 = vpop.f32.mrf.mxu0
        %v672 = vadd.f32 %v658, %v671
        %673 = vdwg.mxu0
        %v674 = vmul.f32 %v670, 0.5
        %v675 = vmul.f32 %v672, 0.5
        %v676 = vtanh.pop %v674
        %v677 = vtanh.pop %v675
        %v678 = vadd.f32 %v676, 1.0
        %v679 = vadd.f32 %v677, 1.0
        %v680 = vmul.f32 %v674, %v678
        %v681 = vmul.f32 %v675, %v679
        %v682 = vpack.c.bf16 %v681, %v680
        %v683 = vld [vmem:[%s4] sm:$0xf]
        %v684 = vld [vmem:[%s4 + $0x4] sm:$0xf]
        %v685 = vld [vmem:[%s4 + $0x8] sm:$0xf]
        %v686 = vld [vmem:[%s4 + $0xc] sm:$0xf]
        %v687 = vld [vmem:[#allocation5] sm:$0x1]
        %v689 = vperm.slane %v687, 0
        %v695 = vunpack.c.l.b16 %v683
        %v696 = vunpack.c.l.b16 %v684
        %v697 = vunpack.c.l.b16 %v685
        %v698 = vunpack.c.l.b16 %v686
        %v699 = vpack.c.b16 %v696, %v695
        %v700 = vpack.c.b16 %v698, %v697
        %vm703 = vcmask 261120
        %v705 = vsel %vm703, %v682, 0
        %707 = vmatpush.bf16.msra.mxu0 0
        %708 = vmatpush.bf16.msra.mxu0 0
        %709 = vmatpush.bf16.msra.mxu0 0
        %710 = vmatpush.bf16.msra.mxu0 0
        %711 = vmatpush.bf16.msra.mxu0 0
        %712 = vmatpush.bf16.msra.mxu0 0
        %713 = vmatpush.bf16.msra.mxu0 %v700
        %714 = vmatpush.bf16.msra.mxu0 %v699
        %715 = vmatmul.bf16.gmra.mxu0 %v705
        %v716 = vpop.f32.mrf.mxu0
        %v717 = vadd.f32 %v689, %v716
        %v718 = vpop.f32.mrf.mxu0
        %v719 = vadd.f32 %v689, %v718
        %720 = vdwg.mxu0
        %v721 = vmul.f32 %v717, 0.5
        %v722 = vmul.f32 %v719, 0.5
        %v723 = vtanh.pop %v721
        %v724 = vtanh.pop %v722
        %v725 = vadd.f32 %v723, 1.0
        %v726 = vadd.f32 %v724, 1.0
        %v727 = vmul.f32 %v721, %v725
        %v728 = vmul.f32 %v722, %v726
        %v729 = vld [vmem:[%s6] sm:$0xf]
        %v730 = vld [vmem:[%s6 + $0x4] sm:$0xf]
        %v731 = vld [vmem:[%s6 + $0x8] sm:$0xf]
        %v732 = vld [vmem:[%s6 + $0xc] sm:$0xf]
        %v733 = vld [vmem:[#allocation7] sm:$0x1]
        %v735 = vperm.slane %v733, 0
        %v741 = vunpack.c.l.b16 %v729
        %v742 = vunpack.c.l.b16 %v730
        %v743 = vunpack.c.l.b16 %v731
        %v744 = vunpack.c.l.b16 %v732
        %v745 = vpack.c.b16 %v742, %v741
        %v746 = vpack.c.b16 %v744, %v743
        %749 = vmatpush.bf16.msra.mxu0 0
        %750 = vmatpush.bf16.msra.mxu0 0
        %751 = vmatpush.bf16.msra.mxu0 0
        %752 = vmatpush.bf16.msra.mxu0 0
        %753 = vmatpush.bf16.msra.mxu0 0
        %754 = vmatpush.bf16.msra.mxu0 0
        %755 = vmatpush.bf16.msra.mxu0 %v746
        %756 = vmatpush.bf16.msra.mxu0 %v745
        %757 = vmatmul.bf16.gmra.mxu0 %v705
        %v758 = vpop.f32.mrf.mxu0
        %v759 = vadd.f32 %v735, %v758
        %v760 = vpop.f32.mrf.mxu0
        %v761 = vadd.f32 %v735, %v760
        %762 = vdwg.mxu0
        %v763 = vmul.f32 %v759, 0.5
        %v764 = vmul.f32 %v761, 0.5
        %v765 = vtanh.pop %v763
        %v766 = vtanh.pop %v764
        %v767 = vadd.f32 %v765, 1.0
        %v768 = vadd.f32 %v766, 1.0
        %v769 = vmul.f32 %v763, %v767
        %v770 = vmul.f32 %v764, %v768
        %vm771 = vcmask 125952
        %772 = vst.msk [vmem:[#allocation2] sm:$0xf] %vm771, 0
        %vm773 = vcmask 125952
        %vm774 = vsmask.f32 7938
        %vm775 = vmand %vm773, %vm774
        %v776 = vld [vmem:[#allocation2 + $0x8] sm:$0xf]
        %v777 = vsel %vm775, 0, %v776
        %778 = vst [vmem:[#allocation2 + $0x8] sm:$0xf] %v777
        %v779 = vld [vmem:[%s1] sm:$0xf]
        %v780 = vld [vmem:[%s1 + $0x4] sm:$0x1]
        %s781 = scalar_lea.vmem %s1, 8
        %v782 = vld [vmem:[%s781] sm:$0xf]
        %v783 = vld [vmem:[%s781 + $0x4] sm:$0x1]
        %v784 = vpack.c.bf16 %v728, %v727
        %v785 = vld [vmem:[%s8] sm:$0xf]
        %v786 = vld [vmem:[%s8 + $0x4] sm:$0xf]
        %v787 = vld [vmem:[%s9] sm:$0x1]
        %v789 = vperm.slane %v787, 0
        %v793 = vunpack.c.l.b16 %v785
        %v794 = vunpack.c.l.b16 %v786
        %v795 = vpack.c.b16 %v794, %v793
        %v798 = vsel %vm642, %v784, 0
        %800 = vmatpush.bf16.msra.mxu0 0
        %801 = vmatpush.bf16.msra.mxu0 0
        %802 = vmatpush.bf16.msra.mxu0 0
        %803 = vmatpush.bf16.msra.mxu0 0
        %804 = vmatpush.bf16.msra.mxu0 0
        %805 = vmatpush.bf16.msra.mxu0 0
        %806 = vmatpush.bf16.msra.mxu0 0
        %807 = vmatpush.bf16.msra.mxu0 %v795
        %808 = vmatmul.bf16.gmra.mxu0 %v798
        %v809 = vpop.f32.mrf.mxu0
        %v810 = vadd.f32 %v789, %v809
        %v811 = vpop.f32.mrf.mxu0
        %v812 = vadd.f32 %v789, %v811
        %813 = vdwg.mxu0
        %v814 = vmul.f32 %v810, 0.5
        %v815 = vmul.f32 %v812, 0.5
        %v816 = vtanh.pop %v814
        %v817 = vtanh.pop %v815
        %v818 = vadd.f32 %v816, 1.0
        %v819 = vadd.f32 %v817, 1.0
        %v820 = vmul.f32 %v814, %v818
        %v821 = vmul.f32 %v815, %v819
        %v822 = vpack.c.bf16 %v820, %v820
        %v823 = vpack.c.bf16 %v821, %v821
        %824 = vst.msk [vmem:[#allocation2 + $0x4] sm:$0xf] %vm771, %v822
        %vm825 = vcmask 122880
        %vm826 = vsmask.f32 256
        %vm827 = vmand %vm825, %vm826
        %v828 = vld [vmem:[#allocation2 + $0x8] sm:$0x1]
        %v829 = vsel %vm827, %v823, %v828
        %830 = vst [vmem:[#allocation2 + $0x8] sm:$0x1] %v829
        %v831 = vld [vmem:[#allocation2] sm:$0xc]
        %v832 = vld [vmem:[#allocation2 + $0x4] sm:$0x7]
        %834 = vset.pattern.permute.xlu0 0
        %835 = vperm.xlu0 %834, %v779
        %v836 = vpop.permute.xlu0 %835
        %v839 = vunpack.c.l.s4 839922192
        %v840 = vunpack.c.0.s8 %v839
        %v841 = vperm.slane %v836, %v840
        %843 = vset.pattern.permute.xlu0 0
        %844 = vperm.xlu0 %843, %v780
        %v845 = vpop.permute.xlu0 %844
        %v848 = vunpack.c.l.s4 839922192
        %v849 = vunpack.c.0.s8 %v848
        %v850 = vperm.slane %v845, %v849
        %v851 = vunpack.c.l.bf16 %v831
        %v852 = vunpack.c.l.bf16 %v832
        %v853 = vunpack.c.l.bf16 %v841
        %v854 = vunpack.c.l.bf16 %v850
        %vm857 = vcmask 1043456
        %v858 = vrot.slane %v853, 4
        %v859 = vrot.slane %v854, 4
        %v860 = vsel %vm857, %v858, %v859
        %v863 = vmul.f32 %v851, %v858
        %v864 = vmul.f32 %v852, %v860
        %v865 = vpack.c.bf16 %v864, %v863
        %v866 = vld [vmem:[%s10] sm:$0xf]
        %v867 = vld [vmem:[%s10 + $0x4] sm:$0xf]
        %s868 = scalar_lea.vmem %s10, 8
        %v869 = vld [vmem:[%s868] sm:$0xf]
        %v870 = vld [vmem:[%s868 + $0x4] sm:$0xf]
        %v873 = vunpack.c.l.b16 %v831
        %v874 = vunpack.c.l.b16 %v832
        %v875 = vpack.c.b16 %v874, %v873
        %v877 = vshrl.u32 %v875, 16
        %v879 = vrot.slane %v877, 2
        %v880 = vshll.u32 %v875, 16
        %v882 = vrot.slane %v880, 3
        %v883 = vor.u32 %v879, %v882
        %v886 = vunpack.c.l.b16 %v869
        %v887 = vunpack.c.l.b16 %v870
        %v888 = vpack.c.b16 %v887, %v886
        %v891 = vsel %vm642, %v883, 0
        %893 = vmatpush.bf16.msra.mxu0 0
        %894 = vmatpush.bf16.msra.mxu0 0
        %895 = vmatpush.bf16.msra.mxu0 0
        %896 = vmatpush.bf16.msra.mxu0 0
        %897 = vmatpush.bf16.msra.mxu0 0
        %898 = vmatpush.bf16.msra.mxu0 0
        %899 = vmatpush.bf16.msra.mxu0 0
        %900 = vmatpush.bf16.msra.mxu0 %v888
        %901 = vmatmul.bf16.gmra.mxu0 %v891
        %v902 = vpop.f32.mrf.mxu0
        %v903 = vadd.f32 0.0, %v902
        %v904 = vpop.f32.mrf.mxu0
        %v905 = vadd.f32 0.0, %v904
        %906 = vdwg.mxu0
        %v908 = vrot.slane %v865, 2
        %v911 = vunpack.c.l.b16 %v866
        %v912 = vunpack.c.l.b16 %v867
        %v913 = vpack.c.b16 %v912, %v911
        %v916 = vsel %vm642, %v908, 0
        %918 = vmatpush.bf16.msra.mxu0 0
        %919 = vmatpush.bf16.msra.mxu0 0
        %920 = vmatpush.bf16.msra.mxu0 0
        %921 = vmatpush.bf16.msra.mxu0 0
        %922 = vmatpush.bf16.msra.mxu0 0
        %923 = vmatpush.bf16.msra.mxu0 0
        %924 = vmatpush.bf16.msra.mxu0 0
        %925 = vmatpush.bf16.msra.mxu0 %v913
        %926 = vmatmul.bf16.gmra.mxu0 %v916
        %v927 = vpop.f32.mrf.mxu0
        %v928 = vadd.f32 %v903, %v927
        %v929 = vpop.f32.mrf.mxu0
        %v930 = vadd.f32 %v905, %v929
        %931 = vdwg.mxu0
        %v932 = vld [vmem:[#allocation2] sm:$0x8]
        %v933 = vld [vmem:[#allocation2 + $0x4] sm:$0xf]
        %935 = vset.pattern.permute.xlu0 0
        %936 = vperm.xlu0 %935, %v782
        %v937 = vpop.permute.xlu0 %936
        %v940 = vunpack.c.l.s4 839922192
        %v941 = vunpack.c.0.s8 %v940
        %v942 = vperm.slane %v937, %v941
        %944 = vset.pattern.permute.xlu0 0
        %945 = vperm.xlu0 %944, %v783
        %v946 = vpop.permute.xlu0 %945
        %v949 = vunpack.c.l.s4 839922192
        %v950 = vunpack.c.0.s8 %v949
        %v951 = vperm.slane %v946, %v950
        %v952 = vunpack.c.l.bf16 %v932
        %v953 = vunpack.c.l.bf16 %v933
        %v954 = vunpack.c.l.bf16 %v942
        %v955 = vunpack.c.l.bf16 %v951
        %vm958 = vcmask 1045504
        %v959 = vrot.slane %v954, 2
        %v960 = vrot.slane %v955, 2
        %v961 = vsel %vm958, %v959, %v960
        %v964 = vmul.f32 %v952, %v959
        %v965 = vmul.f32 %v953, %v961
        %v966 = vpack.c.bf16 %v965, %v964
        %s967 = scalar_lea.vmem %s10, 16
        %v968 = vld [vmem:[%s967] sm:$0xf]
        %v969 = vld [vmem:[%s967 + $0x4] sm:$0xf]
        %v971 = vrot.slane %v966, 3
        %v974 = vunpack.c.l.b16 %v968
        %v975 = vunpack.c.l.b16 %v969
        %v976 = vpack.c.b16 %v975, %v974
        %v979 = vsel %vm642, %v971, 0
        %981 = vmatpush.bf16.msra.mxu0 0
        %982 = vmatpush.bf16.msra.mxu0 0
        %983 = vmatpush.bf16.msra.mxu0 0
        %984 = vmatpush.bf16.msra.mxu0 0
        %985 = vmatpush.bf16.msra.mxu0 0
        %986 = vmatpush.bf16.msra.mxu0 0
        %987 = vmatpush.bf16.msra.mxu0 0
        %988 = vmatpush.bf16.msra.mxu0 %v976
        %989 = vmatmul.bf16.gmra.mxu0 %v979
        %v990 = vpop.f32.mrf.mxu0
        %v991 = vadd.f32 0.0, %v990
        %v992 = vpop.f32.mrf.mxu0
        %v993 = vadd.f32 0.0, %v992
        %994 = vdwg.mxu0
        %v995 = vadd.f32 %v928, %v991
        %v996 = vadd.f32 %v930, %v993
        %vm997 = vcmask 1046528
        %v998 = vrot.slane %v853, 1
        %v999 = vrot.slane %v854, 1
        %v1000 = vsel %vm997, %v998, %v999
        %v1003 = vmul.f32 %v952, %v998
        %v1004 = vmul.f32 %v953, %v1000
        %v1005 = vpack.c.bf16 %v1004, %v1003
        %s1006 = scalar_lea.vmem %s10, 24
        %v1007 = vld [vmem:[%s1006] sm:$0xf]
        %v1008 = vld [vmem:[%s1006 + $0x4] sm:$0xf]
        %v1010 = vshrl.u32 %v1005, 16
        %v1012 = vrot.slane %v1010, 3
        %v1013 = vshll.u32 %v1005, 16
        %v1015 = vrot.slane %v1013, 4
        %v1016 = vor.u32 %v1012, %v1015
        %v1019 = vunpack.c.l.b16 %v1007
        %v1020 = vunpack.c.l.b16 %v1008
        %v1021 = vpack.c.b16 %v1020, %v1019
        %v1024 = vsel %vm642, %v1016, 0
        %1026 = vmatpush.bf16.msra.mxu0 0
        %1027 = vmatpush.bf16.msra.mxu0 0
        %1028 = vmatpush.bf16.msra.mxu0 0
        %1029 = vmatpush.bf16.msra.mxu0 0
        %1030 = vmatpush.bf16.msra.mxu0 0
        %1031 = vmatpush.bf16.msra.mxu0 0
        %1032 = vmatpush.bf16.msra.mxu0 0
        %1033 = vmatpush.bf16.msra.mxu0 %v1021
        %1034 = vmatmul.bf16.gmra.mxu0 %v1024
        %v1035 = vpop.f32.mrf.mxu0
        %v1036 = vadd.f32 0.0, %v1035
        %v1037 = vpop.f32.mrf.mxu0
        %v1038 = vadd.f32 0.0, %v1037
        %1039 = vdwg.mxu0
        %v1040 = vadd.f32 %v995, %v1036
        %v1041 = vadd.f32 %v996, %v1038
        %v1042 = vld [vmem:[#allocation2 + $0x4] sm:$0xf]
        %v1043 = vld [vmem:[#allocation2 + $0x8] sm:$0x1]
        %s1044 = scalar_lea.vmem %s10, 32
        %v1045 = vld [vmem:[%s1044] sm:$0xf]
        %v1046 = vld [vmem:[%s1044 + $0x4] sm:$0xf]
        %v1049 = vunpack.c.l.b16 %v1042
        %v1050 = vunpack.c.l.b16 %v1043
        %v1051 = vpack.c.b16 %v1050, %v1049
        %v1054 = vunpack.c.l.b16 %v1045
        %v1055 = vunpack.c.l.b16 %v1046
        %v1056 = vpack.c.b16 %v1055, %v1054
        %v1059 = vsel %vm642, %v1051, 0
        %1061 = vmatpush.bf16.msra.mxu0 0
        %1062 = vmatpush.bf16.msra.mxu0 0
        %1063 = vmatpush.bf16.msra.mxu0 0
        %1064 = vmatpush.bf16.msra.mxu0 0
        %1065 = vmatpush.bf16.msra.mxu0 0
        %1066 = vmatpush.bf16.msra.mxu0 0
        %1067 = vmatpush.bf16.msra.mxu0 0
        %1068 = vmatpush.bf16.msra.mxu0 %v1056
        %1069 = vmatmul.bf16.gmra.mxu0 %v1059
        %v1070 = vpop.f32.mrf.mxu0
        %v1071 = vadd.f32 0.0, %v1070
        %v1072 = vpop.f32.mrf.mxu0
        %v1073 = vadd.f32 0.0, %v1072
        %1074 = vdwg.mxu0
        %v1075 = vadd.f32 %v1040, %v1071
        %v1076 = vadd.f32 %v1041, %v1073
        %v1077 = vunpack.c.l.bf16 %v1042
        %v1078 = vunpack.c.l.bf16 %v1043
        %vm1079 = vcmask 1040384
        %v1080 = vrot.slane %v954, 7
        %v1081 = vrot.slane %v955, 7
        %v1082 = vsel %vm1079, %v1080, %v1081
        %v1085 = vmul.f32 %v1077, %v1080
        %v1086 = vmul.f32 %v1078, %v1082
        %v1087 = vpack.c.bf16 %v1086, %v1085
        %s1088 = scalar_lea.vmem %s10, 40
        %v1089 = vld [vmem:[%s1088] sm:$0xf]
        %v1090 = vld [vmem:[%s1088 + $0x4] sm:$0xf]
        %v1092 = vshrl.u32 %v1087, 16
        %v1094 = vshll.u32 %v1087, 16
        %v1096 = vrot.slane %v1094, 1
        %v1097 = vor.u32 %v1092, %v1096
        %v1100 = vunpack.c.l.b16 %v1089
        %v1101 = vunpack.c.l.b16 %v1090
        %v1102 = vpack.c.b16 %v1101, %v1100
        %v1105 = vsel %vm642, %v1097, 0
        %1107 = vmatpush.bf16.msra.mxu0 0
        %1108 = vmatpush.bf16.msra.mxu0 0
        %1109 = vmatpush.bf16.msra.mxu0 0
        %1110 = vmatpush.bf16.msra.mxu0 0
        %1111 = vmatpush.bf16.msra.mxu0 0
        %1112 = vmatpush.bf16.msra.mxu0 0
        %1113 = vmatpush.bf16.msra.mxu0 0
        %1114 = vmatpush.bf16.msra.mxu0 %v1102
        %1115 = vmatmul.bf16.gmra.mxu0 %v1105
        %v1116 = vpop.f32.mrf.mxu0
        %v1117 = vadd.f32 0.0, %v1116
        %v1118 = vpop.f32.mrf.mxu0
        %v1119 = vadd.f32 0.0, %v1118
        %1120 = vdwg.mxu0
        %v1121 = vadd.f32 %v1075, %v1117
        %v1122 = vadd.f32 %v1076, %v1119
        %v1123 = vld [vmem:[#allocation2 + $0x4] sm:$0xe]
        %v1124 = vld [vmem:[#allocation2 + $0x8] sm:$0x3]
        %v1125 = vunpack.c.l.bf16 %v1123
        %v1126 = vunpack.c.l.bf16 %v1124
        %vm1127 = vcmask 1041408
        %v1128 = vrot.slane %v853, 6
        %v1129 = vrot.slane %v854, 6
        %v1130 = vsel %vm1127, %v1128, %v1129
        %v1133 = vmul.f32 %v1125, %v1128
        %v1134 = vmul.f32 %v1126, %v1130
        %v1135 = vpack.c.bf16 %v1134, %v1133
        %s1136 = scalar_lea.vmem %s10, 48
        %v1137 = vld [vmem:[%s1136] sm:$0xf]
        %v1138 = vld [vmem:[%s1136 + $0x4] sm:$0xf]
        %v1140 = vrot.slane %v1135, 1
        %v1143 = vunpack.c.l.b16 %v1137
        %v1144 = vunpack.c.l.b16 %v1138
        %v1145 = vpack.c.b16 %v1144, %v1143
        %v1148 = vsel %vm642, %v1140, 0
        %1150 = vmatpush.bf16.msra.mxu0 0
        %1151 = vmatpush.bf16.msra.mxu0 0
        %1152 = vmatpush.bf16.msra.mxu0 0
        %1153 = vmatpush.bf16.msra.mxu0 0
        %1154 = vmatpush.bf16.msra.mxu0 0
        %1155 = vmatpush.bf16.msra.mxu0 0
        %1156 = vmatpush.bf16.msra.mxu0 0
        %1157 = vmatpush.bf16.msra.mxu0 %v1145
        %1158 = vmatmul.bf16.gmra.mxu0 %v1148
        %v1159 = vpop.f32.mrf.mxu0
        %v1160 = vadd.f32 0.0, %v1159
        %v1161 = vpop.f32.mrf.mxu0
        %v1162 = vadd.f32 0.0, %v1161
        %1163 = vdwg.mxu0
        %v1164 = vadd.f32 %v1121, %v1160
        %v1165 = vadd.f32 %v1122, %v1162
        %s1166 = scalar_lea.vmem %s10, 56
        %v1167 = vld [vmem:[%s1166] sm:$0xf]
        %v1168 = vld [vmem:[%s1166 + $0x4] sm:$0xf]
        %v1171 = vunpack.c.l.b16 %v1123
        %v1172 = vunpack.c.l.b16 %v1124
        %v1173 = vpack.c.b16 %v1172, %v1171
        %v1175 = vshrl.u32 %v1173, 16
        %v1177 = vrot.slane %v1175, 1
        %v1178 = vshll.u32 %v1173, 16
        %v1180 = vrot.slane %v1178, 2
        %v1181 = vor.u32 %v1177, %v1180
        %v1184 = vunpack.c.l.b16 %v1167
        %v1185 = vunpack.c.l.b16 %v1168
        %v1186 = vpack.c.b16 %v1185, %v1184
        %v1189 = vsel %vm642, %v1181, 0
        %1191 = vmatpush.bf16.msra.mxu0 0
        %1192 = vmatpush.bf16.msra.mxu0 0
        %1193 = vmatpush.bf16.msra.mxu0 0
        %1194 = vmatpush.bf16.msra.mxu0 0
        %1195 = vmatpush.bf16.msra.mxu0 0
        %1196 = vmatpush.bf16.msra.mxu0 0
        %1197 = vmatpush.bf16.msra.mxu0 0
        %1198 = vmatpush.bf16.msra.mxu0 %v1186
        %1199 = vmatmul.bf16.gmra.mxu0 %v1189
        %v1200 = vpop.f32.mrf.mxu0
        %v1201 = vadd.f32 0.0, %v1200
        %v1202 = vpop.f32.mrf.mxu0
        %v1203 = vadd.f32 0.0, %v1202
        %1204 = vdwg.mxu0
        %v1205 = vadd.f32 %v1164, %v1201
        %v1206 = vadd.f32 %v1165, %v1203
        %v1207 = vld [vmem:[#allocation2 + $0x4] sm:$0xc]
        %v1208 = vld [vmem:[#allocation2 + $0x8] sm:$0x7]
        %v1209 = vunpack.c.l.bf16 %v1207
        %v1210 = vunpack.c.l.bf16 %v1208
        %v1211 = vrot.slane %v954, 4
        %v1212 = vrot.slane %v955, 4
        %v1213 = vsel %vm857, %v1211, %v1212
        %v1216 = vmul.f32 %v1209, %v1211
        %v1217 = vmul.f32 %v1210, %v1213
        %v1218 = vpack.c.bf16 %v1217, %v1216
        %s1219 = scalar_lea.vmem %s10, 64
        %v1220 = vld [vmem:[%s1219] sm:$0xf]
        %v1221 = vld [vmem:[%s1219 + $0x4] sm:$0xf]
        %v1223 = vrot.slane %v1218, 2
        %v1226 = vunpack.c.l.b16 %v1220
        %v1227 = vunpack.c.l.b16 %v1221
        %v1228 = vpack.c.b16 %v1227, %v1226
        %v1231 = vsel %vm642, %v1223, 0
        %1233 = vmatpush.bf16.msra.mxu0 0
        %1234 = vmatpush.bf16.msra.mxu0 0
        %1235 = vmatpush.bf16.msra.mxu0 0
        %1236 = vmatpush.bf16.msra.mxu0 0
        %1237 = vmatpush.bf16.msra.mxu0 0
        %1238 = vmatpush.bf16.msra.mxu0 0
        %1239 = vmatpush.bf16.msra.mxu0 0
        %1240 = vmatpush.bf16.msra.mxu0 %v1228
        %1241 = vmatmul.bf16.gmra.mxu0 %v1231
        %v1242 = vpop.f32.mrf.mxu0
        %v1243 = vadd.f32 0.0, %v1242
        %v1244 = vpop.f32.mrf.mxu0
        %v1245 = vadd.f32 0.0, %v1244
        %1246 = vdwg.mxu0
        %v1247 = vadd.f32 %v1205, %v1243
        %v1248 = vadd.f32 %v1206, %v1245
        %v1249 = vld [vmem:[%s11] sm:$0x1]
        %v1251 = vperm.slane %v1249, 0
        %v1253 = vadd.f32 %v1247, %v1251
        %v1254 = vadd.f32 %v1248, %v1251
        %v1255 = vmul.f32 %v1253, 0.5
        %v1256 = vmul.f32 %v1254, 0.5
        %v1257 = vtanh.pop %v1255
        %v1258 = vtanh.pop %v1256
        %v1259 = vadd.f32 %v1257, 1.0
        %v1260 = vadd.f32 %v1258, 1.0
        %v1261 = vmul.f32 %v1255, %v1259
        %v1262 = vmul.f32 %v1256, %v1260
        %v1263 = vadd.f32 %v727, %v1261
        %v1264 = vadd.f32 %v728, %v1262
        %v1265 = vpack.c.bf16 %v1264, %v1263
        %s1266 = scalar_lea.vmem %s8, 8
        %v1267 = vld [vmem:[%s1266] sm:$0xf]
        %v1268 = vld [vmem:[%s1266 + $0x4] sm:$0xf]
        %s1269 = scalar_lea.vmem %s9, 1
        %v1270 = vld [vmem:[%s1269] sm:$0x1]
        %v1272 = vperm.slane %v1270, 0
        %v1276 = vunpack.c.l.b16 %v1267
        %v1277 = vunpack.c.l.b16 %v1268
        %v1278 = vpack.c.b16 %v1277, %v1276
        %v1281 = vsel %vm642, %v1265, 0
        %1283 = vmatpush.bf16.msra.mxu0 0
        %1284 = vmatpush.bf16.msra.mxu0 0
        %1285 = vmatpush.bf16.msra.mxu0 0
        %1286 = vmatpush.bf16.msra.mxu0 0
        %1287 = vmatpush.bf16.msra.mxu0 0
        %1288 = vmatpush.bf16.msra.mxu0 0
        %1289 = vmatpush.bf16.msra.mxu0 0
        %1290 = vmatpush.bf16.msra.mxu0 %v1278
        %1291 = vmatmul.bf16.gmra.mxu0 %v1281
        %v1292 = vpop.f32.mrf.mxu0
        %v1293 = vadd.f32 %v1272, %v1292
        %v1294 = vpop.f32.mrf.mxu0
        %v1295 = vadd.f32 %v1272, %v1294
        %1296 = vdwg.mxu0
        %v1297 = vmul.f32 %v1293, 0.5
        %v1298 = vmul.f32 %v1295, 0.5
        %v1299 = vtanh.pop %v1297
        %v1300 = vtanh.pop %v1298
        %v1301 = vadd.f32 %v1299, 1.0
        %v1302 = vadd.f32 %v1300, 1.0
        %v1303 = vmul.f32 %v1297, %v1301
        %v1304 = vmul.f32 %v1298, %v1302
        %v1305 = vpack.c.bf16 %v1303, %v1303
        %v1306 = vpack.c.bf16 %v1304, %v1304
        %1307 = vst.msk [vmem:[#allocation2 + $0x4] sm:$0xf] %vm771, %v1305
        %v1308 = vld [vmem:[#allocation2 + $0x8] sm:$0x1]
        %v1309 = vsel %vm827, %v1306, %v1308
        %1310 = vst [vmem:[#allocation2 + $0x8] sm:$0x1] %v1309
        %v1311 = vld [vmem:[#allocation2] sm:$0xc]
        %v1312 = vld [vmem:[#allocation2 + $0x4] sm:$0x7]
        %v1313 = vunpack.c.l.bf16 %v1311
        %v1314 = vunpack.c.l.bf16 %v1312
        %v1315 = vmul.f32 %v1313, %v858
        %v1316 = vmul.f32 %v1314, %v860
        %v1317 = vpack.c.bf16 %v1316, %v1315
        %s1318 = scalar_lea.vmem %s10, 72
        %v1319 = vld [vmem:[%s1318] sm:$0xf]
        %v1320 = vld [vmem:[%s1318 + $0x4] sm:$0xf]
        %s1321 = scalar_lea.vmem %s10, 80
        %v1322 = vld [vmem:[%s1321] sm:$0xf]
        %v1323 = vld [vmem:[%s1321 + $0x4] sm:$0xf]
        %v1326 = vunpack.c.l.b16 %v1311
        %v1327 = vunpack.c.l.b16 %v1312
        %v1328 = vpack.c.b16 %v1327, %v1326
        %v1330 = vshrl.u32 %v1328, 16
        %v1332 = vrot.slane %v1330, 2
        %v1333 = vshll.u32 %v1328, 16
        %v1335 = vrot.slane %v1333, 3
        %v1336 = vor.u32 %v1332, %v1335
        %v1339 = vunpack.c.l.b16 %v1322
        %v1340 = vunpack.c.l.b16 %v1323
        %v1341 = vpack.c.b16 %v1340, %v1339
        %v1344 = vsel %vm642, %v1336, 0
        %1346 = vmatpush.bf16.msra.mxu0 0
        %1347 = vmatpush.bf16.msra.mxu0 0
        %1348 = vmatpush.bf16.msra.mxu0 0
        %1349 = vmatpush.bf16.msra.mxu0 0
        %1350 = vmatpush.bf16.msra.mxu0 0
        %1351 = vmatpush.bf16.msra.mxu0 0
        %1352 = vmatpush.bf16.msra.mxu0 0
        %1353 = vmatpush.bf16.msra.mxu0 %v1341
        %1354 = vmatmul.bf16.gmra.mxu0 %v1344
        %v1355 = vpop.f32.mrf.mxu0
        %v1356 = vadd.f32 0.0, %v1355
        %v1357 = vpop.f32.mrf.mxu0
        %v1358 = vadd.f32 0.0, %v1357
        %1359 = vdwg.mxu0
        %v1361 = vrot.slane %v1317, 2
        %v1364 = vunpack.c.l.b16 %v1319
        %v1365 = vunpack.c.l.b16 %v1320
        %v1366 = vpack.c.b16 %v1365, %v1364
        %v1369 = vsel %vm642, %v1361, 0
        %1371 = vmatpush.bf16.msra.mxu0 0
        %1372 = vmatpush.bf16.msra.mxu0 0
        %1373 = vmatpush.bf16.msra.mxu0 0
        %1374 = vmatpush.bf16.msra.mxu0 0
        %1375 = vmatpush.bf16.msra.mxu0 0
        %1376 = vmatpush.bf16.msra.mxu0 0
        %1377 = vmatpush.bf16.msra.mxu0 0
        %1378 = vmatpush.bf16.msra.mxu0 %v1366
        %1379 = vmatmul.bf16.gmra.mxu0 %v1369
        %v1380 = vpop.f32.mrf.mxu0
        %v1381 = vadd.f32 %v1356, %v1380
        %v1382 = vpop.f32.mrf.mxu0
        %v1383 = vadd.f32 %v1358, %v1382
        %1384 = vdwg.mxu0
        %v1385 = vld [vmem:[#allocation2] sm:$0x8]
        %v1386 = vld [vmem:[#allocation2 + $0x4] sm:$0xf]
        %v1387 = vunpack.c.l.bf16 %v1385
        %v1388 = vunpack.c.l.bf16 %v1386
        %v1389 = vmul.f32 %v1387, %v959
        %v1390 = vmul.f32 %v1388, %v961
        %v1391 = vpack.c.bf16 %v1390, %v1389
        %s1392 = scalar_lea.vmem %s10, 88
        %v1393 = vld [vmem:[%s1392] sm:$0xf]
        %v1394 = vld [vmem:[%s1392 + $0x4] sm:$0xf]
        %v1396 = vrot.slane %v1391, 3
        %v1399 = vunpack.c.l.b16 %v1393
        %v1400 = vunpack.c.l.b16 %v1394
        %v1401 = vpack.c.b16 %v1400, %v1399
        %v1404 = vsel %vm642, %v1396, 0
        %1406 = vmatpush.bf16.msra.mxu0 0
        %1407 = vmatpush.bf16.msra.mxu0 0
        %1408 = vmatpush.bf16.msra.mxu0 0
        %1409 = vmatpush.bf16.msra.mxu0 0
        %1410 = vmatpush.bf16.msra.mxu0 0
        %1411 = vmatpush.bf16.msra.mxu0 0
        %1412 = vmatpush.bf16.msra.mxu0 0
        %1413 = vmatpush.bf16.msra.mxu0 %v1401
        %1414 = vmatmul.bf16.gmra.mxu0 %v1404
        %v1415 = vpop.f32.mrf.mxu0
        %v1416 = vadd.f32 0.0, %v1415
        %v1417 = vpop.f32.mrf.mxu0
        %v1418 = vadd.f32 0.0, %v1417
        %1419 = vdwg.mxu0
        %v1420 = vadd.f32 %v1381, %v1416
        %v1421 = vadd.f32 %v1383, %v1418
        %v1422 = vmul.f32 %v1387, %v998
        %v1423 = vmul.f32 %v1388, %v1000
        %v1424 = vpack.c.bf16 %v1423, %v1422
        %s1425 = scalar_lea.vmem %s10, 96
        %v1426 = vld [vmem:[%s1425] sm:$0xf]
        %v1427 = vld [vmem:[%s1425 + $0x4] sm:$0xf]
        %v1429 = vshrl.u32 %v1424, 16
        %v1431 = vrot.slane %v1429, 3
        %v1432 = vshll.u32 %v1424, 16
        %v1434 = vrot.slane %v1432, 4
        %v1435 = vor.u32 %v1431, %v1434
        %v1438 = vunpack.c.l.b16 %v1426
        %v1439 = vunpack.c.l.b16 %v1427
        %v1440 = vpack.c.b16 %v1439, %v1438
        %v1443 = vsel %vm642, %v1435, 0
        %1445 = vmatpush.bf16.msra.mxu0 0
        %1446 = vmatpush.bf16.msra.mxu0 0
        %1447 = vmatpush.bf16.msra.mxu0 0
        %1448 = vmatpush.bf16.msra.mxu0 0
        %1449 = vmatpush.bf16.msra.mxu0 0
        %1450 = vmatpush.bf16.msra.mxu0 0
        %1451 = vmatpush.bf16.msra.mxu0 0
        %1452 = vmatpush.bf16.msra.mxu0 %v1440
        %1453 = vmatmul.bf16.gmra.mxu0 %v1443
        %v1454 = vpop.f32.mrf.mxu0
        %v1455 = vadd.f32 0.0, %v1454
        %v1456 = vpop.f32.mrf.mxu0
        %v1457 = vadd.f32 0.0, %v1456
        %1458 = vdwg.mxu0
        %v1459 = vadd.f32 %v1420, %v1455
        %v1460 = vadd.f32 %v1421, %v1457
        %v1461 = vld [vmem:[#allocation2 + $0x4] sm:$0xf]
        %v1462 = vld [vmem:[#allocation2 + $0x8] sm:$0x1]
        %s1463 = scalar_lea.vmem %s10, 104
        %v1464 = vld [vmem:[%s1463] sm:$0xf]
        %v1465 = vld [vmem:[%s1463 + $0x4] sm:$0xf]
        %v1468 = vunpack.c.l.b16 %v1461
        %v1469 = vunpack.c.l.b16 %v1462
        %v1470 = vpack.c.b16 %v1469, %v1468
        %v1473 = vunpack.c.l.b16 %v1464
        %v1474 = vunpack.c.l.b16 %v1465
        %v1475 = vpack.c.b16 %v1474, %v1473
        %v1478 = vsel %vm642, %v1470, 0
        %1480 = vmatpush.bf16.msra.mxu0 0
        %1481 = vmatpush.bf16.msra.mxu0 0
        %1482 = vmatpush.bf16.msra.mxu0 0
        %1483 = vmatpush.bf16.msra.mxu0 0
        %1484 = vmatpush.bf16.msra.mxu0 0
        %1485 = vmatpush.bf16.msra.mxu0 0
        %1486 = vmatpush.bf16.msra.mxu0 0
        %1487 = vmatpush.bf16.msra.mxu0 %v1475
        %1488 = vmatmul.bf16.gmra.mxu0 %v1478
        %v1489 = vpop.f32.mrf.mxu0
        %v1490 = vadd.f32 0.0, %v1489
        %v1491 = vpop.f32.mrf.mxu0
        %v1492 = vadd.f32 0.0, %v1491
        %1493 = vdwg.mxu0
        %v1494 = vadd.f32 %v1459, %v1490
        %v1495 = vadd.f32 %v1460, %v1492
        %v1496 = vunpack.c.l.bf16 %v1461
        %v1497 = vunpack.c.l.bf16 %v1462
        %v1498 = vmul.f32 %v1496, %v1080
        %v1499 = vmul.f32 %v1497, %v1082
        %v1500 = vpack.c.bf16 %v1499, %v1498
        %s1501 = scalar_lea.vmem %s10, 112
        %v1502 = vld [vmem:[%s1501] sm:$0xf]
        %v1503 = vld [vmem:[%s1501 + $0x4] sm:$0xf]
        %v1505 = vshrl.u32 %v1500, 16
        %v1507 = vshll.u32 %v1500, 16
        %v1509 = vrot.slane %v1507, 1
        %v1510 = vor.u32 %v1505, %v1509
        %v1513 = vunpack.c.l.b16 %v1502
        %v1514 = vunpack.c.l.b16 %v1503
        %v1515 = vpack.c.b16 %v1514, %v1513
        %v1518 = vsel %vm642, %v1510, 0
        %1520 = vmatpush.bf16.msra.mxu0 0
        %1521 = vmatpush.bf16.msra.mxu0 0
        %1522 = vmatpush.bf16.msra.mxu0 0
        %1523 = vmatpush.bf16.msra.mxu0 0
        %1524 = vmatpush.bf16.msra.mxu0 0
        %1525 = vmatpush.bf16.msra.mxu0 0
        %1526 = vmatpush.bf16.msra.mxu0 0
        %1527 = vmatpush.bf16.msra.mxu0 %v1515
        %1528 = vmatmul.bf16.gmra.mxu0 %v1518
        %v1529 = vpop.f32.mrf.mxu0
        %v1530 = vadd.f32 0.0, %v1529
        %v1531 = vpop.f32.mrf.mxu0
        %v1532 = vadd.f32 0.0, %v1531
        %1533 = vdwg.mxu0
        %v1534 = vadd.f32 %v1494, %v1530
        %v1535 = vadd.f32 %v1495, %v1532
        %v1536 = vld [vmem:[#allocation2 + $0x4] sm:$0xe]
        %v1537 = vld [vmem:[#allocation2 + $0x8] sm:$0x3]
        %v1538 = vunpack.c.l.bf16 %v1536
        %v1539 = vunpack.c.l.bf16 %v1537
        %v1540 = vmul.f32 %v1538, %v1128
        %v1541 = vmul.f32 %v1539, %v1130
        %v1542 = vpack.c.bf16 %v1541, %v1540
        %s1543 = scalar_lea.vmem %s10, 120
        %v1544 = vld [vmem:[%s1543] sm:$0xf]
        %v1545 = vld [vmem:[%s1543 + $0x4] sm:$0xf]
        %v1547 = vrot.slane %v1542, 1
        %v1550 = vunpack.c.l.b16 %v1544
        %v1551 = vunpack.c.l.b16 %v1545
        %v1552 = vpack.c.b16 %v1551, %v1550
        %v1555 = vsel %vm642, %v1547, 0
        %1557 = vmatpush.bf16.msra.mxu0 0
        %1558 = vmatpush.bf16.msra.mxu0 0
        %1559 = vmatpush.bf16.msra.mxu0 0
        %1560 = vmatpush.bf16.msra.mxu0 0
        %1561 = vmatpush.bf16.msra.mxu0 0
        %1562 = vmatpush.bf16.msra.mxu0 0
        %1563 = vmatpush.bf16.msra.mxu0 0
        %1564 = vmatpush.bf16.msra.mxu0 %v1552
        %1565 = vmatmul.bf16.gmra.mxu0 %v1555
        %v1566 = vpop.f32.mrf.mxu0
        %v1567 = vadd.f32 0.0, %v1566
        %v1568 = vpop.f32.mrf.mxu0
        %v1569 = vadd.f32 0.0, %v1568
        %1570 = vdwg.mxu0
        %v1571 = vadd.f32 %v1534, %v1567
        %v1572 = vadd.f32 %v1535, %v1569
        %s1573 = scalar_lea.vmem %s10, 128
        %v1574 = vld [vmem:[%s1573] sm:$0xf]
        %v1575 = vld [vmem:[%s1573 + $0x4] sm:$0xf]
        %v1578 = vunpack.c.l.b16 %v1536
        %v1579 = vunpack.c.l.b16 %v1537
        %v1580 = vpack.c.b16 %v1579, %v1578
        %v1582 = vshrl.u32 %v1580, 16
        %v1584 = vrot.slane %v1582, 1
        %v1585 = vshll.u32 %v1580, 16
        %v1587 = vrot.slane %v1585, 2
        %v1588 = vor.u32 %v1584, %v1587
        %v1591 = vunpack.c.l.b16 %v1574
        %v1592 = vunpack.c.l.b16 %v1575
        %v1593 = vpack.c.b16 %v1592, %v1591
        %v1596 = vsel %vm642, %v1588, 0
        %1598 = vmatpush.bf16.msra.mxu0 0
        %1599 = vmatpush.bf16.msra.mxu0 0
        %1600 = vmatpush.bf16.msra.mxu0 0
        %1601 = vmatpush.bf16.msra.mxu0 0
        %1602 = vmatpush.bf16.msra.mxu0 0
        %1603 = vmatpush.bf16.msra.mxu0 0
        %1604 = vmatpush.bf16.msra.mxu0 0
        %1605 = vmatpush.bf16.msra.mxu0 %v1593
        %1606 = vmatmul.bf16.gmra.mxu0 %v1596
        %v1607 = vpop.f32.mrf.mxu0
        %v1608 = vadd.f32 0.0, %v1607
        %v1609 = vpop.f32.mrf.mxu0
        %v1610 = vadd.f32 0.0, %v1609
        %1611 = vdwg.mxu0
        %v1612 = vadd.f32 %v1571, %v1608
        %v1613 = vadd.f32 %v1572, %v1610
        %v1614 = vld [vmem:[#allocation2 + $0x4] sm:$0xc]
        %v1615 = vld [vmem:[#allocation2 + $0x8] sm:$0x7]
        %v1616 = vunpack.c.l.bf16 %v1614
        %v1617 = vunpack.c.l.bf16 %v1615
        %v1618 = vmul.f32 %v1616, %v1211
        %v1619 = vmul.f32 %v1617, %v1213
        %v1620 = vpack.c.bf16 %v1619, %v1618
        %s1621 = scalar_lea.vmem %s10, 136
        %v1622 = vld [vmem:[%s1621] sm:$0xf]
        %v1623 = vld [vmem:[%s1621 + $0x4] sm:$0xf]
        %v1625 = vrot.slane %v1620, 2
        %v1628 = vunpack.c.l.b16 %v1622
        %v1629 = vunpack.c.l.b16 %v1623
        %v1630 = vpack.c.b16 %v1629, %v1628
        %v1633 = vsel %vm642, %v1625, 0
        %1635 = vmatpush.bf16.msra.mxu0 0
        %1636 = vmatpush.bf16.msra.mxu0 0
        %1637 = vmatpush.bf16.msra.mxu0 0
        %1638 = vmatpush.bf16.msra.mxu0 0
        %1639 = vmatpush.bf16.msra.mxu0 0
        %1640 = vmatpush.bf16.msra.mxu0 0
        %1641 = vmatpush.bf16.msra.mxu0 0
        %1642 = vmatpush.bf16.msra.mxu0 %v1630
        %1643 = vmatmul.bf16.gmra.mxu0 %v1633
        %v1644 = vpop.f32.mrf.mxu0
        %v1645 = vadd.f32 0.0, %v1644
        %v1646 = vpop.f32.mrf.mxu0
        %v1647 = vadd.f32 0.0, %v1646
        %1648 = vdwg.mxu0
        %v1649 = vadd.f32 %v1612, %v1645
        %v1650 = vadd.f32 %v1613, %v1647
        %s1651 = scalar_lea.vmem %s11, 1
        %v1652 = vld [vmem:[%s1651] sm:$0x1]
        %v1654 = vperm.slane %v1652, 0
        %v1656 = vadd.f32 %v1649, %v1654
        %v1657 = vadd.f32 %v1650, %v1654
        %v1658 = vmul.f32 %v1656, 0.5
        %v1659 = vmul.f32 %v1657, 0.5
        %v1660 = vtanh.pop %v1658
        %v1661 = vtanh.pop %v1659
        %v1662 = vadd.f32 %v1660, 1.0
        %v1663 = vadd.f32 %v1661, 1.0
        %v1664 = vmul.f32 %v1658, %v1662
        %v1665 = vmul.f32 %v1659, %v1663
        %v1666 = vadd.f32 %v1263, %v1664
        %v1667 = vadd.f32 %v1264, %v1665
        %v1668 = vpack.c.bf16 %v1667, %v1666
        %v1669 = vld [vmem:[%s12] sm:$0xf]
        %v1670 = vld [vmem:[%s12 + $0x4] sm:$0xf]
        %v1671 = vpack.c.bf16 %v770, %v769
        %v1672 = vld [vmem:[%s13] sm:$0xf]
        %v1673 = vld [vmem:[%s13 + $0x4] sm:$0xf]
        %v1676 = vunpack.c.l.b16 %v1672
        %v1677 = vunpack.c.l.b16 %v1673
        %v1678 = vpack.c.b16 %v1677, %v1676
        %v1681 = vsel %vm642, %v1671, 0
        %1683 = vmatpush.bf16.msra.mxu0 0
        %1684 = vmatpush.bf16.msra.mxu0 0
        %1685 = vmatpush.bf16.msra.mxu0 0
        %1686 = vmatpush.bf16.msra.mxu0 0
        %1687 = vmatpush.bf16.msra.mxu0 0
        %1688 = vmatpush.bf16.msra.mxu0 0
        %1689 = vmatpush.bf16.msra.mxu0 0
        %1690 = vmatpush.bf16.msra.mxu0 %v1678
        %1691 = vmatmul.bf16.gmra.mxu0 %v1681
        %v1692 = vpop.f32.mrf.mxu0
        %v1693 = vadd.f32 0.0, %v1692
        %v1694 = vpop.f32.mrf.mxu0
        %v1695 = vadd.f32 0.0, %v1694
        %1696 = vdwg.mxu0
        %v1699 = vunpack.c.l.b16 %v1669
        %v1700 = vunpack.c.l.b16 %v1670
        %v1701 = vpack.c.b16 %v1700, %v1699
        %v1704 = vsel %vm642, %v1668, 0
        %1706 = vmatpush.bf16.msra.mxu0 0
        %1707 = vmatpush.bf16.msra.mxu0 0
        %1708 = vmatpush.bf16.msra.mxu0 0
        %1709 = vmatpush.bf16.msra.mxu0 0
        %1710 = vmatpush.bf16.msra.mxu0 0
        %1711 = vmatpush.bf16.msra.mxu0 0
        %1712 = vmatpush.bf16.msra.mxu0 0
        %1713 = vmatpush.bf16.msra.mxu0 %v1701
        %1714 = vmatmul.bf16.gmra.mxu0 %v1704
        %v1715 = vpop.f32.mrf.mxu0
        %v1716 = vadd.f32 %v1693, %v1715
        %v1717 = vpop.f32.mrf.mxu0
        %v1718 = vadd.f32 %v1695, %v1717
        %1719 = vdwg.mxu0
        %v1720 = vld [vmem:[#allocation8] sm:$0x1]
        %v1722 = vperm.slane %v1720, 0
        %v1724 = vadd.f32 %v1716, %v1722
        %v1725 = vadd.f32 %v1718, %v1722
        %v1726 = vmul.f32 %v1724, 0.5
        %v1727 = vmul.f32 %v1725, 0.5
        %v1728 = vtanh.pop %v1726
        %v1729 = vtanh.pop %v1727
        %v1730 = vadd.f32 %v1728, 1.0
        %v1731 = vadd.f32 %v1729, 1.0
        %v1732 = vmul.f32 %v1726, %v1730
        %v1733 = vmul.f32 %v1727, %v1731
        %v1734 = vpack.c.bf16 %v1732, %v1732
        %v1735 = vpack.c.bf16 %v1733, %v1733
        %vm1736 = vcmask 257024
        %1737 = vst.msk [vmem:[%s553] sm:$0xf] %vm1736, %v1734
        %vm1738 = vcmask 253952
        %vm1739 = vmand %vm1738, %vm826
        %v1740 = vld [vmem:[%s553 + $0x4] sm:$0x1]
        %v1741 = vsel %vm1739, %v1735, %v1740
        %1742 = vst [vmem:[%s553 + $0x4] sm:$0x1] %v1741
        %p1743 = scmp.lt.s32.totalorder %s29, 1
        %s1744 = scalar_select %p1743, %s29, 1
        %s1745 = smul.addr %s1744, 2
        %s1746 = smul.addr %s1745, 4
        %s1747 = scalar_lea.vmem %s15, %s1746
        // Predicated region
        $region97: #{_lambda_.7} parent=79 // pred_check
          %p1748 = pneg %p367
        $region98: #{_lambda_.7} parent=79 // pred_check_branch
          %1750 = sbr.rel (%p1748) target = $region100
        $region99: #{_lambda_.7} parent=79 // pred_region
          _
        $region100: #{_lambda_.7} parent=79 // pred_fallthru
          _
      $region80: #{_lambda_.7} parent=5 // pred_fallthru
        _
      %p1751 = scmp.le.s32.totalorder 2, %s24
      // Predicated region
      $region101: #{_lambda_.7} parent=5 // pred_check
        %p1752 = pneg %p1751
      $region102: #{_lambda_.7} parent=5 // pred_check_branch
        %1754 = sbr.rel (%p1752) target = $region104
      $region103: #{_lambda_.7} parent=5 // pred_region
        %s1755 = ssub.s32 %s24, 2
        // Predicated region
        $region105: #{_lambda_.7} parent=103 // pred_check
          %p1756 = pneg %p373
        $region106: #{_lambda_.7} parent=103 // pred_check_branch
          %1758 = sbr.rel (%p1756) target = $region108
        $region107: #{_lambda_.7} parent=103 // pred_region
          %p1759 = scmp.lt.s32.totalorder %s30, 1
          %s1760 = scalar_select %p1759, %s30, 1
          %s1761 = smul.addr %s1760, 2
          %s1762 = smul.addr %s1761, 4
          %s1763 = scalar_lea.vmem %s15, %s1762
        $region108: #{_lambda_.7} parent=103 // pred_fallthru
          _
      $region104: #{_lambda_.7} parent=5 // pred_fallthru
        _
    $region6: #{_lambda_.7} parent=1 // loop_footer
      %s28 = sadd.s32 1, %s24
    $region7: #{_lambda_.7} parent=1 // loop_footer_branch
      %23 = sbr.rel target = $region3
    $region8: #{_lambda_.7} parent=1 // loop_exit
      _
    %1764 = vsyncpa [#allocation4], 1
    %s1765 = scalar_lea.sflag [#allocation4], 1
    %1766 = vsyncpa %s1765, 1
    %1767 = vsyncpa [#allocation6], 1
    %1768 = vsyncpa [#allocation9], 1

// kernel: _lambda_.9
$region0: #{_lambda_.9}
  #allocation0 [shape = 'u32[]', space=smem, size = 0x4, offset = 0x4, fixed_abs, tag = 'smem constant byte address 0x4 - core index']
  #allocation1 [shape = 'u32[72,128]{1,0:T(1,128)}', space=vmem, size = 0x9000, scoped, tag = 'internal scratch']
  #allocation2 [shape = 'bf16[16,64]{1,0:T(8,128)(2,1)}', space=vmem, size = 0x1000, scoped, tag = 'scratch operand']
  %s0 = inlined_call_operand.vmem [shape: bf16[2,1,576], index: 0, kind: input, shape index: {}]
  %s1 = inlined_call_operand.vmem [shape: bf16[2,1,1], index: 1, kind: input, shape index: {}]
  %s2 = inlined_call_operand.vmem [shape: bf16[576,128], index: 2, kind: input, shape index: {}]
  %s3 = inlined_call_operand.vmem [shape: f32[1,128], index: 3, kind: input, shape index: {}]
  %s4 = inlined_call_operand.vmem [shape: bf16[128,64], index: 4, kind: input, shape index: {}]
  %s5 = inlined_call_operand.vmem [shape: f32[1,64], index: 5, kind: input, shape index: {}]
  %s6 = inlined_call_operand.vmem [shape: bf16[128,64], index: 6, kind: input, shape index: {}]
  %s7 = inlined_call_operand.vmem [shape: f32[1,64], index: 7, kind: input, shape index: {}]
  %s8 = inlined_call_operand.vmem [shape: bf16[1,64,64], index: 8, kind: input, shape index: {}]
  %s9 = inlined_call_operand.vmem [shape: f32[1,1,64], index: 9, kind: input, shape index: {}]
  %s10 = inlined_call_operand.vmem [shape: bf16[9,64,64], index: 10, kind: input, shape index: {}]
  %s11 = inlined_call_operand.vmem [shape: f32[1,1,64], index: 11, kind: input, shape index: {}]
  %s12 = inlined_call_operand.vmem [shape: bf16[64,128], index: 12, kind: input, shape index: {}]
  %s13 = inlined_call_operand.vmem [shape: bf16[64,128], index: 13, kind: input, shape index: {}]
  %s14 = inlined_call_operand.hbm [shape: f32[1,128], index: 14, kind: input, shape index: {}]
  %s15 = inlined_call_operand.vmem [shape: bf16[2,1,128], index: 15, kind: output, shape index: {}]
  %s16 = sld [smem:[#allocation0]]
  $region97: #{_lambda_.9} parent=0
    _
  %s18 = ssub.s32 1, %s16
  %s19 = scalar_select 0, %s18, %s16
  $region1: #{_lambda_.9} parent=0
    #allocation3 [shape = 'u8[512]{0}', space=vmem, size = 0x400, scoped, tag = 'input window, operand 14, single buffered']
    #allocation4 [shape = 's32[2]{0}', space=sflag, size = 0x8, scoped, tag = 'scoped memory for _lambda_.9']
    %20 = vsyncpa [#allocation4], 0
    loop: start=0, step=1, limit=4
    $region2: #{_lambda_.9} parent=1 // loop_pre_header
      _
    $region3: #{_lambda_.9} parent=1 // loop_header
      %s22 = sphi 0, %s26
      %p23 = scmp.ge.s32.totalorder %s22, 4
      %s32 = sphi 0, %s34
      %s35 = sphi 0, %s32
      %s36 = sphi 0, %s35
      %s52 = sphi 0, %s36
      %s56 = sphi 0, %s56
      %s58 = sphi 0, %s56
      %s59 = sphi 0, %s58
      %s73 = sphi 0, %s59
      %s77 = sphi 0, %s77
      %s79 = sphi 0, %s77
      %s80 = sphi 0, %s79
      %s94 = sphi 0, %s80
      %s98 = sphi 0, %s98
      %s100 = sphi 0, %s98
      %s101 = sphi 0, %s100
      %s115 = sphi 0, %s101
      %s119 = sphi 0, %s119
      %s121 = sphi 0, %s119
      %s122 = sphi 0, %s121
      %s136 = sphi 0, %s122
      %s140 = sphi 0, %s140
      %s142 = sphi 0, %s140
      %s143 = sphi 0, %s142
      %s157 = sphi 0, %s143
      %s161 = sphi 0, %s161
      %s163 = sphi 0, %s161
      %s164 = sphi 0, %s163
      %s178 = sphi 0, %s164
      %s182 = sphi 0, %s182
      %s184 = sphi 0, %s182
      %s185 = sphi 0, %s184
      %s199 = sphi 0, %s185
      %s203 = sphi 0, %s203
      %s205 = sphi 0, %s203
      %s206 = sphi 0, %s205
      %s220 = sphi 0, %s206
      %s224 = sphi 0, %s224
      %s226 = sphi 0, %s224
      %s227 = sphi 0, %s226
      %s241 = sphi 0, %s227
      %s245 = sphi 0, %s245
      %s247 = sphi 0, %s245
      %s248 = sphi 0, %s247
      %s262 = sphi 0, %s248
      %s266 = sphi 0, %s266
      %s268 = sphi 0, %s266
      %s269 = sphi 0, %s268
      %s283 = sphi 0, %s269
      %s287 = sphi 0, %s287
      %s289 = sphi 0, %s287
      %s290 = sphi 0, %s289
      %s304 = sphi 0, %s290
      %s308 = sphi 0, %s308
      %s310 = sphi 0, %s308
      %s311 = sphi 0, %s310
      %s325 = sphi 0, %s311
      %s329 = sphi 0, %s329
      %s331 = sphi 0, %s329
      %s332 = sphi 0, %s331
      %s346 = sphi 0, %s332
      %s352 = sphi 0, %s354
      %s355 = sphi 0, %s352
      %s356 = sphi 0, %s355
      %s372 = sphi 0, %s356
    $region4: #{_lambda_.9} parent=1 // loop_header_branch
      %25 = sbr.rel (%p23) target = $region8
    $region5: #{_lambda_.9} parent=1 // loop_body
      %s27 = ssub.s32 %s22, 1
      %s28 = ssub.s32 %s22, 2
      %s29 = sadd.s32 %s22, 1
      %s30 = ssub.s32 %s22, %s29
      %p31 = scmp.eq.s32.totalorder %s30, 0
      %s33 = sadd.s32 %s32, 1
      %s34 = scalar_select %p31, %s32, %s33
      %p37 = pneg %p31
      %p38 = scmp.eq.s32.totalorder %s22, 1
      %p39 = por %p37, %p38
      %p40 = scmp.ne.s32.totalorder %s32, %s35
      %p41 = scmp.eq.s32.totalorder %s22, 0
      %p42 = por %p40, %p41
      %p43 = scmp.ne.s32.totalorder %s32, %s35
      %p44 = scmp.eq.s32.totalorder %s27, 1
      %p45 = por %p43, %p44
      %p46 = scmp.ne.s32.totalorder %s35, %s36
      %p47 = scmp.eq.s32.totalorder %s27, 0
      %p48 = por %p46, %p47
      %p49 = scmp.ne.s32.totalorder %s35, %s36
      %p50 = scmp.eq.s32.totalorder %s28, 1
      %p51 = por %p49, %p50
      %p53 = scmp.ne.s32.totalorder %s36, %s52
      %p54 = scmp.eq.s32.totalorder %s28, 0
      %p55 = por %p53, %p54
      %s57 = sadd.s32 %s56, 1
      %p60 = scmp.eq.s32.totalorder %s22, 1
      %p61 = scmp.ne.s32.totalorder %s56, %s58
      %p62 = scmp.eq.s32.totalorder %s22, 0
      %p63 = por %p61, %p62
      %p64 = scmp.ne.s32.totalorder %s56, %s58
      %p65 = scmp.eq.s32.totalorder %s27, 1
      %p66 = por %p64, %p65
      %p67 = scmp.ne.s32.totalorder %s58, %s59
      %p68 = scmp.eq.s32.totalorder %s27, 0
      %p69 = por %p67, %p68
      %p70 = scmp.ne.s32.totalorder %s58, %s59
      %p71 = scmp.eq.s32.totalorder %s28, 1
      %p72 = por %p70, %p71
      %p74 = scmp.ne.s32.totalorder %s59, %s73
      %p75 = scmp.eq.s32.totalorder %s28, 0
      %p76 = por %p74, %p75
      %s78 = sadd.s32 %s77, 1
      %p81 = scmp.eq.s32.totalorder %s22, 1
      %p82 = scmp.ne.s32.totalorder %s77, %s79
      %p83 = scmp.eq.s32.totalorder %s22, 0
      %p84 = por %p82, %p83
      %p85 = scmp.ne.s32.totalorder %s77, %s79
      %p86 = scmp.eq.s32.totalorder %s27, 1
      %p87 = por %p85, %p86
      %p88 = scmp.ne.s32.totalorder %s79, %s80
      %p89 = scmp.eq.s32.totalorder %s27, 0
      %p90 = por %p88, %p89
      %p91 = scmp.ne.s32.totalorder %s79, %s80
      %p92 = scmp.eq.s32.totalorder %s28, 1
      %p93 = por %p91, %p92
      %p95 = scmp.ne.s32.totalorder %s80, %s94
      %p96 = scmp.eq.s32.totalorder %s28, 0
      %p97 = por %p95, %p96
      %s99 = sadd.s32 %s98, 1
      %p102 = scmp.eq.s32.totalorder %s22, 1
      %p103 = scmp.ne.s32.totalorder %s98, %s100
      %p104 = scmp.eq.s32.totalorder %s22, 0
      %p105 = por %p103, %p104
      %p106 = scmp.ne.s32.totalorder %s98, %s100
      %p107 = scmp.eq.s32.totalorder %s27, 1
      %p108 = por %p106, %p107
      %p109 = scmp.ne.s32.totalorder %s100, %s101
      %p110 = scmp.eq.s32.totalorder %s27, 0
      %p111 = por %p109, %p110
      %p112 = scmp.ne.s32.totalorder %s100, %s101
      %p113 = scmp.eq.s32.totalorder %s28, 1
      %p114 = por %p112, %p113
      %p116 = scmp.ne.s32.totalorder %s101, %s115
      %p117 = scmp.eq.s32.totalorder %s28, 0
      %p118 = por %p116, %p117
      %s120 = sadd.s32 %s119, 1
      %p123 = scmp.eq.s32.totalorder %s22, 1
      %p124 = scmp.ne.s32.totalorder %s119, %s121
      %p125 = scmp.eq.s32.totalorder %s22, 0
      %p126 = por %p124, %p125
      %p127 = scmp.ne.s32.totalorder %s119, %s121
      %p128 = scmp.eq.s32.totalorder %s27, 1
      %p129 = por %p127, %p128
      %p130 = scmp.ne.s32.totalorder %s121, %s122
      %p131 = scmp.eq.s32.totalorder %s27, 0
      %p132 = por %p130, %p131
      %p133 = scmp.ne.s32.totalorder %s121, %s122
      %p134 = scmp.eq.s32.totalorder %s28, 1
      %p135 = por %p133, %p134
      %p137 = scmp.ne.s32.totalorder %s122, %s136
      %p138 = scmp.eq.s32.totalorder %s28, 0
      %p139 = por %p137, %p138
      %s141 = sadd.s32 %s140, 1
      %p144 = scmp.eq.s32.totalorder %s22, 1
      %p145 = scmp.ne.s32.totalorder %s140, %s142
      %p146 = scmp.eq.s32.totalorder %s22, 0
      %p147 = por %p145, %p146
      %p148 = scmp.ne.s32.totalorder %s140, %s142
      %p149 = scmp.eq.s32.totalorder %s27, 1
      %p150 = por %p148, %p149
      %p151 = scmp.ne.s32.totalorder %s142, %s143
      %p152 = scmp.eq.s32.totalorder %s27, 0
      %p153 = por %p151, %p152
      %p154 = scmp.ne.s32.totalorder %s142, %s143
      %p155 = scmp.eq.s32.totalorder %s28, 1
      %p156 = por %p154, %p155
      %p158 = scmp.ne.s32.totalorder %s143, %s157
      %p159 = scmp.eq.s32.totalorder %s28, 0
      %p160 = por %p158, %p159
      %s162 = sadd.s32 %s161, 1
      %p165 = scmp.eq.s32.totalorder %s22, 1
      %p166 = scmp.ne.s32.totalorder %s161, %s163
      %p167 = scmp.eq.s32.totalorder %s22, 0
      %p168 = por %p166, %p167
      %p169 = scmp.ne.s32.totalorder %s161, %s163
      %p170 = scmp.eq.s32.totalorder %s27, 1
      %p171 = por %p169, %p170
      %p172 = scmp.ne.s32.totalorder %s163, %s164
      %p173 = scmp.eq.s32.totalorder %s27, 0
      %p174 = por %p172, %p173
      %p175 = scmp.ne.s32.totalorder %s163, %s164
      %p176 = scmp.eq.s32.totalorder %s28, 1
      %p177 = por %p175, %p176
      %p179 = scmp.ne.s32.totalorder %s164, %s178
      %p180 = scmp.eq.s32.totalorder %s28, 0
      %p181 = por %p179, %p180
      %s183 = sadd.s32 %s182, 1
      %p186 = scmp.eq.s32.totalorder %s22, 1
      %p187 = scmp.ne.s32.totalorder %s182, %s184
      %p188 = scmp.eq.s32.totalorder %s22, 0
      %p189 = por %p187, %p188
      %p190 = scmp.ne.s32.totalorder %s182, %s184
      %p191 = scmp.eq.s32.totalorder %s27, 1
      %p192 = por %p190, %p191
      %p193 = scmp.ne.s32.totalorder %s184, %s185
      %p194 = scmp.eq.s32.totalorder %s27, 0
      %p195 = por %p193, %p194
      %p196 = scmp.ne.s32.totalorder %s184, %s185
      %p197 = scmp.eq.s32.totalorder %s28, 1
      %p198 = por %p196, %p197
      %p200 = scmp.ne.s32.totalorder %s185, %s199
      %p201 = scmp.eq.s32.totalorder %s28, 0
      %p202 = por %p200, %p201
      %s204 = sadd.s32 %s203, 1
      %p207 = scmp.eq.s32.totalorder %s22, 1
      %p208 = scmp.ne.s32.totalorder %s203, %s205
      %p209 = scmp.eq.s32.totalorder %s22, 0
      %p210 = por %p208, %p209
      %p211 = scmp.ne.s32.totalorder %s203, %s205
      %p212 = scmp.eq.s32.totalorder %s27, 1
      %p213 = por %p211, %p212
      %p214 = scmp.ne.s32.totalorder %s205, %s206
      %p215 = scmp.eq.s32.totalorder %s27, 0
      %p216 = por %p214, %p215
      %p217 = scmp.ne.s32.totalorder %s205, %s206
      %p218 = scmp.eq.s32.totalorder %s28, 1
      %p219 = por %p217, %p218
      %p221 = scmp.ne.s32.totalorder %s206, %s220
      %p222 = scmp.eq.s32.totalorder %s28, 0
      %p223 = por %p221, %p222
      %s225 = sadd.s32 %s224, 1
      %p228 = scmp.eq.s32.totalorder %s22, 1
      %p229 = scmp.ne.s32.totalorder %s224, %s226
      %p230 = scmp.eq.s32.totalorder %s22, 0
      %p231 = por %p229, %p230
      %p232 = scmp.ne.s32.totalorder %s224, %s226
      %p233 = scmp.eq.s32.totalorder %s27, 1
      %p234 = por %p232, %p233
      %p235 = scmp.ne.s32.totalorder %s226, %s227
      %p236 = scmp.eq.s32.totalorder %s27, 0
      %p237 = por %p235, %p236
      %p238 = scmp.ne.s32.totalorder %s226, %s227
      %p239 = scmp.eq.s32.totalorder %s28, 1
      %p240 = por %p238, %p239
      %p242 = scmp.ne.s32.totalorder %s227, %s241
      %p243 = scmp.eq.s32.totalorder %s28, 0
      %p244 = por %p242, %p243
      %s246 = sadd.s32 %s245, 1
      %p249 = scmp.eq.s32.totalorder %s22, 1
      %p250 = scmp.ne.s32.totalorder %s245, %s247
      %p251 = scmp.eq.s32.totalorder %s22, 0
      %p252 = por %p250, %p251
      %p253 = scmp.ne.s32.totalorder %s245, %s247
      %p254 = scmp.eq.s32.totalorder %s27, 1
      %p255 = por %p253, %p254
      %p256 = scmp.ne.s32.totalorder %s247, %s248
      %p257 = scmp.eq.s32.totalorder %s27, 0
      %p258 = por %p256, %p257
      %p259 = scmp.ne.s32.totalorder %s247, %s248
      %p260 = scmp.eq.s32.totalorder %s28, 1
      %p261 = por %p259, %p260
      %p263 = scmp.ne.s32.totalorder %s248, %s262
      %p264 = scmp.eq.s32.totalorder %s28, 0
      %p265 = por %p263, %p264
      %s267 = sadd.s32 %s266, 1
      %p270 = scmp.eq.s32.totalorder %s22, 1
      %p271 = scmp.ne.s32.totalorder %s266, %s268
      %p272 = scmp.eq.s32.totalorder %s22, 0
      %p273 = por %p271, %p272
      %p274 = scmp.ne.s32.totalorder %s266, %s268
      %p275 = scmp.eq.s32.totalorder %s27, 1
      %p276 = por %p274, %p275
      %p277 = scmp.ne.s32.totalorder %s268, %s269
      %p278 = scmp.eq.s32.totalorder %s27, 0
      %p279 = por %p277, %p278
      %p280 = scmp.ne.s32.totalorder %s268, %s269
      %p281 = scmp.eq.s32.totalorder %s28, 1
      %p282 = por %p280, %p281
      %p284 = scmp.ne.s32.totalorder %s269, %s283
      %p285 = scmp.eq.s32.totalorder %s28, 0
      %p286 = por %p284, %p285
      %s288 = sadd.s32 %s287, 1
      %p291 = scmp.eq.s32.totalorder %s22, 1
      %p292 = scmp.ne.s32.totalorder %s287, %s289
      %p293 = scmp.eq.s32.totalorder %s22, 0
      %p294 = por %p292, %p293
      %p295 = scmp.ne.s32.totalorder %s287, %s289
      %p296 = scmp.eq.s32.totalorder %s27, 1
      %p297 = por %p295, %p296
      %p298 = scmp.ne.s32.totalorder %s289, %s290
      %p299 = scmp.eq.s32.totalorder %s27, 0
      %p300 = por %p298, %p299
      %p301 = scmp.ne.s32.totalorder %s289, %s290
      %p302 = scmp.eq.s32.totalorder %s28, 1
      %p303 = por %p301, %p302
      %p305 = scmp.ne.s32.totalorder %s290, %s304
      %p306 = scmp.eq.s32.totalorder %s28, 0
      %p307 = por %p305, %p306
      %s309 = sadd.s32 %s308, 1
      %p312 = scmp.eq.s32.totalorder %s22, 1
      %p313 = scmp.ne.s32.totalorder %s308, %s310
      %p314 = scmp.eq.s32.totalorder %s22, 0
      %p315 = por %p313, %p314
      %p316 = scmp.ne.s32.totalorder %s308, %s310
      %p317 = scmp.eq.s32.totalorder %s27, 1
      %p318 = por %p316, %p317
      %p319 = scmp.ne.s32.totalorder %s310, %s311
      %p320 = scmp.eq.s32.totalorder %s27, 0
      %p321 = por %p319, %p320
      %p322 = scmp.ne.s32.totalorder %s310, %s311
      %p323 = scmp.eq.s32.totalorder %s28, 1
      %p324 = por %p322, %p323
      %p326 = scmp.ne.s32.totalorder %s311, %s325
      %p327 = scmp.eq.s32.totalorder %s28, 0
      %p328 = por %p326, %p327
      %s330 = sadd.s32 %s329, 1
      %p333 = scmp.eq.s32.totalorder %s22, 1
      %p334 = scmp.ne.s32.totalorder %s329, %s331
      %p335 = scmp.eq.s32.totalorder %s22, 0
      %p336 = por %p334, %p335
      %p337 = scmp.ne.s32.totalorder %s329, %s331
      %p338 = scmp.eq.s32.totalorder %s27, 1
      %p339 = por %p337, %p338
      %p340 = scmp.ne.s32.totalorder %s331, %s332
      %p341 = scmp.eq.s32.totalorder %s27, 0
      %p342 = por %p340, %p341
      %p343 = scmp.ne.s32.totalorder %s331, %s332
      %p344 = scmp.eq.s32.totalorder %s28, 1
      %p345 = por %p343, %p344
      %p347 = scmp.ne.s32.totalorder %s332, %s346
      %p348 = scmp.eq.s32.totalorder %s28, 0
      %p349 = por %p347, %p348
      %s350 = ssub.s32 %s22, %s29
      %p351 = scmp.eq.s32.totalorder %s350, 0
      %s353 = sadd.s32 %s352, 1
      %s354 = scalar_select %p351, %s352, %s353
      %p357 = pneg %p351
      %p358 = scmp.eq.s32.totalorder %s22, 1
      %p359 = por %p357, %p358
      %p360 = scmp.ne.s32.totalorder %s352, %s355
      %p361 = scmp.eq.s32.totalorder %s22, 0
      %p362 = por %p360, %p361
      %p363 = scmp.ne.s32.totalorder %s352, %s355
      %p364 = scmp.eq.s32.totalorder %s27, 1
      %p365 = por %p363, %p364
      %p366 = scmp.ne.s32.totalorder %s355, %s356
      %p367 = scmp.eq.s32.totalorder %s27, 0
      %p368 = por %p366, %p367
      %p369 = scmp.ne.s32.totalorder %s355, %s356
      %p370 = scmp.eq.s32.totalorder %s28, 1
      %p371 = por %p369, %p370
      %p373 = scmp.ne.s32.totalorder %s356, %s372
      %p374 = scmp.eq.s32.totalorder %s28, 0
      %p375 = por %p373, %p374
      %p376 = scmp.le.s32.totalorder 1, %s22
      %p377 = scmp.lt.s32.totalorder %s22, 3
      %p378 = pnand %p376, %p377
      %p379 = pneg %p378
      // Predicated region
      $region9: #{_lambda_.9} parent=5 // pred_check
        _
      $region10: #{_lambda_.9} parent=5 // pred_check_branch
        %381 = sbr.rel (%p378) target = $region12
      $region11: #{_lambda_.9} parent=5 // pred_region
        %s382 = ssub.s32 %s22, 1
        // Predicated region
        $region13: #{_lambda_.9} parent=11 // pred_check
          %p383 = pneg %p69
        $region14: #{_lambda_.9} parent=11 // pred_check_branch
          %385 = sbr.rel (%p383) target = $region16
        $region15: #{_lambda_.9} parent=11 // pred_region
          _
        $region16: #{_lambda_.9} parent=11 // pred_fallthru
          _
        // Predicated region
        $region17: #{_lambda_.9} parent=11 // pred_check
          %p386 = pneg %p90
        $region18: #{_lambda_.9} parent=11 // pred_check_branch
          %388 = sbr.rel (%p386) target = $region20
        $region19: #{_lambda_.9} parent=11 // pred_region
          _
        $region20: #{_lambda_.9} parent=11 // pred_fallthru
          _
        // Predicated region
        $region21: #{_lambda_.9} parent=11 // pred_check
          %p389 = pneg %p111
        $region22: #{_lambda_.9} parent=11 // pred_check_branch
          %391 = sbr.rel (%p389) target = $region24
        $region23: #{_lambda_.9} parent=11 // pred_region
          _
        $region24: #{_lambda_.9} parent=11 // pred_fallthru
          _
        // Predicated region
        $region25: #{_lambda_.9} parent=11 // pred_check
          %p392 = pneg %p132
        $region26: #{_lambda_.9} parent=11 // pred_check_branch
          %394 = sbr.rel (%p392) target = $region28
        $region27: #{_lambda_.9} parent=11 // pred_region
          _
        $region28: #{_lambda_.9} parent=11 // pred_fallthru
          _
        // Predicated region
        $region29: #{_lambda_.9} parent=11 // pred_check
          %p395 = pneg %p153
        $region30: #{_lambda_.9} parent=11 // pred_check_branch
          %397 = sbr.rel (%p395) target = $region32
        $region31: #{_lambda_.9} parent=11 // pred_region
          _
        $region32: #{_lambda_.9} parent=11 // pred_fallthru
          _
        // Predicated region
        $region33: #{_lambda_.9} parent=11 // pred_check
          %p398 = pneg %p174
        $region34: #{_lambda_.9} parent=11 // pred_check_branch
          %400 = sbr.rel (%p398) target = $region36
        $region35: #{_lambda_.9} parent=11 // pred_region
          _
        $region36: #{_lambda_.9} parent=11 // pred_fallthru
          _
        // Predicated region
        $region37: #{_lambda_.9} parent=11 // pred_check
          %p401 = pneg %p195
        $region38: #{_lambda_.9} parent=11 // pred_check_branch
          %403 = sbr.rel (%p401) target = $region40
        $region39: #{_lambda_.9} parent=11 // pred_region
          _
        $region40: #{_lambda_.9} parent=11 // pred_fallthru
          _
        // Predicated region
        $region41: #{_lambda_.9} parent=11 // pred_check
          %p404 = pneg %p216
        $region42: #{_lambda_.9} parent=11 // pred_check_branch
          %406 = sbr.rel (%p404) target = $region44
        $region43: #{_lambda_.9} parent=11 // pred_region
          _
        $region44: #{_lambda_.9} parent=11 // pred_fallthru
          _
        // Predicated region
        $region45: #{_lambda_.9} parent=11 // pred_check
          %p407 = pneg %p237
        $region46: #{_lambda_.9} parent=11 // pred_check_branch
          %409 = sbr.rel (%p407) target = $region48
        $region47: #{_lambda_.9} parent=11 // pred_region
          _
        $region48: #{_lambda_.9} parent=11 // pred_fallthru
          _
        // Predicated region
        $region49: #{_lambda_.9} parent=11 // pred_check
          %p410 = pneg %p258
        $region50: #{_lambda_.9} parent=11 // pred_check_branch
          %412 = sbr.rel (%p410) target = $region52
        $region51: #{_lambda_.9} parent=11 // pred_region
          _
        $region52: #{_lambda_.9} parent=11 // pred_fallthru
          _
        // Predicated region
        $region53: #{_lambda_.9} parent=11 // pred_check
          %p413 = pneg %p279
        $region54: #{_lambda_.9} parent=11 // pred_check_branch
          %415 = sbr.rel (%p413) target = $region56
        $region55: #{_lambda_.9} parent=11 // pred_region
          _
        $region56: #{_lambda_.9} parent=11 // pred_fallthru
          _
        // Predicated region
        $region57: #{_lambda_.9} parent=11 // pred_check
          %p416 = pneg %p300
        $region58: #{_lambda_.9} parent=11 // pred_check_branch
          %418 = sbr.rel (%p416) target = $region60
        $region59: #{_lambda_.9} parent=11 // pred_region
          _
        $region60: #{_lambda_.9} parent=11 // pred_fallthru
          _
        // Predicated region
        $region61: #{_lambda_.9} parent=11 // pred_check
          %p419 = pneg %p321
        $region62: #{_lambda_.9} parent=11 // pred_check_branch
          %421 = sbr.rel (%p419) target = $region64
        $region63: #{_lambda_.9} parent=11 // pred_region
          _
        $region64: #{_lambda_.9} parent=11 // pred_fallthru
          _
        // Predicated region
        $region65: #{_lambda_.9} parent=11 // pred_check
          %p422 = pneg %p342
        $region66: #{_lambda_.9} parent=11 // pred_check_branch
          %424 = sbr.rel (%p422) target = $region68
        $region67: #{_lambda_.9} parent=11 // pred_region
          %426 = vsyncadd [#allocation4], 0
          %s428 = sshll.u32 %s14, 4
          %s429 = int_to_ptr.hbm [resolvable:$true] %s428
          %s430 = sshll.u32 [#allocation3], 4
          %s431 = int_to_ptr.vmem [resolvable:$true] %s430
          %433 = dma.hbm_to_vmem [thread:$0]  %s429, 16, %s431, [#allocation4]
        $region68: #{_lambda_.9} parent=11 // pred_fallthru
          _
      $region12: #{_lambda_.9} parent=5 // pred_fallthru
        _
      %p434 = scmp.lt.s32.totalorder %s22, 2
      // Predicated region
      $region69: #{_lambda_.9} parent=5 // pred_check
        %p435 = pneg %p434
      $region70: #{_lambda_.9} parent=5 // pred_check_branch
        %437 = sbr.rel (%p435) target = $region72
      $region71: #{_lambda_.9} parent=5 // pred_region
        // Predicated region
        $region73: #{_lambda_.9} parent=71 // pred_check
          %p438 = pneg %p42
        $region74: #{_lambda_.9} parent=71 // pred_check_branch
          %440 = sbr.rel (%p438) target = $region76
        $region75: #{_lambda_.9} parent=71 // pred_region
          %p441 = scmp.lt.s32.totalorder %s22, 1
          %s442 = scalar_select %p441, %s22, 1
          %s443 = smul.addr %s442, 5
          %s444 = scalar_lea.vmem %s0, %s443
        $region76: #{_lambda_.9} parent=71 // pred_fallthru
          _
      $region72: #{_lambda_.9} parent=5 // pred_fallthru
        _
      %p445 = scmp.le.s32.totalorder 1, %s22
      %p446 = scmp.lt.s32.totalorder %s22, 3
      %p447 = pnand %p445, %p446
      %p448 = pneg %p447
      // Predicated region
      $region77: #{_lambda_.9} parent=5 // pred_check
        _
      $region78: #{_lambda_.9} parent=5 // pred_check_branch
        %450 = sbr.rel (%p447) target = $region80
      $region79: #{_lambda_.9} parent=5 // pred_region
        %s451 = ssub.s32 %s22, 1
        // Predicated region
        $region81: #{_lambda_.9} parent=79 // pred_check
          %p452 = pneg %p342
        $region82: #{_lambda_.9} parent=79 // pred_check_branch
          %454 = sbr.rel (%p452) target = $region84
        $region83: #{_lambda_.9} parent=79 // pred_region
          %456 = dma.done [#allocation4], 16
        $region84: #{_lambda_.9} parent=79 // pred_fallthru
          _
        %p457 = scmp.lt.s32.totalorder %s27, 1
        %s458 = scalar_select %p457, %s27, 1
        %s459 = smul.addr %s458, 5
        %s460 = scalar_lea.vmem %s0, %s459
        %p461 = pneg %p48
        %p462 = pneg %p45
        %p463 = pneg %p69
        %p464 = pneg %p66
        %p465 = pneg %p90
        %p466 = pneg %p87
        %p467 = pneg %p111
        %p468 = pneg %p108
        %p469 = pneg %p132
        %p470 = pneg %p129
        %p471 = pneg %p153
        %p472 = pneg %p150
        %p473 = pneg %p174
        %p474 = pneg %p171
        %p475 = pneg %p195
        %p476 = pneg %p192
        %p477 = pneg %p216
        %p478 = pneg %p213
        %p479 = pneg %p237
        %p480 = pneg %p234
        %p481 = pneg %p258
        %p482 = pneg %p255
        %p483 = pneg %p279
        %p484 = pneg %p276
        %p485 = pneg %p300
        %p486 = pneg %p297
        %p487 = pneg %p321
        %p488 = pneg %p318
        %p489 = pneg %p342
        %p490 = pneg %p339
        %p491 = pneg %p368
        %p492 = pneg %p365
        %p493 = scmp.lt.s32.totalorder %s27, 1
        %s494 = scalar_select %p493, %s27, 1
        %s495 = scalar_lea.vmem %s15, %s494
        %p496 = scmp.lt.s32.totalorder %s27, 1
        %s497 = scalar_select %p496, %s27, 1
        %s498 = smul.addr %s497, 5
        %s499 = scalar_lea.vmem %s0, %s498
        %p500 = scmp.lt.s32.totalorder %s27, 1
        %s501 = scalar_select %p500, %s27, 1
        %s502 = scalar_lea.vmem %s15, %s501
        %v504 = vld [vmem:[%s499] sm:$0x1f]
        %v505 = vld [vmem:[%s2] sm:$0xf]
        %v506 = vld [vmem:[%s2 + $0x4] sm:$0xf]
        %v507 = vld [vmem:[%s2 + $0x8] sm:$0xf]
        %v508 = vld [vmem:[%s2 + $0xc] sm:$0xf]
        %v509 = vld [vmem:[%s2 + $0x10] sm:$0xf]
        %v510 = vld [vmem:[%s2 + $0x14] sm:$0xf]
        %v511 = vld [vmem:[%s2 + $0x18] sm:$0xf]
        %v512 = vld [vmem:[%s2 + $0x1c] sm:$0xf]
        %v513 = vld [vmem:[%s2 + $0x20] sm:$0xf]
        %v514 = vld [vmem:[%s2 + $0x24] sm:$0xf]
        %v515 = vld [vmem:[%s2 + $0x28] sm:$0xf]
        %v516 = vld [vmem:[%s2 + $0x2c] sm:$0xf]
        %v517 = vld [vmem:[%s2 + $0x30] sm:$0xf]
        %v518 = vld [vmem:[%s2 + $0x34] sm:$0xf]
        %v519 = vld [vmem:[%s2 + $0x38] sm:$0xf]
        %v520 = vld [vmem:[%s2 + $0x3c] sm:$0xf]
        %v521 = vld [vmem:[%s2 + $0x40] sm:$0xf]
        %v522 = vld [vmem:[%s2 + $0x44] sm:$0xf]
        %v523 = vld [vmem:[%s2 + $0x48] sm:$0xf]
        %v524 = vld [vmem:[%s2 + $0x4c] sm:$0xf]
        %v525 = vld [vmem:[%s2 + $0x50] sm:$0xf]
        %v526 = vld [vmem:[%s2 + $0x54] sm:$0xf]
        %v527 = vld [vmem:[%s2 + $0x58] sm:$0xf]
        %v528 = vld [vmem:[%s2 + $0x5c] sm:$0xf]
        %v529 = vld [vmem:[%s2 + $0x60] sm:$0xf]
        %v530 = vld [vmem:[%s2 + $0x64] sm:$0xf]
        %v531 = vld [vmem:[%s2 + $0x68] sm:$0xf]
        %v532 = vld [vmem:[%s2 + $0x6c] sm:$0xf]
        %v533 = vld [vmem:[%s2 + $0x70] sm:$0xf]
        %v534 = vld [vmem:[%s2 + $0x74] sm:$0xf]
        %v535 = vld [vmem:[%s2 + $0x78] sm:$0xf]
        %v536 = vld [vmem:[%s2 + $0x7c] sm:$0xf]
        %v537 = vld [vmem:[%s2 + $0x80] sm:$0xf]
        %v538 = vld [vmem:[%s2 + $0x84] sm:$0xf]
        %v539 = vld [vmem:[%s2 + $0x88] sm:$0xf]
        %v540 = vld [vmem:[%s2 + $0x8c] sm:$0xf]
        %v541 = vld [vmem:[%s2 + $0x90] sm:$0xf]
        %v542 = vld [vmem:[%s2 + $0x94] sm:$0xf]
        %v543 = vld [vmem:[%s2 + $0x98] sm:$0xf]
        %v544 = vld [vmem:[%s2 + $0x9c] sm:$0xf]
        %v545 = vld [vmem:[%s2 + $0xa0] sm:$0xf]
        %v546 = vld [vmem:[%s2 + $0xa4] sm:$0xf]
        %v547 = vld [vmem:[%s2 + $0xa8] sm:$0xf]
        %v548 = vld [vmem:[%s2 + $0xac] sm:$0xf]
        %v549 = vld [vmem:[%s2 + $0xb0] sm:$0xf]
        %v550 = vld [vmem:[%s2 + $0xb4] sm:$0xf]
        %v551 = vld [vmem:[%s2 + $0xb8] sm:$0xf]
        %v552 = vld [vmem:[%s2 + $0xbc] sm:$0xf]
        %v553 = vld [vmem:[%s2 + $0xc0] sm:$0xf]
        %v554 = vld [vmem:[%s2 + $0xc4] sm:$0xf]
        %v555 = vld [vmem:[%s2 + $0xc8] sm:$0xf]
        %v556 = vld [vmem:[%s2 + $0xcc] sm:$0xf]
        %v557 = vld [vmem:[%s2 + $0xd0] sm:$0xf]
        %v558 = vld [vmem:[%s2 + $0xd4] sm:$0xf]
        %v559 = vld [vmem:[%s2 + $0xd8] sm:$0xf]
        %v560 = vld [vmem:[%s2 + $0xdc] sm:$0xf]
        %v561 = vld [vmem:[%s2 + $0xe0] sm:$0xf]
        %v562 = vld [vmem:[%s2 + $0xe4] sm:$0xf]
        %v563 = vld [vmem:[%s2 + $0xe8] sm:$0xf]
        %v564 = vld [vmem:[%s2 + $0xec] sm:$0xf]
        %v565 = vld [vmem:[%s2 + $0xf0] sm:$0xf]
        %v566 = vld [vmem:[%s2 + $0xf4] sm:$0xf]
        %v567 = vld [vmem:[%s2 + $0xf8] sm:$0xf]
        %v568 = vld [vmem:[%s2 + $0xfc] sm:$0xf]
        %v569 = vld [vmem:[%s2 + $0x100] sm:$0xf]
        %v570 = vld [vmem:[%s2 + $0x104] sm:$0xf]
        %v571 = vld [vmem:[%s2 + $0x108] sm:$0xf]
        %v572 = vld [vmem:[%s2 + $0x10c] sm:$0xf]
        %v573 = vld [vmem:[%s2 + $0x110] sm:$0xf]
        %v574 = vld [vmem:[%s2 + $0x114] sm:$0xf]
        %v575 = vld [vmem:[%s2 + $0x118] sm:$0xf]
        %v576 = vld [vmem:[%s2 + $0x11c] sm:$0xf]
        %v577 = vld [vmem:[%s3] sm:$0x1]
        %579 = vst [vmem:[#allocation1] ss:$9 sm:$0xff] %v504
        %v580 = vld [vmem:[#allocation1] sm:$0xff]
        %v581 = vld [vmem:[#allocation1 + $0x9] sm:$0xff]
        %v582 = vld [vmem:[#allocation1 + $0x12] sm:$0xff]
        %v583 = vld [vmem:[#allocation1 + $0x1b] sm:$0xff]
        %v584 = vld [vmem:[#allocation1 + $0x24] sm:$0xff]
        %v661 = vunpack.c.l.b16 %v505
        %v662 = vunpack.c.l.b16 %v506
        %v663 = vunpack.c.l.b16 %v507
        %v664 = vunpack.c.l.b16 %v508
        %v665 = vunpack.c.l.b16 %v509
        %v666 = vunpack.c.l.b16 %v510
        %v667 = vunpack.c.l.b16 %v511
        %v668 = vunpack.c.l.b16 %v512
        %v669 = vunpack.c.l.b16 %v513
        %v670 = vunpack.c.l.b16 %v514
        %v671 = vunpack.c.l.b16 %v515
        %v672 = vunpack.c.l.b16 %v516
        %v673 = vunpack.c.l.b16 %v517
        %v674 = vunpack.c.l.b16 %v518
        %v675 = vunpack.c.l.b16 %v519
        %v676 = vunpack.c.l.b16 %v520
        %v677 = vunpack.c.l.b16 %v521
        %v678 = vunpack.c.l.b16 %v522
        %v679 = vunpack.c.l.b16 %v523
        %v680 = vunpack.c.l.b16 %v524
        %v681 = vunpack.c.l.b16 %v525
        %v682 = vunpack.c.l.b16 %v526
        %v683 = vunpack.c.l.b16 %v527
        %v684 = vunpack.c.l.b16 %v528
        %v685 = vunpack.c.l.b16 %v529
        %v686 = vunpack.c.l.b16 %v530
        %v687 = vunpack.c.l.b16 %v531
        %v688 = vunpack.c.l.b16 %v532
        %v689 = vunpack.c.l.b16 %v533
        %v690 = vunpack.c.l.b16 %v534
        %v691 = vunpack.c.l.b16 %v535
        %v692 = vunpack.c.l.b16 %v536
        %v693 = vunpack.c.l.b16 %v537
        %v694 = vunpack.c.l.b16 %v538
        %v695 = vunpack.c.l.b16 %v539
        %v696 = vunpack.c.l.b16 %v540
        %v697 = vunpack.c.l.b16 %v541
        %v698 = vunpack.c.l.b16 %v542
        %v699 = vunpack.c.l.b16 %v543
        %v700 = vunpack.c.l.b16 %v544
        %v701 = vunpack.c.l.b16 %v545
        %v702 = vunpack.c.l.b16 %v546
        %v703 = vunpack.c.l.b16 %v547
        %v704 = vunpack.c.l.b16 %v548
        %v705 = vunpack.c.l.b16 %v549
        %v706 = vunpack.c.l.b16 %v550
        %v707 = vunpack.c.l.b16 %v551
        %v708 = vunpack.c.l.b16 %v552
        %v709 = vunpack.c.l.b16 %v553
        %v710 = vunpack.c.l.b16 %v554
        %v711 = vunpack.c.l.b16 %v555
        %v712 = vunpack.c.l.b16 %v556
        %v713 = vunpack.c.l.b16 %v557
        %v714 = vunpack.c.l.b16 %v558
        %v715 = vunpack.c.l.b16 %v559
        %v716 = vunpack.c.l.b16 %v560
        %v717 = vunpack.c.l.b16 %v561
        %v718 = vunpack.c.l.b16 %v562
        %v719 = vunpack.c.l.b16 %v563
        %v720 = vunpack.c.l.b16 %v564
        %v721 = vunpack.c.l.b16 %v565
        %v722 = vunpack.c.l.b16 %v566
        %v723 = vunpack.c.l.b16 %v567
        %v724 = vunpack.c.l.b16 %v568
        %v725 = vunpack.c.l.b16 %v569
        %v726 = vunpack.c.l.b16 %v570
        %v727 = vunpack.c.l.b16 %v571
        %v728 = vunpack.c.l.b16 %v572
        %v729 = vunpack.c.l.b16 %v573
        %v730 = vunpack.c.l.b16 %v574
        %v731 = vunpack.c.l.b16 %v575
        %v732 = vunpack.c.l.b16 %v576
        %v733 = vpack.c.b16 %v662, %v661
        %v734 = vpack.c.b16 %v664, %v663
        %v735 = vpack.c.b16 %v666, %v665
        %v736 = vpack.c.b16 %v668, %v667
        %v737 = vpack.c.b16 %v670, %v669
        %v738 = vpack.c.b16 %v672, %v671
        %v739 = vpack.c.b16 %v674, %v673
        %v740 = vpack.c.b16 %v676, %v675
        %v741 = vpack.c.b16 %v678, %v677
        %v742 = vpack.c.b16 %v680, %v679
        %v743 = vpack.c.b16 %v682, %v681
        %v744 = vpack.c.b16 %v684, %v683
        %v745 = vpack.c.b16 %v686, %v685
        %v746 = vpack.c.b16 %v688, %v687
        %v747 = vpack.c.b16 %v690, %v689
        %v748 = vpack.c.b16 %v692, %v691
        %v749 = vpack.c.b16 %v694, %v693
        %v750 = vpack.c.b16 %v696, %v695
        %v751 = vpack.c.b16 %v698, %v697
        %v752 = vpack.c.b16 %v700, %v699
        %v753 = vpack.c.b16 %v702, %v701
        %v754 = vpack.c.b16 %v704, %v703
        %v755 = vpack.c.b16 %v706, %v705
        %v756 = vpack.c.b16 %v708, %v707
        %v757 = vpack.c.b16 %v710, %v709
        %v758 = vpack.c.b16 %v712, %v711
        %v759 = vpack.c.b16 %v714, %v713
        %v760 = vpack.c.b16 %v716, %v715
        %v761 = vpack.c.b16 %v718, %v717
        %v762 = vpack.c.b16 %v720, %v719
        %v763 = vpack.c.b16 %v722, %v721
        %v764 = vpack.c.b16 %v724, %v723
        %v765 = vpack.c.b16 %v726, %v725
        %v766 = vpack.c.b16 %v728, %v727
        %v767 = vpack.c.b16 %v730, %v729
        %v768 = vpack.c.b16 %v732, %v731
        %vm805 = vcmask 523264
        %v806 = vsel %vm805, %v584, 0
        %808 = vmatpush.bf16.msra.mxu0 %v740
        %809 = vmatpush.bf16.msra.mxu0 %v739
        %810 = vmatpush.bf16.msra.mxu0 %v738
        %811 = vmatpush.bf16.msra.mxu0 %v737
        %812 = vmatpush.bf16.msra.mxu0 %v736
        %813 = vmatpush.bf16.msra.mxu0 %v735
        %814 = vmatpush.bf16.msra.mxu0 %v734
        %815 = vmatpush.bf16.msra.mxu0 %v733
        %816 = vmatmul.bf16.gmra.mxu0 %v580
        %v817 = vpop.f32.mrf.mxu0
        %v818 = vadd.f32 %v577, %v817
        %v819 = vpop.f32.mrf.mxu0
        %820 = vdwg.mxu0
        %821 = vmatpush.bf16.msra.mxu0 %v748
        %822 = vmatpush.bf16.msra.mxu0 %v747
        %823 = vmatpush.bf16.msra.mxu0 %v746
        %824 = vmatpush.bf16.msra.mxu0 %v745
        %825 = vmatpush.bf16.msra.mxu0 %v744
        %826 = vmatpush.bf16.msra.mxu0 %v743
        %827 = vmatpush.bf16.msra.mxu0 %v742
        %828 = vmatpush.bf16.msra.mxu0 %v741
        %829 = vmatmul.bf16.gmra.mxu0 %v581
        %v830 = vpop.f32.mrf.mxu0
        %v831 = vadd.f32 %v818, %v830
        %v832 = vpop.f32.mrf.mxu0
        %833 = vdwg.mxu0
        %834 = vmatpush.bf16.msra.mxu0 %v756
        %835 = vmatpush.bf16.msra.mxu0 %v755
        %836 = vmatpush.bf16.msra.mxu0 %v754
        %837 = vmatpush.bf16.msra.mxu0 %v753
        %838 = vmatpush.bf16.msra.mxu0 %v752
        %839 = vmatpush.bf16.msra.mxu0 %v751
        %840 = vmatpush.bf16.msra.mxu0 %v750
        %841 = vmatpush.bf16.msra.mxu0 %v749
        %842 = vmatmul.bf16.gmra.mxu0 %v582
        %v843 = vpop.f32.mrf.mxu0
        %v844 = vadd.f32 %v831, %v843
        %v845 = vpop.f32.mrf.mxu0
        %846 = vdwg.mxu0
        %847 = vmatpush.bf16.msra.mxu0 %v764
        %848 = vmatpush.bf16.msra.mxu0 %v763
        %849 = vmatpush.bf16.msra.mxu0 %v762
        %850 = vmatpush.bf16.msra.mxu0 %v761
        %851 = vmatpush.bf16.msra.mxu0 %v760
        %852 = vmatpush.bf16.msra.mxu0 %v759
        %853 = vmatpush.bf16.msra.mxu0 %v758
        %854 = vmatpush.bf16.msra.mxu0 %v757
        %855 = vmatmul.bf16.gmra.mxu0 %v583
        %v856 = vpop.f32.mrf.mxu0
        %v857 = vadd.f32 %v844, %v856
        %v858 = vpop.f32.mrf.mxu0
        %859 = vdwg.mxu0
        %860 = vmatpush.bf16.msra.mxu0 0
        %861 = vmatpush.bf16.msra.mxu0 0
        %862 = vmatpush.bf16.msra.mxu0 0
        %863 = vmatpush.bf16.msra.mxu0 0
        %864 = vmatpush.bf16.msra.mxu0 %v768
        %865 = vmatpush.bf16.msra.mxu0 %v767
        %866 = vmatpush.bf16.msra.mxu0 %v766
        %867 = vmatpush.bf16.msra.mxu0 %v765
        %868 = vmatmul.bf16.gmra.mxu0 %v806
        %v869 = vpop.f32.mrf.mxu0
        %v870 = vadd.f32 %v857, %v869
        %v871 = vpop.f32.mrf.mxu0
        %872 = vdwg.mxu0
        %v873 = vmul.f32 %v870, 0.5
        %v874 = vtanh.pop %v873
        %v875 = vadd.f32 %v874, 1.0
        %v876 = vmul.f32 %v873, %v875
        %v877 = vpack.c.bf16 %v876, %v876
        %v878 = vld [vmem:[%s4] sm:$0xf]
        %v879 = vld [vmem:[%s4 + $0x4] sm:$0xf]
        %v880 = vld [vmem:[%s4 + $0x8] sm:$0xf]
        %v881 = vld [vmem:[%s4 + $0xc] sm:$0xf]
        %v882 = vld [vmem:[%s4 + $0x10] sm:$0xf]
        %v883 = vld [vmem:[%s4 + $0x14] sm:$0xf]
        %v884 = vld [vmem:[%s4 + $0x18] sm:$0xf]
        %v885 = vld [vmem:[%s4 + $0x1c] sm:$0xf]
        %v886 = vld [vmem:[%s4 + $0x20] sm:$0xf]
        %v887 = vld [vmem:[%s4 + $0x24] sm:$0xf]
        %v888 = vld [vmem:[%s4 + $0x28] sm:$0xf]
        %v889 = vld [vmem:[%s4 + $0x2c] sm:$0xf]
        %v890 = vld [vmem:[%s4 + $0x30] sm:$0xf]
        %v891 = vld [vmem:[%s4 + $0x34] sm:$0xf]
        %v892 = vld [vmem:[%s4 + $0x38] sm:$0xf]
        %v893 = vld [vmem:[%s4 + $0x3c] sm:$0xf]
        %v894 = vld [vmem:[%s5] sm:$0x1]
        %v911 = vunpack.c.l.b16 %v878
        %v912 = vunpack.c.l.b16 %v879
        %v913 = vunpack.c.l.b16 %v880
        %v914 = vunpack.c.l.b16 %v881
        %v915 = vunpack.c.l.b16 %v882
        %v916 = vunpack.c.l.b16 %v883
        %v917 = vunpack.c.l.b16 %v884
        %v918 = vunpack.c.l.b16 %v885
        %v919 = vunpack.c.l.b16 %v886
        %v920 = vunpack.c.l.b16 %v887
        %v921 = vunpack.c.l.b16 %v888
        %v922 = vunpack.c.l.b16 %v889
        %v923 = vunpack.c.l.b16 %v890
        %v924 = vunpack.c.l.b16 %v891
        %v925 = vunpack.c.l.b16 %v892
        %v926 = vunpack.c.l.b16 %v893
        %v927 = vpack.c.b16 %v912, %v911
        %v928 = vpack.c.b16 %v914, %v913
        %v929 = vpack.c.b16 %v916, %v915
        %v930 = vpack.c.b16 %v918, %v917
        %v931 = vpack.c.b16 %v920, %v919
        %v932 = vpack.c.b16 %v922, %v921
        %v933 = vpack.c.b16 %v924, %v923
        %v934 = vpack.c.b16 %v926, %v925
        %943 = vmatpush.bf16.msra.mxu0 %v934
        %944 = vmatpush.bf16.msra.mxu0 %v933
        %945 = vmatpush.bf16.msra.mxu0 %v932
        %946 = vmatpush.bf16.msra.mxu0 %v931
        %947 = vmatpush.bf16.msra.mxu0 %v930
        %948 = vmatpush.bf16.msra.mxu0 %v929
        %949 = vmatpush.bf16.msra.mxu0 %v928
        %950 = vmatpush.bf16.msra.mxu0 %v927
        %951 = vmatmul.bf16.gmra.mxu0 %v877
        %v952 = vpop.f32.mrf.mxu0
        %v953 = vadd.f32 %v894, %v952
        %v954 = vpop.f32.mrf.mxu0
        %955 = vdwg.mxu0
        %v956 = vmul.f32 %v953, 0.5
        %v957 = vtanh.pop %v956
        %v958 = vadd.f32 %v957, 1.0
        %v959 = vmul.f32 %v956, %v958
        %v960 = vld [vmem:[%s6] sm:$0xf]
        %v961 = vld [vmem:[%s6 + $0x4] sm:$0xf]
        %v962 = vld [vmem:[%s6 + $0x8] sm:$0xf]
        %v963 = vld [vmem:[%s6 + $0xc] sm:$0xf]
        %v964 = vld [vmem:[%s6 + $0x10] sm:$0xf]
        %v965 = vld [vmem:[%s6 + $0x14] sm:$0xf]
        %v966 = vld [vmem:[%s6 + $0x18] sm:$0xf]
        %v967 = vld [vmem:[%s6 + $0x1c] sm:$0xf]
        %v968 = vld [vmem:[%s6 + $0x20] sm:$0xf]
        %v969 = vld [vmem:[%s6 + $0x24] sm:$0xf]
        %v970 = vld [vmem:[%s6 + $0x28] sm:$0xf]
        %v971 = vld [vmem:[%s6 + $0x2c] sm:$0xf]
        %v972 = vld [vmem:[%s6 + $0x30] sm:$0xf]
        %v973 = vld [vmem:[%s6 + $0x34] sm:$0xf]
        %v974 = vld [vmem:[%s6 + $0x38] sm:$0xf]
        %v975 = vld [vmem:[%s6 + $0x3c] sm:$0xf]
        %v976 = vld [vmem:[%s7] sm:$0x1]
        %v993 = vunpack.c.l.b16 %v960
        %v994 = vunpack.c.l.b16 %v961
        %v995 = vunpack.c.l.b16 %v962
        %v996 = vunpack.c.l.b16 %v963
        %v997 = vunpack.c.l.b16 %v964
        %v998 = vunpack.c.l.b16 %v965
        %v999 = vunpack.c.l.b16 %v966
        %v1000 = vunpack.c.l.b16 %v967
        %v1001 = vunpack.c.l.b16 %v968
        %v1002 = vunpack.c.l.b16 %v969
        %v1003 = vunpack.c.l.b16 %v970
        %v1004 = vunpack.c.l.b16 %v971
        %v1005 = vunpack.c.l.b16 %v972
        %v1006 = vunpack.c.l.b16 %v973
        %v1007 = vunpack.c.l.b16 %v974
        %v1008 = vunpack.c.l.b16 %v975
        %v1009 = vpack.c.b16 %v994, %v993
        %v1010 = vpack.c.b16 %v996, %v995
        %v1011 = vpack.c.b16 %v998, %v997
        %v1012 = vpack.c.b16 %v1000, %v999
        %v1013 = vpack.c.b16 %v1002, %v1001
        %v1014 = vpack.c.b16 %v1004, %v1003
        %v1015 = vpack.c.b16 %v1006, %v1005
        %v1016 = vpack.c.b16 %v1008, %v1007
        %1025 = vmatpush.bf16.msra.mxu0 %v1016
        %1026 = vmatpush.bf16.msra.mxu0 %v1015
        %1027 = vmatpush.bf16.msra.mxu0 %v1014
        %1028 = vmatpush.bf16.msra.mxu0 %v1013
        %1029 = vmatpush.bf16.msra.mxu0 %v1012
        %1030 = vmatpush.bf16.msra.mxu0 %v1011
        %1031 = vmatpush.bf16.msra.mxu0 %v1010
        %1032 = vmatpush.bf16.msra.mxu0 %v1009
        %1033 = vmatmul.bf16.gmra.mxu0 %v877
        %v1034 = vpop.f32.mrf.mxu0
        %v1035 = vadd.f32 %v976, %v1034
        %v1036 = vpop.f32.mrf.mxu0
        %1037 = vdwg.mxu0
        %v1038 = vmul.f32 %v1035, 0.5
        %v1039 = vtanh.pop %v1038
        %v1040 = vadd.f32 %v1039, 1.0
        %v1041 = vmul.f32 %v1038, %v1040
        %vm1042 = vcmask 519168
        %1043 = vst.msk [vmem:[#allocation2] sm:$0xf] %vm1042, 0
        %vm1044 = vcmask 519168
        %vm1045 = vsmask.f32 7938
        %vm1046 = vmand %vm1044, %vm1045
        %v1047 = vld [vmem:[#allocation2 + $0x4] sm:$0xf]
        %v1048 = vsel %vm1046, 0, %v1047
        %1049 = vst [vmem:[#allocation2 + $0x4] sm:$0xf] %v1048
        %v1050 = vld [vmem:[%s1] sm:$0x1]
        %s1051 = scalar_lea.vmem %s1, 1
        %v1052 = vld [vmem:[%s1051] sm:$0x1]
        %v1053 = vpack.c.bf16 %v959, %v959
        %v1054 = vld [vmem:[%s8] sm:$0xf]
        %v1055 = vld [vmem:[%s8 + $0x4] sm:$0xf]
        %v1056 = vld [vmem:[%s8 + $0x8] sm:$0xf]
        %v1057 = vld [vmem:[%s8 + $0xc] sm:$0xf]
        %v1058 = vld [vmem:[%s8 + $0x10] sm:$0xf]
        %v1059 = vld [vmem:[%s8 + $0x14] sm:$0xf]
        %v1060 = vld [vmem:[%s8 + $0x18] sm:$0xf]
        %v1061 = vld [vmem:[%s8 + $0x1c] sm:$0xf]
        %v1062 = vld [vmem:[%s9] sm:$0x1]
        %v1071 = vunpack.c.l.b16 %v1054
        %v1072 = vunpack.c.l.b16 %v1055
        %v1073 = vunpack.c.l.b16 %v1056
        %v1074 = vunpack.c.l.b16 %v1057
        %v1075 = vunpack.c.l.b16 %v1058
        %v1076 = vunpack.c.l.b16 %v1059
        %v1077 = vunpack.c.l.b16 %v1060
        %v1078 = vunpack.c.l.b16 %v1061
        %v1079 = vpack.c.b16 %v1072, %v1071
        %v1080 = vpack.c.b16 %v1074, %v1073
        %v1081 = vpack.c.b16 %v1076, %v1075
        %v1082 = vpack.c.b16 %v1078, %v1077
        %v1088 = vsel %vm805, %v1053, 0
        %1090 = vmatpush.bf16.msra.mxu0 0
        %1091 = vmatpush.bf16.msra.mxu0 0
        %1092 = vmatpush.bf16.msra.mxu0 0
        %1093 = vmatpush.bf16.msra.mxu0 0
        %1094 = vmatpush.bf16.msra.mxu0 %v1082
        %1095 = vmatpush.bf16.msra.mxu0 %v1081
        %1096 = vmatpush.bf16.msra.mxu0 %v1080
        %1097 = vmatpush.bf16.msra.mxu0 %v1079
        %1098 = vmatmul.bf16.gmra.mxu0 %v1088
        %v1099 = vpop.f32.mrf.mxu0
        %v1100 = vadd.f32 %v1062, %v1099
        %v1101 = vpop.f32.mrf.mxu0
        %1102 = vdwg.mxu0
        %v1103 = vmul.f32 %v1100, 0.5
        %v1104 = vtanh.pop %v1103
        %v1105 = vadd.f32 %v1104, 1.0
        %v1106 = vmul.f32 %v1103, %v1105
        %v1107 = vpack.c.bf16 %v1106, %v1106
        %vm1108 = vcmask 516096
        %vm1109 = vsmask.f32 256
        %vm1110 = vmand %vm1108, %vm1109
        %v1111 = vld [vmem:[#allocation2 + $0x4] sm:$0x1]
        %v1112 = vsel %vm1110, %v1107, %v1111
        %1113 = vst [vmem:[#allocation2 + $0x4] sm:$0x1] %v1112
        %v1114 = vld [vmem:[#allocation2] sm:$0x8]
        %1116 = vset.pattern.permute.xlu0 0
        %1117 = vperm.xlu0 %1116, %v1050
        %v1118 = vpop.permute.xlu0 %1117
        %v1120 = vperm.slane %v1118, 0
        %v1121 = vunpack.c.l.bf16 %v1114
        %v1122 = vunpack.c.l.bf16 %v1120
        %v1124 = vperm.slane %v1122, 0
        %v1126 = vmul.f32 %v1121, %v1124
        %v1127 = vpack.c.bf16 %v1126, %v1126
        %v1128 = vld [vmem:[%s10] sm:$0xf]
        %v1129 = vld [vmem:[%s10 + $0x4] sm:$0xf]
        %v1130 = vld [vmem:[%s10 + $0x8] sm:$0xf]
        %v1131 = vld [vmem:[%s10 + $0xc] sm:$0xf]
        %v1132 = vld [vmem:[%s10 + $0x10] sm:$0xf]
        %v1133 = vld [vmem:[%s10 + $0x14] sm:$0xf]
        %v1134 = vld [vmem:[%s10 + $0x18] sm:$0xf]
        %v1135 = vld [vmem:[%s10 + $0x1c] sm:$0xf]
        %s1136 = scalar_lea.vmem %s10, 32
        %v1137 = vld [vmem:[%s1136] sm:$0xf]
        %v1138 = vld [vmem:[%s1136 + $0x4] sm:$0xf]
        %v1139 = vld [vmem:[%s1136 + $0x8] sm:$0xf]
        %v1140 = vld [vmem:[%s1136 + $0xc] sm:$0xf]
        %v1141 = vld [vmem:[%s1136 + $0x10] sm:$0xf]
        %v1142 = vld [vmem:[%s1136 + $0x14] sm:$0xf]
        %v1143 = vld [vmem:[%s1136 + $0x18] sm:$0xf]
        %v1144 = vld [vmem:[%s1136 + $0x1c] sm:$0xf]
        %v1146 = vunpack.c.l.b16 %v1114
        %v1147 = vpack.c.b16 %v1146, %v1146
        %v1149 = vshrl.u32 %v1147, 16
        %v1151 = vrot.slane %v1149, 3
        %v1160 = vunpack.c.l.b16 %v1137
        %v1161 = vunpack.c.l.b16 %v1138
        %v1162 = vunpack.c.l.b16 %v1139
        %v1163 = vunpack.c.l.b16 %v1140
        %v1164 = vunpack.c.l.b16 %v1141
        %v1165 = vunpack.c.l.b16 %v1142
        %v1166 = vunpack.c.l.b16 %v1143
        %v1167 = vunpack.c.l.b16 %v1144
        %v1168 = vpack.c.b16 %v1161, %v1160
        %v1169 = vpack.c.b16 %v1163, %v1162
        %v1170 = vpack.c.b16 %v1165, %v1164
        %v1171 = vpack.c.b16 %v1167, %v1166
        %v1177 = vsel %vm805, %v1151, 0
        %1179 = vmatpush.bf16.msra.mxu0 0
        %1180 = vmatpush.bf16.msra.mxu0 0
        %1181 = vmatpush.bf16.msra.mxu0 0
        %1182 = vmatpush.bf16.msra.mxu0 0
        %1183 = vmatpush.bf16.msra.mxu0 %v1171
        %1184 = vmatpush.bf16.msra.mxu0 %v1170
        %1185 = vmatpush.bf16.msra.mxu0 %v1169
        %1186 = vmatpush.bf16.msra.mxu0 %v1168
        %1187 = vmatmul.bf16.gmra.mxu0 %v1177
        %v1188 = vpop.f32.mrf.mxu0
        %v1189 = vadd.f32 0.0, %v1188
        %v1190 = vpop.f32.mrf.mxu0
        %1191 = vdwg.mxu0
        %v1193 = vrot.slane %v1127, 3
        %v1202 = vunpack.c.l.b16 %v1128
        %v1203 = vunpack.c.l.b16 %v1129
        %v1204 = vunpack.c.l.b16 %v1130
        %v1205 = vunpack.c.l.b16 %v1131
        %v1206 = vunpack.c.l.b16 %v1132
        %v1207 = vunpack.c.l.b16 %v1133
        %v1208 = vunpack.c.l.b16 %v1134
        %v1209 = vunpack.c.l.b16 %v1135
        %v1210 = vpack.c.b16 %v1203, %v1202
        %v1211 = vpack.c.b16 %v1205, %v1204
        %v1212 = vpack.c.b16 %v1207, %v1206
        %v1213 = vpack.c.b16 %v1209, %v1208
        %v1219 = vsel %vm805, %v1193, 0
        %1221 = vmatpush.bf16.msra.mxu0 0
        %1222 = vmatpush.bf16.msra.mxu0 0
        %1223 = vmatpush.bf16.msra.mxu0 0
        %1224 = vmatpush.bf16.msra.mxu0 0
        %1225 = vmatpush.bf16.msra.mxu0 %v1213
        %1226 = vmatpush.bf16.msra.mxu0 %v1212
        %1227 = vmatpush.bf16.msra.mxu0 %v1211
        %1228 = vmatpush.bf16.msra.mxu0 %v1210
        %1229 = vmatmul.bf16.gmra.mxu0 %v1219
        %v1230 = vpop.f32.mrf.mxu0
        %v1231 = vadd.f32 %v1189, %v1230
        %v1232 = vpop.f32.mrf.mxu0
        %1233 = vdwg.mxu0
        %v1234 = vld [vmem:[#allocation2 + $0x4] sm:$0x1]
        %1236 = vset.pattern.permute.xlu0 0
        %1237 = vperm.xlu0 %1236, %v1052
        %v1238 = vpop.permute.xlu0 %1237
        %v1240 = vperm.slane %v1238, 0
        %v1241 = vunpack.c.l.bf16 %v1234
        %v1242 = vunpack.c.l.bf16 %v1240
        %v1243 = vmul.f32 %v1241, %v1242
        %v1244 = vpack.c.bf16 %v1243, %v1243
        %s1245 = scalar_lea.vmem %s10, 64
        %v1246 = vld [vmem:[%s1245] sm:$0xf]
        %v1247 = vld [vmem:[%s1245 + $0x4] sm:$0xf]
        %v1248 = vld [vmem:[%s1245 + $0x8] sm:$0xf]
        %v1249 = vld [vmem:[%s1245 + $0xc] sm:$0xf]
        %v1250 = vld [vmem:[%s1245 + $0x10] sm:$0xf]
        %v1251 = vld [vmem:[%s1245 + $0x14] sm:$0xf]
        %v1252 = vld [vmem:[%s1245 + $0x18] sm:$0xf]
        %v1253 = vld [vmem:[%s1245 + $0x1c] sm:$0xf]
        %v1262 = vunpack.c.l.b16 %v1246
        %v1263 = vunpack.c.l.b16 %v1247
        %v1264 = vunpack.c.l.b16 %v1248
        %v1265 = vunpack.c.l.b16 %v1249
        %v1266 = vunpack.c.l.b16 %v1250
        %v1267 = vunpack.c.l.b16 %v1251
        %v1268 = vunpack.c.l.b16 %v1252
        %v1269 = vunpack.c.l.b16 %v1253
        %v1270 = vpack.c.b16 %v1263, %v1262
        %v1271 = vpack.c.b16 %v1265, %v1264
        %v1272 = vpack.c.b16 %v1267, %v1266
        %v1273 = vpack.c.b16 %v1269, %v1268
        %v1279 = vsel %vm805, %v1244, 0
        %1281 = vmatpush.bf16.msra.mxu0 0
        %1282 = vmatpush.bf16.msra.mxu0 0
        %1283 = vmatpush.bf16.msra.mxu0 0
        %1284 = vmatpush.bf16.msra.mxu0 0
        %1285 = vmatpush.bf16.msra.mxu0 %v1273
        %1286 = vmatpush.bf16.msra.mxu0 %v1272
        %1287 = vmatpush.bf16.msra.mxu0 %v1271
        %1288 = vmatpush.bf16.msra.mxu0 %v1270
        %1289 = vmatmul.bf16.gmra.mxu0 %v1279
        %v1290 = vpop.f32.mrf.mxu0
        %v1291 = vadd.f32 0.0, %v1290
        %v1292 = vpop.f32.mrf.mxu0
        %1293 = vdwg.mxu0
        %v1294 = vadd.f32 %v1231, %v1291
        %s1295 = scalar_lea.vmem %s10, 96
        %v1296 = vld [vmem:[%s1295] sm:$0xf]
        %v1297 = vld [vmem:[%s1295 + $0x4] sm:$0xf]
        %v1298 = vld [vmem:[%s1295 + $0x8] sm:$0xf]
        %v1299 = vld [vmem:[%s1295 + $0xc] sm:$0xf]
        %v1300 = vld [vmem:[%s1295 + $0x10] sm:$0xf]
        %v1301 = vld [vmem:[%s1295 + $0x14] sm:$0xf]
        %v1302 = vld [vmem:[%s1295 + $0x18] sm:$0xf]
        %v1303 = vld [vmem:[%s1295 + $0x1c] sm:$0xf]
        %v1305 = vshrl.u32 %v1127, 16
        %v1307 = vrot.slane %v1305, 3
        %v1316 = vunpack.c.l.b16 %v1296
        %v1317 = vunpack.c.l.b16 %v1297
        %v1318 = vunpack.c.l.b16 %v1298
        %v1319 = vunpack.c.l.b16 %v1299
        %v1320 = vunpack.c.l.b16 %v1300
        %v1321 = vunpack.c.l.b16 %v1301
        %v1322 = vunpack.c.l.b16 %v1302
        %v1323 = vunpack.c.l.b16 %v1303
        %v1324 = vpack.c.b16 %v1317, %v1316
        %v1325 = vpack.c.b16 %v1319, %v1318
        %v1326 = vpack.c.b16 %v1321, %v1320
        %v1327 = vpack.c.b16 %v1323, %v1322
        %v1333 = vsel %vm805, %v1307, 0
        %1335 = vmatpush.bf16.msra.mxu0 0
        %1336 = vmatpush.bf16.msra.mxu0 0
        %1337 = vmatpush.bf16.msra.mxu0 0
        %1338 = vmatpush.bf16.msra.mxu0 0
        %1339 = vmatpush.bf16.msra.mxu0 %v1327
        %1340 = vmatpush.bf16.msra.mxu0 %v1326
        %1341 = vmatpush.bf16.msra.mxu0 %v1325
        %1342 = vmatpush.bf16.msra.mxu0 %v1324
        %1343 = vmatmul.bf16.gmra.mxu0 %v1333
        %v1344 = vpop.f32.mrf.mxu0
        %v1345 = vadd.f32 0.0, %v1344
        %v1346 = vpop.f32.mrf.mxu0
        %1347 = vdwg.mxu0
        %v1348 = vadd.f32 %v1294, %v1345
        %s1349 = scalar_lea.vmem %s10, 128
        %v1350 = vld [vmem:[%s1349] sm:$0xf]
        %v1351 = vld [vmem:[%s1349 + $0x4] sm:$0xf]
        %v1352 = vld [vmem:[%s1349 + $0x8] sm:$0xf]
        %v1353 = vld [vmem:[%s1349 + $0xc] sm:$0xf]
        %v1354 = vld [vmem:[%s1349 + $0x10] sm:$0xf]
        %v1355 = vld [vmem:[%s1349 + $0x14] sm:$0xf]
        %v1356 = vld [vmem:[%s1349 + $0x18] sm:$0xf]
        %v1357 = vld [vmem:[%s1349 + $0x1c] sm:$0xf]
        %v1366 = vunpack.c.l.b16 %v1350
        %v1367 = vunpack.c.l.b16 %v1351
        %v1368 = vunpack.c.l.b16 %v1352
        %v1369 = vunpack.c.l.b16 %v1353
        %v1370 = vunpack.c.l.b16 %v1354
        %v1371 = vunpack.c.l.b16 %v1355
        %v1372 = vunpack.c.l.b16 %v1356
        %v1373 = vunpack.c.l.b16 %v1357
        %v1374 = vpack.c.b16 %v1367, %v1366
        %v1375 = vpack.c.b16 %v1369, %v1368
        %v1376 = vpack.c.b16 %v1371, %v1370
        %v1377 = vpack.c.b16 %v1373, %v1372
        %v1383 = vsel %vm805, %v1234, 0
        %1385 = vmatpush.bf16.msra.mxu0 0
        %1386 = vmatpush.bf16.msra.mxu0 0
        %1387 = vmatpush.bf16.msra.mxu0 0
        %1388 = vmatpush.bf16.msra.mxu0 0
        %1389 = vmatpush.bf16.msra.mxu0 %v1377
        %1390 = vmatpush.bf16.msra.mxu0 %v1376
        %1391 = vmatpush.bf16.msra.mxu0 %v1375
        %1392 = vmatpush.bf16.msra.mxu0 %v1374
        %1393 = vmatmul.bf16.gmra.mxu0 %v1383
        %v1394 = vpop.f32.mrf.mxu0
        %v1395 = vadd.f32 0.0, %v1394
        %v1396 = vpop.f32.mrf.mxu0
        %1397 = vdwg.mxu0
        %v1398 = vadd.f32 %v1348, %v1395
        %v1400 = vperm.slane %v1242, 0
        %v1402 = vmul.f32 %v1241, %v1400
        %v1403 = vpack.c.bf16 %v1402, %v1402
        %s1404 = scalar_lea.vmem %s10, 160
        %v1405 = vld [vmem:[%s1404] sm:$0xf]
        %v1406 = vld [vmem:[%s1404 + $0x4] sm:$0xf]
        %v1407 = vld [vmem:[%s1404 + $0x8] sm:$0xf]
        %v1408 = vld [vmem:[%s1404 + $0xc] sm:$0xf]
        %v1409 = vld [vmem:[%s1404 + $0x10] sm:$0xf]
        %v1410 = vld [vmem:[%s1404 + $0x14] sm:$0xf]
        %v1411 = vld [vmem:[%s1404 + $0x18] sm:$0xf]
        %v1412 = vld [vmem:[%s1404 + $0x1c] sm:$0xf]
        %v1414 = vshrl.u32 %v1403, 16
        %v1424 = vunpack.c.l.b16 %v1405
        %v1425 = vunpack.c.l.b16 %v1406
        %v1426 = vunpack.c.l.b16 %v1407
        %v1427 = vunpack.c.l.b16 %v1408
        %v1428 = vunpack.c.l.b16 %v1409
        %v1429 = vunpack.c.l.b16 %v1410
        %v1430 = vunpack.c.l.b16 %v1411
        %v1431 = vunpack.c.l.b16 %v1412
        %v1432 = vpack.c.b16 %v1425, %v1424
        %v1433 = vpack.c.b16 %v1427, %v1426
        %v1434 = vpack.c.b16 %v1429, %v1428
        %v1435 = vpack.c.b16 %v1431, %v1430
        %v1441 = vsel %vm805, %v1414, 0
        %1443 = vmatpush.bf16.msra.mxu0 0
        %1444 = vmatpush.bf16.msra.mxu0 0
        %1445 = vmatpush.bf16.msra.mxu0 0
        %1446 = vmatpush.bf16.msra.mxu0 0
        %1447 = vmatpush.bf16.msra.mxu0 %v1435
        %1448 = vmatpush.bf16.msra.mxu0 %v1434
        %1449 = vmatpush.bf16.msra.mxu0 %v1433
        %1450 = vmatpush.bf16.msra.mxu0 %v1432
        %1451 = vmatmul.bf16.gmra.mxu0 %v1441
        %v1452 = vpop.f32.mrf.mxu0
        %v1453 = vadd.f32 0.0, %v1452
        %v1454 = vpop.f32.mrf.mxu0
        %1455 = vdwg.mxu0
        %v1456 = vadd.f32 %v1398, %v1453
        %v1457 = vmul.f32 %v1241, %v1122
        %v1458 = vpack.c.bf16 %v1457, %v1457
        %s1459 = scalar_lea.vmem %s10, 192
        %v1460 = vld [vmem:[%s1459] sm:$0xf]
        %v1461 = vld [vmem:[%s1459 + $0x4] sm:$0xf]
        %v1462 = vld [vmem:[%s1459 + $0x8] sm:$0xf]
        %v1463 = vld [vmem:[%s1459 + $0xc] sm:$0xf]
        %v1464 = vld [vmem:[%s1459 + $0x10] sm:$0xf]
        %v1465 = vld [vmem:[%s1459 + $0x14] sm:$0xf]
        %v1466 = vld [vmem:[%s1459 + $0x18] sm:$0xf]
        %v1467 = vld [vmem:[%s1459 + $0x1c] sm:$0xf]
        %v1476 = vunpack.c.l.b16 %v1460
        %v1477 = vunpack.c.l.b16 %v1461
        %v1478 = vunpack.c.l.b16 %v1462
        %v1479 = vunpack.c.l.b16 %v1463
        %v1480 = vunpack.c.l.b16 %v1464
        %v1481 = vunpack.c.l.b16 %v1465
        %v1482 = vunpack.c.l.b16 %v1466
        %v1483 = vunpack.c.l.b16 %v1467
        %v1484 = vpack.c.b16 %v1477, %v1476
        %v1485 = vpack.c.b16 %v1479, %v1478
        %v1486 = vpack.c.b16 %v1481, %v1480
        %v1487 = vpack.c.b16 %v1483, %v1482
        %v1493 = vsel %vm805, %v1458, 0
        %1495 = vmatpush.bf16.msra.mxu0 0
        %1496 = vmatpush.bf16.msra.mxu0 0
        %1497 = vmatpush.bf16.msra.mxu0 0
        %1498 = vmatpush.bf16.msra.mxu0 0
        %1499 = vmatpush.bf16.msra.mxu0 %v1487
        %1500 = vmatpush.bf16.msra.mxu0 %v1486
        %1501 = vmatpush.bf16.msra.mxu0 %v1485
        %1502 = vmatpush.bf16.msra.mxu0 %v1484
        %1503 = vmatmul.bf16.gmra.mxu0 %v1493
        %v1504 = vpop.f32.mrf.mxu0
        %v1505 = vadd.f32 0.0, %v1504
        %v1506 = vpop.f32.mrf.mxu0
        %1507 = vdwg.mxu0
        %v1508 = vadd.f32 %v1456, %v1505
        %s1509 = scalar_lea.vmem %s10, 224
        %v1510 = vld [vmem:[%s1509] sm:$0xf]
        %v1511 = vld [vmem:[%s1509 + $0x4] sm:$0xf]
        %v1512 = vld [vmem:[%s1509 + $0x8] sm:$0xf]
        %v1513 = vld [vmem:[%s1509 + $0xc] sm:$0xf]
        %v1514 = vld [vmem:[%s1509 + $0x10] sm:$0xf]
        %v1515 = vld [vmem:[%s1509 + $0x14] sm:$0xf]
        %v1516 = vld [vmem:[%s1509 + $0x18] sm:$0xf]
        %v1517 = vld [vmem:[%s1509 + $0x1c] sm:$0xf]
        %v1519 = vunpack.c.l.b16 %v1234
        %v1520 = vpack.c.b16 %v1519, %v1519
        %v1522 = vshrl.u32 %v1520, 16
        %v1532 = vunpack.c.l.b16 %v1510
        %v1533 = vunpack.c.l.b16 %v1511
        %v1534 = vunpack.c.l.b16 %v1512
        %v1535 = vunpack.c.l.b16 %v1513
        %v1536 = vunpack.c.l.b16 %v1514
        %v1537 = vunpack.c.l.b16 %v1515
        %v1538 = vunpack.c.l.b16 %v1516
        %v1539 = vunpack.c.l.b16 %v1517
        %v1540 = vpack.c.b16 %v1533, %v1532
        %v1541 = vpack.c.b16 %v1535, %v1534
        %v1542 = vpack.c.b16 %v1537, %v1536
        %v1543 = vpack.c.b16 %v1539, %v1538
        %v1549 = vsel %vm805, %v1522, 0
        %1551 = vmatpush.bf16.msra.mxu0 0
        %1552 = vmatpush.bf16.msra.mxu0 0
        %1553 = vmatpush.bf16.msra.mxu0 0
        %1554 = vmatpush.bf16.msra.mxu0 0
        %1555 = vmatpush.bf16.msra.mxu0 %v1543
        %1556 = vmatpush.bf16.msra.mxu0 %v1542
        %1557 = vmatpush.bf16.msra.mxu0 %v1541
        %1558 = vmatpush.bf16.msra.mxu0 %v1540
        %1559 = vmatmul.bf16.gmra.mxu0 %v1549
        %v1560 = vpop.f32.mrf.mxu0
        %v1561 = vadd.f32 0.0, %v1560
        %v1562 = vpop.f32.mrf.mxu0
        %1563 = vdwg.mxu0
        %v1564 = vadd.f32 %v1508, %v1561
        %v1565 = vld [vmem:[#allocation2 + $0x4] sm:$0x2]
        %v1566 = vunpack.c.l.bf16 %v1565
        %v1567 = vmul.f32 %v1566, %v1400
        %v1568 = vpack.c.bf16 %v1567, %v1567
        %s1569 = scalar_lea.vmem %s10, 256
        %v1570 = vld [vmem:[%s1569] sm:$0xf]
        %v1571 = vld [vmem:[%s1569 + $0x4] sm:$0xf]
        %v1572 = vld [vmem:[%s1569 + $0x8] sm:$0xf]
        %v1573 = vld [vmem:[%s1569 + $0xc] sm:$0xf]
        %v1574 = vld [vmem:[%s1569 + $0x10] sm:$0xf]
        %v1575 = vld [vmem:[%s1569 + $0x14] sm:$0xf]
        %v1576 = vld [vmem:[%s1569 + $0x18] sm:$0xf]
        %v1577 = vld [vmem:[%s1569 + $0x1c] sm:$0xf]
        %v1579 = vrot.slane %v1568, 1
        %v1588 = vunpack.c.l.b16 %v1570
        %v1589 = vunpack.c.l.b16 %v1571
        %v1590 = vunpack.c.l.b16 %v1572
        %v1591 = vunpack.c.l.b16 %v1573
        %v1592 = vunpack.c.l.b16 %v1574
        %v1593 = vunpack.c.l.b16 %v1575
        %v1594 = vunpack.c.l.b16 %v1576
        %v1595 = vunpack.c.l.b16 %v1577
        %v1596 = vpack.c.b16 %v1589, %v1588
        %v1597 = vpack.c.b16 %v1591, %v1590
        %v1598 = vpack.c.b16 %v1593, %v1592
        %v1599 = vpack.c.b16 %v1595, %v1594
        %v1605 = vsel %vm805, %v1579, 0
        %1607 = vmatpush.bf16.msra.mxu0 0
        %1608 = vmatpush.bf16.msra.mxu0 0
        %1609 = vmatpush.bf16.msra.mxu0 0
        %1610 = vmatpush.bf16.msra.mxu0 0
        %1611 = vmatpush.bf16.msra.mxu0 %v1599
        %1612 = vmatpush.bf16.msra.mxu0 %v1598
        %1613 = vmatpush.bf16.msra.mxu0 %v1597
        %1614 = vmatpush.bf16.msra.mxu0 %v1596
        %1615 = vmatmul.bf16.gmra.mxu0 %v1605
        %v1616 = vpop.f32.mrf.mxu0
        %v1617 = vadd.f32 0.0, %v1616
        %v1618 = vpop.f32.mrf.mxu0
        %1619 = vdwg.mxu0
        %v1620 = vadd.f32 %v1564, %v1617
        %v1621 = vld [vmem:[%s11] sm:$0x1]
        %v1622 = vadd.f32 %v1620, %v1621
        %v1623 = vmul.f32 %v1622, 0.5
        %v1624 = vtanh.pop %v1623
        %v1625 = vadd.f32 %v1624, 1.0
        %v1626 = vmul.f32 %v1623, %v1625
        %v1627 = vadd.f32 %v959, %v1626
        %v1628 = vpack.c.bf16 %v1627, %v1627
        %v1629 = vld [vmem:[%s12] sm:$0xf]
        %v1630 = vld [vmem:[%s12 + $0x4] sm:$0xf]
        %v1631 = vld [vmem:[%s12 + $0x8] sm:$0xf]
        %v1632 = vld [vmem:[%s12 + $0xc] sm:$0xf]
        %v1633 = vld [vmem:[%s12 + $0x10] sm:$0xf]
        %v1634 = vld [vmem:[%s12 + $0x14] sm:$0xf]
        %v1635 = vld [vmem:[%s12 + $0x18] sm:$0xf]
        %v1636 = vld [vmem:[%s12 + $0x1c] sm:$0xf]
        %v1637 = vpack.c.bf16 %v1041, %v1041
        %v1638 = vld [vmem:[%s13] sm:$0xf]
        %v1639 = vld [vmem:[%s13 + $0x4] sm:$0xf]
        %v1640 = vld [vmem:[%s13 + $0x8] sm:$0xf]
        %v1641 = vld [vmem:[%s13 + $0xc] sm:$0xf]
        %v1642 = vld [vmem:[%s13 + $0x10] sm:$0xf]
        %v1643 = vld [vmem:[%s13 + $0x14] sm:$0xf]
        %v1644 = vld [vmem:[%s13 + $0x18] sm:$0xf]
        %v1645 = vld [vmem:[%s13 + $0x1c] sm:$0xf]
        %v1654 = vunpack.c.l.b16 %v1638
        %v1655 = vunpack.c.l.b16 %v1639
        %v1656 = vunpack.c.l.b16 %v1640
        %v1657 = vunpack.c.l.b16 %v1641
        %v1658 = vunpack.c.l.b16 %v1642
        %v1659 = vunpack.c.l.b16 %v1643
        %v1660 = vunpack.c.l.b16 %v1644
        %v1661 = vunpack.c.l.b16 %v1645
        %v1662 = vpack.c.b16 %v1655, %v1654
        %v1663 = vpack.c.b16 %v1657, %v1656
        %v1664 = vpack.c.b16 %v1659, %v1658
        %v1665 = vpack.c.b16 %v1661, %v1660
        %v1671 = vsel %vm805, %v1637, 0
        %1673 = vmatpush.bf16.msra.mxu0 0
        %1674 = vmatpush.bf16.msra.mxu0 0
        %1675 = vmatpush.bf16.msra.mxu0 0
        %1676 = vmatpush.bf16.msra.mxu0 0
        %1677 = vmatpush.bf16.msra.mxu0 %v1665
        %1678 = vmatpush.bf16.msra.mxu0 %v1664
        %1679 = vmatpush.bf16.msra.mxu0 %v1663
        %1680 = vmatpush.bf16.msra.mxu0 %v1662
        %1681 = vmatmul.bf16.gmra.mxu0 %v1671
        %v1682 = vpop.f32.mrf.mxu0
        %v1683 = vadd.f32 0.0, %v1682
        %v1684 = vpop.f32.mrf.mxu0
        %1685 = vdwg.mxu0
        %v1694 = vunpack.c.l.b16 %v1629
        %v1695 = vunpack.c.l.b16 %v1630
        %v1696 = vunpack.c.l.b16 %v1631
        %v1697 = vunpack.c.l.b16 %v1632
        %v1698 = vunpack.c.l.b16 %v1633
        %v1699 = vunpack.c.l.b16 %v1634
        %v1700 = vunpack.c.l.b16 %v1635
        %v1701 = vunpack.c.l.b16 %v1636
        %v1702 = vpack.c.b16 %v1695, %v1694
        %v1703 = vpack.c.b16 %v1697, %v1696
        %v1704 = vpack.c.b16 %v1699, %v1698
        %v1705 = vpack.c.b16 %v1701, %v1700
        %v1711 = vsel %vm805, %v1628, 0
        %1713 = vmatpush.bf16.msra.mxu0 0
        %1714 = vmatpush.bf16.msra.mxu0 0
        %1715 = vmatpush.bf16.msra.mxu0 0
        %1716 = vmatpush.bf16.msra.mxu0 0
        %1717 = vmatpush.bf16.msra.mxu0 %v1705
        %1718 = vmatpush.bf16.msra.mxu0 %v1704
        %1719 = vmatpush.bf16.msra.mxu0 %v1703
        %1720 = vmatpush.bf16.msra.mxu0 %v1702
        %1721 = vmatmul.bf16.gmra.mxu0 %v1711
        %v1722 = vpop.f32.mrf.mxu0
        %v1723 = vadd.f32 %v1683, %v1722
        %v1724 = vpop.f32.mrf.mxu0
        %1725 = vdwg.mxu0
        %v1726 = vld [vmem:[#allocation3] sm:$0x1]
        %v1727 = vadd.f32 %v1723, %v1726
        %v1728 = vmul.f32 %v1727, 0.5
        %v1729 = vtanh.pop %v1728
        %v1730 = vadd.f32 %v1729, 1.0
        %v1731 = vmul.f32 %v1728, %v1730
        %v1732 = vpack.c.bf16 %v1731, %v1731
        %vm1733 = vcmask 1040384
        %vm1734 = vmand %vm1733, %vm1109
        %v1735 = vld [vmem:[%s502] sm:$0x1]
        %v1736 = vsel %vm1734, %v1732, %v1735
        %1737 = vst [vmem:[%s502] sm:$0x1] %v1736
        %p1738 = scmp.lt.s32.totalorder %s27, 1
        %s1739 = scalar_select %p1738, %s27, 1
        %s1740 = scalar_lea.vmem %s15, %s1739
        // Predicated region
        $region85: #{_lambda_.9} parent=79 // pred_check
          %p1741 = pneg %p365
        $region86: #{_lambda_.9} parent=79 // pred_check_branch
          %1743 = sbr.rel (%p1741) target = $region88
        $region87: #{_lambda_.9} parent=79 // pred_region
          _
        $region88: #{_lambda_.9} parent=79 // pred_fallthru
          _
      $region80: #{_lambda_.9} parent=5 // pred_fallthru
        _
      %p1744 = scmp.le.s32.totalorder 2, %s22
      // Predicated region
      $region89: #{_lambda_.9} parent=5 // pred_check
        %p1745 = pneg %p1744
      $region90: #{_lambda_.9} parent=5 // pred_check_branch
        %1747 = sbr.rel (%p1745) target = $region92
      $region91: #{_lambda_.9} parent=5 // pred_region
        %s1748 = ssub.s32 %s22, 2
        // Predicated region
        $region93: #{_lambda_.9} parent=91 // pred_check
          %p1749 = pneg %p371
        $region94: #{_lambda_.9} parent=91 // pred_check_branch
          %1751 = sbr.rel (%p1749) target = $region96
        $region95: #{_lambda_.9} parent=91 // pred_region
          %p1752 = scmp.lt.s32.totalorder %s28, 1
          %s1753 = scalar_select %p1752, %s28, 1
          %s1754 = scalar_lea.vmem %s15, %s1753
        $region96: #{_lambda_.9} parent=91 // pred_fallthru
          _
      $region92: #{_lambda_.9} parent=5 // pred_fallthru
        _
    $region6: #{_lambda_.9} parent=1 // loop_footer
      %s26 = sadd.s32 1, %s22
    $region7: #{_lambda_.9} parent=1 // loop_footer_branch
      %21 = sbr.rel target = $region3
    $region8: #{_lambda_.9} parent=1 // loop_exit
      _
    %1755 = vsyncpa [#allocation4], 1
    %s1756 = scalar_lea.sflag [#allocation4], 1
    %1757 = vsyncpa %s1756, 1

// kernel: _lambda_.8
$region0: #{_lambda_.8}
  #allocation0 [shape = 'u32[]', space=smem, size = 0x4, offset = 0x4, fixed_abs, tag = 'smem constant byte address 0x4 - core index']
  #allocation1 [shape = 'u32[72,128]{1,0:T(1,128)}', space=vmem, size = 0x9000, scoped, tag = 'internal scratch']
  #allocation2 [shape = 'bf16[16,32]{1,0:T(8,128)(2,1)}', space=vmem, size = 0x1000, scoped, tag = 'scratch operand']
  %s0 = inlined_call_operand.vmem [shape: bf16[2,4,288], index: 0, kind: input, shape index: {}]
  %s1 = inlined_call_operand.vmem [shape: bf16[2,4,1], index: 1, kind: input, shape index: {}]
  %s2 = inlined_call_operand.vmem [shape: bf16[288,64], index: 2, kind: input, shape index: {}]
  %s3 = inlined_call_operand.hbm [shape: f32[1,64], index: 3, kind: input, shape index: {}]
  %s4 = inlined_call_operand.vmem [shape: bf16[64,32], index: 4, kind: input, shape index: {}]
  %s5 = inlined_call_operand.hbm [shape: f32[1,32], index: 5, kind: input, shape index: {}]
  %s6 = inlined_call_operand.vmem [shape: bf16[64,32], index: 6, kind: input, shape index: {}]
  %s7 = inlined_call_operand.hbm [shape: f32[1,32], index: 7, kind: input, shape index: {}]
  %s8 = inlined_call_operand.vmem [shape: bf16[3,32,32], index: 8, kind: input, shape index: {}]
  %s9 = inlined_call_operand.vmem [shape: f32[3,1,32], index: 9, kind: input, shape index: {}]
  %s10 = inlined_call_operand.vmem [shape: bf16[27,32,32], index: 10, kind: input, shape index: {}]
  %s11 = inlined_call_operand.vmem [shape: f32[3,1,32], index: 11, kind: input, shape index: {}]
  %s12 = inlined_call_operand.vmem [shape: bf16[32,64], index: 12, kind: input, shape index: {}]
  %s13 = inlined_call_operand.vmem [shape: bf16[32,64], index: 13, kind: input, shape index: {}]
  %s14 = inlined_call_operand.hbm [shape: f32[1,64], index: 14, kind: input, shape index: {}]
  %s15 = inlined_call_operand.vmem [shape: bf16[2,4,64], index: 15, kind: output, shape index: {}]
  %s16 = sld [smem:[#allocation0]]
  $region109: #{_lambda_.8} parent=0
    _
  %s18 = ssub.s32 1, %s16
  %s19 = scalar_select 0, %s18, %s16
  $region1: #{_lambda_.8} parent=0
    #allocation3 [shape = 'u8[512]{0}', space=vmem, size = 0x400, scoped, tag = 'input window, operand 3, single buffered']
    #allocation4 [shape = 's32[2]{0}', space=sflag, size = 0x8, scoped, tag = 'scoped memory for _lambda_.8']
    #allocation5 [shape = 'u8[512]{0}', space=vmem, size = 0x400, scoped, tag = 'input window, operand 5, single buffered']
    #allocation6 [shape = 's32[1]{0}', space=sflag, size = 0x4, scoped, tag = 'scoped memory for _lambda_.8']
    #allocation7 [shape = 'u8[512]{0}', space=vmem, size = 0x400, scoped, tag = 'input window, operand 7, single buffered']
    #allocation8 [shape = 'u8[512]{0}', space=vmem, size = 0x400, scoped, tag = 'input window, operand 14, single buffered']
    #allocation9 [shape = 's32[1]{0}', space=sflag, size = 0x4, scoped, tag = 'scoped memory for _lambda_.8']
    %20 = vsyncpa [#allocation4], 0
    %21 = vsyncpa [#allocation6], 0
    %22 = vsyncpa [#allocation9], 0
    loop: start=0, step=1, limit=4
    $region2: #{_lambda_.8} parent=1 // loop_pre_header
      _
    $region3: #{_lambda_.8} parent=1 // loop_header
      %s24 = sphi 0, %s28
      %p25 = scmp.ge.s32.totalorder %s24, 4
      %s34 = sphi 0, %s36
      %s37 = sphi 0, %s34
      %s38 = sphi 0, %s37
      %s54 = sphi 0, %s38
      %s58 = sphi 0, %s58
      %s60 = sphi 0, %s58
      %s61 = sphi 0, %s60
      %s75 = sphi 0, %s61
      %s79 = sphi 0, %s79
      %s81 = sphi 0, %s79
      %s82 = sphi 0, %s81
      %s96 = sphi 0, %s82
      %s100 = sphi 0, %s100
      %s102 = sphi 0, %s100
      %s103 = sphi 0, %s102
      %s117 = sphi 0, %s103
      %s121 = sphi 0, %s121
      %s123 = sphi 0, %s121
      %s124 = sphi 0, %s123
      %s138 = sphi 0, %s124
      %s142 = sphi 0, %s142
      %s144 = sphi 0, %s142
      %s145 = sphi 0, %s144
      %s159 = sphi 0, %s145
      %s163 = sphi 0, %s163
      %s165 = sphi 0, %s163
      %s166 = sphi 0, %s165
      %s180 = sphi 0, %s166
      %s184 = sphi 0, %s184
      %s186 = sphi 0, %s184
      %s187 = sphi 0, %s186
      %s201 = sphi 0, %s187
      %s205 = sphi 0, %s205
      %s207 = sphi 0, %s205
      %s208 = sphi 0, %s207
      %s222 = sphi 0, %s208
      %s226 = sphi 0, %s226
      %s228 = sphi 0, %s226
      %s229 = sphi 0, %s228
      %s243 = sphi 0, %s229
      %s247 = sphi 0, %s247
      %s249 = sphi 0, %s247
      %s250 = sphi 0, %s249
      %s264 = sphi 0, %s250
      %s268 = sphi 0, %s268
      %s270 = sphi 0, %s268
      %s271 = sphi 0, %s270
      %s285 = sphi 0, %s271
      %s289 = sphi 0, %s289
      %s291 = sphi 0, %s289
      %s292 = sphi 0, %s291
      %s306 = sphi 0, %s292
      %s310 = sphi 0, %s310
      %s312 = sphi 0, %s310
      %s313 = sphi 0, %s312
      %s327 = sphi 0, %s313
      %s331 = sphi 0, %s331
      %s333 = sphi 0, %s331
      %s334 = sphi 0, %s333
      %s348 = sphi 0, %s334
      %s354 = sphi 0, %s356
      %s357 = sphi 0, %s354
      %s358 = sphi 0, %s357
      %s374 = sphi 0, %s358
    $region4: #{_lambda_.8} parent=1 // loop_header_branch
      %27 = sbr.rel (%p25) target = $region8
    $region5: #{_lambda_.8} parent=1 // loop_body
      %s29 = ssub.s32 %s24, 1
      %s30 = ssub.s32 %s24, 2
      %s31 = sadd.s32 %s24, 1
      %s32 = ssub.s32 %s24, %s31
      %p33 = scmp.eq.s32.totalorder %s32, 0
      %s35 = sadd.s32 %s34, 1
      %s36 = scalar_select %p33, %s34, %s35
      %p39 = pneg %p33
      %p40 = scmp.eq.s32.totalorder %s24, 1
      %p41 = por %p39, %p40
      %p42 = scmp.ne.s32.totalorder %s34, %s37
      %p43 = scmp.eq.s32.totalorder %s24, 0
      %p44 = por %p42, %p43
      %p45 = scmp.ne.s32.totalorder %s34, %s37
      %p46 = scmp.eq.s32.totalorder %s29, 1
      %p47 = por %p45, %p46
      %p48 = scmp.ne.s32.totalorder %s37, %s38
      %p49 = scmp.eq.s32.totalorder %s29, 0
      %p50 = por %p48, %p49
      %p51 = scmp.ne.s32.totalorder %s37, %s38
      %p52 = scmp.eq.s32.totalorder %s30, 1
      %p53 = por %p51, %p52
      %p55 = scmp.ne.s32.totalorder %s38, %s54
      %p56 = scmp.eq.s32.totalorder %s30, 0
      %p57 = por %p55, %p56
      %s59 = sadd.s32 %s58, 1
      %p62 = scmp.eq.s32.totalorder %s24, 1
      %p63 = scmp.ne.s32.totalorder %s58, %s60
      %p64 = scmp.eq.s32.totalorder %s24, 0
      %p65 = por %p63, %p64
      %p66 = scmp.ne.s32.totalorder %s58, %s60
      %p67 = scmp.eq.s32.totalorder %s29, 1
      %p68 = por %p66, %p67
      %p69 = scmp.ne.s32.totalorder %s60, %s61
      %p70 = scmp.eq.s32.totalorder %s29, 0
      %p71 = por %p69, %p70
      %p72 = scmp.ne.s32.totalorder %s60, %s61
      %p73 = scmp.eq.s32.totalorder %s30, 1
      %p74 = por %p72, %p73
      %p76 = scmp.ne.s32.totalorder %s61, %s75
      %p77 = scmp.eq.s32.totalorder %s30, 0
      %p78 = por %p76, %p77
      %s80 = sadd.s32 %s79, 1
      %p83 = scmp.eq.s32.totalorder %s24, 1
      %p84 = scmp.ne.s32.totalorder %s79, %s81
      %p85 = scmp.eq.s32.totalorder %s24, 0
      %p86 = por %p84, %p85
      %p87 = scmp.ne.s32.totalorder %s79, %s81
      %p88 = scmp.eq.s32.totalorder %s29, 1
      %p89 = por %p87, %p88
      %p90 = scmp.ne.s32.totalorder %s81, %s82
      %p91 = scmp.eq.s32.totalorder %s29, 0
      %p92 = por %p90, %p91
      %p93 = scmp.ne.s32.totalorder %s81, %s82
      %p94 = scmp.eq.s32.totalorder %s30, 1
      %p95 = por %p93, %p94
      %p97 = scmp.ne.s32.totalorder %s82, %s96
      %p98 = scmp.eq.s32.totalorder %s30, 0
      %p99 = por %p97, %p98
      %s101 = sadd.s32 %s100, 1
      %p104 = scmp.eq.s32.totalorder %s24, 1
      %p105 = scmp.ne.s32.totalorder %s100, %s102
      %p106 = scmp.eq.s32.totalorder %s24, 0
      %p107 = por %p105, %p106
      %p108 = scmp.ne.s32.totalorder %s100, %s102
      %p109 = scmp.eq.s32.totalorder %s29, 1
      %p110 = por %p108, %p109
      %p111 = scmp.ne.s32.totalorder %s102, %s103
      %p112 = scmp.eq.s32.totalorder %s29, 0
      %p113 = por %p111, %p112
      %p114 = scmp.ne.s32.totalorder %s102, %s103
      %p115 = scmp.eq.s32.totalorder %s30, 1
      %p116 = por %p114, %p115
      %p118 = scmp.ne.s32.totalorder %s103, %s117
      %p119 = scmp.eq.s32.totalorder %s30, 0
      %p120 = por %p118, %p119
      %s122 = sadd.s32 %s121, 1
      %p125 = scmp.eq.s32.totalorder %s24, 1
      %p126 = scmp.ne.s32.totalorder %s121, %s123
      %p127 = scmp.eq.s32.totalorder %s24, 0
      %p128 = por %p126, %p127
      %p129 = scmp.ne.s32.totalorder %s121, %s123
      %p130 = scmp.eq.s32.totalorder %s29, 1
      %p131 = por %p129, %p130
      %p132 = scmp.ne.s32.totalorder %s123, %s124
      %p133 = scmp.eq.s32.totalorder %s29, 0
      %p134 = por %p132, %p133
      %p135 = scmp.ne.s32.totalorder %s123, %s124
      %p136 = scmp.eq.s32.totalorder %s30, 1
      %p137 = por %p135, %p136
      %p139 = scmp.ne.s32.totalorder %s124, %s138
      %p140 = scmp.eq.s32.totalorder %s30, 0
      %p141 = por %p139, %p140
      %s143 = sadd.s32 %s142, 1
      %p146 = scmp.eq.s32.totalorder %s24, 1
      %p147 = scmp.ne.s32.totalorder %s142, %s144
      %p148 = scmp.eq.s32.totalorder %s24, 0
      %p149 = por %p147, %p148
      %p150 = scmp.ne.s32.totalorder %s142, %s144
      %p151 = scmp.eq.s32.totalorder %s29, 1
      %p152 = por %p150, %p151
      %p153 = scmp.ne.s32.totalorder %s144, %s145
      %p154 = scmp.eq.s32.totalorder %s29, 0
      %p155 = por %p153, %p154
      %p156 = scmp.ne.s32.totalorder %s144, %s145
      %p157 = scmp.eq.s32.totalorder %s30, 1
      %p158 = por %p156, %p157
      %p160 = scmp.ne.s32.totalorder %s145, %s159
      %p161 = scmp.eq.s32.totalorder %s30, 0
      %p162 = por %p160, %p161
      %s164 = sadd.s32 %s163, 1
      %p167 = scmp.eq.s32.totalorder %s24, 1
      %p168 = scmp.ne.s32.totalorder %s163, %s165
      %p169 = scmp.eq.s32.totalorder %s24, 0
      %p170 = por %p168, %p169
      %p171 = scmp.ne.s32.totalorder %s163, %s165
      %p172 = scmp.eq.s32.totalorder %s29, 1
      %p173 = por %p171, %p172
      %p174 = scmp.ne.s32.totalorder %s165, %s166
      %p175 = scmp.eq.s32.totalorder %s29, 0
      %p176 = por %p174, %p175
      %p177 = scmp.ne.s32.totalorder %s165, %s166
      %p178 = scmp.eq.s32.totalorder %s30, 1
      %p179 = por %p177, %p178
      %p181 = scmp.ne.s32.totalorder %s166, %s180
      %p182 = scmp.eq.s32.totalorder %s30, 0
      %p183 = por %p181, %p182
      %s185 = sadd.s32 %s184, 1
      %p188 = scmp.eq.s32.totalorder %s24, 1
      %p189 = scmp.ne.s32.totalorder %s184, %s186
      %p190 = scmp.eq.s32.totalorder %s24, 0
      %p191 = por %p189, %p190
      %p192 = scmp.ne.s32.totalorder %s184, %s186
      %p193 = scmp.eq.s32.totalorder %s29, 1
      %p194 = por %p192, %p193
      %p195 = scmp.ne.s32.totalorder %s186, %s187
      %p196 = scmp.eq.s32.totalorder %s29, 0
      %p197 = por %p195, %p196
      %p198 = scmp.ne.s32.totalorder %s186, %s187
      %p199 = scmp.eq.s32.totalorder %s30, 1
      %p200 = por %p198, %p199
      %p202 = scmp.ne.s32.totalorder %s187, %s201
      %p203 = scmp.eq.s32.totalorder %s30, 0
      %p204 = por %p202, %p203
      %s206 = sadd.s32 %s205, 1
      %p209 = scmp.eq.s32.totalorder %s24, 1
      %p210 = scmp.ne.s32.totalorder %s205, %s207
      %p211 = scmp.eq.s32.totalorder %s24, 0
      %p212 = por %p210, %p211
      %p213 = scmp.ne.s32.totalorder %s205, %s207
      %p214 = scmp.eq.s32.totalorder %s29, 1
      %p215 = por %p213, %p214
      %p216 = scmp.ne.s32.totalorder %s207, %s208
      %p217 = scmp.eq.s32.totalorder %s29, 0
      %p218 = por %p216, %p217
      %p219 = scmp.ne.s32.totalorder %s207, %s208
      %p220 = scmp.eq.s32.totalorder %s30, 1
      %p221 = por %p219, %p220
      %p223 = scmp.ne.s32.totalorder %s208, %s222
      %p224 = scmp.eq.s32.totalorder %s30, 0
      %p225 = por %p223, %p224
      %s227 = sadd.s32 %s226, 1
      %p230 = scmp.eq.s32.totalorder %s24, 1
      %p231 = scmp.ne.s32.totalorder %s226, %s228
      %p232 = scmp.eq.s32.totalorder %s24, 0
      %p233 = por %p231, %p232
      %p234 = scmp.ne.s32.totalorder %s226, %s228
      %p235 = scmp.eq.s32.totalorder %s29, 1
      %p236 = por %p234, %p235
      %p237 = scmp.ne.s32.totalorder %s228, %s229
      %p238 = scmp.eq.s32.totalorder %s29, 0
      %p239 = por %p237, %p238
      %p240 = scmp.ne.s32.totalorder %s228, %s229
      %p241 = scmp.eq.s32.totalorder %s30, 1
      %p242 = por %p240, %p241
      %p244 = scmp.ne.s32.totalorder %s229, %s243
      %p245 = scmp.eq.s32.totalorder %s30, 0
      %p246 = por %p244, %p245
      %s248 = sadd.s32 %s247, 1
      %p251 = scmp.eq.s32.totalorder %s24, 1
      %p252 = scmp.ne.s32.totalorder %s247, %s249
      %p253 = scmp.eq.s32.totalorder %s24, 0
      %p254 = por %p252, %p253
      %p255 = scmp.ne.s32.totalorder %s247, %s249
      %p256 = scmp.eq.s32.totalorder %s29, 1
      %p257 = por %p255, %p256
      %p258 = scmp.ne.s32.totalorder %s249, %s250
      %p259 = scmp.eq.s32.totalorder %s29, 0
      %p260 = por %p258, %p259
      %p261 = scmp.ne.s32.totalorder %s249, %s250
      %p262 = scmp.eq.s32.totalorder %s30, 1
      %p263 = por %p261, %p262
      %p265 = scmp.ne.s32.totalorder %s250, %s264
      %p266 = scmp.eq.s32.totalorder %s30, 0
      %p267 = por %p265, %p266
      %s269 = sadd.s32 %s268, 1
      %p272 = scmp.eq.s32.totalorder %s24, 1
      %p273 = scmp.ne.s32.totalorder %s268, %s270
      %p274 = scmp.eq.s32.totalorder %s24, 0
      %p275 = por %p273, %p274
      %p276 = scmp.ne.s32.totalorder %s268, %s270
      %p277 = scmp.eq.s32.totalorder %s29, 1
      %p278 = por %p276, %p277
      %p279 = scmp.ne.s32.totalorder %s270, %s271
      %p280 = scmp.eq.s32.totalorder %s29, 0
      %p281 = por %p279, %p280
      %p282 = scmp.ne.s32.totalorder %s270, %s271
      %p283 = scmp.eq.s32.totalorder %s30, 1
      %p284 = por %p282, %p283
      %p286 = scmp.ne.s32.totalorder %s271, %s285
      %p287 = scmp.eq.s32.totalorder %s30, 0
      %p288 = por %p286, %p287
      %s290 = sadd.s32 %s289, 1
      %p293 = scmp.eq.s32.totalorder %s24, 1
      %p294 = scmp.ne.s32.totalorder %s289, %s291
      %p295 = scmp.eq.s32.totalorder %s24, 0
      %p296 = por %p294, %p295
      %p297 = scmp.ne.s32.totalorder %s289, %s291
      %p298 = scmp.eq.s32.totalorder %s29, 1
      %p299 = por %p297, %p298
      %p300 = scmp.ne.s32.totalorder %s291, %s292
      %p301 = scmp.eq.s32.totalorder %s29, 0
      %p302 = por %p300, %p301
      %p303 = scmp.ne.s32.totalorder %s291, %s292
      %p304 = scmp.eq.s32.totalorder %s30, 1
      %p305 = por %p303, %p304
      %p307 = scmp.ne.s32.totalorder %s292, %s306
      %p308 = scmp.eq.s32.totalorder %s30, 0
      %p309 = por %p307, %p308
      %s311 = sadd.s32 %s310, 1
      %p314 = scmp.eq.s32.totalorder %s24, 1
      %p315 = scmp.ne.s32.totalorder %s310, %s312
      %p316 = scmp.eq.s32.totalorder %s24, 0
      %p317 = por %p315, %p316
      %p318 = scmp.ne.s32.totalorder %s310, %s312
      %p319 = scmp.eq.s32.totalorder %s29, 1
      %p320 = por %p318, %p319
      %p321 = scmp.ne.s32.totalorder %s312, %s313
      %p322 = scmp.eq.s32.totalorder %s29, 0
      %p323 = por %p321, %p322
      %p324 = scmp.ne.s32.totalorder %s312, %s313
      %p325 = scmp.eq.s32.totalorder %s30, 1
      %p326 = por %p324, %p325
      %p328 = scmp.ne.s32.totalorder %s313, %s327
      %p329 = scmp.eq.s32.totalorder %s30, 0
      %p330 = por %p328, %p329
      %s332 = sadd.s32 %s331, 1
      %p335 = scmp.eq.s32.totalorder %s24, 1
      %p336 = scmp.ne.s32.totalorder %s331, %s333
      %p337 = scmp.eq.s32.totalorder %s24, 0
      %p338 = por %p336, %p337
      %p339 = scmp.ne.s32.totalorder %s331, %s333
      %p340 = scmp.eq.s32.totalorder %s29, 1
      %p341 = por %p339, %p340
      %p342 = scmp.ne.s32.totalorder %s333, %s334
      %p343 = scmp.eq.s32.totalorder %s29, 0
      %p344 = por %p342, %p343
      %p345 = scmp.ne.s32.totalorder %s333, %s334
      %p346 = scmp.eq.s32.totalorder %s30, 1
      %p347 = por %p345, %p346
      %p349 = scmp.ne.s32.totalorder %s334, %s348
      %p350 = scmp.eq.s32.totalorder %s30, 0
      %p351 = por %p349, %p350
      %s352 = ssub.s32 %s24, %s31
      %p353 = scmp.eq.s32.totalorder %s352, 0
      %s355 = sadd.s32 %s354, 1
      %s356 = scalar_select %p353, %s354, %s355
      %p359 = pneg %p353
      %p360 = scmp.eq.s32.totalorder %s24, 1
      %p361 = por %p359, %p360
      %p362 = scmp.ne.s32.totalorder %s354, %s357
      %p363 = scmp.eq.s32.totalorder %s24, 0
      %p364 = por %p362, %p363
      %p365 = scmp.ne.s32.totalorder %s354, %s357
      %p366 = scmp.eq.s32.totalorder %s29, 1
      %p367 = por %p365, %p366
      %p368 = scmp.ne.s32.totalorder %s357, %s358
      %p369 = scmp.eq.s32.totalorder %s29, 0
      %p370 = por %p368, %p369
      %p371 = scmp.ne.s32.totalorder %s357, %s358
      %p372 = scmp.eq.s32.totalorder %s30, 1
      %p373 = por %p371, %p372
      %p375 = scmp.ne.s32.totalorder %s358, %s374
      %p376 = scmp.eq.s32.totalorder %s30, 0
      %p377 = por %p375, %p376
      %p378 = scmp.le.s32.totalorder 1, %s24
      %p379 = scmp.lt.s32.totalorder %s24, 3
      %p380 = pnand %p378, %p379
      %p381 = pneg %p380
      // Predicated region
      $region9: #{_lambda_.8} parent=5 // pred_check
        _
      $region10: #{_lambda_.8} parent=5 // pred_check_branch
        %383 = sbr.rel (%p380) target = $region12
      $region11: #{_lambda_.8} parent=5 // pred_region
        %s384 = ssub.s32 %s24, 1
        // Predicated region
        $region13: #{_lambda_.8} parent=11 // pred_check
          %p385 = pneg %p71
        $region14: #{_lambda_.8} parent=11 // pred_check_branch
          %387 = sbr.rel (%p385) target = $region16
        $region15: #{_lambda_.8} parent=11 // pred_region
          _
        $region16: #{_lambda_.8} parent=11 // pred_fallthru
          _
        // Predicated region
        $region17: #{_lambda_.8} parent=11 // pred_check
          %p388 = pneg %p92
        $region18: #{_lambda_.8} parent=11 // pred_check_branch
          %390 = sbr.rel (%p388) target = $region20
        $region19: #{_lambda_.8} parent=11 // pred_region
          _
        $region20: #{_lambda_.8} parent=11 // pred_fallthru
          _
        // Predicated region
        $region21: #{_lambda_.8} parent=11 // pred_check
          %p391 = pneg %p113
        $region22: #{_lambda_.8} parent=11 // pred_check_branch
          %393 = sbr.rel (%p391) target = $region24
        $region23: #{_lambda_.8} parent=11 // pred_region
          %395 = vsyncadd [#allocation4], 0
          %s397 = sshll.u32 %s3, 4
          %s398 = int_to_ptr.hbm [resolvable:$true] %s397
          %s399 = sshll.u32 [#allocation3], 4
          %s400 = int_to_ptr.vmem [resolvable:$true] %s399
          %402 = dma.hbm_to_vmem [thread:$0]  %s398, 16, %s400, [#allocation4]
        $region24: #{_lambda_.8} parent=11 // pred_fallthru
          _
        // Predicated region
        $region25: #{_lambda_.8} parent=11 // pred_check
          %p403 = pneg %p134
        $region26: #{_lambda_.8} parent=11 // pred_check_branch
          %405 = sbr.rel (%p403) target = $region28
        $region27: #{_lambda_.8} parent=11 // pred_region
          _
        $region28: #{_lambda_.8} parent=11 // pred_fallthru
          _
        // Predicated region
        $region29: #{_lambda_.8} parent=11 // pred_check
          %p406 = pneg %p155
        $region30: #{_lambda_.8} parent=11 // pred_check_branch
          %408 = sbr.rel (%p406) target = $region32
        $region31: #{_lambda_.8} parent=11 // pred_region
          %410 = vsyncadd [#allocation6], 0
          %s412 = sshll.u32 %s5, 4
          %s413 = int_to_ptr.hbm [resolvable:$true] %s412
          %s414 = sshll.u32 [#allocation5], 4
          %s415 = int_to_ptr.vmem [resolvable:$true] %s414
          %417 = dma.hbm_to_vmem [thread:$0]  %s413, 16, %s415, [#allocation6]
        $region32: #{_lambda_.8} parent=11 // pred_fallthru
          _
        // Predicated region
        $region33: #{_lambda_.8} parent=11 // pred_check
          %p418 = pneg %p176
        $region34: #{_lambda_.8} parent=11 // pred_check_branch
          %420 = sbr.rel (%p418) target = $region36
        $region35: #{_lambda_.8} parent=11 // pred_region
          _
        $region36: #{_lambda_.8} parent=11 // pred_fallthru
          _
        // Predicated region
        $region37: #{_lambda_.8} parent=11 // pred_check
          %p421 = pneg %p197
        $region38: #{_lambda_.8} parent=11 // pred_check_branch
          %423 = sbr.rel (%p421) target = $region40
        $region39: #{_lambda_.8} parent=11 // pred_region
          %425 = vsyncadd [#allocation6], 0
          %s427 = sshll.u32 %s7, 4
          %s428 = int_to_ptr.hbm [resolvable:$true] %s427
          %s429 = sshll.u32 [#allocation7], 4
          %s430 = int_to_ptr.vmem [resolvable:$true] %s429
          %432 = dma.hbm_to_vmem [thread:$0]  %s428, 16, %s430, [#allocation6]
        $region40: #{_lambda_.8} parent=11 // pred_fallthru
          _
        // Predicated region
        $region41: #{_lambda_.8} parent=11 // pred_check
          %p433 = pneg %p218
        $region42: #{_lambda_.8} parent=11 // pred_check_branch
          %435 = sbr.rel (%p433) target = $region44
        $region43: #{_lambda_.8} parent=11 // pred_region
          _
        $region44: #{_lambda_.8} parent=11 // pred_fallthru
          _
        // Predicated region
        $region45: #{_lambda_.8} parent=11 // pred_check
          %p436 = pneg %p239
        $region46: #{_lambda_.8} parent=11 // pred_check_branch
          %438 = sbr.rel (%p436) target = $region48
        $region47: #{_lambda_.8} parent=11 // pred_region
          _
        $region48: #{_lambda_.8} parent=11 // pred_fallthru
          _
        // Predicated region
        $region49: #{_lambda_.8} parent=11 // pred_check
          %p439 = pneg %p260
        $region50: #{_lambda_.8} parent=11 // pred_check_branch
          %441 = sbr.rel (%p439) target = $region52
        $region51: #{_lambda_.8} parent=11 // pred_region
          _
        $region52: #{_lambda_.8} parent=11 // pred_fallthru
          _
        // Predicated region
        $region53: #{_lambda_.8} parent=11 // pred_check
          %p442 = pneg %p281
        $region54: #{_lambda_.8} parent=11 // pred_check_branch
          %444 = sbr.rel (%p442) target = $region56
        $region55: #{_lambda_.8} parent=11 // pred_region
          _
        $region56: #{_lambda_.8} parent=11 // pred_fallthru
          _
        // Predicated region
        $region57: #{_lambda_.8} parent=11 // pred_check
          %p445 = pneg %p302
        $region58: #{_lambda_.8} parent=11 // pred_check_branch
          %447 = sbr.rel (%p445) target = $region60
        $region59: #{_lambda_.8} parent=11 // pred_region
          _
        $region60: #{_lambda_.8} parent=11 // pred_fallthru
          _
        // Predicated region
        $region61: #{_lambda_.8} parent=11 // pred_check
          %p448 = pneg %p323
        $region62: #{_lambda_.8} parent=11 // pred_check_branch
          %450 = sbr.rel (%p448) target = $region64
        $region63: #{_lambda_.8} parent=11 // pred_region
          _
        $region64: #{_lambda_.8} parent=11 // pred_fallthru
          _
        // Predicated region
        $region65: #{_lambda_.8} parent=11 // pred_check
          %p451 = pneg %p344
        $region66: #{_lambda_.8} parent=11 // pred_check_branch
          %453 = sbr.rel (%p451) target = $region68
        $region67: #{_lambda_.8} parent=11 // pred_region
          %455 = vsyncadd [#allocation9], 0
          %s457 = sshll.u32 %s14, 4
          %s458 = int_to_ptr.hbm [resolvable:$true] %s457
          %s459 = sshll.u32 [#allocation8], 4
          %s460 = int_to_ptr.vmem [resolvable:$true] %s459
          %462 = dma.hbm_to_vmem [thread:$0]  %s458, 16, %s460, [#allocation9]
        $region68: #{_lambda_.8} parent=11 // pred_fallthru
          _
      $region12: #{_lambda_.8} parent=5 // pred_fallthru
        _
      %p463 = scmp.lt.s32.totalorder %s24, 2
      // Predicated region
      $region69: #{_lambda_.8} parent=5 // pred_check
        %p464 = pneg %p463
      $region70: #{_lambda_.8} parent=5 // pred_check_branch
        %466 = sbr.rel (%p464) target = $region72
      $region71: #{_lambda_.8} parent=5 // pred_region
        // Predicated region
        $region73: #{_lambda_.8} parent=71 // pred_check
          %p467 = pneg %p44
        $region74: #{_lambda_.8} parent=71 // pred_check_branch
          %469 = sbr.rel (%p467) target = $region76
        $region75: #{_lambda_.8} parent=71 // pred_region
          %p470 = scmp.lt.s32.totalorder %s24, 1
          %s471 = scalar_select %p470, %s24, 1
          %s472 = smul.addr %s471, 3
          %s473 = smul.addr %s472, 2
          %s474 = scalar_lea.vmem %s0, %s473
        $region76: #{_lambda_.8} parent=71 // pred_fallthru
          _
      $region72: #{_lambda_.8} parent=5 // pred_fallthru
        _
      %p475 = scmp.le.s32.totalorder 1, %s24
      %p476 = scmp.lt.s32.totalorder %s24, 3
      %p477 = pnand %p475, %p476
      %p478 = pneg %p477
      // Predicated region
      $region77: #{_lambda_.8} parent=5 // pred_check
        _
      $region78: #{_lambda_.8} parent=5 // pred_check_branch
        %480 = sbr.rel (%p477) target = $region80
      $region79: #{_lambda_.8} parent=5 // pred_region
        %s481 = ssub.s32 %s24, 1
        // Predicated region
        $region81: #{_lambda_.8} parent=79 // pred_check
          %p482 = pneg %p113
        $region82: #{_lambda_.8} parent=79 // pred_check_branch
          %484 = sbr.rel (%p482) target = $region84
        $region83: #{_lambda_.8} parent=79 // pred_region
          %486 = dma.done [#allocation4], 16
        $region84: #{_lambda_.8} parent=79 // pred_fallthru
          _
        // Predicated region
        $region85: #{_lambda_.8} parent=79 // pred_check
          %p487 = pneg %p155
        $region86: #{_lambda_.8} parent=79 // pred_check_branch
          %489 = sbr.rel (%p487) target = $region88
        $region87: #{_lambda_.8} parent=79 // pred_region
          %491 = dma.done [#allocation6], 16
        $region88: #{_lambda_.8} parent=79 // pred_fallthru
          _
        // Predicated region
        $region89: #{_lambda_.8} parent=79 // pred_check
          %p492 = pneg %p197
        $region90: #{_lambda_.8} parent=79 // pred_check_branch
          %494 = sbr.rel (%p492) target = $region92
        $region91: #{_lambda_.8} parent=79 // pred_region
          %496 = dma.done [#allocation6], 16
        $region92: #{_lambda_.8} parent=79 // pred_fallthru
          _
        // Predicated region
        $region93: #{_lambda_.8} parent=79 // pred_check
          %p497 = pneg %p344
        $region94: #{_lambda_.8} parent=79 // pred_check_branch
          %499 = sbr.rel (%p497) target = $region96
        $region95: #{_lambda_.8} parent=79 // pred_region
          %501 = dma.done [#allocation9], 16
        $region96: #{_lambda_.8} parent=79 // pred_fallthru
          _
        %p502 = scmp.lt.s32.totalorder %s29, 1
        %s503 = scalar_select %p502, %s29, 1
        %s504 = smul.addr %s503, 3
        %s505 = smul.addr %s504, 2
        %s506 = scalar_lea.vmem %s0, %s505
        %p507 = pneg %p50
        %p508 = pneg %p47
        %p509 = pneg %p71
        %p510 = pneg %p68
        %p511 = pneg %p92
        %p512 = pneg %p89
        %p513 = pneg %p113
        %p514 = pneg %p110
        %p515 = pneg %p134
        %p516 = pneg %p131
        %p517 = pneg %p155
        %p518 = pneg %p152
        %p519 = pneg %p176
        %p520 = pneg %p173
        %p521 = pneg %p197
        %p522 = pneg %p194
        %p523 = pneg %p218
        %p524 = pneg %p215
        %p525 = pneg %p239
        %p526 = pneg %p236
        %p527 = pneg %p260
        %p528 = pneg %p257
        %p529 = pneg %p281
        %p530 = pneg %p278
        %p531 = pneg %p302
        %p532 = pneg %p299
        %p533 = pneg %p323
        %p534 = pneg %p320
        %p535 = pneg %p344
        %p536 = pneg %p341
        %p537 = pneg %p370
        %p538 = pneg %p367
        %p539 = scmp.lt.s32.totalorder %s29, 1
        %s540 = scalar_select %p539, %s29, 1
        %s541 = smul.addr %s540, 2
        %s542 = scalar_lea.vmem %s15, %s541
        %p543 = scmp.lt.s32.totalorder %s29, 1
        %s544 = scalar_select %p543, %s29, 1
        %s545 = smul.addr %s544, 3
        %s546 = smul.addr %s545, 2
        %s547 = scalar_lea.vmem %s0, %s546
        %p548 = scmp.lt.s32.totalorder %s29, 1
        %s549 = scalar_select %p548, %s29, 1
        %s550 = smul.addr %s549, 2
        %s551 = scalar_lea.vmem %s15, %s550
        %v553 = vld [vmem:[%s547] sm:$0x3f]
        %v554 = vld [vmem:[%s2] sm:$0xf]
        %v555 = vld [vmem:[%s2 + $0x4] sm:$0xf]
        %v556 = vld [vmem:[%s2 + $0x8] sm:$0xf]
        %v557 = vld [vmem:[%s2 + $0xc] sm:$0xf]
        %v558 = vld [vmem:[%s2 + $0x10] sm:$0xf]
        %v559 = vld [vmem:[%s2 + $0x14] sm:$0xf]
        %v560 = vld [vmem:[%s2 + $0x18] sm:$0xf]
        %v561 = vld [vmem:[%s2 + $0x1c] sm:$0xf]
        %v562 = vld [vmem:[%s2 + $0x20] sm:$0xf]
        %v563 = vld [vmem:[%s2 + $0x24] sm:$0xf]
        %v564 = vld [vmem:[%s2 + $0x28] sm:$0xf]
        %v565 = vld [vmem:[%s2 + $0x2c] sm:$0xf]
        %v566 = vld [vmem:[%s2 + $0x30] sm:$0xf]
        %v567 = vld [vmem:[%s2 + $0x34] sm:$0xf]
        %v568 = vld [vmem:[%s2 + $0x38] sm:$0xf]
        %v569 = vld [vmem:[%s2 + $0x3c] sm:$0xf]
        %v570 = vld [vmem:[%s2 + $0x40] sm:$0xf]
        %v571 = vld [vmem:[%s2 + $0x44] sm:$0xf]
        %v572 = vld [vmem:[%s2 + $0x48] sm:$0xf]
        %v573 = vld [vmem:[%s2 + $0x4c] sm:$0xf]
        %v574 = vld [vmem:[%s2 + $0x50] sm:$0xf]
        %v575 = vld [vmem:[%s2 + $0x54] sm:$0xf]
        %v576 = vld [vmem:[%s2 + $0x58] sm:$0xf]
        %v577 = vld [vmem:[%s2 + $0x5c] sm:$0xf]
        %v578 = vld [vmem:[%s2 + $0x60] sm:$0xf]
        %v579 = vld [vmem:[%s2 + $0x64] sm:$0xf]
        %v580 = vld [vmem:[%s2 + $0x68] sm:$0xf]
        %v581 = vld [vmem:[%s2 + $0x6c] sm:$0xf]
        %v582 = vld [vmem:[%s2 + $0x70] sm:$0xf]
        %v583 = vld [vmem:[%s2 + $0x74] sm:$0xf]
        %v584 = vld [vmem:[%s2 + $0x78] sm:$0xf]
        %v585 = vld [vmem:[%s2 + $0x7c] sm:$0xf]
        %v586 = vld [vmem:[%s2 + $0x80] sm:$0xf]
        %v587 = vld [vmem:[%s2 + $0x84] sm:$0xf]
        %v588 = vld [vmem:[%s2 + $0x88] sm:$0xf]
        %v589 = vld [vmem:[%s2 + $0x8c] sm:$0xf]
        %v590 = vld [vmem:[#allocation3] sm:$0x1]
        %v592 = vperm.slane %v590, 0
        %595 = vst [vmem:[#allocation1] ss:$4 sm:$0xff] %v553
        %v596 = vld.sshfl [vmem:[#allocation1] sm:$0xff pattern:$0x73625140]
        %v597 = vld.sshfl [vmem:[#allocation1 + $0x8] sm:$0xff pattern:$0x73625140]
        %v598 = vld.sshfl [vmem:[#allocation1 + $0x10] sm:$0xff pattern:$0x73625140]
        %v637 = vunpack.c.l.b16 %v554
        %v638 = vunpack.c.l.b16 %v555
        %v639 = vunpack.c.l.b16 %v556
        %v640 = vunpack.c.l.b16 %v557
        %v641 = vunpack.c.l.b16 %v558
        %v642 = vunpack.c.l.b16 %v559
        %v643 = vunpack.c.l.b16 %v560
        %v644 = vunpack.c.l.b16 %v561
        %v645 = vunpack.c.l.b16 %v562
        %v646 = vunpack.c.l.b16 %v563
        %v647 = vunpack.c.l.b16 %v564
        %v648 = vunpack.c.l.b16 %v565
        %v649 = vunpack.c.l.b16 %v566
        %v650 = vunpack.c.l.b16 %v567
        %v651 = vunpack.c.l.b16 %v568
        %v652 = vunpack.c.l.b16 %v569
        %v653 = vunpack.c.l.b16 %v570
        %v654 = vunpack.c.l.b16 %v571
        %v655 = vunpack.c.l.b16 %v572
        %v656 = vunpack.c.l.b16 %v573
        %v657 = vunpack.c.l.b16 %v574
        %v658 = vunpack.c.l.b16 %v575
        %v659 = vunpack.c.l.b16 %v576
        %v660 = vunpack.c.l.b16 %v577
        %v661 = vunpack.c.l.b16 %v578
        %v662 = vunpack.c.l.b16 %v579
        %v663 = vunpack.c.l.b16 %v580
        %v664 = vunpack.c.l.b16 %v581
        %v665 = vunpack.c.l.b16 %v582
        %v666 = vunpack.c.l.b16 %v583
        %v667 = vunpack.c.l.b16 %v584
        %v668 = vunpack.c.l.b16 %v585
        %v669 = vunpack.c.l.b16 %v586
        %v670 = vunpack.c.l.b16 %v587
        %v671 = vunpack.c.l.b16 %v588
        %v672 = vunpack.c.l.b16 %v589
        %v673 = vpack.c.b16 %v638, %v637
        %v674 = vpack.c.b16 %v640, %v639
        %v675 = vpack.c.b16 %v642, %v641
        %v676 = vpack.c.b16 %v644, %v643
        %v677 = vpack.c.b16 %v646, %v645
        %v678 = vpack.c.b16 %v648, %v647
        %v679 = vpack.c.b16 %v650, %v649
        %v680 = vpack.c.b16 %v652, %v651
        %v681 = vpack.c.b16 %v654, %v653
        %v682 = vpack.c.b16 %v656, %v655
        %v683 = vpack.c.b16 %v658, %v657
        %v684 = vpack.c.b16 %v660, %v659
        %v685 = vpack.c.b16 %v662, %v661
        %v686 = vpack.c.b16 %v664, %v663
        %v687 = vpack.c.b16 %v666, %v665
        %v688 = vpack.c.b16 %v668, %v667
        %v689 = vpack.c.b16 %v670, %v669
        %v690 = vpack.c.b16 %v672, %v671
        %vm709 = vcmask 261120
        %v710 = vsel %vm709, %v598, 0
        %712 = vmatpush.bf16.msra.mxu0 %v680
        %713 = vmatpush.bf16.msra.mxu0 %v679
        %714 = vmatpush.bf16.msra.mxu0 %v678
        %715 = vmatpush.bf16.msra.mxu0 %v677
        %716 = vmatpush.bf16.msra.mxu0 %v676
        %717 = vmatpush.bf16.msra.mxu0 %v675
        %718 = vmatpush.bf16.msra.mxu0 %v674
        %719 = vmatpush.bf16.msra.mxu0 %v673
        %720 = vmatmul.bf16.gmra.mxu0 %v596
        %v721 = vpop.f32.mrf.mxu0
        %v722 = vadd.f32 %v592, %v721
        %v723 = vpop.f32.mrf.mxu0
        %724 = vdwg.mxu0
        %725 = vmatpush.bf16.msra.mxu0 %v688
        %726 = vmatpush.bf16.msra.mxu0 %v687
        %727 = vmatpush.bf16.msra.mxu0 %v686
        %728 = vmatpush.bf16.msra.mxu0 %v685
        %729 = vmatpush.bf16.msra.mxu0 %v684
        %730 = vmatpush.bf16.msra.mxu0 %v683
        %731 = vmatpush.bf16.msra.mxu0 %v682
        %732 = vmatpush.bf16.msra.mxu0 %v681
        %733 = vmatmul.bf16.gmra.mxu0 %v597
        %v734 = vpop.f32.mrf.mxu0
        %v735 = vadd.f32 %v722, %v734
        %v736 = vpop.f32.mrf.mxu0
        %737 = vdwg.mxu0
        %738 = vmatpush.bf16.msra.mxu0 0
        %739 = vmatpush.bf16.msra.mxu0 0
        %740 = vmatpush.bf16.msra.mxu0 0
        %741 = vmatpush.bf16.msra.mxu0 0
        %742 = vmatpush.bf16.msra.mxu0 0
        %743 = vmatpush.bf16.msra.mxu0 0
        %744 = vmatpush.bf16.msra.mxu0 %v690
        %745 = vmatpush.bf16.msra.mxu0 %v689
        %746 = vmatmul.bf16.gmra.mxu0 %v710
        %v747 = vpop.f32.mrf.mxu0
        %v748 = vadd.f32 %v735, %v747
        %v749 = vpop.f32.mrf.mxu0
        %750 = vdwg.mxu0
        %v751 = vmul.f32 %v748, 0.5
        %v752 = vtanh.pop %v751
        %v753 = vadd.f32 %v752, 1.0
        %v754 = vmul.f32 %v751, %v753
        %v755 = vpack.c.bf16 %v754, %v754
        %v756 = vld [vmem:[%s4] sm:$0xf]
        %v757 = vld [vmem:[%s4 + $0x4] sm:$0xf]
        %v758 = vld [vmem:[%s4 + $0x8] sm:$0xf]
        %v759 = vld [vmem:[%s4 + $0xc] sm:$0xf]
        %v760 = vld [vmem:[%s4 + $0x10] sm:$0xf]
        %v761 = vld [vmem:[%s4 + $0x14] sm:$0xf]
        %v762 = vld [vmem:[%s4 + $0x18] sm:$0xf]
        %v763 = vld [vmem:[%s4 + $0x1c] sm:$0xf]
        %v764 = vld [vmem:[#allocation5] sm:$0x1]
        %v766 = vperm.slane %v764, 0
        %v776 = vunpack.c.l.b16 %v756
        %v777 = vunpack.c.l.b16 %v757
        %v778 = vunpack.c.l.b16 %v758
        %v779 = vunpack.c.l.b16 %v759
        %v780 = vunpack.c.l.b16 %v760
        %v781 = vunpack.c.l.b16 %v761
        %v782 = vunpack.c.l.b16 %v762
        %v783 = vunpack.c.l.b16 %v763
        %v784 = vpack.c.b16 %v777, %v776
        %v785 = vpack.c.b16 %v779, %v778
        %v786 = vpack.c.b16 %v781, %v780
        %v787 = vpack.c.b16 %v783, %v782
        %vm792 = vcmask 523264
        %v794 = vsel %vm792, %v755, 0
        %796 = vmatpush.bf16.msra.mxu0 0
        %797 = vmatpush.bf16.msra.mxu0 0
        %798 = vmatpush.bf16.msra.mxu0 0
        %799 = vmatpush.bf16.msra.mxu0 0
        %800 = vmatpush.bf16.msra.mxu0 %v787
        %801 = vmatpush.bf16.msra.mxu0 %v786
        %802 = vmatpush.bf16.msra.mxu0 %v785
        %803 = vmatpush.bf16.msra.mxu0 %v784
        %804 = vmatmul.bf16.gmra.mxu0 %v794
        %v805 = vpop.f32.mrf.mxu0
        %v806 = vadd.f32 %v766, %v805
        %v807 = vpop.f32.mrf.mxu0
        %808 = vdwg.mxu0
        %v809 = vmul.f32 %v806, 0.5
        %v810 = vtanh.pop %v809
        %v811 = vadd.f32 %v810, 1.0
        %v812 = vmul.f32 %v809, %v811
        %v813 = vld [vmem:[%s6] sm:$0xf]
        %v814 = vld [vmem:[%s6 + $0x4] sm:$0xf]
        %v815 = vld [vmem:[%s6 + $0x8] sm:$0xf]
        %v816 = vld [vmem:[%s6 + $0xc] sm:$0xf]
        %v817 = vld [vmem:[%s6 + $0x10] sm:$0xf]
        %v818 = vld [vmem:[%s6 + $0x14] sm:$0xf]
        %v819 = vld [vmem:[%s6 + $0x18] sm:$0xf]
        %v820 = vld [vmem:[%s6 + $0x1c] sm:$0xf]
        %v821 = vld [vmem:[#allocation7] sm:$0x1]
        %v823 = vperm.slane %v821, 0
        %v833 = vunpack.c.l.b16 %v813
        %v834 = vunpack.c.l.b16 %v814
        %v835 = vunpack.c.l.b16 %v815
        %v836 = vunpack.c.l.b16 %v816
        %v837 = vunpack.c.l.b16 %v817
        %v838 = vunpack.c.l.b16 %v818
        %v839 = vunpack.c.l.b16 %v819
        %v840 = vunpack.c.l.b16 %v820
        %v841 = vpack.c.b16 %v834, %v833
        %v842 = vpack.c.b16 %v836, %v835
        %v843 = vpack.c.b16 %v838, %v837
        %v844 = vpack.c.b16 %v840, %v839
        %849 = vmatpush.bf16.msra.mxu0 0
        %850 = vmatpush.bf16.msra.mxu0 0
        %851 = vmatpush.bf16.msra.mxu0 0
        %852 = vmatpush.bf16.msra.mxu0 0
        %853 = vmatpush.bf16.msra.mxu0 %v844
        %854 = vmatpush.bf16.msra.mxu0 %v843
        %855 = vmatpush.bf16.msra.mxu0 %v842
        %856 = vmatpush.bf16.msra.mxu0 %v841
        %857 = vmatmul.bf16.gmra.mxu0 %v794
        %v858 = vpop.f32.mrf.mxu0
        %v859 = vadd.f32 %v823, %v858
        %v860 = vpop.f32.mrf.mxu0
        %861 = vdwg.mxu0
        %v862 = vmul.f32 %v859, 0.5
        %v863 = vtanh.pop %v862
        %v864 = vadd.f32 %v863, 1.0
        %v865 = vmul.f32 %v862, %v864
        %vm866 = vcmask 257024
        %867 = vst.msk [vmem:[#allocation2] sm:$0xf] %vm866, 0
        %vm868 = vcmask 257026
        %869 = vst.msk [vmem:[#allocation2 + $0x4] sm:$0xc] %vm868, 0
        %v870 = vld [vmem:[%s1] sm:$0x3]
        %s871 = scalar_lea.vmem %s1, 2
        %v872 = vld [vmem:[%s871] sm:$0x3]
        %v873 = vpack.c.bf16 %v812, %v812
        %v874 = vld [vmem:[%s8] sm:$0xf]
        %v875 = vld [vmem:[%s8 + $0x4] sm:$0xf]
        %v876 = vld [vmem:[%s8 + $0x8] sm:$0xf]
        %v877 = vld [vmem:[%s8 + $0xc] sm:$0xf]
        %v878 = vld [vmem:[%s9] sm:$0x1]
        %v880 = vperm.slane %v878, 0
        %v886 = vunpack.c.l.b16 %v874
        %v887 = vunpack.c.l.b16 %v875
        %v888 = vunpack.c.l.b16 %v876
        %v889 = vunpack.c.l.b16 %v877
        %v890 = vpack.c.b16 %v887, %v886
        %v891 = vpack.c.b16 %v889, %v888
        %v895 = vsel %vm709, %v873, 0
        %897 = vmatpush.bf16.msra.mxu0 0
        %898 = vmatpush.bf16.msra.mxu0 0
        %899 = vmatpush.bf16.msra.mxu0 0
        %900 = vmatpush.bf16.msra.mxu0 0
        %901 = vmatpush.bf16.msra.mxu0 0
        %902 = vmatpush.bf16.msra.mxu0 0
        %903 = vmatpush.bf16.msra.mxu0 %v891
        %904 = vmatpush.bf16.msra.mxu0 %v890
        %905 = vmatmul.bf16.gmra.mxu0 %v895
        %v906 = vpop.f32.mrf.mxu0
        %v907 = vadd.f32 %v880, %v906
        %v908 = vpop.f32.mrf.mxu0
        %909 = vdwg.mxu0
        %v910 = vmul.f32 %v907, 0.5
        %v911 = vtanh.pop %v910
        %v912 = vadd.f32 %v911, 1.0
        %v913 = vmul.f32 %v910, %v912
        %v914 = vpack.c.bf16 %v913, %v913
        %vm915 = vcmask 254976
        %916 = vst.msk [vmem:[#allocation2 + $0x4] sm:$0x3] %vm915, %v914
        %v917 = vld [vmem:[#allocation2] sm:$0xc]
        %v918 = vld [vmem:[#allocation2 + $0x4] sm:$0x1]
        %920 = vset.pattern.permute.xlu0 0
        %921 = vperm.xlu0 %920, %v870
        %v922 = vpop.permute.xlu0 %921
        %v925 = vunpack.c.l.s4 269488144
        %v926 = vunpack.c.0.s8 %v925
        %v927 = vperm.slane %v922, %v926
        %v928 = vunpack.c.l.bf16 %v917
        %v929 = vunpack.c.l.bf16 %v918
        %v930 = vunpack.c.l.bf16 %v927
        %932 = vst [vmem:[#allocation1] ss:$2 sm:$0xff] %v930
        %v933 = vld.sshfl [vmem:[#allocation1] sm:$0xff pattern:$0x75316420]
        %v934 = vrot.slane %v933, 3
        %v936 = vmul.f32 %v928, %v934
        %v937 = vmul.f32 %v929, %v934
        %v938 = vpack.c.bf16 %v937, %v936
        %v939 = vld [vmem:[%s10] sm:$0xf]
        %v940 = vld [vmem:[%s10 + $0x4] sm:$0xf]
        %v941 = vld [vmem:[%s10 + $0x8] sm:$0xf]
        %v942 = vld [vmem:[%s10 + $0xc] sm:$0xf]
        %v943 = vld [vmem:[#allocation2] sm:$0x8]
        %v944 = vld [vmem:[#allocation2 + $0x4] sm:$0x1]
        %s945 = scalar_lea.vmem %s10, 16
        %v946 = vld [vmem:[%s945] sm:$0xf]
        %v947 = vld [vmem:[%s945 + $0x4] sm:$0xf]
        %v948 = vld [vmem:[%s945 + $0x8] sm:$0xf]
        %v949 = vld [vmem:[%s945 + $0xc] sm:$0xf]
        %v952 = vunpack.c.l.b16 %v943
        %v953 = vunpack.c.l.b16 %v944
        %v954 = vpack.c.b16 %v953, %v952
        %v955 = vrot.slane %v954, 3
        %v960 = vunpack.c.l.b16 %v946
        %v961 = vunpack.c.l.b16 %v947
        %v962 = vunpack.c.l.b16 %v948
        %v963 = vunpack.c.l.b16 %v949
        %v964 = vpack.c.b16 %v961, %v960
        %v965 = vpack.c.b16 %v963, %v962
        %v969 = vsel %vm709, %v955, 0
        %971 = vmatpush.bf16.msra.mxu0 0
        %972 = vmatpush.bf16.msra.mxu0 0
        %973 = vmatpush.bf16.msra.mxu0 0
        %974 = vmatpush.bf16.msra.mxu0 0
        %975 = vmatpush.bf16.msra.mxu0 0
        %976 = vmatpush.bf16.msra.mxu0 0
        %977 = vmatpush.bf16.msra.mxu0 %v965
        %978 = vmatpush.bf16.msra.mxu0 %v964
        %979 = vmatmul.bf16.gmra.mxu0 %v969
        %v980 = vpop.f32.mrf.mxu0
        %v981 = vadd.f32 0.0, %v980
        %v982 = vpop.f32.mrf.mxu0
        %983 = vdwg.mxu0
        %v985 = vshrl.u32 %v938, 16
        %v987 = vrot.slane %v985, 2
        %v988 = vshll.u32 %v938, 16
        %v990 = vrot.slane %v988, 3
        %v991 = vor.u32 %v987, %v990
        %v996 = vunpack.c.l.b16 %v939
        %v997 = vunpack.c.l.b16 %v940
        %v998 = vunpack.c.l.b16 %v941
        %v999 = vunpack.c.l.b16 %v942
        %v1000 = vpack.c.b16 %v997, %v996
        %v1001 = vpack.c.b16 %v999, %v998
        %v1005 = vsel %vm709, %v991, 0
        %1007 = vmatpush.bf16.msra.mxu0 0
        %1008 = vmatpush.bf16.msra.mxu0 0
        %1009 = vmatpush.bf16.msra.mxu0 0
        %1010 = vmatpush.bf16.msra.mxu0 0
        %1011 = vmatpush.bf16.msra.mxu0 0
        %1012 = vmatpush.bf16.msra.mxu0 0
        %1013 = vmatpush.bf16.msra.mxu0 %v1001
        %1014 = vmatpush.bf16.msra.mxu0 %v1000
        %1015 = vmatmul.bf16.gmra.mxu0 %v1005
        %v1016 = vpop.f32.mrf.mxu0
        %v1017 = vadd.f32 %v981, %v1016
        %v1018 = vpop.f32.mrf.mxu0
        %1019 = vdwg.mxu0
        %v1020 = vld [vmem:[#allocation2 + $0x4] sm:$0x3]
        %1022 = vset.pattern.permute.xlu0 0
        %1023 = vperm.xlu0 %1022, %v872
        %v1024 = vpop.permute.xlu0 %1023
        %v1027 = vunpack.c.l.s4 269488144
        %v1028 = vunpack.c.0.s8 %v1027
        %v1029 = vperm.slane %v1024, %v1028
        %v1030 = vunpack.c.l.bf16 %v943
        %v1031 = vunpack.c.l.bf16 %v1020
        %v1032 = vunpack.c.l.bf16 %v1029
        %1034 = vst [vmem:[#allocation1] ss:$2 sm:$0xff] %v1032
        %v1035 = vld.sshfl [vmem:[#allocation1] sm:$0xff pattern:$0x75316420]
        %v1036 = vrot.slane %v1035, 1
        %v1038 = vmul.f32 %v1030, %v1036
        %v1039 = vmul.f32 %v1031, %v1036
        %v1040 = vpack.c.bf16 %v1039, %v1038
        %s1041 = scalar_lea.vmem %s10, 32
        %v1042 = vld [vmem:[%s1041] sm:$0xf]
        %v1043 = vld [vmem:[%s1041 + $0x4] sm:$0xf]
        %v1044 = vld [vmem:[%s1041 + $0x8] sm:$0xf]
        %v1045 = vld [vmem:[%s1041 + $0xc] sm:$0xf]
        %v1047 = vshrl.u32 %v1040, 16
        %v1049 = vrot.slane %v1047, 3
        %v1050 = vshll.u32 %v1040, 16
        %v1052 = vrot.slane %v1050, 4
        %v1053 = vor.u32 %v1049, %v1052
        %v1058 = vunpack.c.l.b16 %v1042
        %v1059 = vunpack.c.l.b16 %v1043
        %v1060 = vunpack.c.l.b16 %v1044
        %v1061 = vunpack.c.l.b16 %v1045
        %v1062 = vpack.c.b16 %v1059, %v1058
        %v1063 = vpack.c.b16 %v1061, %v1060
        %v1067 = vsel %vm709, %v1053, 0
        %1069 = vmatpush.bf16.msra.mxu0 0
        %1070 = vmatpush.bf16.msra.mxu0 0
        %1071 = vmatpush.bf16.msra.mxu0 0
        %1072 = vmatpush.bf16.msra.mxu0 0
        %1073 = vmatpush.bf16.msra.mxu0 0
        %1074 = vmatpush.bf16.msra.mxu0 0
        %1075 = vmatpush.bf16.msra.mxu0 %v1063
        %1076 = vmatpush.bf16.msra.mxu0 %v1062
        %1077 = vmatmul.bf16.gmra.mxu0 %v1067
        %v1078 = vpop.f32.mrf.mxu0
        %v1079 = vadd.f32 0.0, %v1078
        %v1080 = vpop.f32.mrf.mxu0
        %1081 = vdwg.mxu0
        %v1082 = vadd.f32 %v1017, %v1079
        %1083 = vst [vmem:[#allocation1] ss:$2 sm:$0xff] %v930
        %v1084 = vld.sshfl [vmem:[#allocation1] sm:$0xff pattern:$0x75316420]
        %v1085 = vrot.slane %v1084, 1
        %v1087 = vmul.f32 %v1030, %v1085
        %v1088 = vmul.f32 %v1031, %v1085
        %v1089 = vpack.c.bf16 %v1088, %v1087
        %s1090 = scalar_lea.vmem %s10, 48
        %v1091 = vld [vmem:[%s1090] sm:$0xf]
        %v1092 = vld [vmem:[%s1090 + $0x4] sm:$0xf]
        %v1093 = vld [vmem:[%s1090 + $0x8] sm:$0xf]
        %v1094 = vld [vmem:[%s1090 + $0xc] sm:$0xf]
        %v1096 = vshrl.u32 %v1089, 16
        %v1098 = vrot.slane %v1096, 3
        %v1099 = vshll.u32 %v1089, 16
        %v1101 = vrot.slane %v1099, 4
        %v1102 = vor.u32 %v1098, %v1101
        %v1107 = vunpack.c.l.b16 %v1091
        %v1108 = vunpack.c.l.b16 %v1092
        %v1109 = vunpack.c.l.b16 %v1093
        %v1110 = vunpack.c.l.b16 %v1094
        %v1111 = vpack.c.b16 %v1108, %v1107
        %v1112 = vpack.c.b16 %v1110, %v1109
        %v1116 = vsel %vm709, %v1102, 0
        %1118 = vmatpush.bf16.msra.mxu0 0
        %1119 = vmatpush.bf16.msra.mxu0 0
        %1120 = vmatpush.bf16.msra.mxu0 0
        %1121 = vmatpush.bf16.msra.mxu0 0
        %1122 = vmatpush.bf16.msra.mxu0 0
        %1123 = vmatpush.bf16.msra.mxu0 0
        %1124 = vmatpush.bf16.msra.mxu0 %v1112
        %1125 = vmatpush.bf16.msra.mxu0 %v1111
        %1126 = vmatmul.bf16.gmra.mxu0 %v1116
        %v1127 = vpop.f32.mrf.mxu0
        %v1128 = vadd.f32 0.0, %v1127
        %v1129 = vpop.f32.mrf.mxu0
        %1130 = vdwg.mxu0
        %v1131 = vadd.f32 %v1082, %v1128
        %v1132 = vld [vmem:[#allocation2 + $0x4] sm:$0x3]
        %s1133 = scalar_lea.vmem %s10, 64
        %v1134 = vld [vmem:[%s1133] sm:$0xf]
        %v1135 = vld [vmem:[%s1133 + $0x4] sm:$0xf]
        %v1136 = vld [vmem:[%s1133 + $0x8] sm:$0xf]
        %v1137 = vld [vmem:[%s1133 + $0xc] sm:$0xf]
        %v1142 = vunpack.c.l.b16 %v1134
        %v1143 = vunpack.c.l.b16 %v1135
        %v1144 = vunpack.c.l.b16 %v1136
        %v1145 = vunpack.c.l.b16 %v1137
        %v1146 = vpack.c.b16 %v1143, %v1142
        %v1147 = vpack.c.b16 %v1145, %v1144
        %v1151 = vsel %vm709, %v1132, 0
        %1153 = vmatpush.bf16.msra.mxu0 0
        %1154 = vmatpush.bf16.msra.mxu0 0
        %1155 = vmatpush.bf16.msra.mxu0 0
        %1156 = vmatpush.bf16.msra.mxu0 0
        %1157 = vmatpush.bf16.msra.mxu0 0
        %1158 = vmatpush.bf16.msra.mxu0 0
        %1159 = vmatpush.bf16.msra.mxu0 %v1147
        %1160 = vmatpush.bf16.msra.mxu0 %v1146
        %1161 = vmatmul.bf16.gmra.mxu0 %v1151
        %v1162 = vpop.f32.mrf.mxu0
        %v1163 = vadd.f32 0.0, %v1162
        %v1164 = vpop.f32.mrf.mxu0
        %1165 = vdwg.mxu0
        %v1166 = vadd.f32 %v1131, %v1163
        %v1167 = vld [vmem:[#allocation2 + $0x4] sm:$0x7]
        %v1168 = vunpack.c.l.bf16 %v1167
        %1169 = vst [vmem:[#allocation1] ss:$2 sm:$0xff] %v1032
        %v1170 = vld.sshfl [vmem:[#allocation1] sm:$0xff pattern:$0x75316420]
        %v1171 = vrot.slane %v1170, 7
        %v1173 = vmul.f32 %v1168, %v1171
        %v1174 = vpack.c.bf16 %v1173, %v1173
        %s1175 = scalar_lea.vmem %s10, 80
        %v1176 = vld [vmem:[%s1175] sm:$0xf]
        %v1177 = vld [vmem:[%s1175 + $0x4] sm:$0xf]
        %v1178 = vld [vmem:[%s1175 + $0x8] sm:$0xf]
        %v1179 = vld [vmem:[%s1175 + $0xc] sm:$0xf]
        %v1181 = vshrl.u32 %v1174, 16
        %v1183 = vshll.u32 %v1174, 16
        %v1185 = vrot.slane %v1183, 1
        %v1186 = vor.u32 %v1181, %v1185
        %v1191 = vunpack.c.l.b16 %v1176
        %v1192 = vunpack.c.l.b16 %v1177
        %v1193 = vunpack.c.l.b16 %v1178
        %v1194 = vunpack.c.l.b16 %v1179
        %v1195 = vpack.c.b16 %v1192, %v1191
        %v1196 = vpack.c.b16 %v1194, %v1193
        %v1200 = vsel %vm709, %v1186, 0
        %1202 = vmatpush.bf16.msra.mxu0 0
        %1203 = vmatpush.bf16.msra.mxu0 0
        %1204 = vmatpush.bf16.msra.mxu0 0
        %1205 = vmatpush.bf16.msra.mxu0 0
        %1206 = vmatpush.bf16.msra.mxu0 0
        %1207 = vmatpush.bf16.msra.mxu0 0
        %1208 = vmatpush.bf16.msra.mxu0 %v1196
        %1209 = vmatpush.bf16.msra.mxu0 %v1195
        %1210 = vmatmul.bf16.gmra.mxu0 %v1200
        %v1211 = vpop.f32.mrf.mxu0
        %v1212 = vadd.f32 0.0, %v1211
        %v1213 = vpop.f32.mrf.mxu0
        %1214 = vdwg.mxu0
        %v1215 = vadd.f32 %v1166, %v1212
        %1216 = vst [vmem:[#allocation1] ss:$2 sm:$0xff] %v930
        %v1217 = vld.sshfl [vmem:[#allocation1] sm:$0xff pattern:$0x75316420]
        %v1218 = vrot.slane %v1217, 7
        %v1220 = vmul.f32 %v1168, %v1218
        %v1221 = vpack.c.bf16 %v1220, %v1220
        %s1222 = scalar_lea.vmem %s10, 96
        %v1223 = vld [vmem:[%s1222] sm:$0xf]
        %v1224 = vld [vmem:[%s1222 + $0x4] sm:$0xf]
        %v1225 = vld [vmem:[%s1222 + $0x8] sm:$0xf]
        %v1226 = vld [vmem:[%s1222 + $0xc] sm:$0xf]
        %v1228 = vshrl.u32 %v1221, 16
        %v1230 = vshll.u32 %v1221, 16
        %v1232 = vrot.slane %v1230, 1
        %v1233 = vor.u32 %v1228, %v1232
        %v1238 = vunpack.c.l.b16 %v1223
        %v1239 = vunpack.c.l.b16 %v1224
        %v1240 = vunpack.c.l.b16 %v1225
        %v1241 = vunpack.c.l.b16 %v1226
        %v1242 = vpack.c.b16 %v1239, %v1238
        %v1243 = vpack.c.b16 %v1241, %v1240
        %v1247 = vsel %vm709, %v1233, 0
        %1249 = vmatpush.bf16.msra.mxu0 0
        %1250 = vmatpush.bf16.msra.mxu0 0
        %1251 = vmatpush.bf16.msra.mxu0 0
        %1252 = vmatpush.bf16.msra.mxu0 0
        %1253 = vmatpush.bf16.msra.mxu0 0
        %1254 = vmatpush.bf16.msra.mxu0 0
        %1255 = vmatpush.bf16.msra.mxu0 %v1243
        %1256 = vmatpush.bf16.msra.mxu0 %v1242
        %1257 = vmatmul.bf16.gmra.mxu0 %v1247
        %v1258 = vpop.f32.mrf.mxu0
        %v1259 = vadd.f32 0.0, %v1258
        %v1260 = vpop.f32.mrf.mxu0
        %1261 = vdwg.mxu0
        %v1262 = vadd.f32 %v1215, %v1259
        %v1263 = vld [vmem:[#allocation2 + $0x4] sm:$0x6]
        %s1264 = scalar_lea.vmem %s10, 112
        %v1265 = vld [vmem:[%s1264] sm:$0xf]
        %v1266 = vld [vmem:[%s1264 + $0x4] sm:$0xf]
        %v1267 = vld [vmem:[%s1264 + $0x8] sm:$0xf]
        %v1268 = vld [vmem:[%s1264 + $0xc] sm:$0xf]
        %v1270 = vunpack.c.l.b16 %v1263
        %v1271 = vpack.c.b16 %v1270, %v1270
        %v1272 = vrot.slane %v1271, 1
        %v1277 = vunpack.c.l.b16 %v1265
        %v1278 = vunpack.c.l.b16 %v1266
        %v1279 = vunpack.c.l.b16 %v1267
        %v1280 = vunpack.c.l.b16 %v1268
        %v1281 = vpack.c.b16 %v1278, %v1277
        %v1282 = vpack.c.b16 %v1280, %v1279
        %v1286 = vsel %vm709, %v1272, 0
        %1288 = vmatpush.bf16.msra.mxu0 0
        %1289 = vmatpush.bf16.msra.mxu0 0
        %1290 = vmatpush.bf16.msra.mxu0 0
        %1291 = vmatpush.bf16.msra.mxu0 0
        %1292 = vmatpush.bf16.msra.mxu0 0
        %1293 = vmatpush.bf16.msra.mxu0 0
        %1294 = vmatpush.bf16.msra.mxu0 %v1282
        %1295 = vmatpush.bf16.msra.mxu0 %v1281
        %1296 = vmatmul.bf16.gmra.mxu0 %v1286
        %v1297 = vpop.f32.mrf.mxu0
        %v1298 = vadd.f32 0.0, %v1297
        %v1299 = vpop.f32.mrf.mxu0
        %1300 = vdwg.mxu0
        %v1301 = vadd.f32 %v1262, %v1298
        %v1302 = vld [vmem:[#allocation2 + $0x4] sm:$0xe]
        %v1303 = vunpack.c.l.bf16 %v1302
        %1304 = vst [vmem:[#allocation1] ss:$2 sm:$0xff] %v1032
        %v1305 = vld.sshfl [vmem:[#allocation1] sm:$0xff pattern:$0x75316420]
        %v1306 = vrot.slane %v1305, 5
        %v1308 = vmul.f32 %v1303, %v1306
        %v1309 = vpack.c.bf16 %v1308, %v1308
        %s1310 = scalar_lea.vmem %s10, 128
        %v1311 = vld [vmem:[%s1310] sm:$0xf]
        %v1312 = vld [vmem:[%s1310 + $0x4] sm:$0xf]
        %v1313 = vld [vmem:[%s1310 + $0x8] sm:$0xf]
        %v1314 = vld [vmem:[%s1310 + $0xc] sm:$0xf]
        %v1316 = vshrl.u32 %v1309, 16
        %v1318 = vrot.slane %v1316, 1
        %v1319 = vshll.u32 %v1309, 16
        %v1321 = vrot.slane %v1319, 2
        %v1322 = vor.u32 %v1318, %v1321
        %v1327 = vunpack.c.l.b16 %v1311
        %v1328 = vunpack.c.l.b16 %v1312
        %v1329 = vunpack.c.l.b16 %v1313
        %v1330 = vunpack.c.l.b16 %v1314
        %v1331 = vpack.c.b16 %v1328, %v1327
        %v1332 = vpack.c.b16 %v1330, %v1329
        %v1336 = vsel %vm709, %v1322, 0
        %1338 = vmatpush.bf16.msra.mxu0 0
        %1339 = vmatpush.bf16.msra.mxu0 0
        %1340 = vmatpush.bf16.msra.mxu0 0
        %1341 = vmatpush.bf16.msra.mxu0 0
        %1342 = vmatpush.bf16.msra.mxu0 0
        %1343 = vmatpush.bf16.msra.mxu0 0
        %1344 = vmatpush.bf16.msra.mxu0 %v1332
        %1345 = vmatpush.bf16.msra.mxu0 %v1331
        %1346 = vmatmul.bf16.gmra.mxu0 %v1336
        %v1347 = vpop.f32.mrf.mxu0
        %v1348 = vadd.f32 0.0, %v1347
        %v1349 = vpop.f32.mrf.mxu0
        %1350 = vdwg.mxu0
        %v1351 = vadd.f32 %v1301, %v1348
        %v1352 = vld [vmem:[%s11] sm:$0x1]
        %v1354 = vperm.slane %v1352, 0
        %v1356 = vadd.f32 %v1351, %v1354
        %v1357 = vmul.f32 %v1356, 0.5
        %v1358 = vtanh.pop %v1357
        %v1359 = vadd.f32 %v1358, 1.0
        %v1360 = vmul.f32 %v1357, %v1359
        %v1361 = vadd.f32 %v812, %v1360
        %v1362 = vpack.c.bf16 %v1361, %v1361
        %s1363 = scalar_lea.vmem %s8, 16
        %v1364 = vld [vmem:[%s1363] sm:$0xf]
        %v1365 = vld [vmem:[%s1363 + $0x4] sm:$0xf]
        %v1366 = vld [vmem:[%s1363 + $0x8] sm:$0xf]
        %v1367 = vld [vmem:[%s1363 + $0xc] sm:$0xf]
        %s1368 = scalar_lea.vmem %s9, 1
        %v1369 = vld [vmem:[%s1368] sm:$0x1]
        %v1371 = vperm.slane %v1369, 0
        %v1377 = vunpack.c.l.b16 %v1364
        %v1378 = vunpack.c.l.b16 %v1365
        %v1379 = vunpack.c.l.b16 %v1366
        %v1380 = vunpack.c.l.b16 %v1367
        %v1381 = vpack.c.b16 %v1378, %v1377
        %v1382 = vpack.c.b16 %v1380, %v1379
        %v1386 = vsel %vm709, %v1362, 0
        %1388 = vmatpush.bf16.msra.mxu0 0
        %1389 = vmatpush.bf16.msra.mxu0 0
        %1390 = vmatpush.bf16.msra.mxu0 0
        %1391 = vmatpush.bf16.msra.mxu0 0
        %1392 = vmatpush.bf16.msra.mxu0 0
        %1393 = vmatpush.bf16.msra.mxu0 0
        %1394 = vmatpush.bf16.msra.mxu0 %v1382
        %1395 = vmatpush.bf16.msra.mxu0 %v1381
        %1396 = vmatmul.bf16.gmra.mxu0 %v1386
        %v1397 = vpop.f32.mrf.mxu0
        %v1398 = vadd.f32 %v1371, %v1397
        %v1399 = vpop.f32.mrf.mxu0
        %1400 = vdwg.mxu0
        %v1401 = vmul.f32 %v1398, 0.5
        %v1402 = vtanh.pop %v1401
        %v1403 = vadd.f32 %v1402, 1.0
        %v1404 = vmul.f32 %v1401, %v1403
        %v1405 = vpack.c.bf16 %v1404, %v1404
        %1406 = vst.msk [vmem:[#allocation2 + $0x4] sm:$0x3] %vm915, %v1405
        %v1407 = vld [vmem:[#allocation2] sm:$0xc]
        %v1408 = vld [vmem:[#allocation2 + $0x4] sm:$0x1]
        %v1409 = vunpack.c.l.bf16 %v1407
        %v1410 = vunpack.c.l.bf16 %v1408
        %1411 = vst [vmem:[#allocation1] ss:$2 sm:$0xff] %v930
        %v1412 = vld.sshfl [vmem:[#allocation1] sm:$0xff pattern:$0x75316420]
        %v1413 = vrot.slane %v1412, 3
        %v1415 = vmul.f32 %v1409, %v1413
        %v1416 = vmul.f32 %v1410, %v1413
        %v1417 = vpack.c.bf16 %v1416, %v1415
        %s1418 = scalar_lea.vmem %s10, 144
        %v1419 = vld [vmem:[%s1418] sm:$0xf]
        %v1420 = vld [vmem:[%s1418 + $0x4] sm:$0xf]
        %v1421 = vld [vmem:[%s1418 + $0x8] sm:$0xf]
        %v1422 = vld [vmem:[%s1418 + $0xc] sm:$0xf]
        %v1423 = vld [vmem:[#allocation2] sm:$0x8]
        %v1424 = vld [vmem:[#allocation2 + $0x4] sm:$0x1]
        %s1425 = scalar_lea.vmem %s10, 160
        %v1426 = vld [vmem:[%s1425] sm:$0xf]
        %v1427 = vld [vmem:[%s1425 + $0x4] sm:$0xf]
        %v1428 = vld [vmem:[%s1425 + $0x8] sm:$0xf]
        %v1429 = vld [vmem:[%s1425 + $0xc] sm:$0xf]
        %v1432 = vunpack.c.l.b16 %v1423
        %v1433 = vunpack.c.l.b16 %v1424
        %v1434 = vpack.c.b16 %v1433, %v1432
        %v1435 = vrot.slane %v1434, 3
        %v1440 = vunpack.c.l.b16 %v1426
        %v1441 = vunpack.c.l.b16 %v1427
        %v1442 = vunpack.c.l.b16 %v1428
        %v1443 = vunpack.c.l.b16 %v1429
        %v1444 = vpack.c.b16 %v1441, %v1440
        %v1445 = vpack.c.b16 %v1443, %v1442
        %v1449 = vsel %vm709, %v1435, 0
        %1451 = vmatpush.bf16.msra.mxu0 0
        %1452 = vmatpush.bf16.msra.mxu0 0
        %1453 = vmatpush.bf16.msra.mxu0 0
        %1454 = vmatpush.bf16.msra.mxu0 0
        %1455 = vmatpush.bf16.msra.mxu0 0
        %1456 = vmatpush.bf16.msra.mxu0 0
        %1457 = vmatpush.bf16.msra.mxu0 %v1445
        %1458 = vmatpush.bf16.msra.mxu0 %v1444
        %1459 = vmatmul.bf16.gmra.mxu0 %v1449
        %v1460 = vpop.f32.mrf.mxu0
        %v1461 = vadd.f32 0.0, %v1460
        %v1462 = vpop.f32.mrf.mxu0
        %1463 = vdwg.mxu0
        %v1465 = vshrl.u32 %v1417, 16
        %v1467 = vrot.slane %v1465, 2
        %v1468 = vshll.u32 %v1417, 16
        %v1470 = vrot.slane %v1468, 3
        %v1471 = vor.u32 %v1467, %v1470
        %v1476 = vunpack.c.l.b16 %v1419
        %v1477 = vunpack.c.l.b16 %v1420
        %v1478 = vunpack.c.l.b16 %v1421
        %v1479 = vunpack.c.l.b16 %v1422
        %v1480 = vpack.c.b16 %v1477, %v1476
        %v1481 = vpack.c.b16 %v1479, %v1478
        %v1485 = vsel %vm709, %v1471, 0
        %1487 = vmatpush.bf16.msra.mxu0 0
        %1488 = vmatpush.bf16.msra.mxu0 0
        %1489 = vmatpush.bf16.msra.mxu0 0
        %1490 = vmatpush.bf16.msra.mxu0 0
        %1491 = vmatpush.bf16.msra.mxu0 0
        %1492 = vmatpush.bf16.msra.mxu0 0
        %1493 = vmatpush.bf16.msra.mxu0 %v1481
        %1494 = vmatpush.bf16.msra.mxu0 %v1480
        %1495 = vmatmul.bf16.gmra.mxu0 %v1485
        %v1496 = vpop.f32.mrf.mxu0
        %v1497 = vadd.f32 %v1461, %v1496
        %v1498 = vpop.f32.mrf.mxu0
        %1499 = vdwg.mxu0
        %v1500 = vld [vmem:[#allocation2 + $0x4] sm:$0x3]
        %v1501 = vunpack.c.l.bf16 %v1423
        %v1502 = vunpack.c.l.bf16 %v1500
        %1503 = vst [vmem:[#allocation1] ss:$2 sm:$0xff] %v1032
        %v1504 = vld.sshfl [vmem:[#allocation1] sm:$0xff pattern:$0x75316420]
        %v1505 = vrot.slane %v1504, 1
        %v1507 = vmul.f32 %v1501, %v1505
        %v1508 = vmul.f32 %v1502, %v1505
        %v1509 = vpack.c.bf16 %v1508, %v1507
        %s1510 = scalar_lea.vmem %s10, 176
        %v1511 = vld [vmem:[%s1510] sm:$0xf]
        %v1512 = vld [vmem:[%s1510 + $0x4] sm:$0xf]
        %v1513 = vld [vmem:[%s1510 + $0x8] sm:$0xf]
        %v1514 = vld [vmem:[%s1510 + $0xc] sm:$0xf]
        %v1516 = vshrl.u32 %v1509, 16
        %v1518 = vrot.slane %v1516, 3
        %v1519 = vshll.u32 %v1509, 16
        %v1521 = vrot.slane %v1519, 4
        %v1522 = vor.u32 %v1518, %v1521
        %v1527 = vunpack.c.l.b16 %v1511
        %v1528 = vunpack.c.l.b16 %v1512
        %v1529 = vunpack.c.l.b16 %v1513
        %v1530 = vunpack.c.l.b16 %v1514
        %v1531 = vpack.c.b16 %v1528, %v1527
        %v1532 = vpack.c.b16 %v1530, %v1529
        %v1536 = vsel %vm709, %v1522, 0
        %1538 = vmatpush.bf16.msra.mxu0 0
        %1539 = vmatpush.bf16.msra.mxu0 0
        %1540 = vmatpush.bf16.msra.mxu0 0
        %1541 = vmatpush.bf16.msra.mxu0 0
        %1542 = vmatpush.bf16.msra.mxu0 0
        %1543 = vmatpush.bf16.msra.mxu0 0
        %1544 = vmatpush.bf16.msra.mxu0 %v1532
        %1545 = vmatpush.bf16.msra.mxu0 %v1531
        %1546 = vmatmul.bf16.gmra.mxu0 %v1536
        %v1547 = vpop.f32.mrf.mxu0
        %v1548 = vadd.f32 0.0, %v1547
        %v1549 = vpop.f32.mrf.mxu0
        %1550 = vdwg.mxu0
        %v1551 = vadd.f32 %v1497, %v1548
        %1552 = vst [vmem:[#allocation1] ss:$2 sm:$0xff] %v930
        %v1553 = vld.sshfl [vmem:[#allocation1] sm:$0xff pattern:$0x75316420]
        %v1554 = vrot.slane %v1553, 1
        %v1556 = vmul.f32 %v1501, %v1554
        %v1557 = vmul.f32 %v1502, %v1554
        %v1558 = vpack.c.bf16 %v1557, %v1556
        %s1559 = scalar_lea.vmem %s10, 192
        %v1560 = vld [vmem:[%s1559] sm:$0xf]
        %v1561 = vld [vmem:[%s1559 + $0x4] sm:$0xf]
        %v1562 = vld [vmem:[%s1559 + $0x8] sm:$0xf]
        %v1563 = vld [vmem:[%s1559 + $0xc] sm:$0xf]
        %v1565 = vshrl.u32 %v1558, 16
        %v1567 = vrot.slane %v1565, 3
        %v1568 = vshll.u32 %v1558, 16
        %v1570 = vrot.slane %v1568, 4
        %v1571 = vor.u32 %v1567, %v1570
        %v1576 = vunpack.c.l.b16 %v1560
        %v1577 = vunpack.c.l.b16 %v1561
        %v1578 = vunpack.c.l.b16 %v1562
        %v1579 = vunpack.c.l.b16 %v1563
        %v1580 = vpack.c.b16 %v1577, %v1576
        %v1581 = vpack.c.b16 %v1579, %v1578
        %v1585 = vsel %vm709, %v1571, 0
        %1587 = vmatpush.bf16.msra.mxu0 0
        %1588 = vmatpush.bf16.msra.mxu0 0
        %1589 = vmatpush.bf16.msra.mxu0 0
        %1590 = vmatpush.bf16.msra.mxu0 0
        %1591 = vmatpush.bf16.msra.mxu0 0
        %1592 = vmatpush.bf16.msra.mxu0 0
        %1593 = vmatpush.bf16.msra.mxu0 %v1581
        %1594 = vmatpush.bf16.msra.mxu0 %v1580
        %1595 = vmatmul.bf16.gmra.mxu0 %v1585
        %v1596 = vpop.f32.mrf.mxu0
        %v1597 = vadd.f32 0.0, %v1596
        %v1598 = vpop.f32.mrf.mxu0
        %1599 = vdwg.mxu0
        %v1600 = vadd.f32 %v1551, %v1597
        %v1601 = vld [vmem:[#allocation2 + $0x4] sm:$0x3]
        %s1602 = scalar_lea.vmem %s10, 208
        %v1603 = vld [vmem:[%s1602] sm:$0xf]
        %v1604 = vld [vmem:[%s1602 + $0x4] sm:$0xf]
        %v1605 = vld [vmem:[%s1602 + $0x8] sm:$0xf]
        %v1606 = vld [vmem:[%s1602 + $0xc] sm:$0xf]
        %v1611 = vunpack.c.l.b16 %v1603
        %v1612 = vunpack.c.l.b16 %v1604
        %v1613 = vunpack.c.l.b16 %v1605
        %v1614 = vunpack.c.l.b16 %v1606
        %v1615 = vpack.c.b16 %v1612, %v1611
        %v1616 = vpack.c.b16 %v1614, %v1613
        %v1620 = vsel %vm709, %v1601, 0
        %1622 = vmatpush.bf16.msra.mxu0 0
        %1623 = vmatpush.bf16.msra.mxu0 0
        %1624 = vmatpush.bf16.msra.mxu0 0
        %1625 = vmatpush.bf16.msra.mxu0 0
        %1626 = vmatpush.bf16.msra.mxu0 0
        %1627 = vmatpush.bf16.msra.mxu0 0
        %1628 = vmatpush.bf16.msra.mxu0 %v1616
        %1629 = vmatpush.bf16.msra.mxu0 %v1615
        %1630 = vmatmul.bf16.gmra.mxu0 %v1620
        %v1631 = vpop.f32.mrf.mxu0
        %v1632 = vadd.f32 0.0, %v1631
        %v1633 = vpop.f32.mrf.mxu0
        %1634 = vdwg.mxu0
        %v1635 = vadd.f32 %v1600, %v1632
        %v1636 = vld [vmem:[#allocation2 + $0x4] sm:$0x7]
        %v1637 = vunpack.c.l.bf16 %v1636
        %1638 = vst [vmem:[#allocation1] ss:$2 sm:$0xff] %v1032
        %v1639 = vld.sshfl [vmem:[#allocation1] sm:$0xff pattern:$0x75316420]
        %v1640 = vrot.slane %v1639, 7
        %v1642 = vmul.f32 %v1637, %v1640
        %v1643 = vpack.c.bf16 %v1642, %v1642
        %s1644 = scalar_lea.vmem %s10, 224
        %v1645 = vld [vmem:[%s1644] sm:$0xf]
        %v1646 = vld [vmem:[%s1644 + $0x4] sm:$0xf]
        %v1647 = vld [vmem:[%s1644 + $0x8] sm:$0xf]
        %v1648 = vld [vmem:[%s1644 + $0xc] sm:$0xf]
        %v1650 = vshrl.u32 %v1643, 16
        %v1652 = vshll.u32 %v1643, 16
        %v1654 = vrot.slane %v1652, 1
        %v1655 = vor.u32 %v1650, %v1654
        %v1660 = vunpack.c.l.b16 %v1645
        %v1661 = vunpack.c.l.b16 %v1646
        %v1662 = vunpack.c.l.b16 %v1647
        %v1663 = vunpack.c.l.b16 %v1648
        %v1664 = vpack.c.b16 %v1661, %v1660
        %v1665 = vpack.c.b16 %v1663, %v1662
        %v1669 = vsel %vm709, %v1655, 0
        %1671 = vmatpush.bf16.msra.mxu0 0
        %1672 = vmatpush.bf16.msra.mxu0 0
        %1673 = vmatpush.bf16.msra.mxu0 0
        %1674 = vmatpush.bf16.msra.mxu0 0
        %1675 = vmatpush.bf16.msra.mxu0 0
        %1676 = vmatpush.bf16.msra.mxu0 0
        %1677 = vmatpush.bf16.msra.mxu0 %v1665
        %1678 = vmatpush.bf16.msra.mxu0 %v1664
        %1679 = vmatmul.bf16.gmra.mxu0 %v1669
        %v1680 = vpop.f32.mrf.mxu0
        %v1681 = vadd.f32 0.0, %v1680
        %v1682 = vpop.f32.mrf.mxu0
        %1683 = vdwg.mxu0
        %v1684 = vadd.f32 %v1635, %v1681
        %1685 = vst [vmem:[#allocation1] ss:$2 sm:$0xff] %v930
        %v1686 = vld.sshfl [vmem:[#allocation1] sm:$0xff pattern:$0x75316420]
        %v1687 = vrot.slane %v1686, 7
        %v1689 = vmul.f32 %v1637, %v1687
        %v1690 = vpack.c.bf16 %v1689, %v1689
        %s1691 = scalar_lea.vmem %s10, 240
        %v1692 = vld [vmem:[%s1691] sm:$0xf]
        %v1693 = vld [vmem:[%s1691 + $0x4] sm:$0xf]
        %v1694 = vld [vmem:[%s1691 + $0x8] sm:$0xf]
        %v1695 = vld [vmem:[%s1691 + $0xc] sm:$0xf]
        %v1697 = vshrl.u32 %v1690, 16
        %v1699 = vshll.u32 %v1690, 16
        %v1701 = vrot.slane %v1699, 1
        %v1702 = vor.u32 %v1697, %v1701
        %v1707 = vunpack.c.l.b16 %v1692
        %v1708 = vunpack.c.l.b16 %v1693
        %v1709 = vunpack.c.l.b16 %v1694
        %v1710 = vunpack.c.l.b16 %v1695
        %v1711 = vpack.c.b16 %v1708, %v1707
        %v1712 = vpack.c.b16 %v1710, %v1709
        %v1716 = vsel %vm709, %v1702, 0
        %1718 = vmatpush.bf16.msra.mxu0 0
        %1719 = vmatpush.bf16.msra.mxu0 0
        %1720 = vmatpush.bf16.msra.mxu0 0
        %1721 = vmatpush.bf16.msra.mxu0 0
        %1722 = vmatpush.bf16.msra.mxu0 0
        %1723 = vmatpush.bf16.msra.mxu0 0
        %1724 = vmatpush.bf16.msra.mxu0 %v1712
        %1725 = vmatpush.bf16.msra.mxu0 %v1711
        %1726 = vmatmul.bf16.gmra.mxu0 %v1716
        %v1727 = vpop.f32.mrf.mxu0
        %v1728 = vadd.f32 0.0, %v1727
        %v1729 = vpop.f32.mrf.mxu0
        %1730 = vdwg.mxu0
        %v1731 = vadd.f32 %v1684, %v1728
        %v1732 = vld [vmem:[#allocation2 + $0x4] sm:$0x6]
        %s1733 = scalar_lea.vmem %s10, 256
        %v1734 = vld [vmem:[%s1733] sm:$0xf]
        %v1735 = vld [vmem:[%s1733 + $0x4] sm:$0xf]
        %v1736 = vld [vmem:[%s1733 + $0x8] sm:$0xf]
        %v1737 = vld [vmem:[%s1733 + $0xc] sm:$0xf]
        %v1739 = vunpack.c.l.b16 %v1732
        %v1740 = vpack.c.b16 %v1739, %v1739
        %v1741 = vrot.slane %v1740, 1
        %v1746 = vunpack.c.l.b16 %v1734
        %v1747 = vunpack.c.l.b16 %v1735
        %v1748 = vunpack.c.l.b16 %v1736
        %v1749 = vunpack.c.l.b16 %v1737
        %v1750 = vpack.c.b16 %v1747, %v1746
        %v1751 = vpack.c.b16 %v1749, %v1748
        %v1755 = vsel %vm709, %v1741, 0
        %1757 = vmatpush.bf16.msra.mxu0 0
        %1758 = vmatpush.bf16.msra.mxu0 0
        %1759 = vmatpush.bf16.msra.mxu0 0
        %1760 = vmatpush.bf16.msra.mxu0 0
        %1761 = vmatpush.bf16.msra.mxu0 0
        %1762 = vmatpush.bf16.msra.mxu0 0
        %1763 = vmatpush.bf16.msra.mxu0 %v1751
        %1764 = vmatpush.bf16.msra.mxu0 %v1750
        %1765 = vmatmul.bf16.gmra.mxu0 %v1755
        %v1766 = vpop.f32.mrf.mxu0
        %v1767 = vadd.f32 0.0, %v1766
        %v1768 = vpop.f32.mrf.mxu0
        %1769 = vdwg.mxu0
        %v1770 = vadd.f32 %v1731, %v1767
        %v1771 = vld [vmem:[#allocation2 + $0x4] sm:$0xe]
        %v1772 = vunpack.c.l.bf16 %v1771
        %1773 = vst [vmem:[#allocation1] ss:$2 sm:$0xff] %v1032
        %v1774 = vld.sshfl [vmem:[#allocation1] sm:$0xff pattern:$0x75316420]
        %v1775 = vrot.slane %v1774, 5
        %v1777 = vmul.f32 %v1772, %v1775
        %v1778 = vpack.c.bf16 %v1777, %v1777
        %s1779 = scalar_lea.vmem %s10, 272
        %v1780 = vld [vmem:[%s1779] sm:$0xf]
        %v1781 = vld [vmem:[%s1779 + $0x4] sm:$0xf]
        %v1782 = vld [vmem:[%s1779 + $0x8] sm:$0xf]
        %v1783 = vld [vmem:[%s1779 + $0xc] sm:$0xf]
        %v1785 = vshrl.u32 %v1778, 16
        %v1787 = vrot.slane %v1785, 1
        %v1788 = vshll.u32 %v1778, 16
        %v1790 = vrot.slane %v1788, 2
        %v1791 = vor.u32 %v1787, %v1790
        %v1796 = vunpack.c.l.b16 %v1780
        %v1797 = vunpack.c.l.b16 %v1781
        %v1798 = vunpack.c.l.b16 %v1782
        %v1799 = vunpack.c.l.b16 %v1783
        %v1800 = vpack.c.b16 %v1797, %v1796
        %v1801 = vpack.c.b16 %v1799, %v1798
        %v1805 = vsel %vm709, %v1791, 0
        %1807 = vmatpush.bf16.msra.mxu0 0
        %1808 = vmatpush.bf16.msra.mxu0 0
        %1809 = vmatpush.bf16.msra.mxu0 0
        %1810 = vmatpush.bf16.msra.mxu0 0
        %1811 = vmatpush.bf16.msra.mxu0 0
        %1812 = vmatpush.bf16.msra.mxu0 0
        %1813 = vmatpush.bf16.msra.mxu0 %v1801
        %1814 = vmatpush.bf16.msra.mxu0 %v1800
        %1815 = vmatmul.bf16.gmra.mxu0 %v1805
        %v1816 = vpop.f32.mrf.mxu0
        %v1817 = vadd.f32 0.0, %v1816
        %v1818 = vpop.f32.mrf.mxu0
        %1819 = vdwg.mxu0
        %v1820 = vadd.f32 %v1770, %v1817
        %s1821 = scalar_lea.vmem %s11, 1
        %v1822 = vld [vmem:[%s1821] sm:$0x1]
        %v1824 = vperm.slane %v1822, 0
        %v1826 = vadd.f32 %v1820, %v1824
        %v1827 = vmul.f32 %v1826, 0.5
        %v1828 = vtanh.pop %v1827
        %v1829 = vadd.f32 %v1828, 1.0
        %v1830 = vmul.f32 %v1827, %v1829
        %v1831 = vadd.f32 %v1361, %v1830
        %v1832 = vpack.c.bf16 %v1831, %v1831
        %s1833 = scalar_lea.vmem %s8, 32
        %v1834 = vld [vmem:[%s1833] sm:$0xf]
        %v1835 = vld [vmem:[%s1833 + $0x4] sm:$0xf]
        %v1836 = vld [vmem:[%s1833 + $0x8] sm:$0xf]
        %v1837 = vld [vmem:[%s1833 + $0xc] sm:$0xf]
        %s1838 = scalar_lea.vmem %s9, 2
        %v1839 = vld [vmem:[%s1838] sm:$0x1]
        %v1841 = vperm.slane %v1839, 0
        %v1847 = vunpack.c.l.b16 %v1834
        %v1848 = vunpack.c.l.b16 %v1835
        %v1849 = vunpack.c.l.b16 %v1836
        %v1850 = vunpack.c.l.b16 %v1837
        %v1851 = vpack.c.b16 %v1848, %v1847
        %v1852 = vpack.c.b16 %v1850, %v1849
        %v1856 = vsel %vm709, %v1832, 0
        %1858 = vmatpush.bf16.msra.mxu0 0
        %1859 = vmatpush.bf16.msra.mxu0 0
        %1860 = vmatpush.bf16.msra.mxu0 0
        %1861 = vmatpush.bf16.msra.mxu0 0
        %1862 = vmatpush.bf16.msra.mxu0 0
        %1863 = vmatpush.bf16.msra.mxu0 0
        %1864 = vmatpush.bf16.msra.mxu0 %v1852
        %1865 = vmatpush.bf16.msra.mxu0 %v1851
        %1866 = vmatmul.bf16.gmra.mxu0 %v1856
        %v1867 = vpop.f32.mrf.mxu0
        %v1868 = vadd.f32 %v1841, %v1867
        %v1869 = vpop.f32.mrf.mxu0
        %1870 = vdwg.mxu0
        %v1871 = vmul.f32 %v1868, 0.5
        %v1872 = vtanh.pop %v1871
        %v1873 = vadd.f32 %v1872, 1.0
        %v1874 = vmul.f32 %v1871, %v1873
        %v1875 = vpack.c.bf16 %v1874, %v1874
        %1876 = vst.msk [vmem:[#allocation2 + $0x4] sm:$0x3] %vm915, %v1875
        %v1877 = vld [vmem:[#allocation2] sm:$0xc]
        %v1878 = vld [vmem:[#allocation2 + $0x4] sm:$0x1]
        %v1879 = vunpack.c.l.bf16 %v1877
        %v1880 = vunpack.c.l.bf16 %v1878
        %1881 = vst [vmem:[#allocation1] ss:$2 sm:$0xff] %v930
        %v1882 = vld.sshfl [vmem:[#allocation1] sm:$0xff pattern:$0x75316420]
        %v1883 = vrot.slane %v1882, 3
        %v1885 = vmul.f32 %v1879, %v1883
        %v1886 = vmul.f32 %v1880, %v1883
        %v1887 = vpack.c.bf16 %v1886, %v1885
        %s1888 = scalar_lea.vmem %s10, 288
        %v1889 = vld [vmem:[%s1888] sm:$0xf]
        %v1890 = vld [vmem:[%s1888 + $0x4] sm:$0xf]
        %v1891 = vld [vmem:[%s1888 + $0x8] sm:$0xf]
        %v1892 = vld [vmem:[%s1888 + $0xc] sm:$0xf]
        %v1893 = vld [vmem:[#allocation2] sm:$0x8]
        %v1894 = vld [vmem:[#allocation2 + $0x4] sm:$0x1]
        %s1895 = scalar_lea.vmem %s10, 304
        %v1896 = vld [vmem:[%s1895] sm:$0xf]
        %v1897 = vld [vmem:[%s1895 + $0x4] sm:$0xf]
        %v1898 = vld [vmem:[%s1895 + $0x8] sm:$0xf]
        %v1899 = vld [vmem:[%s1895 + $0xc] sm:$0xf]
        %v1902 = vunpack.c.l.b16 %v1893
        %v1903 = vunpack.c.l.b16 %v1894
        %v1904 = vpack.c.b16 %v1903, %v1902
        %v1905 = vrot.slane %v1904, 3
        %v1910 = vunpack.c.l.b16 %v1896
        %v1911 = vunpack.c.l.b16 %v1897
        %v1912 = vunpack.c.l.b16 %v1898
        %v1913 = vunpack.c.l.b16 %v1899
        %v1914 = vpack.c.b16 %v1911, %v1910
        %v1915 = vpack.c.b16 %v1913, %v1912
        %v1919 = vsel %vm709, %v1905, 0
        %1921 = vmatpush.bf16.msra.mxu0 0
        %1922 = vmatpush.bf16.msra.mxu0 0
        %1923 = vmatpush.bf16.msra.mxu0 0
        %1924 = vmatpush.bf16.msra.mxu0 0
        %1925 = vmatpush.bf16.msra.mxu0 0
        %1926 = vmatpush.bf16.msra.mxu0 0
        %1927 = vmatpush.bf16.msra.mxu0 %v1915
        %1928 = vmatpush.bf16.msra.mxu0 %v1914
        %1929 = vmatmul.bf16.gmra.mxu0 %v1919
        %v1930 = vpop.f32.mrf.mxu0
        %v1931 = vadd.f32 0.0, %v1930
        %v1932 = vpop.f32.mrf.mxu0
        %1933 = vdwg.mxu0
        %v1935 = vshrl.u32 %v1887, 16
        %v1937 = vrot.slane %v1935, 2
        %v1938 = vshll.u32 %v1887, 16
        %v1940 = vrot.slane %v1938, 3
        %v1941 = vor.u32 %v1937, %v1940
        %v1946 = vunpack.c.l.b16 %v1889
        %v1947 = vunpack.c.l.b16 %v1890
        %v1948 = vunpack.c.l.b16 %v1891
        %v1949 = vunpack.c.l.b16 %v1892
        %v1950 = vpack.c.b16 %v1947, %v1946
        %v1951 = vpack.c.b16 %v1949, %v1948
        %v1955 = vsel %vm709, %v1941, 0
        %1957 = vmatpush.bf16.msra.mxu0 0
        %1958 = vmatpush.bf16.msra.mxu0 0
        %1959 = vmatpush.bf16.msra.mxu0 0
        %1960 = vmatpush.bf16.msra.mxu0 0
        %1961 = vmatpush.bf16.msra.mxu0 0
        %1962 = vmatpush.bf16.msra.mxu0 0
        %1963 = vmatpush.bf16.msra.mxu0 %v1951
        %1964 = vmatpush.bf16.msra.mxu0 %v1950
        %1965 = vmatmul.bf16.gmra.mxu0 %v1955
        %v1966 = vpop.f32.mrf.mxu0
        %v1967 = vadd.f32 %v1931, %v1966
        %v1968 = vpop.f32.mrf.mxu0
        %1969 = vdwg.mxu0
        %v1970 = vld [vmem:[#allocation2 + $0x4] sm:$0x3]
        %v1971 = vunpack.c.l.bf16 %v1893
        %v1972 = vunpack.c.l.bf16 %v1970
        %1973 = vst [vmem:[#allocation1] ss:$2 sm:$0xff] %v1032
        %v1974 = vld.sshfl [vmem:[#allocation1] sm:$0xff pattern:$0x75316420]
        %v1975 = vrot.slane %v1974, 1
        %v1977 = vmul.f32 %v1971, %v1975
        %v1978 = vmul.f32 %v1972, %v1975
        %v1979 = vpack.c.bf16 %v1978, %v1977
        %s1980 = scalar_lea.vmem %s10, 320
        %v1981 = vld [vmem:[%s1980] sm:$0xf]
        %v1982 = vld [vmem:[%s1980 + $0x4] sm:$0xf]
        %v1983 = vld [vmem:[%s1980 + $0x8] sm:$0xf]
        %v1984 = vld [vmem:[%s1980 + $0xc] sm:$0xf]
        %v1986 = vshrl.u32 %v1979, 16
        %v1988 = vrot.slane %v1986, 3
        %v1989 = vshll.u32 %v1979, 16
        %v1991 = vrot.slane %v1989, 4
        %v1992 = vor.u32 %v1988, %v1991
        %v1997 = vunpack.c.l.b16 %v1981
        %v1998 = vunpack.c.l.b16 %v1982
        %v1999 = vunpack.c.l.b16 %v1983
        %v2000 = vunpack.c.l.b16 %v1984
        %v2001 = vpack.c.b16 %v1998, %v1997
        %v2002 = vpack.c.b16 %v2000, %v1999
        %v2006 = vsel %vm709, %v1992, 0
        %2008 = vmatpush.bf16.msra.mxu0 0
        %2009 = vmatpush.bf16.msra.mxu0 0
        %2010 = vmatpush.bf16.msra.mxu0 0
        %2011 = vmatpush.bf16.msra.mxu0 0
        %2012 = vmatpush.bf16.msra.mxu0 0
        %2013 = vmatpush.bf16.msra.mxu0 0
        %2014 = vmatpush.bf16.msra.mxu0 %v2002
        %2015 = vmatpush.bf16.msra.mxu0 %v2001
        %2016 = vmatmul.bf16.gmra.mxu0 %v2006
        %v2017 = vpop.f32.mrf.mxu0
        %v2018 = vadd.f32 0.0, %v2017
        %v2019 = vpop.f32.mrf.mxu0
        %2020 = vdwg.mxu0
        %v2021 = vadd.f32 %v1967, %v2018
        %2022 = vst [vmem:[#allocation1] ss:$2 sm:$0xff] %v930
        %v2023 = vld.sshfl [vmem:[#allocation1] sm:$0xff pattern:$0x75316420]
        %v2024 = vrot.slane %v2023, 1
        %v2026 = vmul.f32 %v1971, %v2024
        %v2027 = vmul.f32 %v1972, %v2024
        %v2028 = vpack.c.bf16 %v2027, %v2026
        %s2029 = scalar_lea.vmem %s10, 336
        %v2030 = vld [vmem:[%s2029] sm:$0xf]
        %v2031 = vld [vmem:[%s2029 + $0x4] sm:$0xf]
        %v2032 = vld [vmem:[%s2029 + $0x8] sm:$0xf]
        %v2033 = vld [vmem:[%s2029 + $0xc] sm:$0xf]
        %v2035 = vshrl.u32 %v2028, 16
        %v2037 = vrot.slane %v2035, 3
        %v2038 = vshll.u32 %v2028, 16
        %v2040 = vrot.slane %v2038, 4
        %v2041 = vor.u32 %v2037, %v2040
        %v2046 = vunpack.c.l.b16 %v2030
        %v2047 = vunpack.c.l.b16 %v2031
        %v2048 = vunpack.c.l.b16 %v2032
        %v2049 = vunpack.c.l.b16 %v2033
        %v2050 = vpack.c.b16 %v2047, %v2046
        %v2051 = vpack.c.b16 %v2049, %v2048
        %v2055 = vsel %vm709, %v2041, 0
        %2057 = vmatpush.bf16.msra.mxu0 0
        %2058 = vmatpush.bf16.msra.mxu0 0
        %2059 = vmatpush.bf16.msra.mxu0 0
        %2060 = vmatpush.bf16.msra.mxu0 0
        %2061 = vmatpush.bf16.msra.mxu0 0
        %2062 = vmatpush.bf16.msra.mxu0 0
        %2063 = vmatpush.bf16.msra.mxu0 %v2051
        %2064 = vmatpush.bf16.msra.mxu0 %v2050
        %2065 = vmatmul.bf16.gmra.mxu0 %v2055
        %v2066 = vpop.f32.mrf.mxu0
        %v2067 = vadd.f32 0.0, %v2066
        %v2068 = vpop.f32.mrf.mxu0
        %2069 = vdwg.mxu0
        %v2070 = vadd.f32 %v2021, %v2067
        %v2071 = vld [vmem:[#allocation2 + $0x4] sm:$0x3]
        %s2072 = scalar_lea.vmem %s10, 352
        %v2073 = vld [vmem:[%s2072] sm:$0xf]
        %v2074 = vld [vmem:[%s2072 + $0x4] sm:$0xf]
        %v2075 = vld [vmem:[%s2072 + $0x8] sm:$0xf]
        %v2076 = vld [vmem:[%s2072 + $0xc] sm:$0xf]
        %v2081 = vunpack.c.l.b16 %v2073
        %v2082 = vunpack.c.l.b16 %v2074
        %v2083 = vunpack.c.l.b16 %v2075
        %v2084 = vunpack.c.l.b16 %v2076
        %v2085 = vpack.c.b16 %v2082, %v2081
        %v2086 = vpack.c.b16 %v2084, %v2083
        %v2090 = vsel %vm709, %v2071, 0
        %2092 = vmatpush.bf16.msra.mxu0 0
        %2093 = vmatpush.bf16.msra.mxu0 0
        %2094 = vmatpush.bf16.msra.mxu0 0
        %2095 = vmatpush.bf16.msra.mxu0 0
        %2096 = vmatpush.bf16.msra.mxu0 0
        %2097 = vmatpush.bf16.msra.mxu0 0
        %2098 = vmatpush.bf16.msra.mxu0 %v2086
        %2099 = vmatpush.bf16.msra.mxu0 %v2085
        %2100 = vmatmul.bf16.gmra.mxu0 %v2090
        %v2101 = vpop.f32.mrf.mxu0
        %v2102 = vadd.f32 0.0, %v2101
        %v2103 = vpop.f32.mrf.mxu0
        %2104 = vdwg.mxu0
        %v2105 = vadd.f32 %v2070, %v2102
        %v2106 = vld [vmem:[#allocation2 + $0x4] sm:$0x7]
        %v2107 = vunpack.c.l.bf16 %v2106
        %2108 = vst [vmem:[#allocation1] ss:$2 sm:$0xff] %v1032
        %v2109 = vld.sshfl [vmem:[#allocation1] sm:$0xff pattern:$0x75316420]
        %v2110 = vrot.slane %v2109, 7
        %v2112 = vmul.f32 %v2107, %v2110
        %v2113 = vpack.c.bf16 %v2112, %v2112
        %s2114 = scalar_lea.vmem %s10, 368
        %v2115 = vld [vmem:[%s2114] sm:$0xf]
        %v2116 = vld [vmem:[%s2114 + $0x4] sm:$0xf]
        %v2117 = vld [vmem:[%s2114 + $0x8] sm:$0xf]
        %v2118 = vld [vmem:[%s2114 + $0xc] sm:$0xf]
        %v2120 = vshrl.u32 %v2113, 16
        %v2122 = vshll.u32 %v2113, 16
        %v2124 = vrot.slane %v2122, 1
        %v2125 = vor.u32 %v2120, %v2124
        %v2130 = vunpack.c.l.b16 %v2115
        %v2131 = vunpack.c.l.b16 %v2116
        %v2132 = vunpack.c.l.b16 %v2117
        %v2133 = vunpack.c.l.b16 %v2118
        %v2134 = vpack.c.b16 %v2131, %v2130
        %v2135 = vpack.c.b16 %v2133, %v2132
        %v2139 = vsel %vm709, %v2125, 0
        %2141 = vmatpush.bf16.msra.mxu0 0
        %2142 = vmatpush.bf16.msra.mxu0 0
        %2143 = vmatpush.bf16.msra.mxu0 0
        %2144 = vmatpush.bf16.msra.mxu0 0
        %2145 = vmatpush.bf16.msra.mxu0 0
        %2146 = vmatpush.bf16.msra.mxu0 0
        %2147 = vmatpush.bf16.msra.mxu0 %v2135
        %2148 = vmatpush.bf16.msra.mxu0 %v2134
        %2149 = vmatmul.bf16.gmra.mxu0 %v2139
        %v2150 = vpop.f32.mrf.mxu0
        %v2151 = vadd.f32 0.0, %v2150
        %v2152 = vpop.f32.mrf.mxu0
        %2153 = vdwg.mxu0
        %v2154 = vadd.f32 %v2105, %v2151
        %2155 = vst [vmem:[#allocation1] ss:$2 sm:$0xff] %v930
        %v2156 = vld.sshfl [vmem:[#allocation1] sm:$0xff pattern:$0x75316420]
        %v2157 = vrot.slane %v2156, 7
        %v2159 = vmul.f32 %v2107, %v2157
        %v2160 = vpack.c.bf16 %v2159, %v2159
        %s2161 = scalar_lea.vmem %s10, 384
        %v2162 = vld [vmem:[%s2161] sm:$0xf]
        %v2163 = vld [vmem:[%s2161 + $0x4] sm:$0xf]
        %v2164 = vld [vmem:[%s2161 + $0x8] sm:$0xf]
        %v2165 = vld [vmem:[%s2161 + $0xc] sm:$0xf]
        %v2167 = vshrl.u32 %v2160, 16
        %v2169 = vshll.u32 %v2160, 16
        %v2171 = vrot.slane %v2169, 1
        %v2172 = vor.u32 %v2167, %v2171
        %v2177 = vunpack.c.l.b16 %v2162
        %v2178 = vunpack.c.l.b16 %v2163
        %v2179 = vunpack.c.l.b16 %v2164
        %v2180 = vunpack.c.l.b16 %v2165
        %v2181 = vpack.c.b16 %v2178, %v2177
        %v2182 = vpack.c.b16 %v2180, %v2179
        %v2186 = vsel %vm709, %v2172, 0
        %2188 = vmatpush.bf16.msra.mxu0 0
        %2189 = vmatpush.bf16.msra.mxu0 0
        %2190 = vmatpush.bf16.msra.mxu0 0
        %2191 = vmatpush.bf16.msra.mxu0 0
        %2192 = vmatpush.bf16.msra.mxu0 0
        %2193 = vmatpush.bf16.msra.mxu0 0
        %2194 = vmatpush.bf16.msra.mxu0 %v2182
        %2195 = vmatpush.bf16.msra.mxu0 %v2181
        %2196 = vmatmul.bf16.gmra.mxu0 %v2186
        %v2197 = vpop.f32.mrf.mxu0
        %v2198 = vadd.f32 0.0, %v2197
        %v2199 = vpop.f32.mrf.mxu0
        %2200 = vdwg.mxu0
        %v2201 = vadd.f32 %v2154, %v2198
        %v2202 = vld [vmem:[#allocation2 + $0x4] sm:$0x6]
        %s2203 = scalar_lea.vmem %s10, 400
        %v2204 = vld [vmem:[%s2203] sm:$0xf]
        %v2205 = vld [vmem:[%s2203 + $0x4] sm:$0xf]
        %v2206 = vld [vmem:[%s2203 + $0x8] sm:$0xf]
        %v2207 = vld [vmem:[%s2203 + $0xc] sm:$0xf]
        %v2209 = vunpack.c.l.b16 %v2202
        %v2210 = vpack.c.b16 %v2209, %v2209
        %v2211 = vrot.slane %v2210, 1
        %v2216 = vunpack.c.l.b16 %v2204
        %v2217 = vunpack.c.l.b16 %v2205
        %v2218 = vunpack.c.l.b16 %v2206
        %v2219 = vunpack.c.l.b16 %v2207
        %v2220 = vpack.c.b16 %v2217, %v2216
        %v2221 = vpack.c.b16 %v2219, %v2218
        %v2225 = vsel %vm709, %v2211, 0
        %2227 = vmatpush.bf16.msra.mxu0 0
        %2228 = vmatpush.bf16.msra.mxu0 0
        %2229 = vmatpush.bf16.msra.mxu0 0
        %2230 = vmatpush.bf16.msra.mxu0 0
        %2231 = vmatpush.bf16.msra.mxu0 0
        %2232 = vmatpush.bf16.msra.mxu0 0
        %2233 = vmatpush.bf16.msra.mxu0 %v2221
        %2234 = vmatpush.bf16.msra.mxu0 %v2220
        %2235 = vmatmul.bf16.gmra.mxu0 %v2225
        %v2236 = vpop.f32.mrf.mxu0
        %v2237 = vadd.f32 0.0, %v2236
        %v2238 = vpop.f32.mrf.mxu0
        %2239 = vdwg.mxu0
        %v2240 = vadd.f32 %v2201, %v2237
        %v2241 = vld [vmem:[#allocation2 + $0x4] sm:$0xe]
        %v2242 = vunpack.c.l.bf16 %v2241
        %2243 = vst [vmem:[#allocation1] ss:$2 sm:$0xff] %v1032
        %v2244 = vld.sshfl [vmem:[#allocation1] sm:$0xff pattern:$0x75316420]
        %v2245 = vrot.slane %v2244, 5
        %v2247 = vmul.f32 %v2242, %v2245
        %v2248 = vpack.c.bf16 %v2247, %v2247
        %s2249 = scalar_lea.vmem %s10, 416
        %v2250 = vld [vmem:[%s2249] sm:$0xf]
        %v2251 = vld [vmem:[%s2249 + $0x4] sm:$0xf]
        %v2252 = vld [vmem:[%s2249 + $0x8] sm:$0xf]
        %v2253 = vld [vmem:[%s2249 + $0xc] sm:$0xf]
        %v2255 = vshrl.u32 %v2248, 16
        %v2257 = vrot.slane %v2255, 1
        %v2258 = vshll.u32 %v2248, 16
        %v2260 = vrot.slane %v2258, 2
        %v2261 = vor.u32 %v2257, %v2260
        %v2266 = vunpack.c.l.b16 %v2250
        %v2267 = vunpack.c.l.b16 %v2251
        %v2268 = vunpack.c.l.b16 %v2252
        %v2269 = vunpack.c.l.b16 %v2253
        %v2270 = vpack.c.b16 %v2267, %v2266
        %v2271 = vpack.c.b16 %v2269, %v2268
        %v2275 = vsel %vm709, %v2261, 0
        %2277 = vmatpush.bf16.msra.mxu0 0
        %2278 = vmatpush.bf16.msra.mxu0 0
        %2279 = vmatpush.bf16.msra.mxu0 0
        %2280 = vmatpush.bf16.msra.mxu0 0
        %2281 = vmatpush.bf16.msra.mxu0 0
        %2282 = vmatpush.bf16.msra.mxu0 0
        %2283 = vmatpush.bf16.msra.mxu0 %v2271
        %2284 = vmatpush.bf16.msra.mxu0 %v2270
        %2285 = vmatmul.bf16.gmra.mxu0 %v2275
        %v2286 = vpop.f32.mrf.mxu0
        %v2287 = vadd.f32 0.0, %v2286
        %v2288 = vpop.f32.mrf.mxu0
        %2289 = vdwg.mxu0
        %v2290 = vadd.f32 %v2240, %v2287
        %s2291 = scalar_lea.vmem %s11, 2
        %v2292 = vld [vmem:[%s2291] sm:$0x1]
        %v2294 = vperm.slane %v2292, 0
        %v2296 = vadd.f32 %v2290, %v2294
        %v2297 = vmul.f32 %v2296, 0.5
        %v2298 = vtanh.pop %v2297
        %v2299 = vadd.f32 %v2298, 1.0
        %v2300 = vmul.f32 %v2297, %v2299
        %v2301 = vadd.f32 %v1831, %v2300
        %v2302 = vpack.c.bf16 %v2301, %v2301
        %v2303 = vld [vmem:[%s12] sm:$0xf]
        %v2304 = vld [vmem:[%s12 + $0x4] sm:$0xf]
        %v2305 = vld [vmem:[%s12 + $0x8] sm:$0xf]
        %v2306 = vld [vmem:[%s12 + $0xc] sm:$0xf]
        %v2307 = vpack.c.bf16 %v865, %v865
        %v2308 = vld [vmem:[%s13] sm:$0xf]
        %v2309 = vld [vmem:[%s13 + $0x4] sm:$0xf]
        %v2310 = vld [vmem:[%s13 + $0x8] sm:$0xf]
        %v2311 = vld [vmem:[%s13 + $0xc] sm:$0xf]
        %v2316 = vunpack.c.l.b16 %v2308
        %v2317 = vunpack.c.l.b16 %v2309
        %v2318 = vunpack.c.l.b16 %v2310
        %v2319 = vunpack.c.l.b16 %v2311
        %v2320 = vpack.c.b16 %v2317, %v2316
        %v2321 = vpack.c.b16 %v2319, %v2318
        %v2325 = vsel %vm709, %v2307, 0
        %2327 = vmatpush.bf16.msra.mxu0 0
        %2328 = vmatpush.bf16.msra.mxu0 0
        %2329 = vmatpush.bf16.msra.mxu0 0
        %2330 = vmatpush.bf16.msra.mxu0 0
        %2331 = vmatpush.bf16.msra.mxu0 0
        %2332 = vmatpush.bf16.msra.mxu0 0
        %2333 = vmatpush.bf16.msra.mxu0 %v2321
        %2334 = vmatpush.bf16.msra.mxu0 %v2320
        %2335 = vmatmul.bf16.gmra.mxu0 %v2325
        %v2336 = vpop.f32.mrf.mxu0
        %v2337 = vadd.f32 0.0, %v2336
        %v2338 = vpop.f32.mrf.mxu0
        %2339 = vdwg.mxu0
        %v2344 = vunpack.c.l.b16 %v2303
        %v2345 = vunpack.c.l.b16 %v2304
        %v2346 = vunpack.c.l.b16 %v2305
        %v2347 = vunpack.c.l.b16 %v2306
        %v2348 = vpack.c.b16 %v2345, %v2344
        %v2349 = vpack.c.b16 %v2347, %v2346
        %v2353 = vsel %vm709, %v2302, 0
        %2355 = vmatpush.bf16.msra.mxu0 0
        %2356 = vmatpush.bf16.msra.mxu0 0
        %2357 = vmatpush.bf16.msra.mxu0 0
        %2358 = vmatpush.bf16.msra.mxu0 0
        %2359 = vmatpush.bf16.msra.mxu0 0
        %2360 = vmatpush.bf16.msra.mxu0 0
        %2361 = vmatpush.bf16.msra.mxu0 %v2349
        %2362 = vmatpush.bf16.msra.mxu0 %v2348
        %2363 = vmatmul.bf16.gmra.mxu0 %v2353
        %v2364 = vpop.f32.mrf.mxu0
        %v2365 = vadd.f32 %v2337, %v2364
        %v2366 = vpop.f32.mrf.mxu0
        %2367 = vdwg.mxu0
        %v2368 = vld [vmem:[#allocation8] sm:$0x1]
        %v2370 = vperm.slane %v2368, 0
        %v2372 = vadd.f32 %v2365, %v2370
        %v2373 = vmul.f32 %v2372, 0.5
        %v2374 = vtanh.pop %v2373
        %v2375 = vadd.f32 %v2374, 1.0
        %v2376 = vmul.f32 %v2373, %v2375
        %v2377 = vpack.c.bf16 %v2376, %v2376
        %vm2378 = vcmask 517120
        %2379 = vst.msk [vmem:[%s551] sm:$0x3] %vm2378, %v2377
        %p2380 = scmp.lt.s32.totalorder %s29, 1
        %s2381 = scalar_select %p2380, %s29, 1
        %s2382 = smul.addr %s2381, 2
        %s2383 = scalar_lea.vmem %s15, %s2382
        // Predicated region
        $region97: #{_lambda_.8} parent=79 // pred_check
          %p2384 = pneg %p367
        $region98: #{_lambda_.8} parent=79 // pred_check_branch
          %2386 = sbr.rel (%p2384) target = $region100
        $region99: #{_lambda_.8} parent=79 // pred_region
          _
        $region100: #{_lambda_.8} parent=79 // pred_fallthru
          _
      $region80: #{_lambda_.8} parent=5 // pred_fallthru
        _
      %p2387 = scmp.le.s32.totalorder 2, %s24
      // Predicated region
      $region101: #{_lambda_.8} parent=5 // pred_check
        %p2388 = pneg %p2387
      $region102: #{_lambda_.8} parent=5 // pred_check_branch
        %2390 = sbr.rel (%p2388) target = $region104
      $region103: #{_lambda_.8} parent=5 // pred_region
        %s2391 = ssub.s32 %s24, 2
        // Predicated region
        $region105: #{_lambda_.8} parent=103 // pred_check
          %p2392 = pneg %p373
        $region106: #{_lambda_.8} parent=103 // pred_check_branch
          %2394 = sbr.rel (%p2392) target = $region108
        $region107: #{_lambda_.8} parent=103 // pred_region
          %p2395 = scmp.lt.s32.totalorder %s30, 1
          %s2396 = scalar_select %p2395, %s30, 1
          %s2397 = smul.addr %s2396, 2
          %s2398 = scalar_lea.vmem %s15, %s2397
        $region108: #{_lambda_.8} parent=103 // pred_fallthru
          _
      $region104: #{_lambda_.8} parent=5 // pred_fallthru
        _
    $region6: #{_lambda_.8} parent=1 // loop_footer
      %s28 = sadd.s32 1, %s24
    $region7: #{_lambda_.8} parent=1 // loop_footer_branch
      %23 = sbr.rel target = $region3
    $region8: #{_lambda_.8} parent=1 // loop_exit
      _
    %2399 = vsyncpa [#allocation4], 1
    %s2400 = scalar_lea.sflag [#allocation4], 1
    %2401 = vsyncpa %s2400, 1
    %2402 = vsyncpa [#allocation6], 1
    %2403 = vsyncpa [#allocation9], 1

</llo_original>
